<compile_context>
chip_gen: v7x
topology: tpu7x:2x2x1
jax: 0.10.0
libtpu: 0.0.40
codegen_flags: <defaults>
</compile_context>

<pallas_src>
import jax
import jax.numpy as jnp
import numpy as np
from jax.experimental import pallas as pl
from jax.experimental.pallas import tpu as pltpu


# ------------------------------ fused kernel -------------------------------- #

def neuro_lv_kernel(cat_ref, w1_ref, b1_ref, rw_ref, rb_ref, o_ref,
                    pad_a, pad_b):
    """Whole neuro_lv forward for one batch element; activations resident in VMEM.

    cat_ref : (1, H+2, W+2, CP) f32  spatially pre-padded, channel-padded input
    w1_ref  : (9*CP, C)         bf16 conv_1 weight in im2col layout
    b1_ref  : (1, C)            f32  conv_1 bias
    rw_ref  : (2*n_b, 9*C, C)   bf16 residual-block conv weights (conv_a, conv_b / block)
    rb_ref  : (2*n_b, 1, C)     f32  residual-block conv biases
    o_ref   : (1, H, W, C)      f32  output
    pad_a   : (H+2, W+2, C)     f32  resident activation with zero halo
    pad_b   : (H+2, W+2, C)     f32  relu(conv_a) activation with zero halo
    """
    _, hp, wp, cp = cat_ref.shape
    H, W = hp - 2, wp - 2
    C = o_ref.shape[-1]
    HW = H * W
    n_blocks = rw_ref.shape[0] // 2

    # Zero only the 1-pixel halo strips; interiors are always fully overwritten
    # before being read.  Re-done every grid step (cheap: 4 thin stores / buffer)
    # so correctness holds even if the batch axis is split across TensorCores.
    zrow = jnp.zeros((1, wp, C), jnp.float32)
    zcol = jnp.zeros((hp, 1, C), jnp.float32)

    def zero_halo(p):
        p[0:1, :, :] = zrow
        p[hp - 1:hp, :, :] = zrow
        p[:, 0:1, :] = zcol
        p[:, wp - 1:wp, :] = zcol

    zero_halo(pad_a)
    zero_halo(pad_b)

    def conv3x3(tap_fn, w, b):
        # im2col: one (HW, 9*Cin) bf16 LHS -> single MXU matmul, f32 accumulate + bias.
        cols = jnp.concatenate(
            [tap_fn(dy, dx) for dy in range(3) for dx in range(3)], axis=-1)
        return jnp.dot(cols, w, preferred_element_type=jnp.float32) + b

    # ---------------------------- conv_1 + ReLU ---------------------------- #
    def cat_tap(dy, dx):
        win = cat_ref[0, dy:dy + H, dx:dx + W, :]
        return win.reshape(HW, cp).astype(jnp.bfloat16)

    y = conv3x3(cat_tap, w1_ref[...], b1_ref[...])
    act0 = jnp.maximum(y, 0.0).reshape(H, W, C)

    if n_blocks == 0:
        o_ref[0] = act0
        return

    pad_a[1:H + 1, 1:W + 1, :] = act0

    # ------------- recon_trunk: n_b x (x + conv_b(relu(conv_a(x)))) -------- #
    def pad_tap(p):
        def tap(dy, dx):
            return p[dy:dy + H, dx:dx + W, :].reshape(HW, C).astype(jnp.bfloat16)
        return tap

    for i in range(n_blocks):
        t = conv3x3(pad_tap(pad_a), rw_ref[2 * i], rb_ref[2 * i])
        pad_b[1:H + 1, 1:W + 1, :] = jnp.maximum(t, 0.0).reshape(H, W, C)
        y2 = conv3x3(pad_tap(pad_b), rw_ref[2 * i + 1], rb_ref[2 * i + 1])
        new_act = pad_a[1:H + 1, 1:W + 1, :] + y2.reshape(H, W, C)
        if i + 1 < n_blocks:
            pad_a[1:H + 1, 1:W + 1, :] = new_act
        else:
            # last block: write straight to the output tile (skip one VMEM roundtrip)
            o_ref[0] = new_act


# ------------------------------ wrapper ------------------------------------- #

def neuro_lv_forward(kp, x, left, right, h, h_):
    """Inputs in NCHW (PyTorch convention). Returns NCHW f32."""
    C = kp["w1"].shape[1]
    CP = kp["w1"].shape[0] // 9
    B, _, H, W = x.shape

    def to_nhwc(t):
        return jnp.transpose(t, (0, 2, 3, 1)).astype(jnp.float32)

    # layout glue (transpose / concat / pad) stays in XLA; everything compute-heavy
    # is inside the single fused pallas_call below.
    cat = jnp.concatenate([to_nhwc(t) for t in (x, left, right, h, h_)], axis=-1)
    cin = cat.shape[-1]
    assert CP >= cin
    cat_p = jnp.pad(cat, ((0, 0), (1, 1), (1, 1), (0, CP - cin)))  # spatial + channel pad

    out = pl.pallas_call(
        neuro_lv_kernel,
        out_shape=jax.ShapeDtypeStruct((B, H, W, C), jnp.float32),
        grid=(B,),
        in_specs=[
            pl.BlockSpec((1, H + 2, W + 2, CP), lambda i: (i, 0, 0, 0)),
            pl.BlockSpec(kp["w1"].shape, lambda i: (0, 0)),
            pl.BlockSpec(kp["b1"].shape, lambda i: (0, 0)),
            pl.BlockSpec(kp["rw"].shape, lambda i: (0, 0, 0)),
            pl.BlockSpec(kp["rb"].shape, lambda i: (0, 0, 0)),
        ],
        out_specs=pl.BlockSpec((1, H, W, C), lambda i: (i, 0, 0, 0)),
        scratch_shapes=[
            pltpu.VMEM((H + 2, W + 2, C), jnp.float32),   # pad_a: resident activation
            pltpu.VMEM((H + 2, W + 2, C), jnp.float32),   # pad_b: relu(conv_a) buffer
        ],
        compiler_params=pltpu.CompilerParams(
            dimension_semantics=("parallel",)),
    )(cat_p, kp["w1"], kp["b1"], kp["rw"], kp["rb"])

    return jnp.transpose(out, (0, 3, 1, 2))


# --------------------------- params & preparation --------------------------- #

def init_params(key, n_c, n_b):
    """Deterministic synthetic init mirroring initialize_weights(..., scale=0.1)."""
    cin = n_c * 2 + 3 * 3

    def kconv(k, ci, co, scale=0.1):
        std = (2.0 / (ci * 9)) ** 0.5           # kaiming_normal_, fan_in mode
        w = jax.random.normal(k, (3, 3, ci, co), jnp.float32) * std * scale
        b = jnp.zeros((1, co), jnp.float32)      # bias zeroed
        return w, b

    keys = jax.random.split(key, 1 + 2 * n_b)
    params = {"conv1": kconv(keys[0], cin, n_c), "blocks": []}
    for i in range(n_b):
        params["blocks"].append((kconv(keys[1 + 2 * i], n_c, n_c),
                                 kconv(keys[2 + 2 * i], n_c, n_c)))
    return params


def prepare_params(params):
    """Pad / reshape / cast weights into kernel-ready im2col layout (done once)."""
    w1, b1 = params["conv1"]                     # (3,3,cin,c), (1,c)
    cin, c = w1.shape[2], w1.shape[3]
    cp = ((cin + 63) // 64) * 64                 # lane-friendly channel pad (41 -> 64)
    w1p = jnp.pad(w1, ((0, 0), (0, 0), (0, cp - cin), (0, 0)))
    w1p = w1p.reshape(9 * cp, c).astype(jnp.bfloat16)

    rw, rb = [], []
    for (wa, ba), (wb, bb) in params["blocks"]:
        rw += [wa.reshape(9 * c, c), wb.reshape(9 * c, c)]
        rb += [ba, bb]
    return {"w1": w1p,
            "b1": b1.astype(jnp.float32),
            "rw": jnp.stack(rw).astype(jnp.bfloat16),   # (2*n_b, 9*c, c)
            "rb": jnp.stack(rb).astype(jnp.float32)}    # (2*n_b, 1, c)


# ---------------------------- pure-JAX reference ---------------------------- #

def _conv_ref(x, w, b):
    y = jax.lax.conv_general_dilated(
        x, w, (1, 1), "SAME", dimension_numbers=("NHWC", "HWIO", "NHWC"),
        precision=jax.lax.Precision.HIGHEST)
    return y + b.reshape(1, 1, 1, -1)


def neuro_lv_ref(params, cat_nhwc):
    w1, b1 = params["conv1"]
    out = jnp.maximum(_conv_ref(cat_nhwc, w1, b1), 0.0)
    for (wa, ba), (wb, bb) in params["blocks"]:
        t = jnp.maximum(_conv_ref(out, wa, ba), 0.0)
        out = out + _conv_ref(t, wb, bb)
    return out


# ----------------------------------- main ------------------------------------ #

if __name__ == "__main__":
    n_c, n_b = 16, 2          # `scale` of the module is unused by forward
    B, H, W = 2, 16, 16

    key = jax.random.PRNGKey(0)
    kx, kl, kr, kh, kh_, kp = jax.random.split(key, 6)

    # PyTorch-style NCHW inputs
    x = jax.random.normal(kx, (B, 3, H, W), jnp.float32)
    left = jax.random.normal(kl, (B, 3, H, W), jnp.float32)
    right = jax.random.normal(kr, (B, 3, H, W), jnp.float32)
    h = jax.random.normal(kh, (B, n_c, H, W), jnp.float32)
    h_ = jax.random.normal(kh_, (B, n_c, H, W), jnp.float32)

    params = init_params(kp, n_c, n_b)
    kparams = prepare_params(params)

    fwd = jax.jit(neuro_lv_forward)
    out = jax.block_until_ready(fwd(kparams, x, left, right, h, h_))
    assert out.shape == (B, n_c, H, W)

    # correctness check against a pure-JAX f32 reference (kernel matmuls are bf16)
    cat = jnp.concatenate(
        [jnp.transpose(t, (0, 2, 3, 1)) for t in (x, left, right, h, h_)],
        axis=-1)
    ref = jnp.transpose(neuro_lv_ref(params, cat), (0, 3, 1, 2))
    np.testing.assert_allclose(np.asarray(out), np.asarray(ref),
                               rtol=2e-2, atol=5e-3)

    print("KERNEL_OK")
</pallas_src>

<mosaic_0001>
module attributes {stable_mosaic.version = 11 : i64} {
  func.func @neuro_lv_kernel(%arg0: i32, %arg1: memref<1x18x18x64xf32, #tpu.memory_space<vmem>>, %arg2: memref<576x16xbf16, #tpu.memory_space<vmem>>, %arg3: memref<1x16xf32, #tpu.memory_space<vmem>>, %arg4: memref<4x144x16xbf16, #tpu.memory_space<vmem>>, %arg5: memref<4x1x16xf32, #tpu.memory_space<vmem>>, %arg6: memref<1x16x16x16xf32, #tpu.memory_space<vmem>>, %arg7: memref<18x18x16xf32, #tpu.memory_space<vmem>>, %arg8: memref<18x18x16xf32, #tpu.memory_space<vmem>>) attributes {dimension_semantics = [#tpu.dimension_semantics<parallel>], iteration_bounds = array<i64: 2>, scalar_prefetch = 0 : i64, scratch_operands = 2 : i64, tpu.core_type = #tpu.core_type<tc>, window_params = [{transform_indices = @transform_0, window_bounds = array<i64: 1, 18, 18, 64>}, {pipeline_mode = #tpu.pipeline_mode<synchronous>, transform_indices = @transform_1, window_bounds = array<i64: 576, 16>}, {pipeline_mode = #tpu.pipeline_mode<synchronous>, transform_indices = @transform_2, window_bounds = array<i64: 1, 16>}, {pipeline_mode = #tpu.pipeline_mode<synchronous>, transform_indices = @transform_3, window_bounds = array<i64: 4, 144, 16>}, {pipeline_mode = #tpu.pipeline_mode<synchronous>, transform_indices = @transform_4, window_bounds = array<i64: 4, 1, 16>}, {transform_indices = @transform_5, window_bounds = array<i64: 1, 16, 16, 16>}]} {
    %cst = arith.constant 0.000000e+00 : f32
    %0 = vector.broadcast %cst : f32 to vector<1x18x16xf32>
    %cst_0 = arith.constant 0.000000e+00 : f32
    %1 = vector.broadcast %cst_0 : f32 to vector<18x1x16xf32>
    %c0 = arith.constant 0 : index
    %c0_1 = arith.constant 0 : index
    %c0_2 = arith.constant 0 : index
    %2 = vector.load %arg7[%c0, %c0_1, %c0_2] : memref<18x18x16xf32, #tpu.memory_space<vmem>>, vector<1x18x16xf32>
    tpu.vector_store %arg7[%c0, %c0_1, %c0_2], %0 {strides = array<i32>} : memref<18x18x16xf32, #tpu.memory_space<vmem>>, vector<1x18x16xf32>,
    %c17 = arith.constant 17 : index
    %c0_3 = arith.constant 0 : index
    %c0_4 = arith.constant 0 : index
    %3 = vector.load %arg7[%c17, %c0_3, %c0_4] : memref<18x18x16xf32, #tpu.memory_space<vmem>>, vector<1x18x16xf32>
    tpu.vector_store %arg7[%c17, %c0_3, %c0_4], %0 {strides = array<i32>} : memref<18x18x16xf32, #tpu.memory_space<vmem>>, vector<1x18x16xf32>,
    %c0_5 = arith.constant 0 : index
    %c0_6 = arith.constant 0 : index
    %c0_7 = arith.constant 0 : index
    %4 = vector.load %arg7[%c0_5, %c0_6, %c0_7] : memref<18x18x16xf32, #tpu.memory_space<vmem>>, vector<18x1x16xf32>
    tpu.vector_store %arg7[%c0_5, %c0_6, %c0_7], %1 {strides = array<i32>} : memref<18x18x16xf32, #tpu.memory_space<vmem>>, vector<18x1x16xf32>,
    %c0_8 = arith.constant 0 : index
    %c17_9 = arith.constant 17 : index
    %c0_10 = arith.constant 0 : index
    %5 = vector.load %arg7[%c0_8, %c17_9, %c0_10] : memref<18x18x16xf32, #tpu.memory_space<vmem>>, vector<18x1x16xf32>
    tpu.vector_store %arg7[%c0_8, %c17_9, %c0_10], %1 {strides = array<i32>} : memref<18x18x16xf32, #tpu.memory_space<vmem>>, vector<18x1x16xf32>,
    %c0_11 = arith.constant 0 : index
    %c0_12 = arith.constant 0 : index
    %c0_13 = arith.constant 0 : index
    %6 = vector.load %arg8[%c0_11, %c0_12, %c0_13] : memref<18x18x16xf32, #tpu.memory_space<vmem>>, vector<1x18x16xf32>
    tpu.vector_store %arg8[%c0_11, %c0_12, %c0_13], %0 {strides = array<i32>} : memref<18x18x16xf32, #tpu.memory_space<vmem>>, vector<1x18x16xf32>,
    %c17_14 = arith.constant 17 : index
    %c0_15 = arith.constant 0 : index
    %c0_16 = arith.constant 0 : index
    %7 = vector.load %arg8[%c17_14, %c0_15, %c0_16] : memref<18x18x16xf32, #tpu.memory_space<vmem>>, vector<1x18x16xf32>
    tpu.vector_store %arg8[%c17_14, %c0_15, %c0_16], %0 {strides = array<i32>} : memref<18x18x16xf32, #tpu.memory_space<vmem>>, vector<1x18x16xf32>,
    %c0_17 = arith.constant 0 : index
    %c0_18 = arith.constant 0 : index
    %c0_19 = arith.constant 0 : index
    %8 = vector.load %arg8[%c0_17, %c0_18, %c0_19] : memref<18x18x16xf32, #tpu.memory_space<vmem>>, vector<18x1x16xf32>
    tpu.vector_store %arg8[%c0_17, %c0_18, %c0_19], %1 {strides = array<i32>} : memref<18x18x16xf32, #tpu.memory_space<vmem>>, vector<18x1x16xf32>,
    %c0_20 = arith.constant 0 : index
    %c17_21 = arith.constant 17 : index
    %c0_22 = arith.constant 0 : index
    %9 = vector.load %arg8[%c0_20, %c17_21, %c0_22] : memref<18x18x16xf32, #tpu.memory_space<vmem>>, vector<18x1x16xf32>
    tpu.vector_store %arg8[%c0_20, %c17_21, %c0_22], %1 {strides = array<i32>} : memref<18x18x16xf32, #tpu.memory_space<vmem>>, vector<18x1x16xf32>,
    %c0_23 = arith.constant 0 : index
    %c0_24 = arith.constant 0 : index
    %10 = vector.load %arg2[%c0_23, %c0_24] : memref<576x16xbf16, #tpu.memory_space<vmem>>, vector<576x16xbf16>
    %c0_25 = arith.constant 0 : index
    %c0_26 = arith.constant 0 : index
    %11 = vector.load %arg3[%c0_25, %c0_26] : memref<1x16xf32, #tpu.memory_space<vmem>>, vector<1x16xf32>
    %c0_27 = arith.constant 0 : index
    %c0_28 = arith.constant 0 : index
    %c0_29 = arith.constant 0 : index
    %c0_30 = arith.constant 0 : index
    %12 = vector.load %arg1[%c0_27, %c0_28, %c0_29, %c0_30] : memref<1x18x18x64xf32, #tpu.memory_space<vmem>>, vector<1x16x16x64xf32>
    %13 = vector.shape_cast %12 : vector<1x16x16x64xf32> to vector<16x16x64xf32>
    %14 = vector.shape_cast %13 : vector<16x16x64xf32> to vector<256x64xf32>
    %15 = arith.truncf %14 : vector<256x64xf32> to vector<256x64xbf16>
    %c0_31 = arith.constant 0 : index
    %c0_32 = arith.constant 0 : index
    %c1 = arith.constant 1 : index
    %c0_33 = arith.constant 0 : index
    %16 = vector.load %arg1[%c0_31, %c0_32, %c1, %c0_33] : memref<1x18x18x64xf32, #tpu.memory_space<vmem>>, vector<1x16x16x64xf32>
    %17 = vector.shape_cast %16 : vector<1x16x16x64xf32> to vector<16x16x64xf32>
    %18 = vector.shape_cast %17 : vector<16x16x64xf32> to vector<256x64xf32>
    %19 = arith.truncf %18 : vector<256x64xf32> to vector<256x64xbf16>
    %c0_34 = arith.constant 0 : index
    %c0_35 = arith.constant 0 : index
    %c2 = arith.constant 2 : index
    %c0_36 = arith.constant 0 : index
    %20 = vector.load %arg1[%c0_34, %c0_35, %c2, %c0_36] : memref<1x18x18x64xf32, #tpu.memory_space<vmem>>, vector<1x16x16x64xf32>
    %21 = vector.shape_cast %20 : vector<1x16x16x64xf32> to vector<16x16x64xf32>
    %22 = vector.shape_cast %21 : vector<16x16x64xf32> to vector<256x64xf32>
    %23 = arith.truncf %22 : vector<256x64xf32> to vector<256x64xbf16>
    %c0_37 = arith.constant 0 : index
    %c1_38 = arith.constant 1 : index
    %c0_39 = arith.constant 0 : index
    %c0_40 = arith.constant 0 : index
    %24 = vector.load %arg1[%c0_37, %c1_38, %c0_39, %c0_40] : memref<1x18x18x64xf32, #tpu.memory_space<vmem>>, vector<1x16x16x64xf32>
    %25 = vector.shape_cast %24 : vector<1x16x16x64xf32> to vector<16x16x64xf32>
    %26 = vector.shape_cast %25 : vector<16x16x64xf32> to vector<256x64xf32>
    %27 = arith.truncf %26 : vector<256x64xf32> to vector<256x64xbf16>
    %c0_41 = arith.constant 0 : index
    %c1_42 = arith.constant 1 : index
    %c1_43 = arith.constant 1 : index
    %c0_44 = arith.constant 0 : index
    %28 = vector.load %arg1[%c0_41, %c1_42, %c1_43, %c0_44] : memref<1x18x18x64xf32, #tpu.memory_space<vmem>>, vector<1x16x16x64xf32>
    %29 = vector.shape_cast %28 : vector<1x16x16x64xf32> to vector<16x16x64xf32>
    %30 = vector.shape_cast %29 : vector<16x16x64xf32> to vector<256x64xf32>
    %31 = arith.truncf %30 : vector<256x64xf32> to vector<256x64xbf16>
    %c0_45 = arith.constant 0 : index
    %c1_46 = arith.constant 1 : index
    %c2_47 = arith.constant 2 : index
    %c0_48 = arith.constant 0 : index
    %32 = vector.load %arg1[%c0_45, %c1_46, %c2_47, %c0_48] : memref<1x18x18x64xf32, #tpu.memory_space<vmem>>, vector<1x16x16x64xf32>
    %33 = vector.shape_cast %32 : vector<1x16x16x64xf32> to vector<16x16x64xf32>
    %34 = vector.shape_cast %33 : vector<16x16x64xf32> to vector<256x64xf32>
    %35 = arith.truncf %34 : vector<256x64xf32> to vector<256x64xbf16>
    %c0_49 = arith.constant 0 : index
    %c2_50 = arith.constant 2 : index
    %c0_51 = arith.constant 0 : index
    %c0_52 = arith.constant 0 : index
    %36 = vector.load %arg1[%c0_49, %c2_50, %c0_51, %c0_52] : memref<1x18x18x64xf32, #tpu.memory_space<vmem>>, vector<1x16x16x64xf32>
    %37 = vector.shape_cast %36 : vector<1x16x16x64xf32> to vector<16x16x64xf32>
    %38 = vector.shape_cast %37 : vector<16x16x64xf32> to vector<256x64xf32>
    %39 = arith.truncf %38 : vector<256x64xf32> to vector<256x64xbf16>
    %c0_53 = arith.constant 0 : index
    %c2_54 = arith.constant 2 : index
    %c1_55 = arith.constant 1 : index
    %c0_56 = arith.constant 0 : index
    %40 = vector.load %arg1[%c0_53, %c2_54, %c1_55, %c0_56] : memref<1x18x18x64xf32, #tpu.memory_space<vmem>>, vector<1x16x16x64xf32>
    %41 = vector.shape_cast %40 : vector<1x16x16x64xf32> to vector<16x16x64xf32>
    %42 = vector.shape_cast %41 : vector<16x16x64xf32> to vector<256x64xf32>
    %43 = arith.truncf %42 : vector<256x64xf32> to vector<256x64xbf16>
    %c0_57 = arith.constant 0 : index
    %c2_58 = arith.constant 2 : index
    %c2_59 = arith.constant 2 : index
    %c0_60 = arith.constant 0 : index
    %44 = vector.load %arg1[%c0_57, %c2_58, %c2_59, %c0_60] : memref<1x18x18x64xf32, #tpu.memory_space<vmem>>, vector<1x16x16x64xf32>
    %45 = vector.shape_cast %44 : vector<1x16x16x64xf32> to vector<16x16x64xf32>
    %46 = vector.shape_cast %45 : vector<16x16x64xf32> to vector<256x64xf32>
    %47 = arith.truncf %46 : vector<256x64xf32> to vector<256x64xbf16>
    %48 = tpu.concatenate %15, %19, %23, %27, %31, %35, %39, %43, %47 in 1 : vector<256x64xbf16>, vector<256x64xbf16>, vector<256x64xbf16>, vector<256x64xbf16>, vector<256x64xbf16>, vector<256x64xbf16>, vector<256x64xbf16>, vector<256x64xbf16>, vector<256x64xbf16> -> vector<256x576xbf16>
    %cst_61 = arith.constant dense<0.000000e+00> : vector<256x16xf32>
    %49 = tpu.matmul %48, %10, %cst_61 {dimension_numbers = #tpu.dot_dimension_numbers<[1], [0], [0], [1], [0, 0, 1, 1], [], []>} : vector<256x576xbf16>, vector<576x16xbf16>, vector<256x16xf32> -> vector<256x16xf32>
    %50 = vector.broadcast %11 : vector<1x16xf32> to vector<256x16xf32>
    %51 = arith.addf %49, %50 : vector<256x16xf32>
    %cst_62 = arith.constant 0.000000e+00 : f32
    %52 = vector.broadcast %cst_62 : f32 to vector<256x16xf32>
    %53 = arith.maximumf %51, %52 : vector<256x16xf32>
    %54 = vector.shape_cast %53 : vector<256x16xf32> to vector<16x16x16xf32>
    %c1_63 = arith.constant 1 : index
    %c1_64 = arith.constant 1 : index
    %c0_65 = arith.constant 0 : index
    %55 = vector.load %arg7[%c1_63, %c1_64, %c0_65] : memref<18x18x16xf32, #tpu.memory_space<vmem>>, vector<16x16x16xf32>
    tpu.vector_store %arg7[%c1_63, %c1_64, %c0_65], %54 {strides = array<i32>} : memref<18x18x16xf32, #tpu.memory_space<vmem>>, vector<16x16x16xf32>,
    %c0_66 = arith.constant 0 : index
    %c0_67 = arith.constant 0 : index
    %c0_68 = arith.constant 0 : index
    %56 = vector.load %arg4[%c0_66, %c0_67, %c0_68] : memref<4x144x16xbf16, #tpu.memory_space<vmem>>, vector<1x144x16xbf16>
    %57 = vector.shape_cast %56 : vector<1x144x16xbf16> to vector<144x16xbf16>
    %c0_69 = arith.constant 0 : index
    %c0_70 = arith.constant 0 : index
    %c0_71 = arith.constant 0 : index
    %58 = vector.load %arg5[%c0_69, %c0_70, %c0_71] : memref<4x1x16xf32, #tpu.memory_space<vmem>>, vector<1x1x16xf32>
    %59 = vector.shape_cast %58 : vector<1x1x16xf32> to vector<1x16xf32>
    %c0_72 = arith.constant 0 : index
    %c0_73 = arith.constant 0 : index
    %c0_74 = arith.constant 0 : index
    %60 = vector.load %arg7[%c0_72, %c0_73, %c0_74] : memref<18x18x16xf32, #tpu.memory_space<vmem>>, vector<16x16x16xf32>
    %61 = vector.shape_cast %60 : vector<16x16x16xf32> to vector<256x16xf32>
    %62 = arith.truncf %61 : vector<256x16xf32> to vector<256x16xbf16>
    %c0_75 = arith.constant 0 : index
    %c1_76 = arith.constant 1 : index
    %c0_77 = arith.constant 0 : index
    %63 = vector.load %arg7[%c0_75, %c1_76, %c0_77] : memref<18x18x16xf32, #tpu.memory_space<vmem>>, vector<16x16x16xf32>
    %64 = vector.shape_cast %63 : vector<16x16x16xf32> to vector<256x16xf32>
    %65 = arith.truncf %64 : vector<256x16xf32> to vector<256x16xbf16>
    %c0_78 = arith.constant 0 : index
    %c2_79 = arith.constant 2 : index
    %c0_80 = arith.constant 0 : index
    %66 = vector.load %arg7[%c0_78, %c2_79, %c0_80] : memref<18x18x16xf32, #tpu.memory_space<vmem>>, vector<16x16x16xf32>
    %67 = vector.shape_cast %66 : vector<16x16x16xf32> to vector<256x16xf32>
    %68 = arith.truncf %67 : vector<256x16xf32> to vector<256x16xbf16>
    %c1_81 = arith.constant 1 : index
    %c0_82 = arith.constant 0 : index
    %c0_83 = arith.constant 0 : index
    %69 = vector.load %arg7[%c1_81, %c0_82, %c0_83] : memref<18x18x16xf32, #tpu.memory_space<vmem>>, vector<16x16x16xf32>
    %70 = vector.shape_cast %69 : vector<16x16x16xf32> to vector<256x16xf32>
    %71 = arith.truncf %70 : vector<256x16xf32> to vector<256x16xbf16>
    %c1_84 = arith.constant 1 : index
    %c1_85 = arith.constant 1 : index
    %c0_86 = arith.constant 0 : index
    %72 = vector.load %arg7[%c1_84, %c1_85, %c0_86] : memref<18x18x16xf32, #tpu.memory_space<vmem>>, vector<16x16x16xf32>
    %73 = vector.shape_cast %72 : vector<16x16x16xf32> to vector<256x16xf32>
    %74 = arith.truncf %73 : vector<256x16xf32> to vector<256x16xbf16>
    %c1_87 = arith.constant 1 : index
    %c2_88 = arith.constant 2 : index
    %c0_89 = arith.constant 0 : index
    %75 = vector.load %arg7[%c1_87, %c2_88, %c0_89] : memref<18x18x16xf32, #tpu.memory_space<vmem>>, vector<16x16x16xf32>
    %76 = vector.shape_cast %75 : vector<16x16x16xf32> to vector<256x16xf32>
    %77 = arith.truncf %76 : vector<256x16xf32> to vector<256x16xbf16>
    %c2_90 = arith.constant 2 : index
    %c0_91 = arith.constant 0 : index
    %c0_92 = arith.constant 0 : index
    %78 = vector.load %arg7[%c2_90, %c0_91, %c0_92] : memref<18x18x16xf32, #tpu.memory_space<vmem>>, vector<16x16x16xf32>
    %79 = vector.shape_cast %78 : vector<16x16x16xf32> to vector<256x16xf32>
    %80 = arith.truncf %79 : vector<256x16xf32> to vector<256x16xbf16>
    %c2_93 = arith.constant 2 : index
    %c1_94 = arith.constant 1 : index
    %c0_95 = arith.constant 0 : index
    %81 = vector.load %arg7[%c2_93, %c1_94, %c0_95] : memref<18x18x16xf32, #tpu.memory_space<vmem>>, vector<16x16x16xf32>
    %82 = vector.shape_cast %81 : vector<16x16x16xf32> to vector<256x16xf32>
    %83 = arith.truncf %82 : vector<256x16xf32> to vector<256x16xbf16>
    %c2_96 = arith.constant 2 : index
    %c2_97 = arith.constant 2 : index
    %c0_98 = arith.constant 0 : index
    %84 = vector.load %arg7[%c2_96, %c2_97, %c0_98] : memref<18x18x16xf32, #tpu.memory_space<vmem>>, vector<16x16x16xf32>
    %85 = vector.shape_cast %84 : vector<16x16x16xf32> to vector<256x16xf32>
    %86 = arith.truncf %85 : vector<256x16xf32> to vector<256x16xbf16>
    %87 = tpu.concatenate %62, %65, %68, %71, %74, %77, %80, %83, %86 in 1 : vector<256x16xbf16>, vector<256x16xbf16>, vector<256x16xbf16>, vector<256x16xbf16>, vector<256x16xbf16>, vector<256x16xbf16>, vector<256x16xbf16>, vector<256x16xbf16>, vector<256x16xbf16> -> vector<256x144xbf16>
    %cst_99 = arith.constant dense<0.000000e+00> : vector<256x16xf32>
    %88 = tpu.matmul %87, %57, %cst_99 {dimension_numbers = #tpu.dot_dimension_numbers<[1], [0], [0], [1], [0, 0, 1, 1], [], []>} : vector<256x144xbf16>, vector<144x16xbf16>, vector<256x16xf32> -> vector<256x16xf32>
    %89 = vector.broadcast %59 : vector<1x16xf32> to vector<256x16xf32>
    %90 = arith.addf %88, %89 : vector<256x16xf32>
    %cst_100 = arith.constant 0.000000e+00 : f32
    %91 = vector.broadcast %cst_100 : f32 to vector<256x16xf32>
    %92 = arith.maximumf %90, %91 : vector<256x16xf32>
    %93 = vector.shape_cast %92 : vector<256x16xf32> to vector<16x16x16xf32>
    %c1_101 = arith.constant 1 : index
    %c1_102 = arith.constant 1 : index
    %c0_103 = arith.constant 0 : index
    %94 = vector.load %arg8[%c1_101, %c1_102, %c0_103] : memref<18x18x16xf32, #tpu.memory_space<vmem>>, vector<16x16x16xf32>
    tpu.vector_store %arg8[%c1_101, %c1_102, %c0_103], %93 {strides = array<i32>} : memref<18x18x16xf32, #tpu.memory_space<vmem>>, vector<16x16x16xf32>,
    %c1_104 = arith.constant 1 : index
    %c0_105 = arith.constant 0 : index
    %c0_106 = arith.constant 0 : index
    %95 = vector.load %arg4[%c1_104, %c0_105, %c0_106] : memref<4x144x16xbf16, #tpu.memory_space<vmem>>, vector<1x144x16xbf16>
    %96 = vector.shape_cast %95 : vector<1x144x16xbf16> to vector<144x16xbf16>
    %c1_107 = arith.constant 1 : index
    %c0_108 = arith.constant 0 : index
    %c0_109 = arith.constant 0 : index
    %97 = vector.load %arg5[%c1_107, %c0_108, %c0_109] : memref<4x1x16xf32, #tpu.memory_space<vmem>>, vector<1x1x16xf32>
    %98 = vector.shape_cast %97 : vector<1x1x16xf32> to vector<1x16xf32>
    %c0_110 = arith.constant 0 : index
    %c0_111 = arith.constant 0 : index
    %c0_112 = arith.constant 0 : index
    %99 = vector.load %arg8[%c0_110, %c0_111, %c0_112] : memref<18x18x16xf32, #tpu.memory_space<vmem>>, vector<16x16x16xf32>
    %100 = vector.shape_cast %99 : vector<16x16x16xf32> to vector<256x16xf32>
    %101 = arith.truncf %100 : vector<256x16xf32> to vector<256x16xbf16>
    %c0_113 = arith.constant 0 : index
    %c1_114 = arith.constant 1 : index
    %c0_115 = arith.constant 0 : index
    %102 = vector.load %arg8[%c0_113, %c1_114, %c0_115] : memref<18x18x16xf32, #tpu.memory_space<vmem>>, vector<16x16x16xf32>
    %103 = vector.shape_cast %102 : vector<16x16x16xf32> to vector<256x16xf32>
    %104 = arith.truncf %103 : vector<256x16xf32> to vector<256x16xbf16>
    %c0_116 = arith.constant 0 : index
    %c2_117 = arith.constant 2 : index
    %c0_118 = arith.constant 0 : index
    %105 = vector.load %arg8[%c0_116, %c2_117, %c0_118] : memref<18x18x16xf32, #tpu.memory_space<vmem>>, vector<16x16x16xf32>
    %106 = vector.shape_cast %105 : vector<16x16x16xf32> to vector<256x16xf32>
    %107 = arith.truncf %106 : vector<256x16xf32> to vector<256x16xbf16>
    %c1_119 = arith.constant 1 : index
    %c0_120 = arith.constant 0 : index
    %c0_121 = arith.constant 0 : index
    %108 = vector.load %arg8[%c1_119, %c0_120, %c0_121] : memref<18x18x16xf32, #tpu.memory_space<vmem>>, vector<16x16x16xf32>
    %109 = vector.shape_cast %108 : vector<16x16x16xf32> to vector<256x16xf32>
    %110 = arith.truncf %109 : vector<256x16xf32> to vector<256x16xbf16>
    %c1_122 = arith.constant 1 : index
    %c1_123 = arith.constant 1 : index
    %c0_124 = arith.constant 0 : index
    %111 = vector.load %arg8[%c1_122, %c1_123, %c0_124] : memref<18x18x16xf32, #tpu.memory_space<vmem>>, vector<16x16x16xf32>
    %112 = vector.shape_cast %111 : vector<16x16x16xf32> to vector<256x16xf32>
    %113 = arith.truncf %112 : vector<256x16xf32> to vector<256x16xbf16>
    %c1_125 = arith.constant 1 : index
    %c2_126 = arith.constant 2 : index
    %c0_127 = arith.constant 0 : index
    %114 = vector.load %arg8[%c1_125, %c2_126, %c0_127] : memref<18x18x16xf32, #tpu.memory_space<vmem>>, vector<16x16x16xf32>
    %115 = vector.shape_cast %114 : vector<16x16x16xf32> to vector<256x16xf32>
    %116 = arith.truncf %115 : vector<256x16xf32> to vector<256x16xbf16>
    %c2_128 = arith.constant 2 : index
    %c0_129 = arith.constant 0 : index
    %c0_130 = arith.constant 0 : index
    %117 = vector.load %arg8[%c2_128, %c0_129, %c0_130] : memref<18x18x16xf32, #tpu.memory_space<vmem>>, vector<16x16x16xf32>
    %118 = vector.shape_cast %117 : vector<16x16x16xf32> to vector<256x16xf32>
    %119 = arith.truncf %118 : vector<256x16xf32> to vector<256x16xbf16>
    %c2_131 = arith.constant 2 : index
    %c1_132 = arith.constant 1 : index
    %c0_133 = arith.constant 0 : index
    %120 = vector.load %arg8[%c2_131, %c1_132, %c0_133] : memref<18x18x16xf32, #tpu.memory_space<vmem>>, vector<16x16x16xf32>
    %121 = vector.shape_cast %120 : vector<16x16x16xf32> to vector<256x16xf32>
    %122 = arith.truncf %121 : vector<256x16xf32> to vector<256x16xbf16>
    %c2_134 = arith.constant 2 : index
    %c2_135 = arith.constant 2 : index
    %c0_136 = arith.constant 0 : index
    %123 = vector.load %arg8[%c2_134, %c2_135, %c0_136] : memref<18x18x16xf32, #tpu.memory_space<vmem>>, vector<16x16x16xf32>
    %124 = vector.shape_cast %123 : vector<16x16x16xf32> to vector<256x16xf32>
    %125 = arith.truncf %124 : vector<256x16xf32> to vector<256x16xbf16>
    %126 = tpu.concatenate %101, %104, %107, %110, %113, %116, %119, %122, %125 in 1 : vector<256x16xbf16>, vector<256x16xbf16>, vector<256x16xbf16>, vector<256x16xbf16>, vector<256x16xbf16>, vector<256x16xbf16>, vector<256x16xbf16>, vector<256x16xbf16>, vector<256x16xbf16> -> vector<256x144xbf16>
    %cst_137 = arith.constant dense<0.000000e+00> : vector<256x16xf32>
    %127 = tpu.matmul %126, %96, %cst_137 {dimension_numbers = #tpu.dot_dimension_numbers<[1], [0], [0], [1], [0, 0, 1, 1], [], []>} : vector<256x144xbf16>, vector<144x16xbf16>, vector<256x16xf32> -> vector<256x16xf32>
    %128 = vector.broadcast %98 : vector<1x16xf32> to vector<256x16xf32>
    %129 = arith.addf %127, %128 : vector<256x16xf32>
    %c1_138 = arith.constant 1 : index
    %c1_139 = arith.constant 1 : index
    %c0_140 = arith.constant 0 : index
    %130 = vector.load %arg7[%c1_138, %c1_139, %c0_140] : memref<18x18x16xf32, #tpu.memory_space<vmem>>, vector<16x16x16xf32>
    %131 = vector.shape_cast %129 : vector<256x16xf32> to vector<16x16x16xf32>
    %132 = arith.addf %130, %131 : vector<16x16x16xf32>
    %c1_141 = arith.constant 1 : index
    %c1_142 = arith.constant 1 : index
    %c0_143 = arith.constant 0 : index
    %133 = vector.load %arg7[%c1_141, %c1_142, %c0_143] : memref<18x18x16xf32, #tpu.memory_space<vmem>>, vector<16x16x16xf32>
    tpu.vector_store %arg7[%c1_141, %c1_142, %c0_143], %132 {strides = array<i32>} : memref<18x18x16xf32, #tpu.memory_space<vmem>>, vector<16x16x16xf32>,
    %c2_144 = arith.constant 2 : index
    %c0_145 = arith.constant 0 : index
    %c0_146 = arith.constant 0 : index
    %134 = vector.load %arg4[%c2_144, %c0_145, %c0_146] : memref<4x144x16xbf16, #tpu.memory_space<vmem>>, vector<1x144x16xbf16>
    %135 = vector.shape_cast %134 : vector<1x144x16xbf16> to vector<144x16xbf16>
    %c2_147 = arith.constant 2 : index
    %c0_148 = arith.constant 0 : index
    %c0_149 = arith.constant 0 : index
    %136 = vector.load %arg5[%c2_147, %c0_148, %c0_149] : memref<4x1x16xf32, #tpu.memory_space<vmem>>, vector<1x1x16xf32>
    %137 = vector.shape_cast %136 : vector<1x1x16xf32> to vector<1x16xf32>
    %c0_150 = arith.constant 0 : index
    %c0_151 = arith.constant 0 : index
    %c0_152 = arith.constant 0 : index
    %138 = vector.load %arg7[%c0_150, %c0_151, %c0_152] : memref<18x18x16xf32, #tpu.memory_space<vmem>>, vector<16x16x16xf32>
    %139 = vector.shape_cast %138 : vector<16x16x16xf32> to vector<256x16xf32>
    %140 = arith.truncf %139 : vector<256x16xf32> to vector<256x16xbf16>
    %c0_153 = arith.constant 0 : index
    %c1_154 = arith.constant 1 : index
    %c0_155 = arith.constant 0 : index
    %141 = vector.load %arg7[%c0_153, %c1_154, %c0_155] : memref<18x18x16xf32, #tpu.memory_space<vmem>>, vector<16x16x16xf32>
    %142 = vector.shape_cast %141 : vector<16x16x16xf32> to vector<256x16xf32>
    %143 = arith.truncf %142 : vector<256x16xf32> to vector<256x16xbf16>
    %c0_156 = arith.constant 0 : index
    %c2_157 = arith.constant 2 : index
    %c0_158 = arith.constant 0 : index
    %144 = vector.load %arg7[%c0_156, %c2_157, %c0_158] : memref<18x18x16xf32, #tpu.memory_space<vmem>>, vector<16x16x16xf32>
    %145 = vector.shape_cast %144 : vector<16x16x16xf32> to vector<256x16xf32>
    %146 = arith.truncf %145 : vector<256x16xf32> to vector<256x16xbf16>
    %c1_159 = arith.constant 1 : index
    %c0_160 = arith.constant 0 : index
    %c0_161 = arith.constant 0 : index
    %147 = vector.load %arg7[%c1_159, %c0_160, %c0_161] : memref<18x18x16xf32, #tpu.memory_space<vmem>>, vector<16x16x16xf32>
    %148 = vector.shape_cast %147 : vector<16x16x16xf32> to vector<256x16xf32>
    %149 = arith.truncf %148 : vector<256x16xf32> to vector<256x16xbf16>
    %c1_162 = arith.constant 1 : index
    %c1_163 = arith.constant 1 : index
    %c0_164 = arith.constant 0 : index
    %150 = vector.load %arg7[%c1_162, %c1_163, %c0_164] : memref<18x18x16xf32, #tpu.memory_space<vmem>>, vector<16x16x16xf32>
    %151 = vector.shape_cast %150 : vector<16x16x16xf32> to vector<256x16xf32>
    %152 = arith.truncf %151 : vector<256x16xf32> to vector<256x16xbf16>
    %c1_165 = arith.constant 1 : index
    %c2_166 = arith.constant 2 : index
    %c0_167 = arith.constant 0 : index
    %153 = vector.load %arg7[%c1_165, %c2_166, %c0_167] : memref<18x18x16xf32, #tpu.memory_space<vmem>>, vector<16x16x16xf32>
    %154 = vector.shape_cast %153 : vector<16x16x16xf32> to vector<256x16xf32>
    %155 = arith.truncf %154 : vector<256x16xf32> to vector<256x16xbf16>
    %c2_168 = arith.constant 2 : index
    %c0_169 = arith.constant 0 : index
    %c0_170 = arith.constant 0 : index
    %156 = vector.load %arg7[%c2_168, %c0_169, %c0_170] : memref<18x18x16xf32, #tpu.memory_space<vmem>>, vector<16x16x16xf32>
    %157 = vector.shape_cast %156 : vector<16x16x16xf32> to vector<256x16xf32>
    %158 = arith.truncf %157 : vector<256x16xf32> to vector<256x16xbf16>
    %c2_171 = arith.constant 2 : index
    %c1_172 = arith.constant 1 : index
    %c0_173 = arith.constant 0 : index
    %159 = vector.load %arg7[%c2_171, %c1_172, %c0_173] : memref<18x18x16xf32, #tpu.memory_space<vmem>>, vector<16x16x16xf32>
    %160 = vector.shape_cast %159 : vector<16x16x16xf32> to vector<256x16xf32>
    %161 = arith.truncf %160 : vector<256x16xf32> to vector<256x16xbf16>
    %c2_174 = arith.constant 2 : index
    %c2_175 = arith.constant 2 : index
    %c0_176 = arith.constant 0 : index
    %162 = vector.load %arg7[%c2_174, %c2_175, %c0_176] : memref<18x18x16xf32, #tpu.memory_space<vmem>>, vector<16x16x16xf32>
    %163 = vector.shape_cast %162 : vector<16x16x16xf32> to vector<256x16xf32>
    %164 = arith.truncf %163 : vector<256x16xf32> to vector<256x16xbf16>
    %165 = tpu.concatenate %140, %143, %146, %149, %152, %155, %158, %161, %164 in 1 : vector<256x16xbf16>, vector<256x16xbf16>, vector<256x16xbf16>, vector<256x16xbf16>, vector<256x16xbf16>, vector<256x16xbf16>, vector<256x16xbf16>, vector<256x16xbf16>, vector<256x16xbf16> -> vector<256x144xbf16>
    %cst_177 = arith.constant dense<0.000000e+00> : vector<256x16xf32>
    %166 = tpu.matmul %165, %135, %cst_177 {dimension_numbers = #tpu.dot_dimension_numbers<[1], [0], [0], [1], [0, 0, 1, 1], [], []>} : vector<256x144xbf16>, vector<144x16xbf16>, vector<256x16xf32> -> vector<256x16xf32>
    %167 = vector.broadcast %137 : vector<1x16xf32> to vector<256x16xf32>
    %168 = arith.addf %166, %167 : vector<256x16xf32>
    %cst_178 = arith.constant 0.000000e+00 : f32
    %169 = vector.broadcast %cst_178 : f32 to vector<256x16xf32>
    %170 = arith.maximumf %168, %169 : vector<256x16xf32>
    %171 = vector.shape_cast %170 : vector<256x16xf32> to vector<16x16x16xf32>
    %c1_179 = arith.constant 1 : index
    %c1_180 = arith.constant 1 : index
    %c0_181 = arith.constant 0 : index
    %172 = vector.load %arg8[%c1_179, %c1_180, %c0_181] : memref<18x18x16xf32, #tpu.memory_space<vmem>>, vector<16x16x16xf32>
    tpu.vector_store %arg8[%c1_179, %c1_180, %c0_181], %171 {strides = array<i32>} : memref<18x18x16xf32, #tpu.memory_space<vmem>>, vector<16x16x16xf32>,
    %c3 = arith.constant 3 : index
    %c0_182 = arith.constant 0 : index
    %c0_183 = arith.constant 0 : index
    %173 = vector.load %arg4[%c3, %c0_182, %c0_183] : memref<4x144x16xbf16, #tpu.memory_space<vmem>>, vector<1x144x16xbf16>
    %174 = vector.shape_cast %173 : vector<1x144x16xbf16> to vector<144x16xbf16>
    %c3_184 = arith.constant 3 : index
    %c0_185 = arith.constant 0 : index
    %c0_186 = arith.constant 0 : index
    %175 = vector.load %arg5[%c3_184, %c0_185, %c0_186] : memref<4x1x16xf32, #tpu.memory_space<vmem>>, vector<1x1x16xf32>
    %176 = vector.shape_cast %175 : vector<1x1x16xf32> to vector<1x16xf32>
    %c0_187 = arith.constant 0 : index
    %c0_188 = arith.constant 0 : index
    %c0_189 = arith.constant 0 : index
    %177 = vector.load %arg8[%c0_187, %c0_188, %c0_189] : memref<18x18x16xf32, #tpu.memory_space<vmem>>, vector<16x16x16xf32>
    %178 = vector.shape_cast %177 : vector<16x16x16xf32> to vector<256x16xf32>
    %179 = arith.truncf %178 : vector<256x16xf32> to vector<256x16xbf16>
    %c0_190 = arith.constant 0 : index
    %c1_191 = arith.constant 1 : index
    %c0_192 = arith.constant 0 : index
    %180 = vector.load %arg8[%c0_190, %c1_191, %c0_192] : memref<18x18x16xf32, #tpu.memory_space<vmem>>, vector<16x16x16xf32>
    %181 = vector.shape_cast %180 : vector<16x16x16xf32> to vector<256x16xf32>
    %182 = arith.truncf %181 : vector<256x16xf32> to vector<256x16xbf16>
    %c0_193 = arith.constant 0 : index
    %c2_194 = arith.constant 2 : index
    %c0_195 = arith.constant 0 : index
    %183 = vector.load %arg8[%c0_193, %c2_194, %c0_195] : memref<18x18x16xf32, #tpu.memory_space<vmem>>, vector<16x16x16xf32>
    %184 = vector.shape_cast %183 : vector<16x16x16xf32> to vector<256x16xf32>
    %185 = arith.truncf %184 : vector<256x16xf32> to vector<256x16xbf16>
    %c1_196 = arith.constant 1 : index
    %c0_197 = arith.constant 0 : index
    %c0_198 = arith.constant 0 : index
    %186 = vector.load %arg8[%c1_196, %c0_197, %c0_198] : memref<18x18x16xf32, #tpu.memory_space<vmem>>, vector<16x16x16xf32>
    %187 = vector.shape_cast %186 : vector<16x16x16xf32> to vector<256x16xf32>
    %188 = arith.truncf %187 : vector<256x16xf32> to vector<256x16xbf16>
    %c1_199 = arith.constant 1 : index
    %c1_200 = arith.constant 1 : index
    %c0_201 = arith.constant 0 : index
    %189 = vector.load %arg8[%c1_199, %c1_200, %c0_201] : memref<18x18x16xf32, #tpu.memory_space<vmem>>, vector<16x16x16xf32>
    %190 = vector.shape_cast %189 : vector<16x16x16xf32> to vector<256x16xf32>
    %191 = arith.truncf %190 : vector<256x16xf32> to vector<256x16xbf16>
    %c1_202 = arith.constant 1 : index
    %c2_203 = arith.constant 2 : index
    %c0_204 = arith.constant 0 : index
    %192 = vector.load %arg8[%c1_202, %c2_203, %c0_204] : memref<18x18x16xf32, #tpu.memory_space<vmem>>, vector<16x16x16xf32>
    %193 = vector.shape_cast %192 : vector<16x16x16xf32> to vector<256x16xf32>
    %194 = arith.truncf %193 : vector<256x16xf32> to vector<256x16xbf16>
    %c2_205 = arith.constant 2 : index
    %c0_206 = arith.constant 0 : index
    %c0_207 = arith.constant 0 : index
    %195 = vector.load %arg8[%c2_205, %c0_206, %c0_207] : memref<18x18x16xf32, #tpu.memory_space<vmem>>, vector<16x16x16xf32>
    %196 = vector.shape_cast %195 : vector<16x16x16xf32> to vector<256x16xf32>
    %197 = arith.truncf %196 : vector<256x16xf32> to vector<256x16xbf16>
    %c2_208 = arith.constant 2 : index
    %c1_209 = arith.constant 1 : index
    %c0_210 = arith.constant 0 : index
    %198 = vector.load %arg8[%c2_208, %c1_209, %c0_210] : memref<18x18x16xf32, #tpu.memory_space<vmem>>, vector<16x16x16xf32>
    %199 = vector.shape_cast %198 : vector<16x16x16xf32> to vector<256x16xf32>
    %200 = arith.truncf %199 : vector<256x16xf32> to vector<256x16xbf16>
    %c2_211 = arith.constant 2 : index
    %c2_212 = arith.constant 2 : index
    %c0_213 = arith.constant 0 : index
    %201 = vector.load %arg8[%c2_211, %c2_212, %c0_213] : memref<18x18x16xf32, #tpu.memory_space<vmem>>, vector<16x16x16xf32>
    %202 = vector.shape_cast %201 : vector<16x16x16xf32> to vector<256x16xf32>
    %203 = arith.truncf %202 : vector<256x16xf32> to vector<256x16xbf16>
    %204 = tpu.concatenate %179, %182, %185, %188, %191, %194, %197, %200, %203 in 1 : vector<256x16xbf16>, vector<256x16xbf16>, vector<256x16xbf16>, vector<256x16xbf16>, vector<256x16xbf16>, vector<256x16xbf16>, vector<256x16xbf16>, vector<256x16xbf16>, vector<256x16xbf16> -> vector<256x144xbf16>
    %cst_214 = arith.constant dense<0.000000e+00> : vector<256x16xf32>
    %205 = tpu.matmul %204, %174, %cst_214 {dimension_numbers = #tpu.dot_dimension_numbers<[1], [0], [0], [1], [0, 0, 1, 1], [], []>} : vector<256x144xbf16>, vector<144x16xbf16>, vector<256x16xf32> -> vector<256x16xf32>
    %206 = vector.broadcast %176 : vector<1x16xf32> to vector<256x16xf32>
    %207 = arith.addf %205, %206 : vector<256x16xf32>
    %c1_215 = arith.constant 1 : index
    %c1_216 = arith.constant 1 : index
    %c0_217 = arith.constant 0 : index
    %208 = vector.load %arg7[%c1_215, %c1_216, %c0_217] : memref<18x18x16xf32, #tpu.memory_space<vmem>>, vector<16x16x16xf32>
    %209 = vector.shape_cast %207 : vector<256x16xf32> to vector<16x16x16xf32>
    %210 = arith.addf %208, %209 : vector<16x16x16xf32>
    %c0_218 = arith.constant 0 : index
    %c0_219 = arith.constant 0 : index
    %c0_220 = arith.constant 0 : index
    %c0_221 = arith.constant 0 : index
    %211 = vector.load %arg6[%c0_218, %c0_219, %c0_220, %c0_221] : memref<1x16x16x16xf32, #tpu.memory_space<vmem>>, vector<1x16x16x16xf32>
    %212 = vector.shape_cast %211 : vector<1x16x16x16xf32> to vector<16x16x16xf32>
    %213 = vector.shape_cast %210 : vector<16x16x16xf32> to vector<1x16x16x16xf32>
    tpu.vector_store %arg6[%c0_218, %c0_219, %c0_220, %c0_221], %213 {strides = array<i32>} : memref<1x16x16x16xf32, #tpu.memory_space<vmem>>, vector<1x16x16x16xf32>,
    return
  }
  func.func @transform_0(%arg0: i32) -> (i32, i32, i32, i32) {
    %c0_i32 = arith.constant 0 : i32
    %c0_i32_0 = arith.constant 0 : i32
    %c0_i32_1 = arith.constant 0 : i32
    %c0_i32_2 = arith.constant 0 : i32
    return %arg0, %c0_i32, %c0_i32_0, %c0_i32_1 : i32, i32, i32, i32
  }
  func.func @transform_1(%arg0: i32) -> (i32, i32) {
    %c0_i32 = arith.constant 0 : i32
    %c0_i32_0 = arith.constant 0 : i32
    %c0_i32_1 = arith.constant 0 : i32
    return %c0_i32, %c0_i32_0 : i32, i32
  }
  func.func @transform_2(%arg0: i32) -> (i32, i32) {
    %c0_i32 = arith.constant 0 : i32
    %c0_i32_0 = arith.constant 0 : i32
    %c0_i32_1 = arith.constant 0 : i32
    return %c0_i32, %c0_i32_0 : i32, i32
  }
  func.func @transform_3(%arg0: i32) -> (i32, i32, i32) {
    %c0_i32 = arith.constant 0 : i32
    %c0_i32_0 = arith.constant 0 : i32
    %c0_i32_1 = arith.constant 0 : i32
    %c0_i32_2 = arith.constant 0 : i32
    return %c0_i32, %c0_i32_0, %c0_i32_1 : i32, i32, i32
  }
  func.func @transform_4(%arg0: i32) -> (i32, i32, i32) {
    %c0_i32 = arith.constant 0 : i32
    %c0_i32_0 = arith.constant 0 : i32
    %c0_i32_1 = arith.constant 0 : i32
    %c0_i32_2 = arith.constant 0 : i32
    return %c0_i32, %c0_i32_0, %c0_i32_1 : i32, i32, i32
  }
  func.func @transform_5(%arg0: i32) -> (i32, i32, i32, i32) {
    %c0_i32 = arith.constant 0 : i32
    %c0_i32_0 = arith.constant 0 : i32
    %c0_i32_1 = arith.constant 0 : i32
    %c0_i32_2 = arith.constant 0 : i32
    return %arg0, %c0_i32, %c0_i32_0, %c0_i32_1 : i32, i32, i32, i32
  }
}

</mosaic_0001>

<llo_original>
// kernel: neuro_lv_forward.1
$region0: #{neuro_lv_forward.1}
  #allocation0 [shape = 'u32[]', space=smem, size = 0x4, offset = 0x4, fixed_abs, tag = 'smem constant byte address 0x4 - core index']
  #allocation1 [shape = 'u32[144,128]{1,0:T(1,128)}', space=vmem, size = 0x12000, scoped, tag = 'internal scratch']
  #allocation2 [shape = 'f32[18,18,16]{2,1,0:T(8,128)}', space=vmem, size = 0x36000, scoped, tag = 'scratch operand']
  #allocation3 [shape = 'f32[18,18,16]{2,1,0:T(8,128)}', space=vmem, size = 0x36000, scoped, tag = 'scratch operand']
  %s0 = inlined_call_operand.vmem [shape: f32[2,18,18,64], index: 0, kind: input, shape index: {}]
  %s1 = inlined_call_operand.vmem [shape: bf16[576,16], index: 1, kind: input, shape index: {}]
  %s2 = inlined_call_operand.vmem [shape: f32[1,16], index: 2, kind: input, shape index: {}]
  %s3 = inlined_call_operand.vmem [shape: bf16[4,144,16], index: 3, kind: input, shape index: {}]
  %s4 = inlined_call_operand.vmem [shape: f32[4,1,16], index: 4, kind: input, shape index: {}]
  %s5 = inlined_call_operand.vmem [shape: f32[2,16,16,16], index: 5, kind: output, shape index: {}]
  %s6 = sld [smem:[#allocation0]]
  $region53: #{neuro_lv_forward.1} parent=0
    _
  %s8 = ssub.s32 1, %s6
  %s9 = scalar_select 0, %s8, %s6
  loop: start=0, step=1, limit=4
  $region2: #{neuro_lv_forward.1} parent=0 // loop_pre_header
    _
  $region3: #{neuro_lv_forward.1} parent=0 // loop_header
    %s11 = sphi 0, %s15
    %p12 = scmp.ge.s32.totalorder %s11, 4
    %s21 = sphi 0, %s23
    %s24 = sphi 0, %s21
    %s25 = sphi 0, %s24
    %s41 = sphi 0, %s25
    %s45 = sphi 0, %s45
    %s47 = sphi 0, %s45
    %s48 = sphi 0, %s47
    %s62 = sphi 0, %s48
    %s66 = sphi 0, %s66
    %s68 = sphi 0, %s66
    %s69 = sphi 0, %s68
    %s83 = sphi 0, %s69
    %s87 = sphi 0, %s87
    %s89 = sphi 0, %s87
    %s90 = sphi 0, %s89
    %s104 = sphi 0, %s90
    %s108 = sphi 0, %s108
    %s110 = sphi 0, %s108
    %s111 = sphi 0, %s110
    %s125 = sphi 0, %s111
    %s131 = sphi 0, %s133
    %s134 = sphi 0, %s131
    %s135 = sphi 0, %s134
    %s151 = sphi 0, %s135
  $region4: #{neuro_lv_forward.1} parent=0 // loop_header_branch
    %14 = sbr.rel (%p12) target = $region8
  $region5: #{neuro_lv_forward.1} parent=0 // loop_body
    %s16 = ssub.s32 %s11, 1
    %s17 = ssub.s32 %s11, 2
    %s18 = sadd.s32 %s11, 1
    %s19 = ssub.s32 %s11, %s18
    %p20 = scmp.eq.s32.totalorder %s19, 0
    %s22 = sadd.s32 %s21, 1
    %s23 = scalar_select %p20, %s21, %s22
    %p26 = pneg %p20
    %p27 = scmp.eq.s32.totalorder %s11, 1
    %p28 = por %p26, %p27
    %p29 = scmp.ne.s32.totalorder %s21, %s24
    %p30 = scmp.eq.s32.totalorder %s11, 0
    %p31 = por %p29, %p30
    %p32 = scmp.ne.s32.totalorder %s21, %s24
    %p33 = scmp.eq.s32.totalorder %s16, 1
    %p34 = por %p32, %p33
    %p35 = scmp.ne.s32.totalorder %s24, %s25
    %p36 = scmp.eq.s32.totalorder %s16, 0
    %p37 = por %p35, %p36
    %p38 = scmp.ne.s32.totalorder %s24, %s25
    %p39 = scmp.eq.s32.totalorder %s17, 1
    %p40 = por %p38, %p39
    %p42 = scmp.ne.s32.totalorder %s25, %s41
    %p43 = scmp.eq.s32.totalorder %s17, 0
    %p44 = por %p42, %p43
    %s46 = sadd.s32 %s45, 1
    %p49 = scmp.eq.s32.totalorder %s11, 1
    %p50 = scmp.ne.s32.totalorder %s45, %s47
    %p51 = scmp.eq.s32.totalorder %s11, 0
    %p52 = por %p50, %p51
    %p53 = scmp.ne.s32.totalorder %s45, %s47
    %p54 = scmp.eq.s32.totalorder %s16, 1
    %p55 = por %p53, %p54
    %p56 = scmp.ne.s32.totalorder %s47, %s48
    %p57 = scmp.eq.s32.totalorder %s16, 0
    %p58 = por %p56, %p57
    %p59 = scmp.ne.s32.totalorder %s47, %s48
    %p60 = scmp.eq.s32.totalorder %s17, 1
    %p61 = por %p59, %p60
    %p63 = scmp.ne.s32.totalorder %s48, %s62
    %p64 = scmp.eq.s32.totalorder %s17, 0
    %p65 = por %p63, %p64
    %s67 = sadd.s32 %s66, 1
    %p70 = scmp.eq.s32.totalorder %s11, 1
    %p71 = scmp.ne.s32.totalorder %s66, %s68
    %p72 = scmp.eq.s32.totalorder %s11, 0
    %p73 = por %p71, %p72
    %p74 = scmp.ne.s32.totalorder %s66, %s68
    %p75 = scmp.eq.s32.totalorder %s16, 1
    %p76 = por %p74, %p75
    %p77 = scmp.ne.s32.totalorder %s68, %s69
    %p78 = scmp.eq.s32.totalorder %s16, 0
    %p79 = por %p77, %p78
    %p80 = scmp.ne.s32.totalorder %s68, %s69
    %p81 = scmp.eq.s32.totalorder %s17, 1
    %p82 = por %p80, %p81
    %p84 = scmp.ne.s32.totalorder %s69, %s83
    %p85 = scmp.eq.s32.totalorder %s17, 0
    %p86 = por %p84, %p85
    %s88 = sadd.s32 %s87, 1
    %p91 = scmp.eq.s32.totalorder %s11, 1
    %p92 = scmp.ne.s32.totalorder %s87, %s89
    %p93 = scmp.eq.s32.totalorder %s11, 0
    %p94 = por %p92, %p93
    %p95 = scmp.ne.s32.totalorder %s87, %s89
    %p96 = scmp.eq.s32.totalorder %s16, 1
    %p97 = por %p95, %p96
    %p98 = scmp.ne.s32.totalorder %s89, %s90
    %p99 = scmp.eq.s32.totalorder %s16, 0
    %p100 = por %p98, %p99
    %p101 = scmp.ne.s32.totalorder %s89, %s90
    %p102 = scmp.eq.s32.totalorder %s17, 1
    %p103 = por %p101, %p102
    %p105 = scmp.ne.s32.totalorder %s90, %s104
    %p106 = scmp.eq.s32.totalorder %s17, 0
    %p107 = por %p105, %p106
    %s109 = sadd.s32 %s108, 1
    %p112 = scmp.eq.s32.totalorder %s11, 1
    %p113 = scmp.ne.s32.totalorder %s108, %s110
    %p114 = scmp.eq.s32.totalorder %s11, 0
    %p115 = por %p113, %p114
    %p116 = scmp.ne.s32.totalorder %s108, %s110
    %p117 = scmp.eq.s32.totalorder %s16, 1
    %p118 = por %p116, %p117
    %p119 = scmp.ne.s32.totalorder %s110, %s111
    %p120 = scmp.eq.s32.totalorder %s16, 0
    %p121 = por %p119, %p120
    %p122 = scmp.ne.s32.totalorder %s110, %s111
    %p123 = scmp.eq.s32.totalorder %s17, 1
    %p124 = por %p122, %p123
    %p126 = scmp.ne.s32.totalorder %s111, %s125
    %p127 = scmp.eq.s32.totalorder %s17, 0
    %p128 = por %p126, %p127
    %s129 = ssub.s32 %s11, %s18
    %p130 = scmp.eq.s32.totalorder %s129, 0
    %s132 = sadd.s32 %s131, 1
    %s133 = scalar_select %p130, %s131, %s132
    %p136 = pneg %p130
    %p137 = scmp.eq.s32.totalorder %s11, 1
    %p138 = por %p136, %p137
    %p139 = scmp.ne.s32.totalorder %s131, %s134
    %p140 = scmp.eq.s32.totalorder %s11, 0
    %p141 = por %p139, %p140
    %p142 = scmp.ne.s32.totalorder %s131, %s134
    %p143 = scmp.eq.s32.totalorder %s16, 1
    %p144 = por %p142, %p143
    %p145 = scmp.ne.s32.totalorder %s134, %s135
    %p146 = scmp.eq.s32.totalorder %s16, 0
    %p147 = por %p145, %p146
    %p148 = scmp.ne.s32.totalorder %s134, %s135
    %p149 = scmp.eq.s32.totalorder %s17, 1
    %p150 = por %p148, %p149
    %p152 = scmp.ne.s32.totalorder %s135, %s151
    %p153 = scmp.eq.s32.totalorder %s17, 0
    %p154 = por %p152, %p153
    %p155 = scmp.le.s32.totalorder 1, %s11
    %p156 = scmp.lt.s32.totalorder %s11, 3
    %p157 = pnand %p155, %p156
    %p158 = pneg %p157
    // Predicated region
    $region9: #{neuro_lv_forward.1} parent=5 // pred_check
      _
    $region10: #{neuro_lv_forward.1} parent=5 // pred_check_branch
      %160 = sbr.rel (%p157) target = $region12
    $region11: #{neuro_lv_forward.1} parent=5 // pred_region
      %s161 = ssub.s32 %s11, 1
      // Predicated region
      $region13: #{neuro_lv_forward.1} parent=11 // pred_check
        %p162 = pneg %p58
      $region14: #{neuro_lv_forward.1} parent=11 // pred_check_branch
        %164 = sbr.rel (%p162) target = $region16
      $region15: #{neuro_lv_forward.1} parent=11 // pred_region
        _
      $region16: #{neuro_lv_forward.1} parent=11 // pred_fallthru
        _
      // Predicated region
      $region17: #{neuro_lv_forward.1} parent=11 // pred_check
        %p165 = pneg %p79
      $region18: #{neuro_lv_forward.1} parent=11 // pred_check_branch
        %167 = sbr.rel (%p165) target = $region20
      $region19: #{neuro_lv_forward.1} parent=11 // pred_region
        _
      $region20: #{neuro_lv_forward.1} parent=11 // pred_fallthru
        _
      // Predicated region
      $region21: #{neuro_lv_forward.1} parent=11 // pred_check
        %p168 = pneg %p100
      $region22: #{neuro_lv_forward.1} parent=11 // pred_check_branch
        %170 = sbr.rel (%p168) target = $region24
      $region23: #{neuro_lv_forward.1} parent=11 // pred_region
        _
      $region24: #{neuro_lv_forward.1} parent=11 // pred_fallthru
        _
      // Predicated region
      $region25: #{neuro_lv_forward.1} parent=11 // pred_check
        %p171 = pneg %p121
      $region26: #{neuro_lv_forward.1} parent=11 // pred_check_branch
        %173 = sbr.rel (%p171) target = $region28
      $region27: #{neuro_lv_forward.1} parent=11 // pred_region
        _
      $region28: #{neuro_lv_forward.1} parent=11 // pred_fallthru
        _
    $region12: #{neuro_lv_forward.1} parent=5 // pred_fallthru
      _
    %p174 = scmp.lt.s32.totalorder %s11, 2
    // Predicated region
    $region29: #{neuro_lv_forward.1} parent=5 // pred_check
      %p175 = pneg %p174
    $region30: #{neuro_lv_forward.1} parent=5 // pred_check_branch
      %177 = sbr.rel (%p175) target = $region32
    $region31: #{neuro_lv_forward.1} parent=5 // pred_region
      // Predicated region
      $region33: #{neuro_lv_forward.1} parent=31 // pred_check
        %p178 = pneg %p31
      $region34: #{neuro_lv_forward.1} parent=31 // pred_check_branch
        %180 = sbr.rel (%p178) target = $region36
      $region35: #{neuro_lv_forward.1} parent=31 // pred_region
        %p181 = scmp.lt.s32.totalorder %s11, 1
        %s182 = scalar_select %p181, %s11, 1
        %s183 = smul.addr %s182, 54
        %s184 = smul.addr %s183, 8
        %s185 = scalar_lea.vmem %s0, %s184
      $region36: #{neuro_lv_forward.1} parent=31 // pred_fallthru
        _
    $region32: #{neuro_lv_forward.1} parent=5 // pred_fallthru
      _
    %p186 = scmp.le.s32.totalorder 1, %s11
    %p187 = scmp.lt.s32.totalorder %s11, 3
    %p188 = pnand %p186, %p187
    %p189 = pneg %p188
    // Predicated region
    $region37: #{neuro_lv_forward.1} parent=5 // pred_check
      _
    $region38: #{neuro_lv_forward.1} parent=5 // pred_check_branch
      %191 = sbr.rel (%p188) target = $region40
    $region39: #{neuro_lv_forward.1} parent=5 // pred_region
      %s192 = ssub.s32 %s11, 1
      %p193 = scmp.lt.s32.totalorder %s16, 1
      %s194 = scalar_select %p193, %s16, 1
      %s195 = smul.addr %s194, 54
      %s196 = smul.addr %s195, 8
      %s197 = scalar_lea.vmem %s0, %s196
      %p198 = pneg %p37
      %p199 = pneg %p34
      %p200 = pneg %p58
      %p201 = pneg %p55
      %p202 = pneg %p79
      %p203 = pneg %p76
      %p204 = pneg %p100
      %p205 = pneg %p97
      %p206 = pneg %p121
      %p207 = pneg %p118
      %p208 = pneg %p147
      %p209 = pneg %p144
      %p210 = scmp.lt.s32.totalorder %s16, 1
      %s211 = scalar_select %p210, %s16, 1
      %s212 = smul.addr %s211, 32
      %s213 = smul.addr %s212, 8
      %s214 = scalar_lea.vmem %s5, %s213
      %p215 = scmp.lt.s32.totalorder %s16, 1
      %s216 = scalar_select %p215, %s16, 1
      %s217 = smul.addr %s216, 54
      %s218 = smul.addr %s217, 8
      %s219 = scalar_lea.vmem %s0, %s218
      %p220 = scmp.lt.s32.totalorder %s16, 1
      %s221 = scalar_select %p220, %s16, 1
      %s222 = smul.addr %s221, 32
      %s223 = smul.addr %s222, 8
      %s224 = scalar_lea.vmem %s5, %s223
      %vm226 = vcmask 130048
      %227 = vst.msk [vmem:[#allocation2] sm:$0xff] %vm226, 0.0
      %228 = vst.msk [vmem:[#allocation2 + $0x8] sm:$0xff] %vm226, 0.0
      %vm229 = vcmask 123904
      %230 = vst.msk [vmem:[#allocation2 + $0x10] sm:$0x3] %vm229, 0.0
      %s231 = scalar_lea.vmem [#allocation2], 408
      %232 = vst.msk [vmem:[%s231] sm:$0xff] %vm226, 0.0
      %233 = vst.msk [vmem:[%s231 + $0x8] sm:$0xff] %vm226, 0.0
      %234 = vst.msk [vmem:[%s231 + $0x10] sm:$0x3] %vm229, 0.0
      %vm235 = vcmask 122880
      %236 = vst.msk [vmem:[#allocation2] sm:$0x1] %vm235, 0.0
      %237 = vst.msk [vmem:[#allocation2 + $0x18] sm:$0x1] %vm235, 0.0
      %238 = vst.msk [vmem:[#allocation2 + $0x30] sm:$0x1] %vm235, 0.0
      %239 = vst.msk [vmem:[#allocation2 + $0x48] sm:$0x1] %vm235, 0.0
      %240 = vst.msk [vmem:[#allocation2 + $0x60] sm:$0x1] %vm235, 0.0
      %241 = vst.msk [vmem:[#allocation2 + $0x78] sm:$0x1] %vm235, 0.0
      %242 = vst.msk [vmem:[#allocation2 + $0x90] sm:$0x1] %vm235, 0.0
      %243 = vst.msk [vmem:[#allocation2 + $0xa8] sm:$0x1] %vm235, 0.0
      %244 = vst.msk [vmem:[#allocation2 + $0xc0] sm:$0x1] %vm235, 0.0
      %245 = vst.msk [vmem:[#allocation2 + $0xd8] sm:$0x1] %vm235, 0.0
      %246 = vst.msk [vmem:[#allocation2 + $0xf0] sm:$0x1] %vm235, 0.0
      %247 = vst.msk [vmem:[#allocation2 + $0x108] sm:$0x1] %vm235, 0.0
      %248 = vst.msk [vmem:[#allocation2 + $0x120] sm:$0x1] %vm235, 0.0
      %249 = vst.msk [vmem:[#allocation2 + $0x138] sm:$0x1] %vm235, 0.0
      %250 = vst.msk [vmem:[#allocation2 + $0x150] sm:$0x1] %vm235, 0.0
      %251 = vst.msk [vmem:[#allocation2 + $0x168] sm:$0x1] %vm235, 0.0
      %252 = vst.msk [vmem:[#allocation2 + $0x180] sm:$0x1] %vm235, 0.0
      %253 = vst.msk [vmem:[#allocation2 + $0x198] sm:$0x1] %vm235, 0.0
      %254 = vst.msk [vmem:[#allocation2 + $0x11] sm:$0x1] %vm235, 0.0
      %255 = vst.msk [vmem:[#allocation2 + $0x29] sm:$0x1] %vm235, 0.0
      %256 = vst.msk [vmem:[#allocation2 + $0x41] sm:$0x1] %vm235, 0.0
      %257 = vst.msk [vmem:[#allocation2 + $0x59] sm:$0x1] %vm235, 0.0
      %258 = vst.msk [vmem:[#allocation2 + $0x71] sm:$0x1] %vm235, 0.0
      %259 = vst.msk [vmem:[#allocation2 + $0x89] sm:$0x1] %vm235, 0.0
      %260 = vst.msk [vmem:[#allocation2 + $0xa1] sm:$0x1] %vm235, 0.0
      %261 = vst.msk [vmem:[#allocation2 + $0xb9] sm:$0x1] %vm235, 0.0
      %262 = vst.msk [vmem:[#allocation2 + $0xd1] sm:$0x1] %vm235, 0.0
      %263 = vst.msk [vmem:[#allocation2 + $0xe9] sm:$0x1] %vm235, 0.0
      %264 = vst.msk [vmem:[#allocation2 + $0x101] sm:$0x1] %vm235, 0.0
      %265 = vst.msk [vmem:[#allocation2 + $0x119] sm:$0x1] %vm235, 0.0
      %266 = vst.msk [vmem:[#allocation2 + $0x131] sm:$0x1] %vm235, 0.0
      %267 = vst.msk [vmem:[#allocation2 + $0x149] sm:$0x1] %vm235, 0.0
      %268 = vst.msk [vmem:[#allocation2 + $0x161] sm:$0x1] %vm235, 0.0
      %269 = vst.msk [vmem:[#allocation2 + $0x179] sm:$0x1] %vm235, 0.0
      %270 = vst.msk [vmem:[#allocation2 + $0x191] sm:$0x1] %vm235, 0.0
      %271 = vst.msk [vmem:[#allocation2 + $0x1a9] sm:$0x1] %vm235, 0.0
      %272 = vst.msk [vmem:[#allocation3] sm:$0xff] %vm226, 0.0
      %273 = vst.msk [vmem:[#allocation3 + $0x8] sm:$0xff] %vm226, 0.0
      %274 = vst.msk [vmem:[#allocation3 + $0x10] sm:$0x3] %vm229, 0.0
      %s275 = scalar_lea.vmem [#allocation3], 408
      %276 = vst.msk [vmem:[%s275] sm:$0xff] %vm226, 0.0
      %277 = vst.msk [vmem:[%s275 + $0x8] sm:$0xff] %vm226, 0.0
      %278 = vst.msk [vmem:[%s275 + $0x10] sm:$0x3] %vm229, 0.0
      %279 = vst.msk [vmem:[#allocation3] sm:$0x1] %vm235, 0.0
      %280 = vst.msk [vmem:[#allocation3 + $0x18] sm:$0x1] %vm235, 0.0
      %281 = vst.msk [vmem:[#allocation3 + $0x30] sm:$0x1] %vm235, 0.0
      %282 = vst.msk [vmem:[#allocation3 + $0x48] sm:$0x1] %vm235, 0.0
      %283 = vst.msk [vmem:[#allocation3 + $0x60] sm:$0x1] %vm235, 0.0
      %284 = vst.msk [vmem:[#allocation3 + $0x78] sm:$0x1] %vm235, 0.0
      %285 = vst.msk [vmem:[#allocation3 + $0x90] sm:$0x1] %vm235, 0.0
      %286 = vst.msk [vmem:[#allocation3 + $0xa8] sm:$0x1] %vm235, 0.0
      %287 = vst.msk [vmem:[#allocation3 + $0xc0] sm:$0x1] %vm235, 0.0
      %288 = vst.msk [vmem:[#allocation3 + $0xd8] sm:$0x1] %vm235, 0.0
      %289 = vst.msk [vmem:[#allocation3 + $0xf0] sm:$0x1] %vm235, 0.0
      %290 = vst.msk [vmem:[#allocation3 + $0x108] sm:$0x1] %vm235, 0.0
      %291 = vst.msk [vmem:[#allocation3 + $0x120] sm:$0x1] %vm235, 0.0
      %292 = vst.msk [vmem:[#allocation3 + $0x138] sm:$0x1] %vm235, 0.0
      %293 = vst.msk [vmem:[#allocation3 + $0x150] sm:$0x1] %vm235, 0.0
      %294 = vst.msk [vmem:[#allocation3 + $0x168] sm:$0x1] %vm235, 0.0
      %295 = vst.msk [vmem:[#allocation3 + $0x180] sm:$0x1] %vm235, 0.0
      %296 = vst.msk [vmem:[#allocation3 + $0x198] sm:$0x1] %vm235, 0.0
      %297 = vst.msk [vmem:[#allocation3 + $0x11] sm:$0x1] %vm235, 0.0
      %298 = vst.msk [vmem:[#allocation3 + $0x29] sm:$0x1] %vm235, 0.0
      %299 = vst.msk [vmem:[#allocation3 + $0x41] sm:$0x1] %vm235, 0.0
      %300 = vst.msk [vmem:[#allocation3 + $0x59] sm:$0x1] %vm235, 0.0
      %301 = vst.msk [vmem:[#allocation3 + $0x71] sm:$0x1] %vm235, 0.0
      %302 = vst.msk [vmem:[#allocation3 + $0x89] sm:$0x1] %vm235, 0.0
      %303 = vst.msk [vmem:[#allocation3 + $0xa1] sm:$0x1] %vm235, 0.0
      %304 = vst.msk [vmem:[#allocation3 + $0xb9] sm:$0x1] %vm235, 0.0
      %305 = vst.msk [vmem:[#allocation3 + $0xd1] sm:$0x1] %vm235, 0.0
      %306 = vst.msk [vmem:[#allocation3 + $0xe9] sm:$0x1] %vm235, 0.0
      %307 = vst.msk [vmem:[#allocation3 + $0x101] sm:$0x1] %vm235, 0.0
      %308 = vst.msk [vmem:[#allocation3 + $0x119] sm:$0x1] %vm235, 0.0
      %309 = vst.msk [vmem:[#allocation3 + $0x131] sm:$0x1] %vm235, 0.0
      %310 = vst.msk [vmem:[#allocation3 + $0x149] sm:$0x1] %vm235, 0.0
      %311 = vst.msk [vmem:[#allocation3 + $0x161] sm:$0x1] %vm235, 0.0
      %312 = vst.msk [vmem:[#allocation3 + $0x179] sm:$0x1] %vm235, 0.0
      %313 = vst.msk [vmem:[#allocation3 + $0x191] sm:$0x1] %vm235, 0.0
      %314 = vst.msk [vmem:[#allocation3 + $0x1a9] sm:$0x1] %vm235, 0.0
      %v315 = vld [vmem:[%s1] sm:$0xf]
      %v316 = vld [vmem:[%s1 + $0x4] sm:$0xf]
      %v317 = vld [vmem:[%s1 + $0x8] sm:$0xf]
      %v318 = vld [vmem:[%s1 + $0xc] sm:$0xf]
      %v319 = vld [vmem:[%s1 + $0x10] sm:$0xf]
      %v320 = vld [vmem:[%s1 + $0x14] sm:$0xf]
      %v321 = vld [vmem:[%s1 + $0x18] sm:$0xf]
      %v322 = vld [vmem:[%s1 + $0x1c] sm:$0xf]
      %v323 = vld [vmem:[%s1 + $0x20] sm:$0xf]
      %v324 = vld [vmem:[%s1 + $0x24] sm:$0xf]
      %v325 = vld [vmem:[%s1 + $0x28] sm:$0xf]
      %v326 = vld [vmem:[%s1 + $0x2c] sm:$0xf]
      %v327 = vld [vmem:[%s1 + $0x30] sm:$0xf]
      %v328 = vld [vmem:[%s1 + $0x34] sm:$0xf]
      %v329 = vld [vmem:[%s1 + $0x38] sm:$0xf]
      %v330 = vld [vmem:[%s1 + $0x3c] sm:$0xf]
      %v331 = vld [vmem:[%s1 + $0x40] sm:$0xf]
      %v332 = vld [vmem:[%s1 + $0x44] sm:$0xf]
      %v333 = vld [vmem:[%s1 + $0x48] sm:$0xf]
      %v334 = vld [vmem:[%s1 + $0x4c] sm:$0xf]
      %v335 = vld [vmem:[%s1 + $0x50] sm:$0xf]
      %v336 = vld [vmem:[%s1 + $0x54] sm:$0xf]
      %v337 = vld [vmem:[%s1 + $0x58] sm:$0xf]
      %v338 = vld [vmem:[%s1 + $0x5c] sm:$0xf]
      %v339 = vld [vmem:[%s1 + $0x60] sm:$0xf]
      %v340 = vld [vmem:[%s1 + $0x64] sm:$0xf]
      %v341 = vld [vmem:[%s1 + $0x68] sm:$0xf]
      %v342 = vld [vmem:[%s1 + $0x6c] sm:$0xf]
      %v343 = vld [vmem:[%s1 + $0x70] sm:$0xf]
      %v344 = vld [vmem:[%s1 + $0x74] sm:$0xf]
      %v345 = vld [vmem:[%s1 + $0x78] sm:$0xf]
      %v346 = vld [vmem:[%s1 + $0x7c] sm:$0xf]
      %v347 = vld [vmem:[%s1 + $0x80] sm:$0xf]
      %v348 = vld [vmem:[%s1 + $0x84] sm:$0xf]
      %v349 = vld [vmem:[%s1 + $0x88] sm:$0xf]
      %v350 = vld [vmem:[%s1 + $0x8c] sm:$0xf]
      %v351 = vld [vmem:[%s1 + $0x90] sm:$0xf]
      %v352 = vld [vmem:[%s1 + $0x94] sm:$0xf]
      %v353 = vld [vmem:[%s1 + $0x98] sm:$0xf]
      %v354 = vld [vmem:[%s1 + $0x9c] sm:$0xf]
      %v355 = vld [vmem:[%s1 + $0xa0] sm:$0xf]
      %v356 = vld [vmem:[%s1 + $0xa4] sm:$0xf]
      %v357 = vld [vmem:[%s1 + $0xa8] sm:$0xf]
      %v358 = vld [vmem:[%s1 + $0xac] sm:$0xf]
      %v359 = vld [vmem:[%s1 + $0xb0] sm:$0xf]
      %v360 = vld [vmem:[%s1 + $0xb4] sm:$0xf]
      %v361 = vld [vmem:[%s1 + $0xb8] sm:$0xf]
      %v362 = vld [vmem:[%s1 + $0xbc] sm:$0xf]
      %v363 = vld [vmem:[%s1 + $0xc0] sm:$0xf]
      %v364 = vld [vmem:[%s1 + $0xc4] sm:$0xf]
      %v365 = vld [vmem:[%s1 + $0xc8] sm:$0xf]
      %v366 = vld [vmem:[%s1 + $0xcc] sm:$0xf]
      %v367 = vld [vmem:[%s1 + $0xd0] sm:$0xf]
      %v368 = vld [vmem:[%s1 + $0xd4] sm:$0xf]
      %v369 = vld [vmem:[%s1 + $0xd8] sm:$0xf]
      %v370 = vld [vmem:[%s1 + $0xdc] sm:$0xf]
      %v371 = vld [vmem:[%s1 + $0xe0] sm:$0xf]
      %v372 = vld [vmem:[%s1 + $0xe4] sm:$0xf]
      %v373 = vld [vmem:[%s1 + $0xe8] sm:$0xf]
      %v374 = vld [vmem:[%s1 + $0xec] sm:$0xf]
      %v375 = vld [vmem:[%s1 + $0xf0] sm:$0xf]
      %v376 = vld [vmem:[%s1 + $0xf4] sm:$0xf]
      %v377 = vld [vmem:[%s1 + $0xf8] sm:$0xf]
      %v378 = vld [vmem:[%s1 + $0xfc] sm:$0xf]
      %v379 = vld [vmem:[%s1 + $0x100] sm:$0xf]
      %v380 = vld [vmem:[%s1 + $0x104] sm:$0xf]
      %v381 = vld [vmem:[%s1 + $0x108] sm:$0xf]
      %v382 = vld [vmem:[%s1 + $0x10c] sm:$0xf]
      %v383 = vld [vmem:[%s1 + $0x110] sm:$0xf]
      %v384 = vld [vmem:[%s1 + $0x114] sm:$0xf]
      %v385 = vld [vmem:[%s1 + $0x118] sm:$0xf]
      %v386 = vld [vmem:[%s1 + $0x11c] sm:$0xf]
      %v387 = vld [vmem:[%s2] sm:$0x1]
      %v388 = vld [vmem:[%s219] sm:$0xff]
      %v389 = vld [vmem:[%s219 + $0x8] sm:$0xff]
      %v390 = vld [vmem:[%s219 + $0x18] sm:$0xff]
      %v391 = vld [vmem:[%s219 + $0x20] sm:$0xff]
      %v392 = vld [vmem:[%s219 + $0x30] sm:$0xff]
      %v393 = vld [vmem:[%s219 + $0x38] sm:$0xff]
      %v394 = vld [vmem:[%s219 + $0x48] sm:$0xff]
      %v395 = vld [vmem:[%s219 + $0x50] sm:$0xff]
      %v396 = vld [vmem:[%s219 + $0x60] sm:$0xff]
      %v397 = vld [vmem:[%s219 + $0x68] sm:$0xff]
      %v398 = vld [vmem:[%s219 + $0x78] sm:$0xff]
      %v399 = vld [vmem:[%s219 + $0x80] sm:$0xff]
      %v400 = vld [vmem:[%s219 + $0x90] sm:$0xff]
      %v401 = vld [vmem:[%s219 + $0x98] sm:$0xff]
      %v402 = vld [vmem:[%s219 + $0xa8] sm:$0xff]
      %v403 = vld [vmem:[%s219 + $0xb0] sm:$0xff]
      %v404 = vld [vmem:[%s219 + $0xc0] sm:$0xff]
      %v405 = vld [vmem:[%s219 + $0xc8] sm:$0xff]
      %v406 = vld [vmem:[%s219 + $0xd8] sm:$0xff]
      %v407 = vld [vmem:[%s219 + $0xe0] sm:$0xff]
      %v408 = vld [vmem:[%s219 + $0xf0] sm:$0xff]
      %v409 = vld [vmem:[%s219 + $0xf8] sm:$0xff]
      %v410 = vld [vmem:[%s219 + $0x108] sm:$0xff]
      %v411 = vld [vmem:[%s219 + $0x110] sm:$0xff]
      %v412 = vld [vmem:[%s219 + $0x120] sm:$0xff]
      %v413 = vld [vmem:[%s219 + $0x128] sm:$0xff]
      %v414 = vld [vmem:[%s219 + $0x138] sm:$0xff]
      %v415 = vld [vmem:[%s219 + $0x140] sm:$0xff]
      %v416 = vld [vmem:[%s219 + $0x150] sm:$0xff]
      %v417 = vld [vmem:[%s219 + $0x158] sm:$0xff]
      %v418 = vld [vmem:[%s219 + $0x168] sm:$0xff]
      %v419 = vld [vmem:[%s219 + $0x170] sm:$0xff]
      %v420 = vpack.c.bf16 %v389, %v388
      %v421 = vpack.c.bf16 %v391, %v390
      %v422 = vpack.c.bf16 %v393, %v392
      %v423 = vpack.c.bf16 %v395, %v394
      %v424 = vpack.c.bf16 %v397, %v396
      %v425 = vpack.c.bf16 %v399, %v398
      %v426 = vpack.c.bf16 %v401, %v400
      %v427 = vpack.c.bf16 %v403, %v402
      %v428 = vpack.c.bf16 %v405, %v404
      %v429 = vpack.c.bf16 %v407, %v406
      %v430 = vpack.c.bf16 %v409, %v408
      %v431 = vpack.c.bf16 %v411, %v410
      %v432 = vpack.c.bf16 %v413, %v412
      %v433 = vpack.c.bf16 %v415, %v414
      %v434 = vpack.c.bf16 %v417, %v416
      %v435 = vpack.c.bf16 %v419, %v418
      %v436 = vld [vmem:[%s219 + $0x1] sm:$0xff]
      %v437 = vld [vmem:[%s219 + $0x9] sm:$0xff]
      %v438 = vld [vmem:[%s219 + $0x19] sm:$0xff]
      %v439 = vld [vmem:[%s219 + $0x21] sm:$0xff]
      %v440 = vld [vmem:[%s219 + $0x31] sm:$0xff]
      %v441 = vld [vmem:[%s219 + $0x39] sm:$0xff]
      %v442 = vld [vmem:[%s219 + $0x49] sm:$0xff]
      %v443 = vld [vmem:[%s219 + $0x51] sm:$0xff]
      %v444 = vld [vmem:[%s219 + $0x61] sm:$0xff]
      %v445 = vld [vmem:[%s219 + $0x69] sm:$0xff]
      %v446 = vld [vmem:[%s219 + $0x79] sm:$0xff]
      %v447 = vld [vmem:[%s219 + $0x81] sm:$0xff]
      %v448 = vld [vmem:[%s219 + $0x91] sm:$0xff]
      %v449 = vld [vmem:[%s219 + $0x99] sm:$0xff]
      %v450 = vld [vmem:[%s219 + $0xa9] sm:$0xff]
      %v451 = vld [vmem:[%s219 + $0xb1] sm:$0xff]
      %v452 = vld [vmem:[%s219 + $0xc1] sm:$0xff]
      %v453 = vld [vmem:[%s219 + $0xc9] sm:$0xff]
      %v454 = vld [vmem:[%s219 + $0xd9] sm:$0xff]
      %v455 = vld [vmem:[%s219 + $0xe1] sm:$0xff]
      %v456 = vld [vmem:[%s219 + $0xf1] sm:$0xff]
      %v457 = vld [vmem:[%s219 + $0xf9] sm:$0xff]
      %v458 = vld [vmem:[%s219 + $0x109] sm:$0xff]
      %v459 = vld [vmem:[%s219 + $0x111] sm:$0xff]
      %v460 = vld [vmem:[%s219 + $0x121] sm:$0xff]
      %v461 = vld [vmem:[%s219 + $0x129] sm:$0xff]
      %v462 = vld [vmem:[%s219 + $0x139] sm:$0xff]
      %v463 = vld [vmem:[%s219 + $0x141] sm:$0xff]
      %v464 = vld [vmem:[%s219 + $0x151] sm:$0xff]
      %v465 = vld [vmem:[%s219 + $0x159] sm:$0xff]
      %v466 = vld [vmem:[%s219 + $0x169] sm:$0xff]
      %v467 = vld [vmem:[%s219 + $0x171] sm:$0xff]
      %v468 = vpack.c.bf16 %v437, %v436
      %v469 = vpack.c.bf16 %v439, %v438
      %v470 = vpack.c.bf16 %v441, %v440
      %v471 = vpack.c.bf16 %v443, %v442
      %v472 = vpack.c.bf16 %v445, %v444
      %v473 = vpack.c.bf16 %v447, %v446
      %v474 = vpack.c.bf16 %v449, %v448
      %v475 = vpack.c.bf16 %v451, %v450
      %v476 = vpack.c.bf16 %v453, %v452
      %v477 = vpack.c.bf16 %v455, %v454
      %v478 = vpack.c.bf16 %v457, %v456
      %v479 = vpack.c.bf16 %v459, %v458
      %v480 = vpack.c.bf16 %v461, %v460
      %v481 = vpack.c.bf16 %v463, %v462
      %v482 = vpack.c.bf16 %v465, %v464
      %v483 = vpack.c.bf16 %v467, %v466
      %v484 = vld [vmem:[%s219 + $0x2] sm:$0xff]
      %v485 = vld [vmem:[%s219 + $0xa] sm:$0xff]
      %v486 = vld [vmem:[%s219 + $0x1a] sm:$0xff]
      %v487 = vld [vmem:[%s219 + $0x22] sm:$0xff]
      %v488 = vld [vmem:[%s219 + $0x32] sm:$0xff]
      %v489 = vld [vmem:[%s219 + $0x3a] sm:$0xff]
      %v490 = vld [vmem:[%s219 + $0x4a] sm:$0xff]
      %v491 = vld [vmem:[%s219 + $0x52] sm:$0xff]
      %v492 = vld [vmem:[%s219 + $0x62] sm:$0xff]
      %v493 = vld [vmem:[%s219 + $0x6a] sm:$0xff]
      %v494 = vld [vmem:[%s219 + $0x7a] sm:$0xff]
      %v495 = vld [vmem:[%s219 + $0x82] sm:$0xff]
      %v496 = vld [vmem:[%s219 + $0x92] sm:$0xff]
      %v497 = vld [vmem:[%s219 + $0x9a] sm:$0xff]
      %v498 = vld [vmem:[%s219 + $0xaa] sm:$0xff]
      %v499 = vld [vmem:[%s219 + $0xb2] sm:$0xff]
      %v500 = vld [vmem:[%s219 + $0xc2] sm:$0xff]
      %v501 = vld [vmem:[%s219 + $0xca] sm:$0xff]
      %v502 = vld [vmem:[%s219 + $0xda] sm:$0xff]
      %v503 = vld [vmem:[%s219 + $0xe2] sm:$0xff]
      %v504 = vld [vmem:[%s219 + $0xf2] sm:$0xff]
      %v505 = vld [vmem:[%s219 + $0xfa] sm:$0xff]
      %v506 = vld [vmem:[%s219 + $0x10a] sm:$0xff]
      %v507 = vld [vmem:[%s219 + $0x112] sm:$0xff]
      %v508 = vld [vmem:[%s219 + $0x122] sm:$0xff]
      %v509 = vld [vmem:[%s219 + $0x12a] sm:$0xff]
      %v510 = vld [vmem:[%s219 + $0x13a] sm:$0xff]
      %v511 = vld [vmem:[%s219 + $0x142] sm:$0xff]
      %v512 = vld [vmem:[%s219 + $0x152] sm:$0xff]
      %v513 = vld [vmem:[%s219 + $0x15a] sm:$0xff]
      %v514 = vld [vmem:[%s219 + $0x16a] sm:$0xff]
      %v515 = vld [vmem:[%s219 + $0x172] sm:$0xff]
      %v516 = vpack.c.bf16 %v485, %v484
      %v517 = vpack.c.bf16 %v487, %v486
      %v518 = vpack.c.bf16 %v489, %v488
      %v519 = vpack.c.bf16 %v491, %v490
      %v520 = vpack.c.bf16 %v493, %v492
      %v521 = vpack.c.bf16 %v495, %v494
      %v522 = vpack.c.bf16 %v497, %v496
      %v523 = vpack.c.bf16 %v499, %v498
      %v524 = vpack.c.bf16 %v501, %v500
      %v525 = vpack.c.bf16 %v503, %v502
      %v526 = vpack.c.bf16 %v505, %v504
      %v527 = vpack.c.bf16 %v507, %v506
      %v528 = vpack.c.bf16 %v509, %v508
      %v529 = vpack.c.bf16 %v511, %v510
      %v530 = vpack.c.bf16 %v513, %v512
      %v531 = vpack.c.bf16 %v515, %v514
      %s532 = scalar_lea.vmem %s219, 24
      %v533 = vld [vmem:[%s532] sm:$0xff]
      %v534 = vld [vmem:[%s532 + $0x8] sm:$0xff]
      %v535 = vld [vmem:[%s532 + $0x18] sm:$0xff]
      %v536 = vld [vmem:[%s532 + $0x20] sm:$0xff]
      %v537 = vld [vmem:[%s532 + $0x30] sm:$0xff]
      %v538 = vld [vmem:[%s532 + $0x38] sm:$0xff]
      %v539 = vld [vmem:[%s532 + $0x48] sm:$0xff]
      %v540 = vld [vmem:[%s532 + $0x50] sm:$0xff]
      %v541 = vld [vmem:[%s532 + $0x60] sm:$0xff]
      %v542 = vld [vmem:[%s532 + $0x68] sm:$0xff]
      %v543 = vld [vmem:[%s532 + $0x78] sm:$0xff]
      %v544 = vld [vmem:[%s532 + $0x80] sm:$0xff]
      %v545 = vld [vmem:[%s532 + $0x90] sm:$0xff]
      %v546 = vld [vmem:[%s532 + $0x98] sm:$0xff]
      %v547 = vld [vmem:[%s532 + $0xa8] sm:$0xff]
      %v548 = vld [vmem:[%s532 + $0xb0] sm:$0xff]
      %v549 = vld [vmem:[%s532 + $0xc0] sm:$0xff]
      %v550 = vld [vmem:[%s532 + $0xc8] sm:$0xff]
      %v551 = vld [vmem:[%s532 + $0xd8] sm:$0xff]
      %v552 = vld [vmem:[%s532 + $0xe0] sm:$0xff]
      %v553 = vld [vmem:[%s532 + $0xf0] sm:$0xff]
      %v554 = vld [vmem:[%s532 + $0xf8] sm:$0xff]
      %v555 = vld [vmem:[%s532 + $0x108] sm:$0xff]
      %v556 = vld [vmem:[%s532 + $0x110] sm:$0xff]
      %v557 = vld [vmem:[%s532 + $0x120] sm:$0xff]
      %v558 = vld [vmem:[%s532 + $0x128] sm:$0xff]
      %v559 = vld [vmem:[%s532 + $0x138] sm:$0xff]
      %v560 = vld [vmem:[%s532 + $0x140] sm:$0xff]
      %v561 = vld [vmem:[%s532 + $0x150] sm:$0xff]
      %v562 = vld [vmem:[%s532 + $0x158] sm:$0xff]
      %v563 = vld [vmem:[%s532 + $0x168] sm:$0xff]
      %v564 = vld [vmem:[%s532 + $0x170] sm:$0xff]
      %v565 = vpack.c.bf16 %v534, %v533
      %v566 = vpack.c.bf16 %v536, %v535
      %v567 = vpack.c.bf16 %v538, %v537
      %v568 = vpack.c.bf16 %v540, %v539
      %v569 = vpack.c.bf16 %v542, %v541
      %v570 = vpack.c.bf16 %v544, %v543
      %v571 = vpack.c.bf16 %v546, %v545
      %v572 = vpack.c.bf16 %v548, %v547
      %v573 = vpack.c.bf16 %v550, %v549
      %v574 = vpack.c.bf16 %v552, %v551
      %v575 = vpack.c.bf16 %v554, %v553
      %v576 = vpack.c.bf16 %v556, %v555
      %v577 = vpack.c.bf16 %v558, %v557
      %v578 = vpack.c.bf16 %v560, %v559
      %v579 = vpack.c.bf16 %v562, %v561
      %v580 = vpack.c.bf16 %v564, %v563
      %v581 = vld [vmem:[%s532 + $0x1] sm:$0xff]
      %v582 = vld [vmem:[%s532 + $0x9] sm:$0xff]
      %v583 = vld [vmem:[%s532 + $0x19] sm:$0xff]
      %v584 = vld [vmem:[%s532 + $0x21] sm:$0xff]
      %v585 = vld [vmem:[%s532 + $0x31] sm:$0xff]
      %v586 = vld [vmem:[%s532 + $0x39] sm:$0xff]
      %v587 = vld [vmem:[%s532 + $0x49] sm:$0xff]
      %v588 = vld [vmem:[%s532 + $0x51] sm:$0xff]
      %v589 = vld [vmem:[%s532 + $0x61] sm:$0xff]
      %v590 = vld [vmem:[%s532 + $0x69] sm:$0xff]
      %v591 = vld [vmem:[%s532 + $0x79] sm:$0xff]
      %v592 = vld [vmem:[%s532 + $0x81] sm:$0xff]
      %v593 = vld [vmem:[%s532 + $0x91] sm:$0xff]
      %v594 = vld [vmem:[%s532 + $0x99] sm:$0xff]
      %v595 = vld [vmem:[%s532 + $0xa9] sm:$0xff]
      %v596 = vld [vmem:[%s532 + $0xb1] sm:$0xff]
      %v597 = vld [vmem:[%s532 + $0xc1] sm:$0xff]
      %v598 = vld [vmem:[%s532 + $0xc9] sm:$0xff]
      %v599 = vld [vmem:[%s532 + $0xd9] sm:$0xff]
      %v600 = vld [vmem:[%s532 + $0xe1] sm:$0xff]
      %v601 = vld [vmem:[%s532 + $0xf1] sm:$0xff]
      %v602 = vld [vmem:[%s532 + $0xf9] sm:$0xff]
      %v603 = vld [vmem:[%s532 + $0x109] sm:$0xff]
      %v604 = vld [vmem:[%s532 + $0x111] sm:$0xff]
      %v605 = vld [vmem:[%s532 + $0x121] sm:$0xff]
      %v606 = vld [vmem:[%s532 + $0x129] sm:$0xff]
      %v607 = vld [vmem:[%s532 + $0x139] sm:$0xff]
      %v608 = vld [vmem:[%s532 + $0x141] sm:$0xff]
      %v609 = vld [vmem:[%s532 + $0x151] sm:$0xff]
      %v610 = vld [vmem:[%s532 + $0x159] sm:$0xff]
      %v611 = vld [vmem:[%s532 + $0x169] sm:$0xff]
      %v612 = vld [vmem:[%s532 + $0x171] sm:$0xff]
      %v613 = vpack.c.bf16 %v582, %v581
      %v614 = vpack.c.bf16 %v584, %v583
      %v615 = vpack.c.bf16 %v586, %v585
      %v616 = vpack.c.bf16 %v588, %v587
      %v617 = vpack.c.bf16 %v590, %v589
      %v618 = vpack.c.bf16 %v592, %v591
      %v619 = vpack.c.bf16 %v594, %v593
      %v620 = vpack.c.bf16 %v596, %v595
      %v621 = vpack.c.bf16 %v598, %v597
      %v622 = vpack.c.bf16 %v600, %v599
      %v623 = vpack.c.bf16 %v602, %v601
      %v624 = vpack.c.bf16 %v604, %v603
      %v625 = vpack.c.bf16 %v606, %v605
      %v626 = vpack.c.bf16 %v608, %v607
      %v627 = vpack.c.bf16 %v610, %v609
      %v628 = vpack.c.bf16 %v612, %v611
      %v629 = vld [vmem:[%s532 + $0x2] sm:$0xff]
      %v630 = vld [vmem:[%s532 + $0xa] sm:$0xff]
      %v631 = vld [vmem:[%s532 + $0x1a] sm:$0xff]
      %v632 = vld [vmem:[%s532 + $0x22] sm:$0xff]
      %v633 = vld [vmem:[%s532 + $0x32] sm:$0xff]
      %v634 = vld [vmem:[%s532 + $0x3a] sm:$0xff]
      %v635 = vld [vmem:[%s532 + $0x4a] sm:$0xff]
      %v636 = vld [vmem:[%s532 + $0x52] sm:$0xff]
      %v637 = vld [vmem:[%s532 + $0x62] sm:$0xff]
      %v638 = vld [vmem:[%s532 + $0x6a] sm:$0xff]
      %v639 = vld [vmem:[%s532 + $0x7a] sm:$0xff]
      %v640 = vld [vmem:[%s532 + $0x82] sm:$0xff]
      %v641 = vld [vmem:[%s532 + $0x92] sm:$0xff]
      %v642 = vld [vmem:[%s532 + $0x9a] sm:$0xff]
      %v643 = vld [vmem:[%s532 + $0xaa] sm:$0xff]
      %v644 = vld [vmem:[%s532 + $0xb2] sm:$0xff]
      %v645 = vld [vmem:[%s532 + $0xc2] sm:$0xff]
      %v646 = vld [vmem:[%s532 + $0xca] sm:$0xff]
      %v647 = vld [vmem:[%s532 + $0xda] sm:$0xff]
      %v648 = vld [vmem:[%s532 + $0xe2] sm:$0xff]
      %v649 = vld [vmem:[%s532 + $0xf2] sm:$0xff]
      %v650 = vld [vmem:[%s532 + $0xfa] sm:$0xff]
      %v651 = vld [vmem:[%s532 + $0x10a] sm:$0xff]
      %v652 = vld [vmem:[%s532 + $0x112] sm:$0xff]
      %v653 = vld [vmem:[%s532 + $0x122] sm:$0xff]
      %v654 = vld [vmem:[%s532 + $0x12a] sm:$0xff]
      %v655 = vld [vmem:[%s532 + $0x13a] sm:$0xff]
      %v656 = vld [vmem:[%s532 + $0x142] sm:$0xff]
      %v657 = vld [vmem:[%s532 + $0x152] sm:$0xff]
      %v658 = vld [vmem:[%s532 + $0x15a] sm:$0xff]
      %v659 = vld [vmem:[%s532 + $0x16a] sm:$0xff]
      %v660 = vld [vmem:[%s532 + $0x172] sm:$0xff]
      %v661 = vpack.c.bf16 %v630, %v629
      %v662 = vpack.c.bf16 %v632, %v631
      %v663 = vpack.c.bf16 %v634, %v633
      %v664 = vpack.c.bf16 %v636, %v635
      %v665 = vpack.c.bf16 %v638, %v637
      %v666 = vpack.c.bf16 %v640, %v639
      %v667 = vpack.c.bf16 %v642, %v641
      %v668 = vpack.c.bf16 %v644, %v643
      %v669 = vpack.c.bf16 %v646, %v645
      %v670 = vpack.c.bf16 %v648, %v647
      %v671 = vpack.c.bf16 %v650, %v649
      %v672 = vpack.c.bf16 %v652, %v651
      %v673 = vpack.c.bf16 %v654, %v653
      %v674 = vpack.c.bf16 %v656, %v655
      %v675 = vpack.c.bf16 %v658, %v657
      %v676 = vpack.c.bf16 %v660, %v659
      %s677 = scalar_lea.vmem %s219, 48
      %v678 = vld [vmem:[%s677] sm:$0xff]
      %v679 = vld [vmem:[%s677 + $0x8] sm:$0xff]
      %v680 = vld [vmem:[%s677 + $0x18] sm:$0xff]
      %v681 = vld [vmem:[%s677 + $0x20] sm:$0xff]
      %v682 = vld [vmem:[%s677 + $0x30] sm:$0xff]
      %v683 = vld [vmem:[%s677 + $0x38] sm:$0xff]
      %v684 = vld [vmem:[%s677 + $0x48] sm:$0xff]
      %v685 = vld [vmem:[%s677 + $0x50] sm:$0xff]
      %v686 = vld [vmem:[%s677 + $0x60] sm:$0xff]
      %v687 = vld [vmem:[%s677 + $0x68] sm:$0xff]
      %v688 = vld [vmem:[%s677 + $0x78] sm:$0xff]
      %v689 = vld [vmem:[%s677 + $0x80] sm:$0xff]
      %v690 = vld [vmem:[%s677 + $0x90] sm:$0xff]
      %v691 = vld [vmem:[%s677 + $0x98] sm:$0xff]
      %v692 = vld [vmem:[%s677 + $0xa8] sm:$0xff]
      %v693 = vld [vmem:[%s677 + $0xb0] sm:$0xff]
      %v694 = vld [vmem:[%s677 + $0xc0] sm:$0xff]
      %v695 = vld [vmem:[%s677 + $0xc8] sm:$0xff]
      %v696 = vld [vmem:[%s677 + $0xd8] sm:$0xff]
      %v697 = vld [vmem:[%s677 + $0xe0] sm:$0xff]
      %v698 = vld [vmem:[%s677 + $0xf0] sm:$0xff]
      %v699 = vld [vmem:[%s677 + $0xf8] sm:$0xff]
      %v700 = vld [vmem:[%s677 + $0x108] sm:$0xff]
      %v701 = vld [vmem:[%s677 + $0x110] sm:$0xff]
      %v702 = vld [vmem:[%s677 + $0x120] sm:$0xff]
      %v703 = vld [vmem:[%s677 + $0x128] sm:$0xff]
      %v704 = vld [vmem:[%s677 + $0x138] sm:$0xff]
      %v705 = vld [vmem:[%s677 + $0x140] sm:$0xff]
      %v706 = vld [vmem:[%s677 + $0x150] sm:$0xff]
      %v707 = vld [vmem:[%s677 + $0x158] sm:$0xff]
      %v708 = vld [vmem:[%s677 + $0x168] sm:$0xff]
      %v709 = vld [vmem:[%s677 + $0x170] sm:$0xff]
      %v710 = vpack.c.bf16 %v679, %v678
      %v711 = vpack.c.bf16 %v681, %v680
      %v712 = vpack.c.bf16 %v683, %v682
      %v713 = vpack.c.bf16 %v685, %v684
      %v714 = vpack.c.bf16 %v687, %v686
      %v715 = vpack.c.bf16 %v689, %v688
      %v716 = vpack.c.bf16 %v691, %v690
      %v717 = vpack.c.bf16 %v693, %v692
      %v718 = vpack.c.bf16 %v695, %v694
      %v719 = vpack.c.bf16 %v697, %v696
      %v720 = vpack.c.bf16 %v699, %v698
      %v721 = vpack.c.bf16 %v701, %v700
      %v722 = vpack.c.bf16 %v703, %v702
      %v723 = vpack.c.bf16 %v705, %v704
      %v724 = vpack.c.bf16 %v707, %v706
      %v725 = vpack.c.bf16 %v709, %v708
      %v726 = vld [vmem:[%s677 + $0x1] sm:$0xff]
      %v727 = vld [vmem:[%s677 + $0x9] sm:$0xff]
      %v728 = vld [vmem:[%s677 + $0x19] sm:$0xff]
      %v729 = vld [vmem:[%s677 + $0x21] sm:$0xff]
      %v730 = vld [vmem:[%s677 + $0x31] sm:$0xff]
      %v731 = vld [vmem:[%s677 + $0x39] sm:$0xff]
      %v732 = vld [vmem:[%s677 + $0x49] sm:$0xff]
      %v733 = vld [vmem:[%s677 + $0x51] sm:$0xff]
      %v734 = vld [vmem:[%s677 + $0x61] sm:$0xff]
      %v735 = vld [vmem:[%s677 + $0x69] sm:$0xff]
      %v736 = vld [vmem:[%s677 + $0x79] sm:$0xff]
      %v737 = vld [vmem:[%s677 + $0x81] sm:$0xff]
      %v738 = vld [vmem:[%s677 + $0x91] sm:$0xff]
      %v739 = vld [vmem:[%s677 + $0x99] sm:$0xff]
      %v740 = vld [vmem:[%s677 + $0xa9] sm:$0xff]
      %v741 = vld [vmem:[%s677 + $0xb1] sm:$0xff]
      %v742 = vld [vmem:[%s677 + $0xc1] sm:$0xff]
      %v743 = vld [vmem:[%s677 + $0xc9] sm:$0xff]
      %v744 = vld [vmem:[%s677 + $0xd9] sm:$0xff]
      %v745 = vld [vmem:[%s677 + $0xe1] sm:$0xff]
      %v746 = vld [vmem:[%s677 + $0xf1] sm:$0xff]
      %v747 = vld [vmem:[%s677 + $0xf9] sm:$0xff]
      %v748 = vld [vmem:[%s677 + $0x109] sm:$0xff]
      %v749 = vld [vmem:[%s677 + $0x111] sm:$0xff]
      %v750 = vld [vmem:[%s677 + $0x121] sm:$0xff]
      %v751 = vld [vmem:[%s677 + $0x129] sm:$0xff]
      %v752 = vld [vmem:[%s677 + $0x139] sm:$0xff]
      %v753 = vld [vmem:[%s677 + $0x141] sm:$0xff]
      %v754 = vld [vmem:[%s677 + $0x151] sm:$0xff]
      %v755 = vld [vmem:[%s677 + $0x159] sm:$0xff]
      %v756 = vld [vmem:[%s677 + $0x169] sm:$0xff]
      %v757 = vld [vmem:[%s677 + $0x171] sm:$0xff]
      %v758 = vpack.c.bf16 %v727, %v726
      %v759 = vpack.c.bf16 %v729, %v728
      %v760 = vpack.c.bf16 %v731, %v730
      %v761 = vpack.c.bf16 %v733, %v732
      %v762 = vpack.c.bf16 %v735, %v734
      %v763 = vpack.c.bf16 %v737, %v736
      %v764 = vpack.c.bf16 %v739, %v738
      %v765 = vpack.c.bf16 %v741, %v740
      %v766 = vpack.c.bf16 %v743, %v742
      %v767 = vpack.c.bf16 %v745, %v744
      %v768 = vpack.c.bf16 %v747, %v746
      %v769 = vpack.c.bf16 %v749, %v748
      %v770 = vpack.c.bf16 %v751, %v750
      %v771 = vpack.c.bf16 %v753, %v752
      %v772 = vpack.c.bf16 %v755, %v754
      %v773 = vpack.c.bf16 %v757, %v756
      %v774 = vld [vmem:[%s677 + $0x2] sm:$0xff]
      %v775 = vld [vmem:[%s677 + $0xa] sm:$0xff]
      %v776 = vld [vmem:[%s677 + $0x1a] sm:$0xff]
      %v777 = vld [vmem:[%s677 + $0x22] sm:$0xff]
      %v778 = vld [vmem:[%s677 + $0x32] sm:$0xff]
      %v779 = vld [vmem:[%s677 + $0x3a] sm:$0xff]
      %v780 = vld [vmem:[%s677 + $0x4a] sm:$0xff]
      %v781 = vld [vmem:[%s677 + $0x52] sm:$0xff]
      %v782 = vld [vmem:[%s677 + $0x62] sm:$0xff]
      %v783 = vld [vmem:[%s677 + $0x6a] sm:$0xff]
      %v784 = vld [vmem:[%s677 + $0x7a] sm:$0xff]
      %v785 = vld [vmem:[%s677 + $0x82] sm:$0xff]
      %v786 = vld [vmem:[%s677 + $0x92] sm:$0xff]
      %v787 = vld [vmem:[%s677 + $0x9a] sm:$0xff]
      %v788 = vld [vmem:[%s677 + $0xaa] sm:$0xff]
      %v789 = vld [vmem:[%s677 + $0xb2] sm:$0xff]
      %v790 = vld [vmem:[%s677 + $0xc2] sm:$0xff]
      %v791 = vld [vmem:[%s677 + $0xca] sm:$0xff]
      %v792 = vld [vmem:[%s677 + $0xda] sm:$0xff]
      %v793 = vld [vmem:[%s677 + $0xe2] sm:$0xff]
      %v794 = vld [vmem:[%s677 + $0xf2] sm:$0xff]
      %v795 = vld [vmem:[%s677 + $0xfa] sm:$0xff]
      %v796 = vld [vmem:[%s677 + $0x10a] sm:$0xff]
      %v797 = vld [vmem:[%s677 + $0x112] sm:$0xff]
      %v798 = vld [vmem:[%s677 + $0x122] sm:$0xff]
      %v799 = vld [vmem:[%s677 + $0x12a] sm:$0xff]
      %v800 = vld [vmem:[%s677 + $0x13a] sm:$0xff]
      %v801 = vld [vmem:[%s677 + $0x142] sm:$0xff]
      %v802 = vld [vmem:[%s677 + $0x152] sm:$0xff]
      %v803 = vld [vmem:[%s677 + $0x15a] sm:$0xff]
      %v804 = vld [vmem:[%s677 + $0x16a] sm:$0xff]
      %v805 = vld [vmem:[%s677 + $0x172] sm:$0xff]
      %v806 = vpack.c.bf16 %v775, %v774
      %v807 = vpack.c.bf16 %v777, %v776
      %v808 = vpack.c.bf16 %v779, %v778
      %v809 = vpack.c.bf16 %v781, %v780
      %v810 = vpack.c.bf16 %v783, %v782
      %v811 = vpack.c.bf16 %v785, %v784
      %v812 = vpack.c.bf16 %v787, %v786
      %v813 = vpack.c.bf16 %v789, %v788
      %v814 = vpack.c.bf16 %v791, %v790
      %v815 = vpack.c.bf16 %v793, %v792
      %v816 = vpack.c.bf16 %v795, %v794
      %v817 = vpack.c.bf16 %v797, %v796
      %v818 = vpack.c.bf16 %v799, %v798
      %v819 = vpack.c.bf16 %v801, %v800
      %v820 = vpack.c.bf16 %v803, %v802
      %v821 = vpack.c.bf16 %v805, %v804
      %838 = vrot.lane.b32.xlu0 %v468, 64
      %v839 = vpop.permute.xlu0 %838
      %840 = vrot.lane.b32.xlu0 %v469, 64
      %v841 = vpop.permute.xlu0 %840
      %842 = vrot.lane.b32.xlu0 %v470, 64
      %v843 = vpop.permute.xlu0 %842
      %844 = vrot.lane.b32.xlu0 %v471, 64
      %v845 = vpop.permute.xlu0 %844
      %846 = vrot.lane.b32.xlu0 %v472, 64
      %v847 = vpop.permute.xlu0 %846
      %848 = vrot.lane.b32.xlu0 %v473, 64
      %v849 = vpop.permute.xlu0 %848
      %850 = vrot.lane.b32.xlu0 %v474, 64
      %v851 = vpop.permute.xlu0 %850
      %852 = vrot.lane.b32.xlu0 %v475, 64
      %v853 = vpop.permute.xlu0 %852
      %854 = vrot.lane.b32.xlu0 %v476, 64
      %v855 = vpop.permute.xlu0 %854
      %856 = vrot.lane.b32.xlu0 %v477, 64
      %v857 = vpop.permute.xlu0 %856
      %858 = vrot.lane.b32.xlu0 %v478, 64
      %v859 = vpop.permute.xlu0 %858
      %860 = vrot.lane.b32.xlu0 %v479, 64
      %v861 = vpop.permute.xlu0 %860
      %862 = vrot.lane.b32.xlu0 %v480, 64
      %v863 = vpop.permute.xlu0 %862
      %864 = vrot.lane.b32.xlu0 %v481, 64
      %v865 = vpop.permute.xlu0 %864
      %866 = vrot.lane.b32.xlu0 %v482, 64
      %v867 = vpop.permute.xlu0 %866
      %868 = vrot.lane.b32.xlu0 %v483, 64
      %v869 = vpop.permute.xlu0 %868
      %886 = vrot.lane.b32.xlu0 %v565, 64
      %v887 = vpop.permute.xlu0 %886
      %888 = vrot.lane.b32.xlu0 %v566, 64
      %v889 = vpop.permute.xlu0 %888
      %890 = vrot.lane.b32.xlu0 %v567, 64
      %v891 = vpop.permute.xlu0 %890
      %892 = vrot.lane.b32.xlu0 %v568, 64
      %v893 = vpop.permute.xlu0 %892
      %894 = vrot.lane.b32.xlu0 %v569, 64
      %v895 = vpop.permute.xlu0 %894
      %896 = vrot.lane.b32.xlu0 %v570, 64
      %v897 = vpop.permute.xlu0 %896
      %898 = vrot.lane.b32.xlu0 %v571, 64
      %v899 = vpop.permute.xlu0 %898
      %900 = vrot.lane.b32.xlu0 %v572, 64
      %v901 = vpop.permute.xlu0 %900
      %902 = vrot.lane.b32.xlu0 %v573, 64
      %v903 = vpop.permute.xlu0 %902
      %904 = vrot.lane.b32.xlu0 %v574, 64
      %v905 = vpop.permute.xlu0 %904
      %906 = vrot.lane.b32.xlu0 %v575, 64
      %v907 = vpop.permute.xlu0 %906
      %908 = vrot.lane.b32.xlu0 %v576, 64
      %v909 = vpop.permute.xlu0 %908
      %910 = vrot.lane.b32.xlu0 %v577, 64
      %v911 = vpop.permute.xlu0 %910
      %912 = vrot.lane.b32.xlu0 %v578, 64
      %v913 = vpop.permute.xlu0 %912
      %914 = vrot.lane.b32.xlu0 %v579, 64
      %v915 = vpop.permute.xlu0 %914
      %916 = vrot.lane.b32.xlu0 %v580, 64
      %v917 = vpop.permute.xlu0 %916
      %934 = vrot.lane.b32.xlu0 %v661, 64
      %v935 = vpop.permute.xlu0 %934
      %936 = vrot.lane.b32.xlu0 %v662, 64
      %v937 = vpop.permute.xlu0 %936
      %938 = vrot.lane.b32.xlu0 %v663, 64
      %v939 = vpop.permute.xlu0 %938
      %940 = vrot.lane.b32.xlu0 %v664, 64
      %v941 = vpop.permute.xlu0 %940
      %942 = vrot.lane.b32.xlu0 %v665, 64
      %v943 = vpop.permute.xlu0 %942
      %944 = vrot.lane.b32.xlu0 %v666, 64
      %v945 = vpop.permute.xlu0 %944
      %946 = vrot.lane.b32.xlu0 %v667, 64
      %v947 = vpop.permute.xlu0 %946
      %948 = vrot.lane.b32.xlu0 %v668, 64
      %v949 = vpop.permute.xlu0 %948
      %950 = vrot.lane.b32.xlu0 %v669, 64
      %v951 = vpop.permute.xlu0 %950
      %952 = vrot.lane.b32.xlu0 %v670, 64
      %v953 = vpop.permute.xlu0 %952
      %954 = vrot.lane.b32.xlu0 %v671, 64
      %v955 = vpop.permute.xlu0 %954
      %956 = vrot.lane.b32.xlu0 %v672, 64
      %v957 = vpop.permute.xlu0 %956
      %958 = vrot.lane.b32.xlu0 %v673, 64
      %v959 = vpop.permute.xlu0 %958
      %960 = vrot.lane.b32.xlu0 %v674, 64
      %v961 = vpop.permute.xlu0 %960
      %962 = vrot.lane.b32.xlu0 %v675, 64
      %v963 = vpop.permute.xlu0 %962
      %964 = vrot.lane.b32.xlu0 %v676, 64
      %v965 = vpop.permute.xlu0 %964
      %982 = vrot.lane.b32.xlu0 %v758, 64
      %v983 = vpop.permute.xlu0 %982
      %984 = vrot.lane.b32.xlu0 %v759, 64
      %v985 = vpop.permute.xlu0 %984
      %986 = vrot.lane.b32.xlu0 %v760, 64
      %v987 = vpop.permute.xlu0 %986
      %988 = vrot.lane.b32.xlu0 %v761, 64
      %v989 = vpop.permute.xlu0 %988
      %990 = vrot.lane.b32.xlu0 %v762, 64
      %v991 = vpop.permute.xlu0 %990
      %992 = vrot.lane.b32.xlu0 %v763, 64
      %v993 = vpop.permute.xlu0 %992
      %994 = vrot.lane.b32.xlu0 %v764, 64
      %v995 = vpop.permute.xlu0 %994
      %996 = vrot.lane.b32.xlu0 %v765, 64
      %v997 = vpop.permute.xlu0 %996
      %998 = vrot.lane.b32.xlu0 %v766, 64
      %v999 = vpop.permute.xlu0 %998
      %1000 = vrot.lane.b32.xlu0 %v767, 64
      %v1001 = vpop.permute.xlu0 %1000
      %1002 = vrot.lane.b32.xlu0 %v768, 64
      %v1003 = vpop.permute.xlu0 %1002
      %1004 = vrot.lane.b32.xlu0 %v769, 64
      %v1005 = vpop.permute.xlu0 %1004
      %1006 = vrot.lane.b32.xlu0 %v770, 64
      %v1007 = vpop.permute.xlu0 %1006
      %1008 = vrot.lane.b32.xlu0 %v771, 64
      %v1009 = vpop.permute.xlu0 %1008
      %1010 = vrot.lane.b32.xlu0 %v772, 64
      %v1011 = vpop.permute.xlu0 %1010
      %1012 = vrot.lane.b32.xlu0 %v773, 64
      %v1013 = vpop.permute.xlu0 %1012
      %vm1014 = vcmask 523264
      %v1017 = vsel %vm1014, %v420, %v839
      %v1021 = vsel %vm1014, %v421, %v841
      %v1025 = vsel %vm1014, %v422, %v843
      %v1029 = vsel %vm1014, %v423, %v845
      %v1033 = vsel %vm1014, %v424, %v847
      %v1037 = vsel %vm1014, %v425, %v849
      %v1041 = vsel %vm1014, %v426, %v851
      %v1045 = vsel %vm1014, %v427, %v853
      %v1049 = vsel %vm1014, %v428, %v855
      %v1053 = vsel %vm1014, %v429, %v857
      %v1057 = vsel %vm1014, %v430, %v859
      %v1061 = vsel %vm1014, %v431, %v861
      %v1065 = vsel %vm1014, %v432, %v863
      %v1069 = vsel %vm1014, %v433, %v865
      %v1073 = vsel %vm1014, %v434, %v867
      %v1077 = vsel %vm1014, %v435, %v869
      %v1081 = vsel %vm1014, %v516, %v887
      %v1085 = vsel %vm1014, %v517, %v889
      %v1089 = vsel %vm1014, %v518, %v891
      %v1093 = vsel %vm1014, %v519, %v893
      %v1097 = vsel %vm1014, %v520, %v895
      %v1101 = vsel %vm1014, %v521, %v897
      %v1105 = vsel %vm1014, %v522, %v899
      %v1109 = vsel %vm1014, %v523, %v901
      %v1113 = vsel %vm1014, %v524, %v903
      %v1117 = vsel %vm1014, %v525, %v905
      %v1121 = vsel %vm1014, %v526, %v907
      %v1125 = vsel %vm1014, %v527, %v909
      %v1129 = vsel %vm1014, %v528, %v911
      %v1133 = vsel %vm1014, %v529, %v913
      %v1137 = vsel %vm1014, %v530, %v915
      %v1141 = vsel %vm1014, %v531, %v917
      %v1145 = vsel %vm1014, %v613, %v935
      %v1149 = vsel %vm1014, %v614, %v937
      %v1153 = vsel %vm1014, %v615, %v939
      %v1157 = vsel %vm1014, %v616, %v941
      %v1161 = vsel %vm1014, %v617, %v943
      %v1165 = vsel %vm1014, %v618, %v945
      %v1169 = vsel %vm1014, %v619, %v947
      %v1173 = vsel %vm1014, %v620, %v949
      %v1177 = vsel %vm1014, %v621, %v951
      %v1181 = vsel %vm1014, %v622, %v953
      %v1185 = vsel %vm1014, %v623, %v955
      %v1189 = vsel %vm1014, %v624, %v957
      %v1193 = vsel %vm1014, %v625, %v959
      %v1197 = vsel %vm1014, %v626, %v961
      %v1201 = vsel %vm1014, %v627, %v963
      %v1205 = vsel %vm1014, %v628, %v965
      %v1209 = vsel %vm1014, %v710, %v983
      %v1213 = vsel %vm1014, %v711, %v985
      %v1217 = vsel %vm1014, %v712, %v987
      %v1221 = vsel %vm1014, %v713, %v989
      %v1225 = vsel %vm1014, %v714, %v991
      %v1229 = vsel %vm1014, %v715, %v993
      %v1233 = vsel %vm1014, %v716, %v995
      %v1237 = vsel %vm1014, %v717, %v997
      %v1241 = vsel %vm1014, %v718, %v999
      %v1245 = vsel %vm1014, %v719, %v1001
      %v1249 = vsel %vm1014, %v720, %v1003
      %v1253 = vsel %vm1014, %v721, %v1005
      %v1257 = vsel %vm1014, %v722, %v1007
      %v1261 = vsel %vm1014, %v723, %v1009
      %v1265 = vsel %vm1014, %v724, %v1011
      %v1269 = vsel %vm1014, %v725, %v1013
      %v1272 = vlaneseq
      %v1273 = vshrl.u32 %v1272, 7
      %v1274 = vsub.s32 0, %v1273
      %v1275 = vrot.slane %v387, %v1274
      %v1349 = vunpack.c.l.b16 %v315
      %v1350 = vunpack.c.l.b16 %v316
      %v1351 = vunpack.c.l.b16 %v317
      %v1352 = vunpack.c.l.b16 %v318
      %v1353 = vunpack.c.l.b16 %v319
      %v1354 = vunpack.c.l.b16 %v320
      %v1355 = vunpack.c.l.b16 %v321
      %v1356 = vunpack.c.l.b16 %v322
      %v1357 = vunpack.c.l.b16 %v323
      %v1358 = vunpack.c.l.b16 %v324
      %v1359 = vunpack.c.l.b16 %v325
      %v1360 = vunpack.c.l.b16 %v326
      %v1361 = vunpack.c.l.b16 %v327
      %v1362 = vunpack.c.l.b16 %v328
      %v1363 = vunpack.c.l.b16 %v329
      %v1364 = vunpack.c.l.b16 %v330
      %v1365 = vunpack.c.l.b16 %v331
      %v1366 = vunpack.c.l.b16 %v332
      %v1367 = vunpack.c.l.b16 %v333
      %v1368 = vunpack.c.l.b16 %v334
      %v1369 = vunpack.c.l.b16 %v335
      %v1370 = vunpack.c.l.b16 %v336
      %v1371 = vunpack.c.l.b16 %v337
      %v1372 = vunpack.c.l.b16 %v338
      %v1373 = vunpack.c.l.b16 %v339
      %v1374 = vunpack.c.l.b16 %v340
      %v1375 = vunpack.c.l.b16 %v341
      %v1376 = vunpack.c.l.b16 %v342
      %v1377 = vunpack.c.l.b16 %v343
      %v1378 = vunpack.c.l.b16 %v344
      %v1379 = vunpack.c.l.b16 %v345
      %v1380 = vunpack.c.l.b16 %v346
      %v1381 = vunpack.c.l.b16 %v347
      %v1382 = vunpack.c.l.b16 %v348
      %v1383 = vunpack.c.l.b16 %v349
      %v1384 = vunpack.c.l.b16 %v350
      %v1385 = vunpack.c.l.b16 %v351
      %v1386 = vunpack.c.l.b16 %v352
      %v1387 = vunpack.c.l.b16 %v353
      %v1388 = vunpack.c.l.b16 %v354
      %v1389 = vunpack.c.l.b16 %v355
      %v1390 = vunpack.c.l.b16 %v356
      %v1391 = vunpack.c.l.b16 %v357
      %v1392 = vunpack.c.l.b16 %v358
      %v1393 = vunpack.c.l.b16 %v359
      %v1394 = vunpack.c.l.b16 %v360
      %v1395 = vunpack.c.l.b16 %v361
      %v1396 = vunpack.c.l.b16 %v362
      %v1397 = vunpack.c.l.b16 %v363
      %v1398 = vunpack.c.l.b16 %v364
      %v1399 = vunpack.c.l.b16 %v365
      %v1400 = vunpack.c.l.b16 %v366
      %v1401 = vunpack.c.l.b16 %v367
      %v1402 = vunpack.c.l.b16 %v368
      %v1403 = vunpack.c.l.b16 %v369
      %v1404 = vunpack.c.l.b16 %v370
      %v1405 = vunpack.c.l.b16 %v371
      %v1406 = vunpack.c.l.b16 %v372
      %v1407 = vunpack.c.l.b16 %v373
      %v1408 = vunpack.c.l.b16 %v374
      %v1409 = vunpack.c.l.b16 %v375
      %v1410 = vunpack.c.l.b16 %v376
      %v1411 = vunpack.c.l.b16 %v377
      %v1412 = vunpack.c.l.b16 %v378
      %v1413 = vunpack.c.l.b16 %v379
      %v1414 = vunpack.c.l.b16 %v380
      %v1415 = vunpack.c.l.b16 %v381
      %v1416 = vunpack.c.l.b16 %v382
      %v1417 = vunpack.c.l.b16 %v383
      %v1418 = vunpack.c.l.b16 %v384
      %v1419 = vunpack.c.l.b16 %v385
      %v1420 = vunpack.c.l.b16 %v386
      %v1421 = vpack.c.b16 %v1350, %v1349
      %v1422 = vpack.c.b16 %v1352, %v1351
      %v1423 = vpack.c.b16 %v1354, %v1353
      %v1424 = vpack.c.b16 %v1356, %v1355
      %v1425 = vpack.c.b16 %v1358, %v1357
      %v1426 = vpack.c.b16 %v1360, %v1359
      %v1427 = vpack.c.b16 %v1362, %v1361
      %v1428 = vpack.c.b16 %v1364, %v1363
      %v1429 = vpack.c.b16 %v1366, %v1365
      %v1430 = vpack.c.b16 %v1368, %v1367
      %v1431 = vpack.c.b16 %v1370, %v1369
      %v1432 = vpack.c.b16 %v1372, %v1371
      %v1433 = vpack.c.b16 %v1374, %v1373
      %v1434 = vpack.c.b16 %v1376, %v1375
      %v1435 = vpack.c.b16 %v1378, %v1377
      %v1436 = vpack.c.b16 %v1380, %v1379
      %v1437 = vpack.c.b16 %v1382, %v1381
      %v1438 = vpack.c.b16 %v1384, %v1383
      %v1439 = vpack.c.b16 %v1386, %v1385
      %v1440 = vpack.c.b16 %v1388, %v1387
      %v1441 = vpack.c.b16 %v1390, %v1389
      %v1442 = vpack.c.b16 %v1392, %v1391
      %v1443 = vpack.c.b16 %v1394, %v1393
      %v1444 = vpack.c.b16 %v1396, %v1395
      %v1445 = vpack.c.b16 %v1398, %v1397
      %v1446 = vpack.c.b16 %v1400, %v1399
      %v1447 = vpack.c.b16 %v1402, %v1401
      %v1448 = vpack.c.b16 %v1404, %v1403
      %v1449 = vpack.c.b16 %v1406, %v1405
      %v1450 = vpack.c.b16 %v1408, %v1407
      %v1451 = vpack.c.b16 %v1410, %v1409
      %v1452 = vpack.c.b16 %v1412, %v1411
      %v1453 = vpack.c.b16 %v1414, %v1413
      %v1454 = vpack.c.b16 %v1416, %v1415
      %v1455 = vpack.c.b16 %v1418, %v1417
      %v1456 = vpack.c.b16 %v1420, %v1419
      %v1494 = vsel %vm1014, %v806, 0
      %v1497 = vsel %vm1014, %v807, 0
      %v1500 = vsel %vm1014, %v808, 0
      %v1503 = vsel %vm1014, %v809, 0
      %v1506 = vsel %vm1014, %v810, 0
      %v1509 = vsel %vm1014, %v811, 0
      %v1512 = vsel %vm1014, %v812, 0
      %v1515 = vsel %vm1014, %v813, 0
      %v1518 = vsel %vm1014, %v814, 0
      %v1521 = vsel %vm1014, %v815, 0
      %v1524 = vsel %vm1014, %v816, 0
      %v1527 = vsel %vm1014, %v817, 0
      %v1530 = vsel %vm1014, %v818, 0
      %v1533 = vsel %vm1014, %v819, 0
      %v1536 = vsel %vm1014, %v820, 0
      %v1539 = vsel %vm1014, %v821, 0
      %1541 = vmatprep.subr.bf16.mxu0 0
      %1542 = vmatpush1.bf16.msra.mxu0 %v1421
      %1543 = vmatprep.subr.bf16.mxu0 0
      %1544 = vmatpush1.bf16.msra.mxu0 %v1422
      %1545 = vmatprep.subr.bf16.mxu0 0
      %1546 = vmatpush1.bf16.msra.mxu0 %v1423
      %1547 = vmatprep.subr.bf16.mxu0 0
      %1548 = vmatpush1.bf16.msra.mxu0 %v1424
      %1549 = vmatprep.subr.bf16.mxu0 0
      %1550 = vmatpush1.bf16.msra.mxu0 %v1425
      %1551 = vmatprep.subr.bf16.mxu0 0
      %1552 = vmatpush1.bf16.msra.mxu0 %v1426
      %1553 = vmatprep.subr.bf16.mxu0 0
      %1554 = vmatpush1.bf16.msra.mxu0 %v1427
      %1555 = vmatprep.subr.bf16.mxu0 0
      %1556 = vmatpush1.bf16.msra.mxu0 %v1428
      %1557 = vmatprep.subr.bf16.mxu0 0
      %1558 = vmatpush1.bf16.msra.mxu0 %v1429
      %1559 = vmatprep.subr.bf16.mxu0 0
      %1560 = vmatpush1.bf16.msra.mxu0 %v1430
      %1561 = vmatprep.subr.bf16.mxu0 0
      %1562 = vmatpush1.bf16.msra.mxu0 %v1431
      %1563 = vmatprep.subr.bf16.mxu0 0
      %1564 = vmatpush1.bf16.msra.mxu0 %v1432
      %1565 = vmatprep.subr.bf16.mxu0 0
      %1566 = vmatpush1.bf16.msra.mxu0 %v1433
      %1567 = vmatprep.subr.bf16.mxu0 0
      %1568 = vmatpush1.bf16.msra.mxu0 %v1434
      %1569 = vmatprep.subr.bf16.mxu0 0
      %1570 = vmatpush1.bf16.msra.mxu0 %v1435
      %1571 = vmatprep.subr.bf16.mxu0 0
      %1572 = vmatpush1.bf16.msra.mxu0 %v1436
      %1573 = vmatprep.mubr.bf16.mxu0 %v1081
      %1574 = vmatmul.mubr.bf16.gmra.mrb[0].mxu0 %v1017
      %v1575 = vpop.f32.mrb[0].mxu0
      %v1576 = vadd.f32 %v1275, %v1575
      %v1577 = vpop.f32.mrb[0].mxu0
      %v1578 = vpop.f32.mrb[0].mxu0
      %v1579 = vadd.f32 %v1275, %v1578
      %v1580 = vpop.f32.mrb[0].mxu0
      %1581 = vmatprep.mubr.bf16.mxu0 %v1085
      %1582 = vmatmul.mubr.bf16.gmra.mrb[0].mxu0 %v1021
      %v1583 = vpop.f32.mrb[0].mxu0
      %v1584 = vadd.f32 %v1275, %v1583
      %v1585 = vpop.f32.mrb[0].mxu0
      %v1586 = vpop.f32.mrb[0].mxu0
      %v1587 = vadd.f32 %v1275, %v1586
      %v1588 = vpop.f32.mrb[0].mxu0
      %1589 = vmatprep.mubr.bf16.mxu0 %v1089
      %1590 = vmatmul.mubr.bf16.gmra.mrb[0].mxu0 %v1025
      %v1591 = vpop.f32.mrb[0].mxu0
      %v1592 = vadd.f32 %v1275, %v1591
      %v1593 = vpop.f32.mrb[0].mxu0
      %v1594 = vpop.f32.mrb[0].mxu0
      %v1595 = vadd.f32 %v1275, %v1594
      %v1596 = vpop.f32.mrb[0].mxu0
      %1597 = vmatprep.mubr.bf16.mxu0 %v1093
      %1598 = vmatmul.mubr.bf16.gmra.mrb[0].mxu0 %v1029
      %v1599 = vpop.f32.mrb[0].mxu0
      %v1600 = vadd.f32 %v1275, %v1599
      %v1601 = vpop.f32.mrb[0].mxu0
      %v1602 = vpop.f32.mrb[0].mxu0
      %v1603 = vadd.f32 %v1275, %v1602
      %v1604 = vpop.f32.mrb[0].mxu0
      %1605 = vmatprep.mubr.bf16.mxu0 %v1097
      %1606 = vmatmul.mubr.bf16.gmra.mrb[0].mxu0 %v1033
      %v1607 = vpop.f32.mrb[0].mxu0
      %v1608 = vadd.f32 %v1275, %v1607
      %v1609 = vpop.f32.mrb[0].mxu0
      %v1610 = vpop.f32.mrb[0].mxu0
      %v1611 = vadd.f32 %v1275, %v1610
      %v1612 = vpop.f32.mrb[0].mxu0
      %1613 = vmatprep.mubr.bf16.mxu0 %v1101
      %1614 = vmatmul.mubr.bf16.gmra.mrb[0].mxu0 %v1037
      %v1615 = vpop.f32.mrb[0].mxu0
      %v1616 = vadd.f32 %v1275, %v1615
      %v1617 = vpop.f32.mrb[0].mxu0
      %v1618 = vpop.f32.mrb[0].mxu0
      %v1619 = vadd.f32 %v1275, %v1618
      %v1620 = vpop.f32.mrb[0].mxu0
      %1621 = vmatprep.mubr.bf16.mxu0 %v1105
      %1622 = vmatmul.mubr.bf16.gmra.mrb[0].mxu0 %v1041
      %v1623 = vpop.f32.mrb[0].mxu0
      %v1624 = vadd.f32 %v1275, %v1623
      %v1625 = vpop.f32.mrb[0].mxu0
      %v1626 = vpop.f32.mrb[0].mxu0
      %v1627 = vadd.f32 %v1275, %v1626
      %v1628 = vpop.f32.mrb[0].mxu0
      %1629 = vmatprep.mubr.bf16.mxu0 %v1109
      %1630 = vmatmul.mubr.bf16.gmra.mrb[0].mxu0 %v1045
      %v1631 = vpop.f32.mrb[0].mxu0
      %v1632 = vadd.f32 %v1275, %v1631
      %v1633 = vpop.f32.mrb[0].mxu0
      %v1634 = vpop.f32.mrb[0].mxu0
      %v1635 = vadd.f32 %v1275, %v1634
      %v1636 = vpop.f32.mrb[0].mxu0
      %1637 = vmatprep.mubr.bf16.mxu0 %v1113
      %1638 = vmatmul.mubr.bf16.gmra.mrb[0].mxu0 %v1049
      %v1639 = vpop.f32.mrb[0].mxu0
      %v1640 = vadd.f32 %v1275, %v1639
      %v1641 = vpop.f32.mrb[0].mxu0
      %v1642 = vpop.f32.mrb[0].mxu0
      %v1643 = vadd.f32 %v1275, %v1642
      %v1644 = vpop.f32.mrb[0].mxu0
      %1645 = vmatprep.mubr.bf16.mxu0 %v1117
      %1646 = vmatmul.mubr.bf16.gmra.mrb[0].mxu0 %v1053
      %v1647 = vpop.f32.mrb[0].mxu0
      %v1648 = vadd.f32 %v1275, %v1647
      %v1649 = vpop.f32.mrb[0].mxu0
      %v1650 = vpop.f32.mrb[0].mxu0
      %v1651 = vadd.f32 %v1275, %v1650
      %v1652 = vpop.f32.mrb[0].mxu0
      %1653 = vmatprep.mubr.bf16.mxu0 %v1121
      %1654 = vmatmul.mubr.bf16.gmra.mrb[0].mxu0 %v1057
      %v1655 = vpop.f32.mrb[0].mxu0
      %v1656 = vadd.f32 %v1275, %v1655
      %v1657 = vpop.f32.mrb[0].mxu0
      %v1658 = vpop.f32.mrb[0].mxu0
      %v1659 = vadd.f32 %v1275, %v1658
      %v1660 = vpop.f32.mrb[0].mxu0
      %1661 = vmatprep.mubr.bf16.mxu0 %v1125
      %1662 = vmatmul.mubr.bf16.gmra.mrb[0].mxu0 %v1061
      %v1663 = vpop.f32.mrb[0].mxu0
      %v1664 = vadd.f32 %v1275, %v1663
      %v1665 = vpop.f32.mrb[0].mxu0
      %v1666 = vpop.f32.mrb[0].mxu0
      %v1667 = vadd.f32 %v1275, %v1666
      %v1668 = vpop.f32.mrb[0].mxu0
      %1669 = vmatprep.mubr.bf16.mxu0 %v1129
      %1670 = vmatmul.mubr.bf16.gmra.mrb[0].mxu0 %v1065
      %v1671 = vpop.f32.mrb[0].mxu0
      %v1672 = vadd.f32 %v1275, %v1671
      %v1673 = vpop.f32.mrb[0].mxu0
      %v1674 = vpop.f32.mrb[0].mxu0
      %v1675 = vadd.f32 %v1275, %v1674
      %v1676 = vpop.f32.mrb[0].mxu0
      %1677 = vmatprep.mubr.bf16.mxu0 %v1133
      %1678 = vmatmul.mubr.bf16.gmra.mrb[0].mxu0 %v1069
      %v1679 = vpop.f32.mrb[0].mxu0
      %v1680 = vadd.f32 %v1275, %v1679
      %v1681 = vpop.f32.mrb[0].mxu0
      %v1682 = vpop.f32.mrb[0].mxu0
      %v1683 = vadd.f32 %v1275, %v1682
      %v1684 = vpop.f32.mrb[0].mxu0
      %1685 = vmatprep.mubr.bf16.mxu0 %v1137
      %1686 = vmatmul.mubr.bf16.gmra.mrb[0].mxu0 %v1073
      %v1687 = vpop.f32.mrb[0].mxu0
      %v1688 = vadd.f32 %v1275, %v1687
      %v1689 = vpop.f32.mrb[0].mxu0
      %v1690 = vpop.f32.mrb[0].mxu0
      %v1691 = vadd.f32 %v1275, %v1690
      %v1692 = vpop.f32.mrb[0].mxu0
      %1693 = vmatprep.mubr.bf16.mxu0 %v1141
      %1694 = vmatmul.mubr.bf16.gmra.mrb[0].mxu0 %v1077
      %v1695 = vpop.f32.mrb[0].mxu0
      %v1696 = vadd.f32 %v1275, %v1695
      %v1697 = vpop.f32.mrb[0].mxu0
      %v1698 = vpop.f32.mrb[0].mxu0
      %v1699 = vadd.f32 %v1275, %v1698
      %v1700 = vpop.f32.mrb[0].mxu0
      %1701 = vdwg.mxu0
      %1702 = vmatprep.subr.bf16.mxu0 0
      %1703 = vmatpush1.bf16.msra.mxu0 %v1437
      %1704 = vmatprep.subr.bf16.mxu0 0
      %1705 = vmatpush1.bf16.msra.mxu0 %v1438
      %1706 = vmatprep.subr.bf16.mxu0 0
      %1707 = vmatpush1.bf16.msra.mxu0 %v1439
      %1708 = vmatprep.subr.bf16.mxu0 0
      %1709 = vmatpush1.bf16.msra.mxu0 %v1440
      %1710 = vmatprep.subr.bf16.mxu0 0
      %1711 = vmatpush1.bf16.msra.mxu0 %v1441
      %1712 = vmatprep.subr.bf16.mxu0 0
      %1713 = vmatpush1.bf16.msra.mxu0 %v1442
      %1714 = vmatprep.subr.bf16.mxu0 0
      %1715 = vmatpush1.bf16.msra.mxu0 %v1443
      %1716 = vmatprep.subr.bf16.mxu0 0
      %1717 = vmatpush1.bf16.msra.mxu0 %v1444
      %1718 = vmatprep.subr.bf16.mxu0 0
      %1719 = vmatpush1.bf16.msra.mxu0 %v1445
      %1720 = vmatprep.subr.bf16.mxu0 0
      %1721 = vmatpush1.bf16.msra.mxu0 %v1446
      %1722 = vmatprep.subr.bf16.mxu0 0
      %1723 = vmatpush1.bf16.msra.mxu0 %v1447
      %1724 = vmatprep.subr.bf16.mxu0 0
      %1725 = vmatpush1.bf16.msra.mxu0 %v1448
      %1726 = vmatprep.subr.bf16.mxu0 0
      %1727 = vmatpush1.bf16.msra.mxu0 %v1449
      %1728 = vmatprep.subr.bf16.mxu0 0
      %1729 = vmatpush1.bf16.msra.mxu0 %v1450
      %1730 = vmatprep.subr.bf16.mxu0 0
      %1731 = vmatpush1.bf16.msra.mxu0 %v1451
      %1732 = vmatprep.subr.bf16.mxu0 0
      %1733 = vmatpush1.bf16.msra.mxu0 %v1452
      %1734 = vmatprep.mubr.bf16.mxu0 %v1209
      %1735 = vmatmul.mubr.bf16.gmra.mrb[0].mxu0 %v1145
      %v1736 = vpop.f32.mrb[0].mxu0
      %v1737 = vadd.f32 %v1576, %v1736
      %v1738 = vpop.f32.mrb[0].mxu0
      %v1739 = vpop.f32.mrb[0].mxu0
      %v1740 = vadd.f32 %v1579, %v1739
      %v1741 = vpop.f32.mrb[0].mxu0
      %1742 = vmatprep.mubr.bf16.mxu0 %v1213
      %1743 = vmatmul.mubr.bf16.gmra.mrb[0].mxu0 %v1149
      %v1744 = vpop.f32.mrb[0].mxu0
      %v1745 = vadd.f32 %v1584, %v1744
      %v1746 = vpop.f32.mrb[0].mxu0
      %v1747 = vpop.f32.mrb[0].mxu0
      %v1748 = vadd.f32 %v1587, %v1747
      %v1749 = vpop.f32.mrb[0].mxu0
      %1750 = vmatprep.mubr.bf16.mxu0 %v1217
      %1751 = vmatmul.mubr.bf16.gmra.mrb[0].mxu0 %v1153
      %v1752 = vpop.f32.mrb[0].mxu0
      %v1753 = vadd.f32 %v1592, %v1752
      %v1754 = vpop.f32.mrb[0].mxu0
      %v1755 = vpop.f32.mrb[0].mxu0
      %v1756 = vadd.f32 %v1595, %v1755
      %v1757 = vpop.f32.mrb[0].mxu0
      %1758 = vmatprep.mubr.bf16.mxu0 %v1221
      %1759 = vmatmul.mubr.bf16.gmra.mrb[0].mxu0 %v1157
      %v1760 = vpop.f32.mrb[0].mxu0
      %v1761 = vadd.f32 %v1600, %v1760
      %v1762 = vpop.f32.mrb[0].mxu0
      %v1763 = vpop.f32.mrb[0].mxu0
      %v1764 = vadd.f32 %v1603, %v1763
      %v1765 = vpop.f32.mrb[0].mxu0
      %1766 = vmatprep.mubr.bf16.mxu0 %v1225
      %1767 = vmatmul.mubr.bf16.gmra.mrb[0].mxu0 %v1161
      %v1768 = vpop.f32.mrb[0].mxu0
      %v1769 = vadd.f32 %v1608, %v1768
      %v1770 = vpop.f32.mrb[0].mxu0
      %v1771 = vpop.f32.mrb[0].mxu0
      %v1772 = vadd.f32 %v1611, %v1771
      %v1773 = vpop.f32.mrb[0].mxu0
      %1774 = vmatprep.mubr.bf16.mxu0 %v1229
      %1775 = vmatmul.mubr.bf16.gmra.mrb[0].mxu0 %v1165
      %v1776 = vpop.f32.mrb[0].mxu0
      %v1777 = vadd.f32 %v1616, %v1776
      %v1778 = vpop.f32.mrb[0].mxu0
      %v1779 = vpop.f32.mrb[0].mxu0
      %v1780 = vadd.f32 %v1619, %v1779
      %v1781 = vpop.f32.mrb[0].mxu0
      %1782 = vmatprep.mubr.bf16.mxu0 %v1233
      %1783 = vmatmul.mubr.bf16.gmra.mrb[0].mxu0 %v1169
      %v1784 = vpop.f32.mrb[0].mxu0
      %v1785 = vadd.f32 %v1624, %v1784
      %v1786 = vpop.f32.mrb[0].mxu0
      %v1787 = vpop.f32.mrb[0].mxu0
      %v1788 = vadd.f32 %v1627, %v1787
      %v1789 = vpop.f32.mrb[0].mxu0
      %1790 = vmatprep.mubr.bf16.mxu0 %v1237
      %1791 = vmatmul.mubr.bf16.gmra.mrb[0].mxu0 %v1173
      %v1792 = vpop.f32.mrb[0].mxu0
      %v1793 = vadd.f32 %v1632, %v1792
      %v1794 = vpop.f32.mrb[0].mxu0
      %v1795 = vpop.f32.mrb[0].mxu0
      %v1796 = vadd.f32 %v1635, %v1795
      %v1797 = vpop.f32.mrb[0].mxu0
      %1798 = vmatprep.mubr.bf16.mxu0 %v1241
      %1799 = vmatmul.mubr.bf16.gmra.mrb[0].mxu0 %v1177
      %v1800 = vpop.f32.mrb[0].mxu0
      %v1801 = vadd.f32 %v1640, %v1800
      %v1802 = vpop.f32.mrb[0].mxu0
      %v1803 = vpop.f32.mrb[0].mxu0
      %v1804 = vadd.f32 %v1643, %v1803
      %v1805 = vpop.f32.mrb[0].mxu0
      %1806 = vmatprep.mubr.bf16.mxu0 %v1245
      %1807 = vmatmul.mubr.bf16.gmra.mrb[0].mxu0 %v1181
      %v1808 = vpop.f32.mrb[0].mxu0
      %v1809 = vadd.f32 %v1648, %v1808
      %v1810 = vpop.f32.mrb[0].mxu0
      %v1811 = vpop.f32.mrb[0].mxu0
      %v1812 = vadd.f32 %v1651, %v1811
      %v1813 = vpop.f32.mrb[0].mxu0
      %1814 = vmatprep.mubr.bf16.mxu0 %v1249
      %1815 = vmatmul.mubr.bf16.gmra.mrb[0].mxu0 %v1185
      %v1816 = vpop.f32.mrb[0].mxu0
      %v1817 = vadd.f32 %v1656, %v1816
      %v1818 = vpop.f32.mrb[0].mxu0
      %v1819 = vpop.f32.mrb[0].mxu0
      %v1820 = vadd.f32 %v1659, %v1819
      %v1821 = vpop.f32.mrb[0].mxu0
      %1822 = vmatprep.mubr.bf16.mxu0 %v1253
      %1823 = vmatmul.mubr.bf16.gmra.mrb[0].mxu0 %v1189
      %v1824 = vpop.f32.mrb[0].mxu0
      %v1825 = vadd.f32 %v1664, %v1824
      %v1826 = vpop.f32.mrb[0].mxu0
      %v1827 = vpop.f32.mrb[0].mxu0
      %v1828 = vadd.f32 %v1667, %v1827
      %v1829 = vpop.f32.mrb[0].mxu0
      %1830 = vmatprep.mubr.bf16.mxu0 %v1257
      %1831 = vmatmul.mubr.bf16.gmra.mrb[0].mxu0 %v1193
      %v1832 = vpop.f32.mrb[0].mxu0
      %v1833 = vadd.f32 %v1672, %v1832
      %v1834 = vpop.f32.mrb[0].mxu0
      %v1835 = vpop.f32.mrb[0].mxu0
      %v1836 = vadd.f32 %v1675, %v1835
      %v1837 = vpop.f32.mrb[0].mxu0
      %1838 = vmatprep.mubr.bf16.mxu0 %v1261
      %1839 = vmatmul.mubr.bf16.gmra.mrb[0].mxu0 %v1197
      %v1840 = vpop.f32.mrb[0].mxu0
      %v1841 = vadd.f32 %v1680, %v1840
      %v1842 = vpop.f32.mrb[0].mxu0
      %v1843 = vpop.f32.mrb[0].mxu0
      %v1844 = vadd.f32 %v1683, %v1843
      %v1845 = vpop.f32.mrb[0].mxu0
      %1846 = vmatprep.mubr.bf16.mxu0 %v1265
      %1847 = vmatmul.mubr.bf16.gmra.mrb[0].mxu0 %v1201
      %v1848 = vpop.f32.mrb[0].mxu0
      %v1849 = vadd.f32 %v1688, %v1848
      %v1850 = vpop.f32.mrb[0].mxu0
      %v1851 = vpop.f32.mrb[0].mxu0
      %v1852 = vadd.f32 %v1691, %v1851
      %v1853 = vpop.f32.mrb[0].mxu0
      %1854 = vmatprep.mubr.bf16.mxu0 %v1269
      %1855 = vmatmul.mubr.bf16.gmra.mrb[0].mxu0 %v1205
      %v1856 = vpop.f32.mrb[0].mxu0
      %v1857 = vadd.f32 %v1696, %v1856
      %v1858 = vpop.f32.mrb[0].mxu0
      %v1859 = vpop.f32.mrb[0].mxu0
      %v1860 = vadd.f32 %v1699, %v1859
      %v1861 = vpop.f32.mrb[0].mxu0
      %1862 = vdwg.mxu0
      %1863 = vmatprep.subr.bf16.mxu0 0
      %1864 = vmatpush1.bf16.msra.mxu0 %v1453
      %1865 = vmatprep.subr.bf16.mxu0 0
      %1866 = vmatpush1.bf16.msra.mxu0 %v1454
      %1867 = vmatprep.subr.bf16.mxu0 0
      %1868 = vmatpush1.bf16.msra.mxu0 %v1455
      %1869 = vmatprep.subr.bf16.mxu0 0
      %1870 = vmatpush1.bf16.msra.mxu0 %v1456
      %1871 = vmatprep.subr.bf16.mxu0 0
      %1872 = vmatpush1.bf16.msra.mxu0 0
      %1873 = vmatprep.subr.bf16.mxu0 0
      %1874 = vmatpush1.bf16.msra.mxu0 0
      %1875 = vmatprep.subr.bf16.mxu0 0
      %1876 = vmatpush1.bf16.msra.mxu0 0
      %1877 = vmatprep.subr.bf16.mxu0 0
      %1878 = vmatpush1.bf16.msra.mxu0 0
      %1879 = vmatprep.subr.bf16.mxu0 0
      %1880 = vmatpush1.bf16.msra.mxu0 0
      %1881 = vmatprep.subr.bf16.mxu0 0
      %1882 = vmatpush1.bf16.msra.mxu0 0
      %1883 = vmatprep.subr.bf16.mxu0 0
      %1884 = vmatpush1.bf16.msra.mxu0 0
      %1885 = vmatprep.subr.bf16.mxu0 0
      %1886 = vmatpush1.bf16.msra.mxu0 0
      %1887 = vmatprep.subr.bf16.mxu0 0
      %1888 = vmatpush1.bf16.msra.mxu0 0
      %1889 = vmatprep.subr.bf16.mxu0 0
      %1890 = vmatpush1.bf16.msra.mxu0 0
      %1891 = vmatprep.subr.bf16.mxu0 0
      %1892 = vmatpush1.bf16.msra.mxu0 0
      %1893 = vmatprep.subr.bf16.mxu0 0
      %1894 = vmatpush1.bf16.msra.mxu0 0
      %1895 = vmatprep.mubr.bf16.mxu0 0
      %1896 = vmatmul.mubr.bf16.gmra.mrb[0].mxu0 %v1494
      %v1897 = vpop.f32.mrb[0].mxu0
      %v1898 = vadd.f32 %v1737, %v1897
      %v1899 = vpop.f32.mrb[0].mxu0
      %v1900 = vpop.f32.mrb[0].mxu0
      %v1901 = vadd.f32 %v1740, %v1900
      %v1902 = vpop.f32.mrb[0].mxu0
      %1903 = vmatprep.mubr.bf16.mxu0 0
      %1904 = vmatmul.mubr.bf16.gmra.mrb[0].mxu0 %v1497
      %v1905 = vpop.f32.mrb[0].mxu0
      %v1906 = vadd.f32 %v1745, %v1905
      %v1907 = vpop.f32.mrb[0].mxu0
      %v1908 = vpop.f32.mrb[0].mxu0
      %v1909 = vadd.f32 %v1748, %v1908
      %v1910 = vpop.f32.mrb[0].mxu0
      %1911 = vmatprep.mubr.bf16.mxu0 0
      %1912 = vmatmul.mubr.bf16.gmra.mrb[0].mxu0 %v1500
      %v1913 = vpop.f32.mrb[0].mxu0
      %v1914 = vadd.f32 %v1753, %v1913
      %v1915 = vpop.f32.mrb[0].mxu0
      %v1916 = vpop.f32.mrb[0].mxu0
      %v1917 = vadd.f32 %v1756, %v1916
      %v1918 = vpop.f32.mrb[0].mxu0
      %1919 = vmatprep.mubr.bf16.mxu0 0
      %1920 = vmatmul.mubr.bf16.gmra.mrb[0].mxu0 %v1503
      %v1921 = vpop.f32.mrb[0].mxu0
      %v1922 = vadd.f32 %v1761, %v1921
      %v1923 = vpop.f32.mrb[0].mxu0
      %v1924 = vpop.f32.mrb[0].mxu0
      %v1925 = vadd.f32 %v1764, %v1924
      %v1926 = vpop.f32.mrb[0].mxu0
      %1927 = vmatprep.mubr.bf16.mxu0 0
      %1928 = vmatmul.mubr.bf16.gmra.mrb[0].mxu0 %v1506
      %v1929 = vpop.f32.mrb[0].mxu0
      %v1930 = vadd.f32 %v1769, %v1929
      %v1931 = vpop.f32.mrb[0].mxu0
      %v1932 = vpop.f32.mrb[0].mxu0
      %v1933 = vadd.f32 %v1772, %v1932
      %v1934 = vpop.f32.mrb[0].mxu0
      %1935 = vmatprep.mubr.bf16.mxu0 0
      %1936 = vmatmul.mubr.bf16.gmra.mrb[0].mxu0 %v1509
      %v1937 = vpop.f32.mrb[0].mxu0
      %v1938 = vadd.f32 %v1777, %v1937
      %v1939 = vpop.f32.mrb[0].mxu0
      %v1940 = vpop.f32.mrb[0].mxu0
      %v1941 = vadd.f32 %v1780, %v1940
      %v1942 = vpop.f32.mrb[0].mxu0
      %1943 = vmatprep.mubr.bf16.mxu0 0
      %1944 = vmatmul.mubr.bf16.gmra.mrb[0].mxu0 %v1512
      %v1945 = vpop.f32.mrb[0].mxu0
      %v1946 = vadd.f32 %v1785, %v1945
      %v1947 = vpop.f32.mrb[0].mxu0
      %v1948 = vpop.f32.mrb[0].mxu0
      %v1949 = vadd.f32 %v1788, %v1948
      %v1950 = vpop.f32.mrb[0].mxu0
      %1951 = vmatprep.mubr.bf16.mxu0 0
      %1952 = vmatmul.mubr.bf16.gmra.mrb[0].mxu0 %v1515
      %v1953 = vpop.f32.mrb[0].mxu0
      %v1954 = vadd.f32 %v1793, %v1953
      %v1955 = vpop.f32.mrb[0].mxu0
      %v1956 = vpop.f32.mrb[0].mxu0
      %v1957 = vadd.f32 %v1796, %v1956
      %v1958 = vpop.f32.mrb[0].mxu0
      %1959 = vmatprep.mubr.bf16.mxu0 0
      %1960 = vmatmul.mubr.bf16.gmra.mrb[0].mxu0 %v1518
      %v1961 = vpop.f32.mrb[0].mxu0
      %v1962 = vadd.f32 %v1801, %v1961
      %v1963 = vpop.f32.mrb[0].mxu0
      %v1964 = vpop.f32.mrb[0].mxu0
      %v1965 = vadd.f32 %v1804, %v1964
      %v1966 = vpop.f32.mrb[0].mxu0
      %1967 = vmatprep.mubr.bf16.mxu0 0
      %1968 = vmatmul.mubr.bf16.gmra.mrb[0].mxu0 %v1521
      %v1969 = vpop.f32.mrb[0].mxu0
      %v1970 = vadd.f32 %v1809, %v1969
      %v1971 = vpop.f32.mrb[0].mxu0
      %v1972 = vpop.f32.mrb[0].mxu0
      %v1973 = vadd.f32 %v1812, %v1972
      %v1974 = vpop.f32.mrb[0].mxu0
      %1975 = vmatprep.mubr.bf16.mxu0 0
      %1976 = vmatmul.mubr.bf16.gmra.mrb[0].mxu0 %v1524
      %v1977 = vpop.f32.mrb[0].mxu0
      %v1978 = vadd.f32 %v1817, %v1977
      %v1979 = vpop.f32.mrb[0].mxu0
      %v1980 = vpop.f32.mrb[0].mxu0
      %v1981 = vadd.f32 %v1820, %v1980
      %v1982 = vpop.f32.mrb[0].mxu0
      %1983 = vmatprep.mubr.bf16.mxu0 0
      %1984 = vmatmul.mubr.bf16.gmra.mrb[0].mxu0 %v1527
      %v1985 = vpop.f32.mrb[0].mxu0
      %v1986 = vadd.f32 %v1825, %v1985
      %v1987 = vpop.f32.mrb[0].mxu0
      %v1988 = vpop.f32.mrb[0].mxu0
      %v1989 = vadd.f32 %v1828, %v1988
      %v1990 = vpop.f32.mrb[0].mxu0
      %1991 = vmatprep.mubr.bf16.mxu0 0
      %1992 = vmatmul.mubr.bf16.gmra.mrb[0].mxu0 %v1530
      %v1993 = vpop.f32.mrb[0].mxu0
      %v1994 = vadd.f32 %v1833, %v1993
      %v1995 = vpop.f32.mrb[0].mxu0
      %v1996 = vpop.f32.mrb[0].mxu0
      %v1997 = vadd.f32 %v1836, %v1996
      %v1998 = vpop.f32.mrb[0].mxu0
      %1999 = vmatprep.mubr.bf16.mxu0 0
      %2000 = vmatmul.mubr.bf16.gmra.mrb[0].mxu0 %v1533
      %v2001 = vpop.f32.mrb[0].mxu0
      %v2002 = vadd.f32 %v1841, %v2001
      %v2003 = vpop.f32.mrb[0].mxu0
      %v2004 = vpop.f32.mrb[0].mxu0
      %v2005 = vadd.f32 %v1844, %v2004
      %v2006 = vpop.f32.mrb[0].mxu0
      %2007 = vmatprep.mubr.bf16.mxu0 0
      %2008 = vmatmul.mubr.bf16.gmra.mrb[0].mxu0 %v1536
      %v2009 = vpop.f32.mrb[0].mxu0
      %v2010 = vadd.f32 %v1849, %v2009
      %v2011 = vpop.f32.mrb[0].mxu0
      %v2012 = vpop.f32.mrb[0].mxu0
      %v2013 = vadd.f32 %v1852, %v2012
      %v2014 = vpop.f32.mrb[0].mxu0
      %2015 = vmatprep.mubr.bf16.mxu0 0
      %2016 = vmatmul.mubr.bf16.gmra.mrb[0].mxu0 %v1539
      %v2017 = vpop.f32.mrb[0].mxu0
      %v2018 = vadd.f32 %v1857, %v2017
      %v2019 = vpop.f32.mrb[0].mxu0
      %v2020 = vpop.f32.mrb[0].mxu0
      %v2021 = vadd.f32 %v1860, %v2020
      %v2022 = vpop.f32.mrb[0].mxu0
      %2023 = vdwg.mxu0
      %v2024 = vmax.f32 %v1898, 0.0
      %v2025 = vmax.f32 %v1901, 0.0
      %v2026 = vmax.f32 %v1906, 0.0
      %v2027 = vmax.f32 %v1909, 0.0
      %v2028 = vmax.f32 %v1914, 0.0
      %v2029 = vmax.f32 %v1917, 0.0
      %v2030 = vmax.f32 %v1922, 0.0
      %v2031 = vmax.f32 %v1925, 0.0
      %v2032 = vmax.f32 %v1930, 0.0
      %v2033 = vmax.f32 %v1933, 0.0
      %v2034 = vmax.f32 %v1938, 0.0
      %v2035 = vmax.f32 %v1941, 0.0
      %v2036 = vmax.f32 %v1946, 0.0
      %v2037 = vmax.f32 %v1949, 0.0
      %v2038 = vmax.f32 %v1954, 0.0
      %v2039 = vmax.f32 %v1957, 0.0
      %v2040 = vmax.f32 %v1962, 0.0
      %v2041 = vmax.f32 %v1965, 0.0
      %v2042 = vmax.f32 %v1970, 0.0
      %v2043 = vmax.f32 %v1973, 0.0
      %v2044 = vmax.f32 %v1978, 0.0
      %v2045 = vmax.f32 %v1981, 0.0
      %v2046 = vmax.f32 %v1986, 0.0
      %v2047 = vmax.f32 %v1989, 0.0
      %v2048 = vmax.f32 %v1994, 0.0
      %v2049 = vmax.f32 %v1997, 0.0
      %v2050 = vmax.f32 %v2002, 0.0
      %v2051 = vmax.f32 %v2005, 0.0
      %v2052 = vmax.f32 %v2010, 0.0
      %v2053 = vmax.f32 %v2013, 0.0
      %v2054 = vmax.f32 %v2018, 0.0
      %v2055 = vmax.f32 %v2021, 0.0
      %s2056 = scalar_lea.vmem [#allocation2], 24
      %2057 = vst.msk [vmem:[%s2056 + $0x1] sm:$0xff] %vm226, %v2024
      %2058 = vst.msk [vmem:[%s2056 + $0x9] sm:$0xff] %vm226, %v2025
      %2059 = vst.msk [vmem:[%s2056 + $0x19] sm:$0xff] %vm226, %v2026
      %2060 = vst.msk [vmem:[%s2056 + $0x21] sm:$0xff] %vm226, %v2027
      %2061 = vst.msk [vmem:[%s2056 + $0x31] sm:$0xff] %vm226, %v2028
      %2062 = vst.msk [vmem:[%s2056 + $0x39] sm:$0xff] %vm226, %v2029
      %2063 = vst.msk [vmem:[%s2056 + $0x49] sm:$0xff] %vm226, %v2030
      %2064 = vst.msk [vmem:[%s2056 + $0x51] sm:$0xff] %vm226, %v2031
      %2065 = vst.msk [vmem:[%s2056 + $0x61] sm:$0xff] %vm226, %v2032
      %2066 = vst.msk [vmem:[%s2056 + $0x69] sm:$0xff] %vm226, %v2033
      %2067 = vst.msk [vmem:[%s2056 + $0x79] sm:$0xff] %vm226, %v2034
      %2068 = vst.msk [vmem:[%s2056 + $0x81] sm:$0xff] %vm226, %v2035
      %2069 = vst.msk [vmem:[%s2056 + $0x91] sm:$0xff] %vm226, %v2036
      %2070 = vst.msk [vmem:[%s2056 + $0x99] sm:$0xff] %vm226, %v2037
      %2071 = vst.msk [vmem:[%s2056 + $0xa9] sm:$0xff] %vm226, %v2038
      %2072 = vst.msk [vmem:[%s2056 + $0xb1] sm:$0xff] %vm226, %v2039
      %2073 = vst.msk [vmem:[%s2056 + $0xc1] sm:$0xff] %vm226, %v2040
      %2074 = vst.msk [vmem:[%s2056 + $0xc9] sm:$0xff] %vm226, %v2041
      %2075 = vst.msk [vmem:[%s2056 + $0xd9] sm:$0xff] %vm226, %v2042
      %2076 = vst.msk [vmem:[%s2056 + $0xe1] sm:$0xff] %vm226, %v2043
      %2077 = vst.msk [vmem:[%s2056 + $0xf1] sm:$0xff] %vm226, %v2044
      %2078 = vst.msk [vmem:[%s2056 + $0xf9] sm:$0xff] %vm226, %v2045
      %2079 = vst.msk [vmem:[%s2056 + $0x109] sm:$0xff] %vm226, %v2046
      %2080 = vst.msk [vmem:[%s2056 + $0x111] sm:$0xff] %vm226, %v2047
      %2081 = vst.msk [vmem:[%s2056 + $0x121] sm:$0xff] %vm226, %v2048
      %2082 = vst.msk [vmem:[%s2056 + $0x129] sm:$0xff] %vm226, %v2049
      %2083 = vst.msk [vmem:[%s2056 + $0x139] sm:$0xff] %vm226, %v2050
      %2084 = vst.msk [vmem:[%s2056 + $0x141] sm:$0xff] %vm226, %v2051
      %2085 = vst.msk [vmem:[%s2056 + $0x151] sm:$0xff] %vm226, %v2052
      %2086 = vst.msk [vmem:[%s2056 + $0x159] sm:$0xff] %vm226, %v2053
      %2087 = vst.msk [vmem:[%s2056 + $0x169] sm:$0xff] %vm226, %v2054
      %2088 = vst.msk [vmem:[%s2056 + $0x171] sm:$0xff] %vm226, %v2055
      %v2089 = vld [vmem:[%s3] sm:$0xf]
      %v2090 = vld [vmem:[%s3 + $0x4] sm:$0xf]
      %v2091 = vld [vmem:[%s3 + $0x8] sm:$0xf]
      %v2092 = vld [vmem:[%s3 + $0xc] sm:$0xf]
      %v2093 = vld [vmem:[%s3 + $0x10] sm:$0xf]
      %v2094 = vld [vmem:[%s3 + $0x14] sm:$0xf]
      %v2095 = vld [vmem:[%s3 + $0x18] sm:$0xf]
      %v2096 = vld [vmem:[%s3 + $0x1c] sm:$0xf]
      %v2097 = vld [vmem:[%s3 + $0x20] sm:$0xf]
      %v2098 = vld [vmem:[%s3 + $0x24] sm:$0xf]
      %v2099 = vld [vmem:[%s3 + $0x28] sm:$0xf]
      %v2100 = vld [vmem:[%s3 + $0x2c] sm:$0xf]
      %v2101 = vld [vmem:[%s3 + $0x30] sm:$0xf]
      %v2102 = vld [vmem:[%s3 + $0x34] sm:$0xf]
      %v2103 = vld [vmem:[%s3 + $0x38] sm:$0xf]
      %v2104 = vld [vmem:[%s3 + $0x3c] sm:$0xf]
      %v2105 = vld [vmem:[%s3 + $0x40] sm:$0xf]
      %v2106 = vld [vmem:[%s3 + $0x44] sm:$0xf]
      %v2107 = vld [vmem:[%s4] sm:$0x1]
      %v2108 = vld [vmem:[#allocation2] sm:$0xff]
      %v2109 = vld [vmem:[#allocation2 + $0x8] sm:$0xff]
      %v2110 = vld [vmem:[#allocation2 + $0x18] sm:$0xff]
      %v2111 = vld [vmem:[#allocation2 + $0x20] sm:$0xff]
      %v2112 = vld [vmem:[#allocation2 + $0x30] sm:$0xff]
      %v2113 = vld [vmem:[#allocation2 + $0x38] sm:$0xff]
      %v2114 = vld [vmem:[#allocation2 + $0x48] sm:$0xff]
      %v2115 = vld [vmem:[#allocation2 + $0x50] sm:$0xff]
      %v2116 = vld [vmem:[#allocation2 + $0x60] sm:$0xff]
      %v2117 = vld [vmem:[#allocation2 + $0x68] sm:$0xff]
      %v2118 = vld [vmem:[#allocation2 + $0x78] sm:$0xff]
      %v2119 = vld [vmem:[#allocation2 + $0x80] sm:$0xff]
      %v2120 = vld [vmem:[#allocation2 + $0x90] sm:$0xff]
      %v2121 = vld [vmem:[#allocation2 + $0x98] sm:$0xff]
      %v2122 = vld [vmem:[#allocation2 + $0xa8] sm:$0xff]
      %v2123 = vld [vmem:[#allocation2 + $0xb0] sm:$0xff]
      %v2124 = vld [vmem:[#allocation2 + $0xc0] sm:$0xff]
      %v2125 = vld [vmem:[#allocation2 + $0xc8] sm:$0xff]
      %v2126 = vld [vmem:[#allocation2 + $0xd8] sm:$0xff]
      %v2127 = vld [vmem:[#allocation2 + $0xe0] sm:$0xff]
      %v2128 = vld [vmem:[#allocation2 + $0xf0] sm:$0xff]
      %v2129 = vld [vmem:[#allocation2 + $0xf8] sm:$0xff]
      %v2130 = vld [vmem:[#allocation2 + $0x108] sm:$0xff]
      %v2131 = vld [vmem:[#allocation2 + $0x110] sm:$0xff]
      %v2132 = vld [vmem:[#allocation2 + $0x120] sm:$0xff]
      %v2133 = vld [vmem:[#allocation2 + $0x128] sm:$0xff]
      %v2134 = vld [vmem:[#allocation2 + $0x138] sm:$0xff]
      %v2135 = vld [vmem:[#allocation2 + $0x140] sm:$0xff]
      %v2136 = vld [vmem:[#allocation2 + $0x150] sm:$0xff]
      %v2137 = vld [vmem:[#allocation2 + $0x158] sm:$0xff]
      %v2138 = vld [vmem:[#allocation2 + $0x168] sm:$0xff]
      %v2139 = vld [vmem:[#allocation2 + $0x170] sm:$0xff]
      %v2140 = vpack.c.bf16 %v2109, %v2108
      %v2141 = vpack.c.bf16 %v2111, %v2110
      %v2142 = vpack.c.bf16 %v2113, %v2112
      %v2143 = vpack.c.bf16 %v2115, %v2114
      %v2144 = vpack.c.bf16 %v2117, %v2116
      %v2145 = vpack.c.bf16 %v2119, %v2118
      %v2146 = vpack.c.bf16 %v2121, %v2120
      %v2147 = vpack.c.bf16 %v2123, %v2122
      %v2148 = vpack.c.bf16 %v2125, %v2124
      %v2149 = vpack.c.bf16 %v2127, %v2126
      %v2150 = vpack.c.bf16 %v2129, %v2128
      %v2151 = vpack.c.bf16 %v2131, %v2130
      %v2152 = vpack.c.bf16 %v2133, %v2132
      %v2153 = vpack.c.bf16 %v2135, %v2134
      %v2154 = vpack.c.bf16 %v2137, %v2136
      %v2155 = vpack.c.bf16 %v2139, %v2138
      %v2156 = vld [vmem:[#allocation2 + $0x1] sm:$0xff]
      %v2157 = vld [vmem:[#allocation2 + $0x9] sm:$0xff]
      %v2158 = vld [vmem:[#allocation2 + $0x19] sm:$0xff]
      %v2159 = vld [vmem:[#allocation2 + $0x21] sm:$0xff]
      %v2160 = vld [vmem:[#allocation2 + $0x31] sm:$0xff]
      %v2161 = vld [vmem:[#allocation2 + $0x39] sm:$0xff]
      %v2162 = vld [vmem:[#allocation2 + $0x49] sm:$0xff]
      %v2163 = vld [vmem:[#allocation2 + $0x51] sm:$0xff]
      %v2164 = vld [vmem:[#allocation2 + $0x61] sm:$0xff]
      %v2165 = vld [vmem:[#allocation2 + $0x69] sm:$0xff]
      %v2166 = vld [vmem:[#allocation2 + $0x79] sm:$0xff]
      %v2167 = vld [vmem:[#allocation2 + $0x81] sm:$0xff]
      %v2168 = vld [vmem:[#allocation2 + $0x91] sm:$0xff]
      %v2169 = vld [vmem:[#allocation2 + $0x99] sm:$0xff]
      %v2170 = vld [vmem:[#allocation2 + $0xa9] sm:$0xff]
      %v2171 = vld [vmem:[#allocation2 + $0xb1] sm:$0xff]
      %v2172 = vld [vmem:[#allocation2 + $0xc1] sm:$0xff]
      %v2173 = vld [vmem:[#allocation2 + $0xc9] sm:$0xff]
      %v2174 = vld [vmem:[#allocation2 + $0xd9] sm:$0xff]
      %v2175 = vld [vmem:[#allocation2 + $0xe1] sm:$0xff]
      %v2176 = vld [vmem:[#allocation2 + $0xf1] sm:$0xff]
      %v2177 = vld [vmem:[#allocation2 + $0xf9] sm:$0xff]
      %v2178 = vld [vmem:[#allocation2 + $0x109] sm:$0xff]
      %v2179 = vld [vmem:[#allocation2 + $0x111] sm:$0xff]
      %v2180 = vld [vmem:[#allocation2 + $0x121] sm:$0xff]
      %v2181 = vld [vmem:[#allocation2 + $0x129] sm:$0xff]
      %v2182 = vld [vmem:[#allocation2 + $0x139] sm:$0xff]
      %v2183 = vld [vmem:[#allocation2 + $0x141] sm:$0xff]
      %v2184 = vld [vmem:[#allocation2 + $0x151] sm:$0xff]
      %v2185 = vld [vmem:[#allocation2 + $0x159] sm:$0xff]
      %v2186 = vld [vmem:[#allocation2 + $0x169] sm:$0xff]
      %v2187 = vld [vmem:[#allocation2 + $0x171] sm:$0xff]
      %v2188 = vpack.c.bf16 %v2157, %v2156
      %v2189 = vpack.c.bf16 %v2159, %v2158
      %v2190 = vpack.c.bf16 %v2161, %v2160
      %v2191 = vpack.c.bf16 %v2163, %v2162
      %v2192 = vpack.c.bf16 %v2165, %v2164
      %v2193 = vpack.c.bf16 %v2167, %v2166
      %v2194 = vpack.c.bf16 %v2169, %v2168
      %v2195 = vpack.c.bf16 %v2171, %v2170
      %v2196 = vpack.c.bf16 %v2173, %v2172
      %v2197 = vpack.c.bf16 %v2175, %v2174
      %v2198 = vpack.c.bf16 %v2177, %v2176
      %v2199 = vpack.c.bf16 %v2179, %v2178
      %v2200 = vpack.c.bf16 %v2181, %v2180
      %v2201 = vpack.c.bf16 %v2183, %v2182
      %v2202 = vpack.c.bf16 %v2185, %v2184
      %v2203 = vpack.c.bf16 %v2187, %v2186
      %v2204 = vld [vmem:[#allocation2 + $0x2] sm:$0xff]
      %v2205 = vld [vmem:[#allocation2 + $0xa] sm:$0xff]
      %v2206 = vld [vmem:[#allocation2 + $0x1a] sm:$0xff]
      %v2207 = vld [vmem:[#allocation2 + $0x22] sm:$0xff]
      %v2208 = vld [vmem:[#allocation2 + $0x32] sm:$0xff]
      %v2209 = vld [vmem:[#allocation2 + $0x3a] sm:$0xff]
      %v2210 = vld [vmem:[#allocation2 + $0x4a] sm:$0xff]
      %v2211 = vld [vmem:[#allocation2 + $0x52] sm:$0xff]
      %v2212 = vld [vmem:[#allocation2 + $0x62] sm:$0xff]
      %v2213 = vld [vmem:[#allocation2 + $0x6a] sm:$0xff]
      %v2214 = vld [vmem:[#allocation2 + $0x7a] sm:$0xff]
      %v2215 = vld [vmem:[#allocation2 + $0x82] sm:$0xff]
      %v2216 = vld [vmem:[#allocation2 + $0x92] sm:$0xff]
      %v2217 = vld [vmem:[#allocation2 + $0x9a] sm:$0xff]
      %v2218 = vld [vmem:[#allocation2 + $0xaa] sm:$0xff]
      %v2219 = vld [vmem:[#allocation2 + $0xb2] sm:$0xff]
      %v2220 = vld [vmem:[#allocation2 + $0xc2] sm:$0xff]
      %v2221 = vld [vmem:[#allocation2 + $0xca] sm:$0xff]
      %v2222 = vld [vmem:[#allocation2 + $0xda] sm:$0xff]
      %v2223 = vld [vmem:[#allocation2 + $0xe2] sm:$0xff]
      %v2224 = vld [vmem:[#allocation2 + $0xf2] sm:$0xff]
      %v2225 = vld [vmem:[#allocation2 + $0xfa] sm:$0xff]
      %v2226 = vld [vmem:[#allocation2 + $0x10a] sm:$0xff]
      %v2227 = vld [vmem:[#allocation2 + $0x112] sm:$0xff]
      %v2228 = vld [vmem:[#allocation2 + $0x122] sm:$0xff]
      %v2229 = vld [vmem:[#allocation2 + $0x12a] sm:$0xff]
      %v2230 = vld [vmem:[#allocation2 + $0x13a] sm:$0xff]
      %v2231 = vld [vmem:[#allocation2 + $0x142] sm:$0xff]
      %v2232 = vld [vmem:[#allocation2 + $0x152] sm:$0xff]
      %v2233 = vld [vmem:[#allocation2 + $0x15a] sm:$0xff]
      %v2234 = vld [vmem:[#allocation2 + $0x16a] sm:$0xff]
      %v2235 = vld [vmem:[#allocation2 + $0x172] sm:$0xff]
      %v2236 = vpack.c.bf16 %v2205, %v2204
      %v2237 = vpack.c.bf16 %v2207, %v2206
      %v2238 = vpack.c.bf16 %v2209, %v2208
      %v2239 = vpack.c.bf16 %v2211, %v2210
      %v2240 = vpack.c.bf16 %v2213, %v2212
      %v2241 = vpack.c.bf16 %v2215, %v2214
      %v2242 = vpack.c.bf16 %v2217, %v2216
      %v2243 = vpack.c.bf16 %v2219, %v2218
      %v2244 = vpack.c.bf16 %v2221, %v2220
      %v2245 = vpack.c.bf16 %v2223, %v2222
      %v2246 = vpack.c.bf16 %v2225, %v2224
      %v2247 = vpack.c.bf16 %v2227, %v2226
      %v2248 = vpack.c.bf16 %v2229, %v2228
      %v2249 = vpack.c.bf16 %v2231, %v2230
      %v2250 = vpack.c.bf16 %v2233, %v2232
      %v2251 = vpack.c.bf16 %v2235, %v2234
      %v2252 = vld [vmem:[%s2056] sm:$0xff]
      %v2253 = vld [vmem:[%s2056 + $0x8] sm:$0xff]
      %v2254 = vld [vmem:[%s2056 + $0x18] sm:$0xff]
      %v2255 = vld [vmem:[%s2056 + $0x20] sm:$0xff]
      %v2256 = vld [vmem:[%s2056 + $0x30] sm:$0xff]
      %v2257 = vld [vmem:[%s2056 + $0x38] sm:$0xff]
      %v2258 = vld [vmem:[%s2056 + $0x48] sm:$0xff]
      %v2259 = vld [vmem:[%s2056 + $0x50] sm:$0xff]
      %v2260 = vld [vmem:[%s2056 + $0x60] sm:$0xff]
      %v2261 = vld [vmem:[%s2056 + $0x68] sm:$0xff]
      %v2262 = vld [vmem:[%s2056 + $0x78] sm:$0xff]
      %v2263 = vld [vmem:[%s2056 + $0x80] sm:$0xff]
      %v2264 = vld [vmem:[%s2056 + $0x90] sm:$0xff]
      %v2265 = vld [vmem:[%s2056 + $0x98] sm:$0xff]
      %v2266 = vld [vmem:[%s2056 + $0xa8] sm:$0xff]
      %v2267 = vld [vmem:[%s2056 + $0xb0] sm:$0xff]
      %v2268 = vld [vmem:[%s2056 + $0xc0] sm:$0xff]
      %v2269 = vld [vmem:[%s2056 + $0xc8] sm:$0xff]
      %v2270 = vld [vmem:[%s2056 + $0xd8] sm:$0xff]
      %v2271 = vld [vmem:[%s2056 + $0xe0] sm:$0xff]
      %v2272 = vld [vmem:[%s2056 + $0xf0] sm:$0xff]
      %v2273 = vld [vmem:[%s2056 + $0xf8] sm:$0xff]
      %v2274 = vld [vmem:[%s2056 + $0x108] sm:$0xff]
      %v2275 = vld [vmem:[%s2056 + $0x110] sm:$0xff]
      %v2276 = vld [vmem:[%s2056 + $0x120] sm:$0xff]
      %v2277 = vld [vmem:[%s2056 + $0x128] sm:$0xff]
      %v2278 = vld [vmem:[%s2056 + $0x138] sm:$0xff]
      %v2279 = vld [vmem:[%s2056 + $0x140] sm:$0xff]
      %v2280 = vld [vmem:[%s2056 + $0x150] sm:$0xff]
      %v2281 = vld [vmem:[%s2056 + $0x158] sm:$0xff]
      %v2282 = vld [vmem:[%s2056 + $0x168] sm:$0xff]
      %v2283 = vld [vmem:[%s2056 + $0x170] sm:$0xff]
      %v2284 = vpack.c.bf16 %v2253, %v2252
      %v2285 = vpack.c.bf16 %v2255, %v2254
      %v2286 = vpack.c.bf16 %v2257, %v2256
      %v2287 = vpack.c.bf16 %v2259, %v2258
      %v2288 = vpack.c.bf16 %v2261, %v2260
      %v2289 = vpack.c.bf16 %v2263, %v2262
      %v2290 = vpack.c.bf16 %v2265, %v2264
      %v2291 = vpack.c.bf16 %v2267, %v2266
      %v2292 = vpack.c.bf16 %v2269, %v2268
      %v2293 = vpack.c.bf16 %v2271, %v2270
      %v2294 = vpack.c.bf16 %v2273, %v2272
      %v2295 = vpack.c.bf16 %v2275, %v2274
      %v2296 = vpack.c.bf16 %v2277, %v2276
      %v2297 = vpack.c.bf16 %v2279, %v2278
      %v2298 = vpack.c.bf16 %v2281, %v2280
      %v2299 = vpack.c.bf16 %v2283, %v2282
      %v2300 = vld [vmem:[%s2056 + $0x1] sm:$0xff]
      %v2301 = vld [vmem:[%s2056 + $0x9] sm:$0xff]
      %v2302 = vld [vmem:[%s2056 + $0x19] sm:$0xff]
      %v2303 = vld [vmem:[%s2056 + $0x21] sm:$0xff]
      %v2304 = vld [vmem:[%s2056 + $0x31] sm:$0xff]
      %v2305 = vld [vmem:[%s2056 + $0x39] sm:$0xff]
      %v2306 = vld [vmem:[%s2056 + $0x49] sm:$0xff]
      %v2307 = vld [vmem:[%s2056 + $0x51] sm:$0xff]
      %v2308 = vld [vmem:[%s2056 + $0x61] sm:$0xff]
      %v2309 = vld [vmem:[%s2056 + $0x69] sm:$0xff]
      %v2310 = vld [vmem:[%s2056 + $0x79] sm:$0xff]
      %v2311 = vld [vmem:[%s2056 + $0x81] sm:$0xff]
      %v2312 = vld [vmem:[%s2056 + $0x91] sm:$0xff]
      %v2313 = vld [vmem:[%s2056 + $0x99] sm:$0xff]
      %v2314 = vld [vmem:[%s2056 + $0xa9] sm:$0xff]
      %v2315 = vld [vmem:[%s2056 + $0xb1] sm:$0xff]
      %v2316 = vld [vmem:[%s2056 + $0xc1] sm:$0xff]
      %v2317 = vld [vmem:[%s2056 + $0xc9] sm:$0xff]
      %v2318 = vld [vmem:[%s2056 + $0xd9] sm:$0xff]
      %v2319 = vld [vmem:[%s2056 + $0xe1] sm:$0xff]
      %v2320 = vld [vmem:[%s2056 + $0xf1] sm:$0xff]
      %v2321 = vld [vmem:[%s2056 + $0xf9] sm:$0xff]
      %v2322 = vld [vmem:[%s2056 + $0x109] sm:$0xff]
      %v2323 = vld [vmem:[%s2056 + $0x111] sm:$0xff]
      %v2324 = vld [vmem:[%s2056 + $0x121] sm:$0xff]
      %v2325 = vld [vmem:[%s2056 + $0x129] sm:$0xff]
      %v2326 = vld [vmem:[%s2056 + $0x139] sm:$0xff]
      %v2327 = vld [vmem:[%s2056 + $0x141] sm:$0xff]
      %v2328 = vld [vmem:[%s2056 + $0x151] sm:$0xff]
      %v2329 = vld [vmem:[%s2056 + $0x159] sm:$0xff]
      %v2330 = vld [vmem:[%s2056 + $0x169] sm:$0xff]
      %v2331 = vld [vmem:[%s2056 + $0x171] sm:$0xff]
      %v2332 = vpack.c.bf16 %v2301, %v2300
      %v2333 = vpack.c.bf16 %v2303, %v2302
      %v2334 = vpack.c.bf16 %v2305, %v2304
      %v2335 = vpack.c.bf16 %v2307, %v2306
      %v2336 = vpack.c.bf16 %v2309, %v2308
      %v2337 = vpack.c.bf16 %v2311, %v2310
      %v2338 = vpack.c.bf16 %v2313, %v2312
      %v2339 = vpack.c.bf16 %v2315, %v2314
      %v2340 = vpack.c.bf16 %v2317, %v2316
      %v2341 = vpack.c.bf16 %v2319, %v2318
      %v2342 = vpack.c.bf16 %v2321, %v2320
      %v2343 = vpack.c.bf16 %v2323, %v2322
      %v2344 = vpack.c.bf16 %v2325, %v2324
      %v2345 = vpack.c.bf16 %v2327, %v2326
      %v2346 = vpack.c.bf16 %v2329, %v2328
      %v2347 = vpack.c.bf16 %v2331, %v2330
      %v2348 = vld [vmem:[%s2056 + $0x2] sm:$0xff]
      %v2349 = vld [vmem:[%s2056 + $0xa] sm:$0xff]
      %v2350 = vld [vmem:[%s2056 + $0x1a] sm:$0xff]
      %v2351 = vld [vmem:[%s2056 + $0x22] sm:$0xff]
      %v2352 = vld [vmem:[%s2056 + $0x32] sm:$0xff]
      %v2353 = vld [vmem:[%s2056 + $0x3a] sm:$0xff]
      %v2354 = vld [vmem:[%s2056 + $0x4a] sm:$0xff]
      %v2355 = vld [vmem:[%s2056 + $0x52] sm:$0xff]
      %v2356 = vld [vmem:[%s2056 + $0x62] sm:$0xff]
      %v2357 = vld [vmem:[%s2056 + $0x6a] sm:$0xff]
      %v2358 = vld [vmem:[%s2056 + $0x7a] sm:$0xff]
      %v2359 = vld [vmem:[%s2056 + $0x82] sm:$0xff]
      %v2360 = vld [vmem:[%s2056 + $0x92] sm:$0xff]
      %v2361 = vld [vmem:[%s2056 + $0x9a] sm:$0xff]
      %v2362 = vld [vmem:[%s2056 + $0xaa] sm:$0xff]
      %v2363 = vld [vmem:[%s2056 + $0xb2] sm:$0xff]
      %v2364 = vld [vmem:[%s2056 + $0xc2] sm:$0xff]
      %v2365 = vld [vmem:[%s2056 + $0xca] sm:$0xff]
      %v2366 = vld [vmem:[%s2056 + $0xda] sm:$0xff]
      %v2367 = vld [vmem:[%s2056 + $0xe2] sm:$0xff]
      %v2368 = vld [vmem:[%s2056 + $0xf2] sm:$0xff]
      %v2369 = vld [vmem:[%s2056 + $0xfa] sm:$0xff]
      %v2370 = vld [vmem:[%s2056 + $0x10a] sm:$0xff]
      %v2371 = vld [vmem:[%s2056 + $0x112] sm:$0xff]
      %v2372 = vld [vmem:[%s2056 + $0x122] sm:$0xff]
      %v2373 = vld [vmem:[%s2056 + $0x12a] sm:$0xff]
      %v2374 = vld [vmem:[%s2056 + $0x13a] sm:$0xff]
      %v2375 = vld [vmem:[%s2056 + $0x142] sm:$0xff]
      %v2376 = vld [vmem:[%s2056 + $0x152] sm:$0xff]
      %v2377 = vld [vmem:[%s2056 + $0x15a] sm:$0xff]
      %v2378 = vld [vmem:[%s2056 + $0x16a] sm:$0xff]
      %v2379 = vld [vmem:[%s2056 + $0x172] sm:$0xff]
      %v2380 = vpack.c.bf16 %v2349, %v2348
      %v2381 = vpack.c.bf16 %v2351, %v2350
      %v2382 = vpack.c.bf16 %v2353, %v2352
      %v2383 = vpack.c.bf16 %v2355, %v2354
      %v2384 = vpack.c.bf16 %v2357, %v2356
      %v2385 = vpack.c.bf16 %v2359, %v2358
      %v2386 = vpack.c.bf16 %v2361, %v2360
      %v2387 = vpack.c.bf16 %v2363, %v2362
      %v2388 = vpack.c.bf16 %v2365, %v2364
      %v2389 = vpack.c.bf16 %v2367, %v2366
      %v2390 = vpack.c.bf16 %v2369, %v2368
      %v2391 = vpack.c.bf16 %v2371, %v2370
      %v2392 = vpack.c.bf16 %v2373, %v2372
      %v2393 = vpack.c.bf16 %v2375, %v2374
      %v2394 = vpack.c.bf16 %v2377, %v2376
      %v2395 = vpack.c.bf16 %v2379, %v2378
      %s2396 = scalar_lea.vmem [#allocation2], 48
      %v2397 = vld [vmem:[%s2396] sm:$0xff]
      %v2398 = vld [vmem:[%s2396 + $0x8] sm:$0xff]
      %v2399 = vld [vmem:[%s2396 + $0x18] sm:$0xff]
      %v2400 = vld [vmem:[%s2396 + $0x20] sm:$0xff]
      %v2401 = vld [vmem:[%s2396 + $0x30] sm:$0xff]
      %v2402 = vld [vmem:[%s2396 + $0x38] sm:$0xff]
      %v2403 = vld [vmem:[%s2396 + $0x48] sm:$0xff]
      %v2404 = vld [vmem:[%s2396 + $0x50] sm:$0xff]
      %v2405 = vld [vmem:[%s2396 + $0x60] sm:$0xff]
      %v2406 = vld [vmem:[%s2396 + $0x68] sm:$0xff]
      %v2407 = vld [vmem:[%s2396 + $0x78] sm:$0xff]
      %v2408 = vld [vmem:[%s2396 + $0x80] sm:$0xff]
      %v2409 = vld [vmem:[%s2396 + $0x90] sm:$0xff]
      %v2410 = vld [vmem:[%s2396 + $0x98] sm:$0xff]
      %v2411 = vld [vmem:[%s2396 + $0xa8] sm:$0xff]
      %v2412 = vld [vmem:[%s2396 + $0xb0] sm:$0xff]
      %v2413 = vld [vmem:[%s2396 + $0xc0] sm:$0xff]
      %v2414 = vld [vmem:[%s2396 + $0xc8] sm:$0xff]
      %v2415 = vld [vmem:[%s2396 + $0xd8] sm:$0xff]
      %v2416 = vld [vmem:[%s2396 + $0xe0] sm:$0xff]
      %v2417 = vld [vmem:[%s2396 + $0xf0] sm:$0xff]
      %v2418 = vld [vmem:[%s2396 + $0xf8] sm:$0xff]
      %v2419 = vld [vmem:[%s2396 + $0x108] sm:$0xff]
      %v2420 = vld [vmem:[%s2396 + $0x110] sm:$0xff]
      %v2421 = vld [vmem:[%s2396 + $0x120] sm:$0xff]
      %v2422 = vld [vmem:[%s2396 + $0x128] sm:$0xff]
      %v2423 = vld [vmem:[%s2396 + $0x138] sm:$0xff]
      %v2424 = vld [vmem:[%s2396 + $0x140] sm:$0xff]
      %v2425 = vld [vmem:[%s2396 + $0x150] sm:$0xff]
      %v2426 = vld [vmem:[%s2396 + $0x158] sm:$0xff]
      %v2427 = vld [vmem:[%s2396 + $0x168] sm:$0xff]
      %v2428 = vld [vmem:[%s2396 + $0x170] sm:$0xff]
      %v2429 = vpack.c.bf16 %v2398, %v2397
      %v2430 = vpack.c.bf16 %v2400, %v2399
      %v2431 = vpack.c.bf16 %v2402, %v2401
      %v2432 = vpack.c.bf16 %v2404, %v2403
      %v2433 = vpack.c.bf16 %v2406, %v2405
      %v2434 = vpack.c.bf16 %v2408, %v2407
      %v2435 = vpack.c.bf16 %v2410, %v2409
      %v2436 = vpack.c.bf16 %v2412, %v2411
      %v2437 = vpack.c.bf16 %v2414, %v2413
      %v2438 = vpack.c.bf16 %v2416, %v2415
      %v2439 = vpack.c.bf16 %v2418, %v2417
      %v2440 = vpack.c.bf16 %v2420, %v2419
      %v2441 = vpack.c.bf16 %v2422, %v2421
      %v2442 = vpack.c.bf16 %v2424, %v2423
      %v2443 = vpack.c.bf16 %v2426, %v2425
      %v2444 = vpack.c.bf16 %v2428, %v2427
      %v2445 = vld [vmem:[%s2396 + $0x1] sm:$0xff]
      %v2446 = vld [vmem:[%s2396 + $0x9] sm:$0xff]
      %v2447 = vld [vmem:[%s2396 + $0x19] sm:$0xff]
      %v2448 = vld [vmem:[%s2396 + $0x21] sm:$0xff]
      %v2449 = vld [vmem:[%s2396 + $0x31] sm:$0xff]
      %v2450 = vld [vmem:[%s2396 + $0x39] sm:$0xff]
      %v2451 = vld [vmem:[%s2396 + $0x49] sm:$0xff]
      %v2452 = vld [vmem:[%s2396 + $0x51] sm:$0xff]
      %v2453 = vld [vmem:[%s2396 + $0x61] sm:$0xff]
      %v2454 = vld [vmem:[%s2396 + $0x69] sm:$0xff]
      %v2455 = vld [vmem:[%s2396 + $0x79] sm:$0xff]
      %v2456 = vld [vmem:[%s2396 + $0x81] sm:$0xff]
      %v2457 = vld [vmem:[%s2396 + $0x91] sm:$0xff]
      %v2458 = vld [vmem:[%s2396 + $0x99] sm:$0xff]
      %v2459 = vld [vmem:[%s2396 + $0xa9] sm:$0xff]
      %v2460 = vld [vmem:[%s2396 + $0xb1] sm:$0xff]
      %v2461 = vld [vmem:[%s2396 + $0xc1] sm:$0xff]
      %v2462 = vld [vmem:[%s2396 + $0xc9] sm:$0xff]
      %v2463 = vld [vmem:[%s2396 + $0xd9] sm:$0xff]
      %v2464 = vld [vmem:[%s2396 + $0xe1] sm:$0xff]
      %v2465 = vld [vmem:[%s2396 + $0xf1] sm:$0xff]
      %v2466 = vld [vmem:[%s2396 + $0xf9] sm:$0xff]
      %v2467 = vld [vmem:[%s2396 + $0x109] sm:$0xff]
      %v2468 = vld [vmem:[%s2396 + $0x111] sm:$0xff]
      %v2469 = vld [vmem:[%s2396 + $0x121] sm:$0xff]
      %v2470 = vld [vmem:[%s2396 + $0x129] sm:$0xff]
      %v2471 = vld [vmem:[%s2396 + $0x139] sm:$0xff]
      %v2472 = vld [vmem:[%s2396 + $0x141] sm:$0xff]
      %v2473 = vld [vmem:[%s2396 + $0x151] sm:$0xff]
      %v2474 = vld [vmem:[%s2396 + $0x159] sm:$0xff]
      %v2475 = vld [vmem:[%s2396 + $0x169] sm:$0xff]
      %v2476 = vld [vmem:[%s2396 + $0x171] sm:$0xff]
      %v2477 = vpack.c.bf16 %v2446, %v2445
      %v2478 = vpack.c.bf16 %v2448, %v2447
      %v2479 = vpack.c.bf16 %v2450, %v2449
      %v2480 = vpack.c.bf16 %v2452, %v2451
      %v2481 = vpack.c.bf16 %v2454, %v2453
      %v2482 = vpack.c.bf16 %v2456, %v2455
      %v2483 = vpack.c.bf16 %v2458, %v2457
      %v2484 = vpack.c.bf16 %v2460, %v2459
      %v2485 = vpack.c.bf16 %v2462, %v2461
      %v2486 = vpack.c.bf16 %v2464, %v2463
      %v2487 = vpack.c.bf16 %v2466, %v2465
      %v2488 = vpack.c.bf16 %v2468, %v2467
      %v2489 = vpack.c.bf16 %v2470, %v2469
      %v2490 = vpack.c.bf16 %v2472, %v2471
      %v2491 = vpack.c.bf16 %v2474, %v2473
      %v2492 = vpack.c.bf16 %v2476, %v2475
      %v2493 = vld [vmem:[%s2396 + $0x2] sm:$0xff]
      %v2494 = vld [vmem:[%s2396 + $0xa] sm:$0xff]
      %v2495 = vld [vmem:[%s2396 + $0x1a] sm:$0xff]
      %v2496 = vld [vmem:[%s2396 + $0x22] sm:$0xff]
      %v2497 = vld [vmem:[%s2396 + $0x32] sm:$0xff]
      %v2498 = vld [vmem:[%s2396 + $0x3a] sm:$0xff]
      %v2499 = vld [vmem:[%s2396 + $0x4a] sm:$0xff]
      %v2500 = vld [vmem:[%s2396 + $0x52] sm:$0xff]
      %v2501 = vld [vmem:[%s2396 + $0x62] sm:$0xff]
      %v2502 = vld [vmem:[%s2396 + $0x6a] sm:$0xff]
      %v2503 = vld [vmem:[%s2396 + $0x7a] sm:$0xff]
      %v2504 = vld [vmem:[%s2396 + $0x82] sm:$0xff]
      %v2505 = vld [vmem:[%s2396 + $0x92] sm:$0xff]
      %v2506 = vld [vmem:[%s2396 + $0x9a] sm:$0xff]
      %v2507 = vld [vmem:[%s2396 + $0xaa] sm:$0xff]
      %v2508 = vld [vmem:[%s2396 + $0xb2] sm:$0xff]
      %v2509 = vld [vmem:[%s2396 + $0xc2] sm:$0xff]
      %v2510 = vld [vmem:[%s2396 + $0xca] sm:$0xff]
      %v2511 = vld [vmem:[%s2396 + $0xda] sm:$0xff]
      %v2512 = vld [vmem:[%s2396 + $0xe2] sm:$0xff]
      %v2513 = vld [vmem:[%s2396 + $0xf2] sm:$0xff]
      %v2514 = vld [vmem:[%s2396 + $0xfa] sm:$0xff]
      %v2515 = vld [vmem:[%s2396 + $0x10a] sm:$0xff]
      %v2516 = vld [vmem:[%s2396 + $0x112] sm:$0xff]
      %v2517 = vld [vmem:[%s2396 + $0x122] sm:$0xff]
      %v2518 = vld [vmem:[%s2396 + $0x12a] sm:$0xff]
      %v2519 = vld [vmem:[%s2396 + $0x13a] sm:$0xff]
      %v2520 = vld [vmem:[%s2396 + $0x142] sm:$0xff]
      %v2521 = vld [vmem:[%s2396 + $0x152] sm:$0xff]
      %v2522 = vld [vmem:[%s2396 + $0x15a] sm:$0xff]
      %v2523 = vld [vmem:[%s2396 + $0x16a] sm:$0xff]
      %v2524 = vld [vmem:[%s2396 + $0x172] sm:$0xff]
      %v2525 = vpack.c.bf16 %v2494, %v2493
      %v2526 = vpack.c.bf16 %v2496, %v2495
      %v2527 = vpack.c.bf16 %v2498, %v2497
      %v2528 = vpack.c.bf16 %v2500, %v2499
      %v2529 = vpack.c.bf16 %v2502, %v2501
      %v2530 = vpack.c.bf16 %v2504, %v2503
      %v2531 = vpack.c.bf16 %v2506, %v2505
      %v2532 = vpack.c.bf16 %v2508, %v2507
      %v2533 = vpack.c.bf16 %v2510, %v2509
      %v2534 = vpack.c.bf16 %v2512, %v2511
      %v2535 = vpack.c.bf16 %v2514, %v2513
      %v2536 = vpack.c.bf16 %v2516, %v2515
      %v2537 = vpack.c.bf16 %v2518, %v2517
      %v2538 = vpack.c.bf16 %v2520, %v2519
      %v2539 = vpack.c.bf16 %v2522, %v2521
      %v2540 = vpack.c.bf16 %v2524, %v2523
      %2557 = vrot.lane.b32.xlu0 %v2188, 16
      %v2558 = vpop.permute.xlu0 %2557
      %2559 = vrot.lane.b32.xlu0 %v2189, 16
      %v2560 = vpop.permute.xlu0 %2559
      %2561 = vrot.lane.b32.xlu0 %v2190, 16
      %v2562 = vpop.permute.xlu0 %2561
      %2563 = vrot.lane.b32.xlu0 %v2191, 16
      %v2564 = vpop.permute.xlu0 %2563
      %2565 = vrot.lane.b32.xlu0 %v2192, 16
      %v2566 = vpop.permute.xlu0 %2565
      %2567 = vrot.lane.b32.xlu0 %v2193, 16
      %v2568 = vpop.permute.xlu0 %2567
      %2569 = vrot.lane.b32.xlu0 %v2194, 16
      %v2570 = vpop.permute.xlu0 %2569
      %2571 = vrot.lane.b32.xlu0 %v2195, 16
      %v2572 = vpop.permute.xlu0 %2571
      %2573 = vrot.lane.b32.xlu0 %v2196, 16
      %v2574 = vpop.permute.xlu0 %2573
      %2575 = vrot.lane.b32.xlu0 %v2197, 16
      %v2576 = vpop.permute.xlu0 %2575
      %2577 = vrot.lane.b32.xlu0 %v2198, 16
      %v2578 = vpop.permute.xlu0 %2577
      %2579 = vrot.lane.b32.xlu0 %v2199, 16
      %v2580 = vpop.permute.xlu0 %2579
      %2581 = vrot.lane.b32.xlu0 %v2200, 16
      %v2582 = vpop.permute.xlu0 %2581
      %2583 = vrot.lane.b32.xlu0 %v2201, 16
      %v2584 = vpop.permute.xlu0 %2583
      %2585 = vrot.lane.b32.xlu0 %v2202, 16
      %v2586 = vpop.permute.xlu0 %2585
      %2587 = vrot.lane.b32.xlu0 %v2203, 16
      %v2588 = vpop.permute.xlu0 %2587
      %2605 = vrot.lane.b32.xlu0 %v2236, 32
      %v2606 = vpop.permute.xlu0 %2605
      %2607 = vrot.lane.b32.xlu0 %v2237, 32
      %v2608 = vpop.permute.xlu0 %2607
      %2609 = vrot.lane.b32.xlu0 %v2238, 32
      %v2610 = vpop.permute.xlu0 %2609
      %2611 = vrot.lane.b32.xlu0 %v2239, 32
      %v2612 = vpop.permute.xlu0 %2611
      %2613 = vrot.lane.b32.xlu0 %v2240, 32
      %v2614 = vpop.permute.xlu0 %2613
      %2615 = vrot.lane.b32.xlu0 %v2241, 32
      %v2616 = vpop.permute.xlu0 %2615
      %2617 = vrot.lane.b32.xlu0 %v2242, 32
      %v2618 = vpop.permute.xlu0 %2617
      %2619 = vrot.lane.b32.xlu0 %v2243, 32
      %v2620 = vpop.permute.xlu0 %2619
      %2621 = vrot.lane.b32.xlu0 %v2244, 32
      %v2622 = vpop.permute.xlu0 %2621
      %2623 = vrot.lane.b32.xlu0 %v2245, 32
      %v2624 = vpop.permute.xlu0 %2623
      %2625 = vrot.lane.b32.xlu0 %v2246, 32
      %v2626 = vpop.permute.xlu0 %2625
      %2627 = vrot.lane.b32.xlu0 %v2247, 32
      %v2628 = vpop.permute.xlu0 %2627
      %2629 = vrot.lane.b32.xlu0 %v2248, 32
      %v2630 = vpop.permute.xlu0 %2629
      %2631 = vrot.lane.b32.xlu0 %v2249, 32
      %v2632 = vpop.permute.xlu0 %2631
      %2633 = vrot.lane.b32.xlu0 %v2250, 32
      %v2634 = vpop.permute.xlu0 %2633
      %2635 = vrot.lane.b32.xlu0 %v2251, 32
      %v2636 = vpop.permute.xlu0 %2635
      %2653 = vrot.lane.b32.xlu0 %v2284, 48
      %v2654 = vpop.permute.xlu0 %2653
      %2655 = vrot.lane.b32.xlu0 %v2285, 48
      %v2656 = vpop.permute.xlu0 %2655
      %2657 = vrot.lane.b32.xlu0 %v2286, 48
      %v2658 = vpop.permute.xlu0 %2657
      %2659 = vrot.lane.b32.xlu0 %v2287, 48
      %v2660 = vpop.permute.xlu0 %2659
      %2661 = vrot.lane.b32.xlu0 %v2288, 48
      %v2662 = vpop.permute.xlu0 %2661
      %2663 = vrot.lane.b32.xlu0 %v2289, 48
      %v2664 = vpop.permute.xlu0 %2663
      %2665 = vrot.lane.b32.xlu0 %v2290, 48
      %v2666 = vpop.permute.xlu0 %2665
      %2667 = vrot.lane.b32.xlu0 %v2291, 48
      %v2668 = vpop.permute.xlu0 %2667
      %2669 = vrot.lane.b32.xlu0 %v2292, 48
      %v2670 = vpop.permute.xlu0 %2669
      %2671 = vrot.lane.b32.xlu0 %v2293, 48
      %v2672 = vpop.permute.xlu0 %2671
      %2673 = vrot.lane.b32.xlu0 %v2294, 48
      %v2674 = vpop.permute.xlu0 %2673
      %2675 = vrot.lane.b32.xlu0 %v2295, 48
      %v2676 = vpop.permute.xlu0 %2675
      %2677 = vrot.lane.b32.xlu0 %v2296, 48
      %v2678 = vpop.permute.xlu0 %2677
      %2679 = vrot.lane.b32.xlu0 %v2297, 48
      %v2680 = vpop.permute.xlu0 %2679
      %2681 = vrot.lane.b32.xlu0 %v2298, 48
      %v2682 = vpop.permute.xlu0 %2681
      %2683 = vrot.lane.b32.xlu0 %v2299, 48
      %v2684 = vpop.permute.xlu0 %2683
      %2701 = vrot.lane.b32.xlu0 %v2332, 64
      %v2702 = vpop.permute.xlu0 %2701
      %2703 = vrot.lane.b32.xlu0 %v2333, 64
      %v2704 = vpop.permute.xlu0 %2703
      %2705 = vrot.lane.b32.xlu0 %v2334, 64
      %v2706 = vpop.permute.xlu0 %2705
      %2707 = vrot.lane.b32.xlu0 %v2335, 64
      %v2708 = vpop.permute.xlu0 %2707
      %2709 = vrot.lane.b32.xlu0 %v2336, 64
      %v2710 = vpop.permute.xlu0 %2709
      %2711 = vrot.lane.b32.xlu0 %v2337, 64
      %v2712 = vpop.permute.xlu0 %2711
      %2713 = vrot.lane.b32.xlu0 %v2338, 64
      %v2714 = vpop.permute.xlu0 %2713
      %2715 = vrot.lane.b32.xlu0 %v2339, 64
      %v2716 = vpop.permute.xlu0 %2715
      %2717 = vrot.lane.b32.xlu0 %v2340, 64
      %v2718 = vpop.permute.xlu0 %2717
      %2719 = vrot.lane.b32.xlu0 %v2341, 64
      %v2720 = vpop.permute.xlu0 %2719
      %2721 = vrot.lane.b32.xlu0 %v2342, 64
      %v2722 = vpop.permute.xlu0 %2721
      %2723 = vrot.lane.b32.xlu0 %v2343, 64
      %v2724 = vpop.permute.xlu0 %2723
      %2725 = vrot.lane.b32.xlu0 %v2344, 64
      %v2726 = vpop.permute.xlu0 %2725
      %2727 = vrot.lane.b32.xlu0 %v2345, 64
      %v2728 = vpop.permute.xlu0 %2727
      %2729 = vrot.lane.b32.xlu0 %v2346, 64
      %v2730 = vpop.permute.xlu0 %2729
      %2731 = vrot.lane.b32.xlu0 %v2347, 64
      %v2732 = vpop.permute.xlu0 %2731
      %2749 = vrot.lane.b32.xlu0 %v2380, 80
      %v2750 = vpop.permute.xlu0 %2749
      %2751 = vrot.lane.b32.xlu0 %v2381, 80
      %v2752 = vpop.permute.xlu0 %2751
      %2753 = vrot.lane.b32.xlu0 %v2382, 80
      %v2754 = vpop.permute.xlu0 %2753
      %2755 = vrot.lane.b32.xlu0 %v2383, 80
      %v2756 = vpop.permute.xlu0 %2755
      %2757 = vrot.lane.b32.xlu0 %v2384, 80
      %v2758 = vpop.permute.xlu0 %2757
      %2759 = vrot.lane.b32.xlu0 %v2385, 80
      %v2760 = vpop.permute.xlu0 %2759
      %2761 = vrot.lane.b32.xlu0 %v2386, 80
      %v2762 = vpop.permute.xlu0 %2761
      %2763 = vrot.lane.b32.xlu0 %v2387, 80
      %v2764 = vpop.permute.xlu0 %2763
      %2765 = vrot.lane.b32.xlu0 %v2388, 80
      %v2766 = vpop.permute.xlu0 %2765
      %2767 = vrot.lane.b32.xlu0 %v2389, 80
      %v2768 = vpop.permute.xlu0 %2767
      %2769 = vrot.lane.b32.xlu0 %v2390, 80
      %v2770 = vpop.permute.xlu0 %2769
      %2771 = vrot.lane.b32.xlu0 %v2391, 80
      %v2772 = vpop.permute.xlu0 %2771
      %2773 = vrot.lane.b32.xlu0 %v2392, 80
      %v2774 = vpop.permute.xlu0 %2773
      %2775 = vrot.lane.b32.xlu0 %v2393, 80
      %v2776 = vpop.permute.xlu0 %2775
      %2777 = vrot.lane.b32.xlu0 %v2394, 80
      %v2778 = vpop.permute.xlu0 %2777
      %2779 = vrot.lane.b32.xlu0 %v2395, 80
      %v2780 = vpop.permute.xlu0 %2779
      %2797 = vrot.lane.b32.xlu0 %v2429, 96
      %v2798 = vpop.permute.xlu0 %2797
      %2799 = vrot.lane.b32.xlu0 %v2430, 96
      %v2800 = vpop.permute.xlu0 %2799
      %2801 = vrot.lane.b32.xlu0 %v2431, 96
      %v2802 = vpop.permute.xlu0 %2801
      %2803 = vrot.lane.b32.xlu0 %v2432, 96
      %v2804 = vpop.permute.xlu0 %2803
      %2805 = vrot.lane.b32.xlu0 %v2433, 96
      %v2806 = vpop.permute.xlu0 %2805
      %2807 = vrot.lane.b32.xlu0 %v2434, 96
      %v2808 = vpop.permute.xlu0 %2807
      %2809 = vrot.lane.b32.xlu0 %v2435, 96
      %v2810 = vpop.permute.xlu0 %2809
      %2811 = vrot.lane.b32.xlu0 %v2436, 96
      %v2812 = vpop.permute.xlu0 %2811
      %2813 = vrot.lane.b32.xlu0 %v2437, 96
      %v2814 = vpop.permute.xlu0 %2813
      %2815 = vrot.lane.b32.xlu0 %v2438, 96
      %v2816 = vpop.permute.xlu0 %2815
      %2817 = vrot.lane.b32.xlu0 %v2439, 96
      %v2818 = vpop.permute.xlu0 %2817
      %2819 = vrot.lane.b32.xlu0 %v2440, 96
      %v2820 = vpop.permute.xlu0 %2819
      %2821 = vrot.lane.b32.xlu0 %v2441, 96
      %v2822 = vpop.permute.xlu0 %2821
      %2823 = vrot.lane.b32.xlu0 %v2442, 96
      %v2824 = vpop.permute.xlu0 %2823
      %2825 = vrot.lane.b32.xlu0 %v2443, 96
      %v2826 = vpop.permute.xlu0 %2825
      %2827 = vrot.lane.b32.xlu0 %v2444, 96
      %v2828 = vpop.permute.xlu0 %2827
      %2845 = vrot.lane.b32.xlu0 %v2477, 112
      %v2846 = vpop.permute.xlu0 %2845
      %2847 = vrot.lane.b32.xlu0 %v2478, 112
      %v2848 = vpop.permute.xlu0 %2847
      %2849 = vrot.lane.b32.xlu0 %v2479, 112
      %v2850 = vpop.permute.xlu0 %2849
      %2851 = vrot.lane.b32.xlu0 %v2480, 112
      %v2852 = vpop.permute.xlu0 %2851
      %2853 = vrot.lane.b32.xlu0 %v2481, 112
      %v2854 = vpop.permute.xlu0 %2853
      %2855 = vrot.lane.b32.xlu0 %v2482, 112
      %v2856 = vpop.permute.xlu0 %2855
      %2857 = vrot.lane.b32.xlu0 %v2483, 112
      %v2858 = vpop.permute.xlu0 %2857
      %2859 = vrot.lane.b32.xlu0 %v2484, 112
      %v2860 = vpop.permute.xlu0 %2859
      %2861 = vrot.lane.b32.xlu0 %v2485, 112
      %v2862 = vpop.permute.xlu0 %2861
      %2863 = vrot.lane.b32.xlu0 %v2486, 112
      %v2864 = vpop.permute.xlu0 %2863
      %2865 = vrot.lane.b32.xlu0 %v2487, 112
      %v2866 = vpop.permute.xlu0 %2865
      %2867 = vrot.lane.b32.xlu0 %v2488, 112
      %v2868 = vpop.permute.xlu0 %2867
      %2869 = vrot.lane.b32.xlu0 %v2489, 112
      %v2870 = vpop.permute.xlu0 %2869
      %2871 = vrot.lane.b32.xlu0 %v2490, 112
      %v2872 = vpop.permute.xlu0 %2871
      %2873 = vrot.lane.b32.xlu0 %v2491, 112
      %v2874 = vpop.permute.xlu0 %2873
      %2875 = vrot.lane.b32.xlu0 %v2492, 112
      %v2876 = vpop.permute.xlu0 %2875
      %v2879 = vsel %vm226, %v2140, %v2558
      %v2882 = vsel %vm226, %v2141, %v2560
      %v2885 = vsel %vm226, %v2142, %v2562
      %v2888 = vsel %vm226, %v2143, %v2564
      %v2891 = vsel %vm226, %v2144, %v2566
      %v2894 = vsel %vm226, %v2145, %v2568
      %v2897 = vsel %vm226, %v2146, %v2570
      %v2900 = vsel %vm226, %v2147, %v2572
      %v2903 = vsel %vm226, %v2148, %v2574
      %v2906 = vsel %vm226, %v2149, %v2576
      %v2909 = vsel %vm226, %v2150, %v2578
      %v2912 = vsel %vm226, %v2151, %v2580
      %v2915 = vsel %vm226, %v2152, %v2582
      %v2918 = vsel %vm226, %v2153, %v2584
      %v2921 = vsel %vm226, %v2154, %v2586
      %v2924 = vsel %vm226, %v2155, %v2588
      %vm2925 = vcmask 261120
      %v2927 = vsel %vm2925, %v2879, %v2606
      %v2929 = vsel %vm2925, %v2882, %v2608
      %v2931 = vsel %vm2925, %v2885, %v2610
      %v2933 = vsel %vm2925, %v2888, %v2612
      %v2935 = vsel %vm2925, %v2891, %v2614
      %v2937 = vsel %vm2925, %v2894, %v2616
      %v2939 = vsel %vm2925, %v2897, %v2618
      %v2941 = vsel %vm2925, %v2900, %v2620
      %v2943 = vsel %vm2925, %v2903, %v2622
      %v2945 = vsel %vm2925, %v2906, %v2624
      %v2947 = vsel %vm2925, %v2909, %v2626
      %v2949 = vsel %vm2925, %v2912, %v2628
      %v2951 = vsel %vm2925, %v2915, %v2630
      %v2953 = vsel %vm2925, %v2918, %v2632
      %v2955 = vsel %vm2925, %v2921, %v2634
      %v2957 = vsel %vm2925, %v2924, %v2636
      %vm2958 = vcmask 392192
      %v2960 = vsel %vm2958, %v2927, %v2654
      %v2962 = vsel %vm2958, %v2929, %v2656
      %v2964 = vsel %vm2958, %v2931, %v2658
      %v2966 = vsel %vm2958, %v2933, %v2660
      %v2968 = vsel %vm2958, %v2935, %v2662
      %v2970 = vsel %vm2958, %v2937, %v2664
      %v2972 = vsel %vm2958, %v2939, %v2666
      %v2974 = vsel %vm2958, %v2941, %v2668
      %v2976 = vsel %vm2958, %v2943, %v2670
      %v2978 = vsel %vm2958, %v2945, %v2672
      %v2980 = vsel %vm2958, %v2947, %v2674
      %v2982 = vsel %vm2958, %v2949, %v2676
      %v2984 = vsel %vm2958, %v2951, %v2678
      %v2986 = vsel %vm2958, %v2953, %v2680
      %v2988 = vsel %vm2958, %v2955, %v2682
      %v2990 = vsel %vm2958, %v2957, %v2684
      %v2992 = vsel %vm1014, %v2960, %v2702
      %v2994 = vsel %vm1014, %v2962, %v2704
      %v2996 = vsel %vm1014, %v2964, %v2706
      %v2998 = vsel %vm1014, %v2966, %v2708
      %v3000 = vsel %vm1014, %v2968, %v2710
      %v3002 = vsel %vm1014, %v2970, %v2712
      %v3004 = vsel %vm1014, %v2972, %v2714
      %v3006 = vsel %vm1014, %v2974, %v2716
      %v3008 = vsel %vm1014, %v2976, %v2718
      %v3010 = vsel %vm1014, %v2978, %v2720
      %v3012 = vsel %vm1014, %v2980, %v2722
      %v3014 = vsel %vm1014, %v2982, %v2724
      %v3016 = vsel %vm1014, %v2984, %v2726
      %v3018 = vsel %vm1014, %v2986, %v2728
      %v3020 = vsel %vm1014, %v2988, %v2730
      %v3022 = vsel %vm1014, %v2990, %v2732
      %vm3023 = vcmask 654336
      %v3025 = vsel %vm3023, %v2992, %v2750
      %v3027 = vsel %vm3023, %v2994, %v2752
      %v3029 = vsel %vm3023, %v2996, %v2754
      %v3031 = vsel %vm3023, %v2998, %v2756
      %v3033 = vsel %vm3023, %v3000, %v2758
      %v3035 = vsel %vm3023, %v3002, %v2760
      %v3037 = vsel %vm3023, %v3004, %v2762
      %v3039 = vsel %vm3023, %v3006, %v2764
      %v3041 = vsel %vm3023, %v3008, %v2766
      %v3043 = vsel %vm3023, %v3010, %v2768
      %v3045 = vsel %vm3023, %v3012, %v2770
      %v3047 = vsel %vm3023, %v3014, %v2772
      %v3049 = vsel %vm3023, %v3016, %v2774
      %v3051 = vsel %vm3023, %v3018, %v2776
      %v3053 = vsel %vm3023, %v3020, %v2778
      %v3055 = vsel %vm3023, %v3022, %v2780
      %vm3056 = vcmask 785408
      %v3058 = vsel %vm3056, %v3025, %v2798
      %v3060 = vsel %vm3056, %v3027, %v2800
      %v3062 = vsel %vm3056, %v3029, %v2802
      %v3064 = vsel %vm3056, %v3031, %v2804
      %v3066 = vsel %vm3056, %v3033, %v2806
      %v3068 = vsel %vm3056, %v3035, %v2808
      %v3070 = vsel %vm3056, %v3037, %v2810
      %v3072 = vsel %vm3056, %v3039, %v2812
      %v3074 = vsel %vm3056, %v3041, %v2814
      %v3076 = vsel %vm3056, %v3043, %v2816
      %v3078 = vsel %vm3056, %v3045, %v2818
      %v3080 = vsel %vm3056, %v3047, %v2820
      %v3082 = vsel %vm3056, %v3049, %v2822
      %v3084 = vsel %vm3056, %v3051, %v2824
      %v3086 = vsel %vm3056, %v3053, %v2826
      %v3088 = vsel %vm3056, %v3055, %v2828
      %vm3089 = vcmask 916480
      %v3091 = vsel %vm3089, %v3058, %v2846
      %v3094 = vsel %vm3089, %v3060, %v2848
      %v3097 = vsel %vm3089, %v3062, %v2850
      %v3100 = vsel %vm3089, %v3064, %v2852
      %v3103 = vsel %vm3089, %v3066, %v2854
      %v3106 = vsel %vm3089, %v3068, %v2856
      %v3109 = vsel %vm3089, %v3070, %v2858
      %v3112 = vsel %vm3089, %v3072, %v2860
      %v3115 = vsel %vm3089, %v3074, %v2862
      %v3118 = vsel %vm3089, %v3076, %v2864
      %v3121 = vsel %vm3089, %v3078, %v2866
      %v3124 = vsel %vm3089, %v3080, %v2868
      %v3127 = vsel %vm3089, %v3082, %v2870
      %v3130 = vsel %vm3089, %v3084, %v2872
      %v3133 = vsel %vm3089, %v3086, %v2874
      %v3136 = vsel %vm3089, %v3088, %v2876
      %v3139 = vlaneseq
      %v3140 = vshrl.u32 %v3139, 7
      %v3141 = vsub.s32 0, %v3140
      %v3142 = vrot.slane %v2107, %v3141
      %v3162 = vunpack.c.l.b16 %v2089
      %v3163 = vunpack.c.l.b16 %v2090
      %v3164 = vunpack.c.l.b16 %v2091
      %v3165 = vunpack.c.l.b16 %v2092
      %v3166 = vunpack.c.l.b16 %v2093
      %v3167 = vunpack.c.l.b16 %v2094
      %v3168 = vunpack.c.l.b16 %v2095
      %v3169 = vunpack.c.l.b16 %v2096
      %v3170 = vunpack.c.l.b16 %v2097
      %v3171 = vunpack.c.l.b16 %v2098
      %v3172 = vunpack.c.l.b16 %v2099
      %v3173 = vunpack.c.l.b16 %v2100
      %v3174 = vunpack.c.l.b16 %v2101
      %v3175 = vunpack.c.l.b16 %v2102
      %v3176 = vunpack.c.l.b16 %v2103
      %v3177 = vunpack.c.l.b16 %v2104
      %v3178 = vunpack.c.l.b16 %v2105
      %v3179 = vunpack.c.l.b16 %v2106
      %v3180 = vpack.c.b16 %v3163, %v3162
      %v3181 = vpack.c.b16 %v3165, %v3164
      %v3182 = vpack.c.b16 %v3167, %v3166
      %v3183 = vpack.c.b16 %v3169, %v3168
      %v3184 = vpack.c.b16 %v3171, %v3170
      %v3185 = vpack.c.b16 %v3173, %v3172
      %v3186 = vpack.c.b16 %v3175, %v3174
      %v3187 = vpack.c.b16 %v3177, %v3176
      %v3188 = vpack.c.b16 %v3179, %v3178
      %v3199 = vsel %vm226, %v2525, 0
      %v3202 = vsel %vm226, %v2526, 0
      %v3205 = vsel %vm226, %v2527, 0
      %v3208 = vsel %vm226, %v2528, 0
      %v3211 = vsel %vm226, %v2529, 0
      %v3214 = vsel %vm226, %v2530, 0
      %v3217 = vsel %vm226, %v2531, 0
      %v3220 = vsel %vm226, %v2532, 0
      %v3223 = vsel %vm226, %v2533, 0
      %v3226 = vsel %vm226, %v2534, 0
      %v3229 = vsel %vm226, %v2535, 0
      %v3232 = vsel %vm226, %v2536, 0
      %v3235 = vsel %vm226, %v2537, 0
      %v3238 = vsel %vm226, %v2538, 0
      %v3241 = vsel %vm226, %v2539, 0
      %v3244 = vsel %vm226, %v2540, 0
      %3246 = vmatprep.subr.bf16.mxu0 0
      %3247 = vmatpush1.bf16.msra.mxu0 %v3180
      %3248 = vmatprep.subr.bf16.mxu0 0
      %3249 = vmatpush1.bf16.msra.mxu0 %v3181
      %3250 = vmatprep.subr.bf16.mxu0 0
      %3251 = vmatpush1.bf16.msra.mxu0 %v3182
      %3252 = vmatprep.subr.bf16.mxu0 0
      %3253 = vmatpush1.bf16.msra.mxu0 %v3183
      %3254 = vmatprep.subr.bf16.mxu0 0
      %3255 = vmatpush1.bf16.msra.mxu0 %v3184
      %3256 = vmatprep.subr.bf16.mxu0 0
      %3257 = vmatpush1.bf16.msra.mxu0 %v3185
      %3258 = vmatprep.subr.bf16.mxu0 0
      %3259 = vmatpush1.bf16.msra.mxu0 %v3186
      %3260 = vmatprep.subr.bf16.mxu0 0
      %3261 = vmatpush1.bf16.msra.mxu0 %v3187
      %3262 = vmatprep.subr.bf16.mxu0 0
      %3263 = vmatpush1.bf16.msra.mxu0 %v3188
      %3264 = vmatprep.subr.bf16.mxu0 0
      %3265 = vmatpush1.bf16.msra.mxu0 0
      %3266 = vmatprep.subr.bf16.mxu0 0
      %3267 = vmatpush1.bf16.msra.mxu0 0
      %3268 = vmatprep.subr.bf16.mxu0 0
      %3269 = vmatpush1.bf16.msra.mxu0 0
      %3270 = vmatprep.subr.bf16.mxu0 0
      %3271 = vmatpush1.bf16.msra.mxu0 0
      %3272 = vmatprep.subr.bf16.mxu0 0
      %3273 = vmatpush1.bf16.msra.mxu0 0
      %3274 = vmatprep.subr.bf16.mxu0 0
      %3275 = vmatpush1.bf16.msra.mxu0 0
      %3276 = vmatprep.subr.bf16.mxu0 0
      %3277 = vmatpush1.bf16.msra.mxu0 0
      %3278 = vmatprep.mubr.bf16.mxu0 %v3199
      %3279 = vmatmul.mubr.bf16.gmra.mrb[0].mxu0 %v3091
      %v3280 = vpop.f32.mrb[0].mxu0
      %v3281 = vadd.f32 %v3142, %v3280
      %v3282 = vpop.f32.mrb[0].mxu0
      %v3283 = vpop.f32.mrb[0].mxu0
      %v3284 = vadd.f32 %v3142, %v3283
      %v3285 = vpop.f32.mrb[0].mxu0
      %3286 = vmatprep.mubr.bf16.mxu0 %v3202
      %3287 = vmatmul.mubr.bf16.gmra.mrb[0].mxu0 %v3094
      %v3288 = vpop.f32.mrb[0].mxu0
      %v3289 = vadd.f32 %v3142, %v3288
      %v3290 = vpop.f32.mrb[0].mxu0
      %v3291 = vpop.f32.mrb[0].mxu0
      %v3292 = vadd.f32 %v3142, %v3291
      %v3293 = vpop.f32.mrb[0].mxu0
      %3294 = vmatprep.mubr.bf16.mxu0 %v3205
      %3295 = vmatmul.mubr.bf16.gmra.mrb[0].mxu0 %v3097
      %v3296 = vpop.f32.mrb[0].mxu0
      %v3297 = vadd.f32 %v3142, %v3296
      %v3298 = vpop.f32.mrb[0].mxu0
      %v3299 = vpop.f32.mrb[0].mxu0
      %v3300 = vadd.f32 %v3142, %v3299
      %v3301 = vpop.f32.mrb[0].mxu0
      %3302 = vmatprep.mubr.bf16.mxu0 %v3208
      %3303 = vmatmul.mubr.bf16.gmra.mrb[0].mxu0 %v3100
      %v3304 = vpop.f32.mrb[0].mxu0
      %v3305 = vadd.f32 %v3142, %v3304
      %v3306 = vpop.f32.mrb[0].mxu0
      %v3307 = vpop.f32.mrb[0].mxu0
      %v3308 = vadd.f32 %v3142, %v3307
      %v3309 = vpop.f32.mrb[0].mxu0
      %3310 = vmatprep.mubr.bf16.mxu0 %v3211
      %3311 = vmatmul.mubr.bf16.gmra.mrb[0].mxu0 %v3103
      %v3312 = vpop.f32.mrb[0].mxu0
      %v3313 = vadd.f32 %v3142, %v3312
      %v3314 = vpop.f32.mrb[0].mxu0
      %v3315 = vpop.f32.mrb[0].mxu0
      %v3316 = vadd.f32 %v3142, %v3315
      %v3317 = vpop.f32.mrb[0].mxu0
      %3318 = vmatprep.mubr.bf16.mxu0 %v3214
      %3319 = vmatmul.mubr.bf16.gmra.mrb[0].mxu0 %v3106
      %v3320 = vpop.f32.mrb[0].mxu0
      %v3321 = vadd.f32 %v3142, %v3320
      %v3322 = vpop.f32.mrb[0].mxu0
      %v3323 = vpop.f32.mrb[0].mxu0
      %v3324 = vadd.f32 %v3142, %v3323
      %v3325 = vpop.f32.mrb[0].mxu0
      %3326 = vmatprep.mubr.bf16.mxu0 %v3217
      %3327 = vmatmul.mubr.bf16.gmra.mrb[0].mxu0 %v3109
      %v3328 = vpop.f32.mrb[0].mxu0
      %v3329 = vadd.f32 %v3142, %v3328
      %v3330 = vpop.f32.mrb[0].mxu0
      %v3331 = vpop.f32.mrb[0].mxu0
      %v3332 = vadd.f32 %v3142, %v3331
      %v3333 = vpop.f32.mrb[0].mxu0
      %3334 = vmatprep.mubr.bf16.mxu0 %v3220
      %3335 = vmatmul.mubr.bf16.gmra.mrb[0].mxu0 %v3112
      %v3336 = vpop.f32.mrb[0].mxu0
      %v3337 = vadd.f32 %v3142, %v3336
      %v3338 = vpop.f32.mrb[0].mxu0
      %v3339 = vpop.f32.mrb[0].mxu0
      %v3340 = vadd.f32 %v3142, %v3339
      %v3341 = vpop.f32.mrb[0].mxu0
      %3342 = vmatprep.mubr.bf16.mxu0 %v3223
      %3343 = vmatmul.mubr.bf16.gmra.mrb[0].mxu0 %v3115
      %v3344 = vpop.f32.mrb[0].mxu0
      %v3345 = vadd.f32 %v3142, %v3344
      %v3346 = vpop.f32.mrb[0].mxu0
      %v3347 = vpop.f32.mrb[0].mxu0
      %v3348 = vadd.f32 %v3142, %v3347
      %v3349 = vpop.f32.mrb[0].mxu0
      %3350 = vmatprep.mubr.bf16.mxu0 %v3226
      %3351 = vmatmul.mubr.bf16.gmra.mrb[0].mxu0 %v3118
      %v3352 = vpop.f32.mrb[0].mxu0
      %v3353 = vadd.f32 %v3142, %v3352
      %v3354 = vpop.f32.mrb[0].mxu0
      %v3355 = vpop.f32.mrb[0].mxu0
      %v3356 = vadd.f32 %v3142, %v3355
      %v3357 = vpop.f32.mrb[0].mxu0
      %3358 = vmatprep.mubr.bf16.mxu0 %v3229
      %3359 = vmatmul.mubr.bf16.gmra.mrb[0].mxu0 %v3121
      %v3360 = vpop.f32.mrb[0].mxu0
      %v3361 = vadd.f32 %v3142, %v3360
      %v3362 = vpop.f32.mrb[0].mxu0
      %v3363 = vpop.f32.mrb[0].mxu0
      %v3364 = vadd.f32 %v3142, %v3363
      %v3365 = vpop.f32.mrb[0].mxu0
      %3366 = vmatprep.mubr.bf16.mxu0 %v3232
      %3367 = vmatmul.mubr.bf16.gmra.mrb[0].mxu0 %v3124
      %v3368 = vpop.f32.mrb[0].mxu0
      %v3369 = vadd.f32 %v3142, %v3368
      %v3370 = vpop.f32.mrb[0].mxu0
      %v3371 = vpop.f32.mrb[0].mxu0
      %v3372 = vadd.f32 %v3142, %v3371
      %v3373 = vpop.f32.mrb[0].mxu0
      %3374 = vmatprep.mubr.bf16.mxu0 %v3235
      %3375 = vmatmul.mubr.bf16.gmra.mrb[0].mxu0 %v3127
      %v3376 = vpop.f32.mrb[0].mxu0
      %v3377 = vadd.f32 %v3142, %v3376
      %v3378 = vpop.f32.mrb[0].mxu0
      %v3379 = vpop.f32.mrb[0].mxu0
      %v3380 = vadd.f32 %v3142, %v3379
      %v3381 = vpop.f32.mrb[0].mxu0
      %3382 = vmatprep.mubr.bf16.mxu0 %v3238
      %3383 = vmatmul.mubr.bf16.gmra.mrb[0].mxu0 %v3130
      %v3384 = vpop.f32.mrb[0].mxu0
      %v3385 = vadd.f32 %v3142, %v3384
      %v3386 = vpop.f32.mrb[0].mxu0
      %v3387 = vpop.f32.mrb[0].mxu0
      %v3388 = vadd.f32 %v3142, %v3387
      %v3389 = vpop.f32.mrb[0].mxu0
      %3390 = vmatprep.mubr.bf16.mxu0 %v3241
      %3391 = vmatmul.mubr.bf16.gmra.mrb[0].mxu0 %v3133
      %v3392 = vpop.f32.mrb[0].mxu0
      %v3393 = vadd.f32 %v3142, %v3392
      %v3394 = vpop.f32.mrb[0].mxu0
      %v3395 = vpop.f32.mrb[0].mxu0
      %v3396 = vadd.f32 %v3142, %v3395
      %v3397 = vpop.f32.mrb[0].mxu0
      %3398 = vmatprep.mubr.bf16.mxu0 %v3244
      %3399 = vmatmul.mubr.bf16.gmra.mrb[0].mxu0 %v3136
      %v3400 = vpop.f32.mrb[0].mxu0
      %v3401 = vadd.f32 %v3142, %v3400
      %v3402 = vpop.f32.mrb[0].mxu0
      %v3403 = vpop.f32.mrb[0].mxu0
      %v3404 = vadd.f32 %v3142, %v3403
      %v3405 = vpop.f32.mrb[0].mxu0
      %3406 = vdwg.mxu0
      %v3407 = vmax.f32 %v3281, 0.0
      %v3408 = vmax.f32 %v3284, 0.0
      %v3409 = vmax.f32 %v3289, 0.0
      %v3410 = vmax.f32 %v3292, 0.0
      %v3411 = vmax.f32 %v3297, 0.0
      %v3412 = vmax.f32 %v3300, 0.0
      %v3413 = vmax.f32 %v3305, 0.0
      %v3414 = vmax.f32 %v3308, 0.0
      %v3415 = vmax.f32 %v3313, 0.0
      %v3416 = vmax.f32 %v3316, 0.0
      %v3417 = vmax.f32 %v3321, 0.0
      %v3418 = vmax.f32 %v3324, 0.0
      %v3419 = vmax.f32 %v3329, 0.0
      %v3420 = vmax.f32 %v3332, 0.0
      %v3421 = vmax.f32 %v3337, 0.0
      %v3422 = vmax.f32 %v3340, 0.0
      %v3423 = vmax.f32 %v3345, 0.0
      %v3424 = vmax.f32 %v3348, 0.0
      %v3425 = vmax.f32 %v3353, 0.0
      %v3426 = vmax.f32 %v3356, 0.0
      %v3427 = vmax.f32 %v3361, 0.0
      %v3428 = vmax.f32 %v3364, 0.0
      %v3429 = vmax.f32 %v3369, 0.0
      %v3430 = vmax.f32 %v3372, 0.0
      %v3431 = vmax.f32 %v3377, 0.0
      %v3432 = vmax.f32 %v3380, 0.0
      %v3433 = vmax.f32 %v3385, 0.0
      %v3434 = vmax.f32 %v3388, 0.0
      %v3435 = vmax.f32 %v3393, 0.0
      %v3436 = vmax.f32 %v3396, 0.0
      %v3437 = vmax.f32 %v3401, 0.0
      %v3438 = vmax.f32 %v3404, 0.0
      %s3439 = scalar_lea.vmem [#allocation3], 24
      %3440 = vst.msk [vmem:[%s3439 + $0x1] sm:$0xff] %vm226, %v3407
      %3441 = vst.msk [vmem:[%s3439 + $0x9] sm:$0xff] %vm226, %v3408
      %3442 = vst.msk [vmem:[%s3439 + $0x19] sm:$0xff] %vm226, %v3409
      %3443 = vst.msk [vmem:[%s3439 + $0x21] sm:$0xff] %vm226, %v3410
      %3444 = vst.msk [vmem:[%s3439 + $0x31] sm:$0xff] %vm226, %v3411
      %3445 = vst.msk [vmem:[%s3439 + $0x39] sm:$0xff] %vm226, %v3412
      %3446 = vst.msk [vmem:[%s3439 + $0x49] sm:$0xff] %vm226, %v3413
      %3447 = vst.msk [vmem:[%s3439 + $0x51] sm:$0xff] %vm226, %v3414
      %3448 = vst.msk [vmem:[%s3439 + $0x61] sm:$0xff] %vm226, %v3415
      %3449 = vst.msk [vmem:[%s3439 + $0x69] sm:$0xff] %vm226, %v3416
      %3450 = vst.msk [vmem:[%s3439 + $0x79] sm:$0xff] %vm226, %v3417
      %3451 = vst.msk [vmem:[%s3439 + $0x81] sm:$0xff] %vm226, %v3418
      %3452 = vst.msk [vmem:[%s3439 + $0x91] sm:$0xff] %vm226, %v3419
      %3453 = vst.msk [vmem:[%s3439 + $0x99] sm:$0xff] %vm226, %v3420
      %3454 = vst.msk [vmem:[%s3439 + $0xa9] sm:$0xff] %vm226, %v3421
      %3455 = vst.msk [vmem:[%s3439 + $0xb1] sm:$0xff] %vm226, %v3422
      %3456 = vst.msk [vmem:[%s3439 + $0xc1] sm:$0xff] %vm226, %v3423
      %3457 = vst.msk [vmem:[%s3439 + $0xc9] sm:$0xff] %vm226, %v3424
      %3458 = vst.msk [vmem:[%s3439 + $0xd9] sm:$0xff] %vm226, %v3425
      %3459 = vst.msk [vmem:[%s3439 + $0xe1] sm:$0xff] %vm226, %v3426
      %3460 = vst.msk [vmem:[%s3439 + $0xf1] sm:$0xff] %vm226, %v3427
      %3461 = vst.msk [vmem:[%s3439 + $0xf9] sm:$0xff] %vm226, %v3428
      %3462 = vst.msk [vmem:[%s3439 + $0x109] sm:$0xff] %vm226, %v3429
      %3463 = vst.msk [vmem:[%s3439 + $0x111] sm:$0xff] %vm226, %v3430
      %3464 = vst.msk [vmem:[%s3439 + $0x121] sm:$0xff] %vm226, %v3431
      %3465 = vst.msk [vmem:[%s3439 + $0x129] sm:$0xff] %vm226, %v3432
      %3466 = vst.msk [vmem:[%s3439 + $0x139] sm:$0xff] %vm226, %v3433
      %3467 = vst.msk [vmem:[%s3439 + $0x141] sm:$0xff] %vm226, %v3434
      %3468 = vst.msk [vmem:[%s3439 + $0x151] sm:$0xff] %vm226, %v3435
      %3469 = vst.msk [vmem:[%s3439 + $0x159] sm:$0xff] %vm226, %v3436
      %3470 = vst.msk [vmem:[%s3439 + $0x169] sm:$0xff] %vm226, %v3437
      %3471 = vst.msk [vmem:[%s3439 + $0x171] sm:$0xff] %vm226, %v3438
      %s3472 = scalar_lea.vmem %s3, 72
      %v3473 = vld [vmem:[%s3472] sm:$0xf]
      %v3474 = vld [vmem:[%s3472 + $0x4] sm:$0xf]
      %v3475 = vld [vmem:[%s3472 + $0x8] sm:$0xf]
      %v3476 = vld [vmem:[%s3472 + $0xc] sm:$0xf]
      %v3477 = vld [vmem:[%s3472 + $0x10] sm:$0xf]
      %v3478 = vld [vmem:[%s3472 + $0x14] sm:$0xf]
      %v3479 = vld [vmem:[%s3472 + $0x18] sm:$0xf]
      %v3480 = vld [vmem:[%s3472 + $0x1c] sm:$0xf]
      %v3481 = vld [vmem:[%s3472 + $0x20] sm:$0xf]
      %v3482 = vld [vmem:[%s3472 + $0x24] sm:$0xf]
      %v3483 = vld [vmem:[%s3472 + $0x28] sm:$0xf]
      %v3484 = vld [vmem:[%s3472 + $0x2c] sm:$0xf]
      %v3485 = vld [vmem:[%s3472 + $0x30] sm:$0xf]
      %v3486 = vld [vmem:[%s3472 + $0x34] sm:$0xf]
      %v3487 = vld [vmem:[%s3472 + $0x38] sm:$0xf]
      %v3488 = vld [vmem:[%s3472 + $0x3c] sm:$0xf]
      %v3489 = vld [vmem:[%s3472 + $0x40] sm:$0xf]
      %v3490 = vld [vmem:[%s3472 + $0x44] sm:$0xf]
      %s3491 = scalar_lea.vmem %s4, 1
      %v3492 = vld [vmem:[%s3491] sm:$0x1]
      %v3493 = vld [vmem:[#allocation3] sm:$0xff]
      %v3494 = vld [vmem:[#allocation3 + $0x8] sm:$0xff]
      %v3495 = vld [vmem:[#allocation3 + $0x18] sm:$0xff]
      %v3496 = vld [vmem:[#allocation3 + $0x20] sm:$0xff]
      %v3497 = vld [vmem:[#allocation3 + $0x30] sm:$0xff]
      %v3498 = vld [vmem:[#allocation3 + $0x38] sm:$0xff]
      %v3499 = vld [vmem:[#allocation3 + $0x48] sm:$0xff]
      %v3500 = vld [vmem:[#allocation3 + $0x50] sm:$0xff]
      %v3501 = vld [vmem:[#allocation3 + $0x60] sm:$0xff]
      %v3502 = vld [vmem:[#allocation3 + $0x68] sm:$0xff]
      %v3503 = vld [vmem:[#allocation3 + $0x78] sm:$0xff]
      %v3504 = vld [vmem:[#allocation3 + $0x80] sm:$0xff]
      %v3505 = vld [vmem:[#allocation3 + $0x90] sm:$0xff]
      %v3506 = vld [vmem:[#allocation3 + $0x98] sm:$0xff]
      %v3507 = vld [vmem:[#allocation3 + $0xa8] sm:$0xff]
      %v3508 = vld [vmem:[#allocation3 + $0xb0] sm:$0xff]
      %v3509 = vld [vmem:[#allocation3 + $0xc0] sm:$0xff]
      %v3510 = vld [vmem:[#allocation3 + $0xc8] sm:$0xff]
      %v3511 = vld [vmem:[#allocation3 + $0xd8] sm:$0xff]
      %v3512 = vld [vmem:[#allocation3 + $0xe0] sm:$0xff]
      %v3513 = vld [vmem:[#allocation3 + $0xf0] sm:$0xff]
      %v3514 = vld [vmem:[#allocation3 + $0xf8] sm:$0xff]
      %v3515 = vld [vmem:[#allocation3 + $0x108] sm:$0xff]
      %v3516 = vld [vmem:[#allocation3 + $0x110] sm:$0xff]
      %v3517 = vld [vmem:[#allocation3 + $0x120] sm:$0xff]
      %v3518 = vld [vmem:[#allocation3 + $0x128] sm:$0xff]
      %v3519 = vld [vmem:[#allocation3 + $0x138] sm:$0xff]
      %v3520 = vld [vmem:[#allocation3 + $0x140] sm:$0xff]
      %v3521 = vld [vmem:[#allocation3 + $0x150] sm:$0xff]
      %v3522 = vld [vmem:[#allocation3 + $0x158] sm:$0xff]
      %v3523 = vld [vmem:[#allocation3 + $0x168] sm:$0xff]
      %v3524 = vld [vmem:[#allocation3 + $0x170] sm:$0xff]
      %v3525 = vpack.c.bf16 %v3494, %v3493
      %v3526 = vpack.c.bf16 %v3496, %v3495
      %v3527 = vpack.c.bf16 %v3498, %v3497
      %v3528 = vpack.c.bf16 %v3500, %v3499
      %v3529 = vpack.c.bf16 %v3502, %v3501
      %v3530 = vpack.c.bf16 %v3504, %v3503
      %v3531 = vpack.c.bf16 %v3506, %v3505
      %v3532 = vpack.c.bf16 %v3508, %v3507
      %v3533 = vpack.c.bf16 %v3510, %v3509
      %v3534 = vpack.c.bf16 %v3512, %v3511
      %v3535 = vpack.c.bf16 %v3514, %v3513
      %v3536 = vpack.c.bf16 %v3516, %v3515
      %v3537 = vpack.c.bf16 %v3518, %v3517
      %v3538 = vpack.c.bf16 %v3520, %v3519
      %v3539 = vpack.c.bf16 %v3522, %v3521
      %v3540 = vpack.c.bf16 %v3524, %v3523
      %v3541 = vld [vmem:[#allocation3 + $0x1] sm:$0xff]
      %v3542 = vld [vmem:[#allocation3 + $0x9] sm:$0xff]
      %v3543 = vld [vmem:[#allocation3 + $0x19] sm:$0xff]
      %v3544 = vld [vmem:[#allocation3 + $0x21] sm:$0xff]
      %v3545 = vld [vmem:[#allocation3 + $0x31] sm:$0xff]
      %v3546 = vld [vmem:[#allocation3 + $0x39] sm:$0xff]
      %v3547 = vld [vmem:[#allocation3 + $0x49] sm:$0xff]
      %v3548 = vld [vmem:[#allocation3 + $0x51] sm:$0xff]
      %v3549 = vld [vmem:[#allocation3 + $0x61] sm:$0xff]
      %v3550 = vld [vmem:[#allocation3 + $0x69] sm:$0xff]
      %v3551 = vld [vmem:[#allocation3 + $0x79] sm:$0xff]
      %v3552 = vld [vmem:[#allocation3 + $0x81] sm:$0xff]
      %v3553 = vld [vmem:[#allocation3 + $0x91] sm:$0xff]
      %v3554 = vld [vmem:[#allocation3 + $0x99] sm:$0xff]
      %v3555 = vld [vmem:[#allocation3 + $0xa9] sm:$0xff]
      %v3556 = vld [vmem:[#allocation3 + $0xb1] sm:$0xff]
      %v3557 = vld [vmem:[#allocation3 + $0xc1] sm:$0xff]
      %v3558 = vld [vmem:[#allocation3 + $0xc9] sm:$0xff]
      %v3559 = vld [vmem:[#allocation3 + $0xd9] sm:$0xff]
      %v3560 = vld [vmem:[#allocation3 + $0xe1] sm:$0xff]
      %v3561 = vld [vmem:[#allocation3 + $0xf1] sm:$0xff]
      %v3562 = vld [vmem:[#allocation3 + $0xf9] sm:$0xff]
      %v3563 = vld [vmem:[#allocation3 + $0x109] sm:$0xff]
      %v3564 = vld [vmem:[#allocation3 + $0x111] sm:$0xff]
      %v3565 = vld [vmem:[#allocation3 + $0x121] sm:$0xff]
      %v3566 = vld [vmem:[#allocation3 + $0x129] sm:$0xff]
      %v3567 = vld [vmem:[#allocation3 + $0x139] sm:$0xff]
      %v3568 = vld [vmem:[#allocation3 + $0x141] sm:$0xff]
      %v3569 = vld [vmem:[#allocation3 + $0x151] sm:$0xff]
      %v3570 = vld [vmem:[#allocation3 + $0x159] sm:$0xff]
      %v3571 = vld [vmem:[#allocation3 + $0x169] sm:$0xff]
      %v3572 = vld [vmem:[#allocation3 + $0x171] sm:$0xff]
      %v3573 = vpack.c.bf16 %v3542, %v3541
      %v3574 = vpack.c.bf16 %v3544, %v3543
      %v3575 = vpack.c.bf16 %v3546, %v3545
      %v3576 = vpack.c.bf16 %v3548, %v3547
      %v3577 = vpack.c.bf16 %v3550, %v3549
      %v3578 = vpack.c.bf16 %v3552, %v3551
      %v3579 = vpack.c.bf16 %v3554, %v3553
      %v3580 = vpack.c.bf16 %v3556, %v3555
      %v3581 = vpack.c.bf16 %v3558, %v3557
      %v3582 = vpack.c.bf16 %v3560, %v3559
      %v3583 = vpack.c.bf16 %v3562, %v3561
      %v3584 = vpack.c.bf16 %v3564, %v3563
      %v3585 = vpack.c.bf16 %v3566, %v3565
      %v3586 = vpack.c.bf16 %v3568, %v3567
      %v3587 = vpack.c.bf16 %v3570, %v3569
      %v3588 = vpack.c.bf16 %v3572, %v3571
      %v3589 = vld [vmem:[#allocation3 + $0x2] sm:$0xff]
      %v3590 = vld [vmem:[#allocation3 + $0xa] sm:$0xff]
      %v3591 = vld [vmem:[#allocation3 + $0x1a] sm:$0xff]
      %v3592 = vld [vmem:[#allocation3 + $0x22] sm:$0xff]
      %v3593 = vld [vmem:[#allocation3 + $0x32] sm:$0xff]
      %v3594 = vld [vmem:[#allocation3 + $0x3a] sm:$0xff]
      %v3595 = vld [vmem:[#allocation3 + $0x4a] sm:$0xff]
      %v3596 = vld [vmem:[#allocation3 + $0x52] sm:$0xff]
      %v3597 = vld [vmem:[#allocation3 + $0x62] sm:$0xff]
      %v3598 = vld [vmem:[#allocation3 + $0x6a] sm:$0xff]
      %v3599 = vld [vmem:[#allocation3 + $0x7a] sm:$0xff]
      %v3600 = vld [vmem:[#allocation3 + $0x82] sm:$0xff]
      %v3601 = vld [vmem:[#allocation3 + $0x92] sm:$0xff]
      %v3602 = vld [vmem:[#allocation3 + $0x9a] sm:$0xff]
      %v3603 = vld [vmem:[#allocation3 + $0xaa] sm:$0xff]
      %v3604 = vld [vmem:[#allocation3 + $0xb2] sm:$0xff]
      %v3605 = vld [vmem:[#allocation3 + $0xc2] sm:$0xff]
      %v3606 = vld [vmem:[#allocation3 + $0xca] sm:$0xff]
      %v3607 = vld [vmem:[#allocation3 + $0xda] sm:$0xff]
      %v3608 = vld [vmem:[#allocation3 + $0xe2] sm:$0xff]
      %v3609 = vld [vmem:[#allocation3 + $0xf2] sm:$0xff]
      %v3610 = vld [vmem:[#allocation3 + $0xfa] sm:$0xff]
      %v3611 = vld [vmem:[#allocation3 + $0x10a] sm:$0xff]
      %v3612 = vld [vmem:[#allocation3 + $0x112] sm:$0xff]
      %v3613 = vld [vmem:[#allocation3 + $0x122] sm:$0xff]
      %v3614 = vld [vmem:[#allocation3 + $0x12a] sm:$0xff]
      %v3615 = vld [vmem:[#allocation3 + $0x13a] sm:$0xff]
      %v3616 = vld [vmem:[#allocation3 + $0x142] sm:$0xff]
      %v3617 = vld [vmem:[#allocation3 + $0x152] sm:$0xff]
      %v3618 = vld [vmem:[#allocation3 + $0x15a] sm:$0xff]
      %v3619 = vld [vmem:[#allocation3 + $0x16a] sm:$0xff]
      %v3620 = vld [vmem:[#allocation3 + $0x172] sm:$0xff]
      %v3621 = vpack.c.bf16 %v3590, %v3589
      %v3622 = vpack.c.bf16 %v3592, %v3591
      %v3623 = vpack.c.bf16 %v3594, %v3593
      %v3624 = vpack.c.bf16 %v3596, %v3595
      %v3625 = vpack.c.bf16 %v3598, %v3597
      %v3626 = vpack.c.bf16 %v3600, %v3599
      %v3627 = vpack.c.bf16 %v3602, %v3601
      %v3628 = vpack.c.bf16 %v3604, %v3603
      %v3629 = vpack.c.bf16 %v3606, %v3605
      %v3630 = vpack.c.bf16 %v3608, %v3607
      %v3631 = vpack.c.bf16 %v3610, %v3609
      %v3632 = vpack.c.bf16 %v3612, %v3611
      %v3633 = vpack.c.bf16 %v3614, %v3613
      %v3634 = vpack.c.bf16 %v3616, %v3615
      %v3635 = vpack.c.bf16 %v3618, %v3617
      %v3636 = vpack.c.bf16 %v3620, %v3619
      %v3637 = vld [vmem:[%s3439] sm:$0xff]
      %v3638 = vld [vmem:[%s3439 + $0x8] sm:$0xff]
      %v3639 = vld [vmem:[%s3439 + $0x18] sm:$0xff]
      %v3640 = vld [vmem:[%s3439 + $0x20] sm:$0xff]
      %v3641 = vld [vmem:[%s3439 + $0x30] sm:$0xff]
      %v3642 = vld [vmem:[%s3439 + $0x38] sm:$0xff]
      %v3643 = vld [vmem:[%s3439 + $0x48] sm:$0xff]
      %v3644 = vld [vmem:[%s3439 + $0x50] sm:$0xff]
      %v3645 = vld [vmem:[%s3439 + $0x60] sm:$0xff]
      %v3646 = vld [vmem:[%s3439 + $0x68] sm:$0xff]
      %v3647 = vld [vmem:[%s3439 + $0x78] sm:$0xff]
      %v3648 = vld [vmem:[%s3439 + $0x80] sm:$0xff]
      %v3649 = vld [vmem:[%s3439 + $0x90] sm:$0xff]
      %v3650 = vld [vmem:[%s3439 + $0x98] sm:$0xff]
      %v3651 = vld [vmem:[%s3439 + $0xa8] sm:$0xff]
      %v3652 = vld [vmem:[%s3439 + $0xb0] sm:$0xff]
      %v3653 = vld [vmem:[%s3439 + $0xc0] sm:$0xff]
      %v3654 = vld [vmem:[%s3439 + $0xc8] sm:$0xff]
      %v3655 = vld [vmem:[%s3439 + $0xd8] sm:$0xff]
      %v3656 = vld [vmem:[%s3439 + $0xe0] sm:$0xff]
      %v3657 = vld [vmem:[%s3439 + $0xf0] sm:$0xff]
      %v3658 = vld [vmem:[%s3439 + $0xf8] sm:$0xff]
      %v3659 = vld [vmem:[%s3439 + $0x108] sm:$0xff]
      %v3660 = vld [vmem:[%s3439 + $0x110] sm:$0xff]
      %v3661 = vld [vmem:[%s3439 + $0x120] sm:$0xff]
      %v3662 = vld [vmem:[%s3439 + $0x128] sm:$0xff]
      %v3663 = vld [vmem:[%s3439 + $0x138] sm:$0xff]
      %v3664 = vld [vmem:[%s3439 + $0x140] sm:$0xff]
      %v3665 = vld [vmem:[%s3439 + $0x150] sm:$0xff]
      %v3666 = vld [vmem:[%s3439 + $0x158] sm:$0xff]
      %v3667 = vld [vmem:[%s3439 + $0x168] sm:$0xff]
      %v3668 = vld [vmem:[%s3439 + $0x170] sm:$0xff]
      %v3669 = vpack.c.bf16 %v3638, %v3637
      %v3670 = vpack.c.bf16 %v3640, %v3639
      %v3671 = vpack.c.bf16 %v3642, %v3641
      %v3672 = vpack.c.bf16 %v3644, %v3643
      %v3673 = vpack.c.bf16 %v3646, %v3645
      %v3674 = vpack.c.bf16 %v3648, %v3647
      %v3675 = vpack.c.bf16 %v3650, %v3649
      %v3676 = vpack.c.bf16 %v3652, %v3651
      %v3677 = vpack.c.bf16 %v3654, %v3653
      %v3678 = vpack.c.bf16 %v3656, %v3655
      %v3679 = vpack.c.bf16 %v3658, %v3657
      %v3680 = vpack.c.bf16 %v3660, %v3659
      %v3681 = vpack.c.bf16 %v3662, %v3661
      %v3682 = vpack.c.bf16 %v3664, %v3663
      %v3683 = vpack.c.bf16 %v3666, %v3665
      %v3684 = vpack.c.bf16 %v3668, %v3667
      %v3685 = vld [vmem:[%s3439 + $0x1] sm:$0xff]
      %v3686 = vld [vmem:[%s3439 + $0x9] sm:$0xff]
      %v3687 = vld [vmem:[%s3439 + $0x19] sm:$0xff]
      %v3688 = vld [vmem:[%s3439 + $0x21] sm:$0xff]
      %v3689 = vld [vmem:[%s3439 + $0x31] sm:$0xff]
      %v3690 = vld [vmem:[%s3439 + $0x39] sm:$0xff]
      %v3691 = vld [vmem:[%s3439 + $0x49] sm:$0xff]
      %v3692 = vld [vmem:[%s3439 + $0x51] sm:$0xff]
      %v3693 = vld [vmem:[%s3439 + $0x61] sm:$0xff]
      %v3694 = vld [vmem:[%s3439 + $0x69] sm:$0xff]
      %v3695 = vld [vmem:[%s3439 + $0x79] sm:$0xff]
      %v3696 = vld [vmem:[%s3439 + $0x81] sm:$0xff]
      %v3697 = vld [vmem:[%s3439 + $0x91] sm:$0xff]
      %v3698 = vld [vmem:[%s3439 + $0x99] sm:$0xff]
      %v3699 = vld [vmem:[%s3439 + $0xa9] sm:$0xff]
      %v3700 = vld [vmem:[%s3439 + $0xb1] sm:$0xff]
      %v3701 = vld [vmem:[%s3439 + $0xc1] sm:$0xff]
      %v3702 = vld [vmem:[%s3439 + $0xc9] sm:$0xff]
      %v3703 = vld [vmem:[%s3439 + $0xd9] sm:$0xff]
      %v3704 = vld [vmem:[%s3439 + $0xe1] sm:$0xff]
      %v3705 = vld [vmem:[%s3439 + $0xf1] sm:$0xff]
      %v3706 = vld [vmem:[%s3439 + $0xf9] sm:$0xff]
      %v3707 = vld [vmem:[%s3439 + $0x109] sm:$0xff]
      %v3708 = vld [vmem:[%s3439 + $0x111] sm:$0xff]
      %v3709 = vld [vmem:[%s3439 + $0x121] sm:$0xff]
      %v3710 = vld [vmem:[%s3439 + $0x129] sm:$0xff]
      %v3711 = vld [vmem:[%s3439 + $0x139] sm:$0xff]
      %v3712 = vld [vmem:[%s3439 + $0x141] sm:$0xff]
      %v3713 = vld [vmem:[%s3439 + $0x151] sm:$0xff]
      %v3714 = vld [vmem:[%s3439 + $0x159] sm:$0xff]
      %v3715 = vld [vmem:[%s3439 + $0x169] sm:$0xff]
      %v3716 = vld [vmem:[%s3439 + $0x171] sm:$0xff]
      %v3717 = vpack.c.bf16 %v3686, %v3685
      %v3718 = vpack.c.bf16 %v3688, %v3687
      %v3719 = vpack.c.bf16 %v3690, %v3689
      %v3720 = vpack.c.bf16 %v3692, %v3691
      %v3721 = vpack.c.bf16 %v3694, %v3693
      %v3722 = vpack.c.bf16 %v3696, %v3695
      %v3723 = vpack.c.bf16 %v3698, %v3697
      %v3724 = vpack.c.bf16 %v3700, %v3699
      %v3725 = vpack.c.bf16 %v3702, %v3701
      %v3726 = vpack.c.bf16 %v3704, %v3703
      %v3727 = vpack.c.bf16 %v3706, %v3705
      %v3728 = vpack.c.bf16 %v3708, %v3707
      %v3729 = vpack.c.bf16 %v3710, %v3709
      %v3730 = vpack.c.bf16 %v3712, %v3711
      %v3731 = vpack.c.bf16 %v3714, %v3713
      %v3732 = vpack.c.bf16 %v3716, %v3715
      %v3733 = vld [vmem:[%s3439 + $0x2] sm:$0xff]
      %v3734 = vld [vmem:[%s3439 + $0xa] sm:$0xff]
      %v3735 = vld [vmem:[%s3439 + $0x1a] sm:$0xff]
      %v3736 = vld [vmem:[%s3439 + $0x22] sm:$0xff]
      %v3737 = vld [vmem:[%s3439 + $0x32] sm:$0xff]
      %v3738 = vld [vmem:[%s3439 + $0x3a] sm:$0xff]
      %v3739 = vld [vmem:[%s3439 + $0x4a] sm:$0xff]
      %v3740 = vld [vmem:[%s3439 + $0x52] sm:$0xff]
      %v3741 = vld [vmem:[%s3439 + $0x62] sm:$0xff]
      %v3742 = vld [vmem:[%s3439 + $0x6a] sm:$0xff]
      %v3743 = vld [vmem:[%s3439 + $0x7a] sm:$0xff]
      %v3744 = vld [vmem:[%s3439 + $0x82] sm:$0xff]
      %v3745 = vld [vmem:[%s3439 + $0x92] sm:$0xff]
      %v3746 = vld [vmem:[%s3439 + $0x9a] sm:$0xff]
      %v3747 = vld [vmem:[%s3439 + $0xaa] sm:$0xff]
      %v3748 = vld [vmem:[%s3439 + $0xb2] sm:$0xff]
      %v3749 = vld [vmem:[%s3439 + $0xc2] sm:$0xff]
      %v3750 = vld [vmem:[%s3439 + $0xca] sm:$0xff]
      %v3751 = vld [vmem:[%s3439 + $0xda] sm:$0xff]
      %v3752 = vld [vmem:[%s3439 + $0xe2] sm:$0xff]
      %v3753 = vld [vmem:[%s3439 + $0xf2] sm:$0xff]
      %v3754 = vld [vmem:[%s3439 + $0xfa] sm:$0xff]
      %v3755 = vld [vmem:[%s3439 + $0x10a] sm:$0xff]
      %v3756 = vld [vmem:[%s3439 + $0x112] sm:$0xff]
      %v3757 = vld [vmem:[%s3439 + $0x122] sm:$0xff]
      %v3758 = vld [vmem:[%s3439 + $0x12a] sm:$0xff]
      %v3759 = vld [vmem:[%s3439 + $0x13a] sm:$0xff]
      %v3760 = vld [vmem:[%s3439 + $0x142] sm:$0xff]
      %v3761 = vld [vmem:[%s3439 + $0x152] sm:$0xff]
      %v3762 = vld [vmem:[%s3439 + $0x15a] sm:$0xff]
      %v3763 = vld [vmem:[%s3439 + $0x16a] sm:$0xff]
      %v3764 = vld [vmem:[%s3439 + $0x172] sm:$0xff]
      %v3765 = vpack.c.bf16 %v3734, %v3733
      %v3766 = vpack.c.bf16 %v3736, %v3735
      %v3767 = vpack.c.bf16 %v3738, %v3737
      %v3768 = vpack.c.bf16 %v3740, %v3739
      %v3769 = vpack.c.bf16 %v3742, %v3741
      %v3770 = vpack.c.bf16 %v3744, %v3743
      %v3771 = vpack.c.bf16 %v3746, %v3745
      %v3772 = vpack.c.bf16 %v3748, %v3747
      %v3773 = vpack.c.bf16 %v3750, %v3749
      %v3774 = vpack.c.bf16 %v3752, %v3751
      %v3775 = vpack.c.bf16 %v3754, %v3753
      %v3776 = vpack.c.bf16 %v3756, %v3755
      %v3777 = vpack.c.bf16 %v3758, %v3757
      %v3778 = vpack.c.bf16 %v3760, %v3759
      %v3779 = vpack.c.bf16 %v3762, %v3761
      %v3780 = vpack.c.bf16 %v3764, %v3763
      %s3781 = scalar_lea.vmem [#allocation3], 48
      %v3782 = vld [vmem:[%s3781] sm:$0xff]
      %v3783 = vld [vmem:[%s3781 + $0x8] sm:$0xff]
      %v3784 = vld [vmem:[%s3781 + $0x18] sm:$0xff]
      %v3785 = vld [vmem:[%s3781 + $0x20] sm:$0xff]
      %v3786 = vld [vmem:[%s3781 + $0x30] sm:$0xff]
      %v3787 = vld [vmem:[%s3781 + $0x38] sm:$0xff]
      %v3788 = vld [vmem:[%s3781 + $0x48] sm:$0xff]
      %v3789 = vld [vmem:[%s3781 + $0x50] sm:$0xff]
      %v3790 = vld [vmem:[%s3781 + $0x60] sm:$0xff]
      %v3791 = vld [vmem:[%s3781 + $0x68] sm:$0xff]
      %v3792 = vld [vmem:[%s3781 + $0x78] sm:$0xff]
      %v3793 = vld [vmem:[%s3781 + $0x80] sm:$0xff]
      %v3794 = vld [vmem:[%s3781 + $0x90] sm:$0xff]
      %v3795 = vld [vmem:[%s3781 + $0x98] sm:$0xff]
      %v3796 = vld [vmem:[%s3781 + $0xa8] sm:$0xff]
      %v3797 = vld [vmem:[%s3781 + $0xb0] sm:$0xff]
      %v3798 = vld [vmem:[%s3781 + $0xc0] sm:$0xff]
      %v3799 = vld [vmem:[%s3781 + $0xc8] sm:$0xff]
      %v3800 = vld [vmem:[%s3781 + $0xd8] sm:$0xff]
      %v3801 = vld [vmem:[%s3781 + $0xe0] sm:$0xff]
      %v3802 = vld [vmem:[%s3781 + $0xf0] sm:$0xff]
      %v3803 = vld [vmem:[%s3781 + $0xf8] sm:$0xff]
      %v3804 = vld [vmem:[%s3781 + $0x108] sm:$0xff]
      %v3805 = vld [vmem:[%s3781 + $0x110] sm:$0xff]
      %v3806 = vld [vmem:[%s3781 + $0x120] sm:$0xff]
      %v3807 = vld [vmem:[%s3781 + $0x128] sm:$0xff]
      %v3808 = vld [vmem:[%s3781 + $0x138] sm:$0xff]
      %v3809 = vld [vmem:[%s3781 + $0x140] sm:$0xff]
      %v3810 = vld [vmem:[%s3781 + $0x150] sm:$0xff]
      %v3811 = vld [vmem:[%s3781 + $0x158] sm:$0xff]
      %v3812 = vld [vmem:[%s3781 + $0x168] sm:$0xff]
      %v3813 = vld [vmem:[%s3781 + $0x170] sm:$0xff]
      %v3814 = vpack.c.bf16 %v3783, %v3782
      %v3815 = vpack.c.bf16 %v3785, %v3784
      %v3816 = vpack.c.bf16 %v3787, %v3786
      %v3817 = vpack.c.bf16 %v3789, %v3788
      %v3818 = vpack.c.bf16 %v3791, %v3790
      %v3819 = vpack.c.bf16 %v3793, %v3792
      %v3820 = vpack.c.bf16 %v3795, %v3794
      %v3821 = vpack.c.bf16 %v3797, %v3796
      %v3822 = vpack.c.bf16 %v3799, %v3798
      %v3823 = vpack.c.bf16 %v3801, %v3800
      %v3824 = vpack.c.bf16 %v3803, %v3802
      %v3825 = vpack.c.bf16 %v3805, %v3804
      %v3826 = vpack.c.bf16 %v3807, %v3806
      %v3827 = vpack.c.bf16 %v3809, %v3808
      %v3828 = vpack.c.bf16 %v3811, %v3810
      %v3829 = vpack.c.bf16 %v3813, %v3812
      %v3830 = vld [vmem:[%s3781 + $0x1] sm:$0xff]
      %v3831 = vld [vmem:[%s3781 + $0x9] sm:$0xff]
      %v3832 = vld [vmem:[%s3781 + $0x19] sm:$0xff]
      %v3833 = vld [vmem:[%s3781 + $0x21] sm:$0xff]
      %v3834 = vld [vmem:[%s3781 + $0x31] sm:$0xff]
      %v3835 = vld [vmem:[%s3781 + $0x39] sm:$0xff]
      %v3836 = vld [vmem:[%s3781 + $0x49] sm:$0xff]
      %v3837 = vld [vmem:[%s3781 + $0x51] sm:$0xff]
      %v3838 = vld [vmem:[%s3781 + $0x61] sm:$0xff]
      %v3839 = vld [vmem:[%s3781 + $0x69] sm:$0xff]
      %v3840 = vld [vmem:[%s3781 + $0x79] sm:$0xff]
      %v3841 = vld [vmem:[%s3781 + $0x81] sm:$0xff]
      %v3842 = vld [vmem:[%s3781 + $0x91] sm:$0xff]
      %v3843 = vld [vmem:[%s3781 + $0x99] sm:$0xff]
      %v3844 = vld [vmem:[%s3781 + $0xa9] sm:$0xff]
      %v3845 = vld [vmem:[%s3781 + $0xb1] sm:$0xff]
      %v3846 = vld [vmem:[%s3781 + $0xc1] sm:$0xff]
      %v3847 = vld [vmem:[%s3781 + $0xc9] sm:$0xff]
      %v3848 = vld [vmem:[%s3781 + $0xd9] sm:$0xff]
      %v3849 = vld [vmem:[%s3781 + $0xe1] sm:$0xff]
      %v3850 = vld [vmem:[%s3781 + $0xf1] sm:$0xff]
      %v3851 = vld [vmem:[%s3781 + $0xf9] sm:$0xff]
      %v3852 = vld [vmem:[%s3781 + $0x109] sm:$0xff]
      %v3853 = vld [vmem:[%s3781 + $0x111] sm:$0xff]
      %v3854 = vld [vmem:[%s3781 + $0x121] sm:$0xff]
      %v3855 = vld [vmem:[%s3781 + $0x129] sm:$0xff]
      %v3856 = vld [vmem:[%s3781 + $0x139] sm:$0xff]
      %v3857 = vld [vmem:[%s3781 + $0x141] sm:$0xff]
      %v3858 = vld [vmem:[%s3781 + $0x151] sm:$0xff]
      %v3859 = vld [vmem:[%s3781 + $0x159] sm:$0xff]
      %v3860 = vld [vmem:[%s3781 + $0x169] sm:$0xff]
      %v3861 = vld [vmem:[%s3781 + $0x171] sm:$0xff]
      %v3862 = vpack.c.bf16 %v3831, %v3830
      %v3863 = vpack.c.bf16 %v3833, %v3832
      %v3864 = vpack.c.bf16 %v3835, %v3834
      %v3865 = vpack.c.bf16 %v3837, %v3836
      %v3866 = vpack.c.bf16 %v3839, %v3838
      %v3867 = vpack.c.bf16 %v3841, %v3840
      %v3868 = vpack.c.bf16 %v3843, %v3842
      %v3869 = vpack.c.bf16 %v3845, %v3844
      %v3870 = vpack.c.bf16 %v3847, %v3846
      %v3871 = vpack.c.bf16 %v3849, %v3848
      %v3872 = vpack.c.bf16 %v3851, %v3850
      %v3873 = vpack.c.bf16 %v3853, %v3852
      %v3874 = vpack.c.bf16 %v3855, %v3854
      %v3875 = vpack.c.bf16 %v3857, %v3856
      %v3876 = vpack.c.bf16 %v3859, %v3858
      %v3877 = vpack.c.bf16 %v3861, %v3860
      %v3878 = vld [vmem:[%s3781 + $0x2] sm:$0xff]
      %v3879 = vld [vmem:[%s3781 + $0xa] sm:$0xff]
      %v3880 = vld [vmem:[%s3781 + $0x1a] sm:$0xff]
      %v3881 = vld [vmem:[%s3781 + $0x22] sm:$0xff]
      %v3882 = vld [vmem:[%s3781 + $0x32] sm:$0xff]
      %v3883 = vld [vmem:[%s3781 + $0x3a] sm:$0xff]
      %v3884 = vld [vmem:[%s3781 + $0x4a] sm:$0xff]
      %v3885 = vld [vmem:[%s3781 + $0x52] sm:$0xff]
      %v3886 = vld [vmem:[%s3781 + $0x62] sm:$0xff]
      %v3887 = vld [vmem:[%s3781 + $0x6a] sm:$0xff]
      %v3888 = vld [vmem:[%s3781 + $0x7a] sm:$0xff]
      %v3889 = vld [vmem:[%s3781 + $0x82] sm:$0xff]
      %v3890 = vld [vmem:[%s3781 + $0x92] sm:$0xff]
      %v3891 = vld [vmem:[%s3781 + $0x9a] sm:$0xff]
      %v3892 = vld [vmem:[%s3781 + $0xaa] sm:$0xff]
      %v3893 = vld [vmem:[%s3781 + $0xb2] sm:$0xff]
      %v3894 = vld [vmem:[%s3781 + $0xc2] sm:$0xff]
      %v3895 = vld [vmem:[%s3781 + $0xca] sm:$0xff]
      %v3896 = vld [vmem:[%s3781 + $0xda] sm:$0xff]
      %v3897 = vld [vmem:[%s3781 + $0xe2] sm:$0xff]
      %v3898 = vld [vmem:[%s3781 + $0xf2] sm:$0xff]
      %v3899 = vld [vmem:[%s3781 + $0xfa] sm:$0xff]
      %v3900 = vld [vmem:[%s3781 + $0x10a] sm:$0xff]
      %v3901 = vld [vmem:[%s3781 + $0x112] sm:$0xff]
      %v3902 = vld [vmem:[%s3781 + $0x122] sm:$0xff]
      %v3903 = vld [vmem:[%s3781 + $0x12a] sm:$0xff]
      %v3904 = vld [vmem:[%s3781 + $0x13a] sm:$0xff]
      %v3905 = vld [vmem:[%s3781 + $0x142] sm:$0xff]
      %v3906 = vld [vmem:[%s3781 + $0x152] sm:$0xff]
      %v3907 = vld [vmem:[%s3781 + $0x15a] sm:$0xff]
      %v3908 = vld [vmem:[%s3781 + $0x16a] sm:$0xff]
      %v3909 = vld [vmem:[%s3781 + $0x172] sm:$0xff]
      %v3910 = vpack.c.bf16 %v3879, %v3878
      %v3911 = vpack.c.bf16 %v3881, %v3880
      %v3912 = vpack.c.bf16 %v3883, %v3882
      %v3913 = vpack.c.bf16 %v3885, %v3884
      %v3914 = vpack.c.bf16 %v3887, %v3886
      %v3915 = vpack.c.bf16 %v3889, %v3888
      %v3916 = vpack.c.bf16 %v3891, %v3890
      %v3917 = vpack.c.bf16 %v3893, %v3892
      %v3918 = vpack.c.bf16 %v3895, %v3894
      %v3919 = vpack.c.bf16 %v3897, %v3896
      %v3920 = vpack.c.bf16 %v3899, %v3898
      %v3921 = vpack.c.bf16 %v3901, %v3900
      %v3922 = vpack.c.bf16 %v3903, %v3902
      %v3923 = vpack.c.bf16 %v3905, %v3904
      %v3924 = vpack.c.bf16 %v3907, %v3906
      %v3925 = vpack.c.bf16 %v3909, %v3908
      %3942 = vrot.lane.b32.xlu0 %v3573, 16
      %v3943 = vpop.permute.xlu0 %3942
      %3944 = vrot.lane.b32.xlu0 %v3574, 16
      %v3945 = vpop.permute.xlu0 %3944
      %3946 = vrot.lane.b32.xlu0 %v3575, 16
      %v3947 = vpop.permute.xlu0 %3946
      %3948 = vrot.lane.b32.xlu0 %v3576, 16
      %v3949 = vpop.permute.xlu0 %3948
      %3950 = vrot.lane.b32.xlu0 %v3577, 16
      %v3951 = vpop.permute.xlu0 %3950
      %3952 = vrot.lane.b32.xlu0 %v3578, 16
      %v3953 = vpop.permute.xlu0 %3952
      %3954 = vrot.lane.b32.xlu0 %v3579, 16
      %v3955 = vpop.permute.xlu0 %3954
      %3956 = vrot.lane.b32.xlu0 %v3580, 16
      %v3957 = vpop.permute.xlu0 %3956
      %3958 = vrot.lane.b32.xlu0 %v3581, 16
      %v3959 = vpop.permute.xlu0 %3958
      %3960 = vrot.lane.b32.xlu0 %v3582, 16
      %v3961 = vpop.permute.xlu0 %3960
      %3962 = vrot.lane.b32.xlu0 %v3583, 16
      %v3963 = vpop.permute.xlu0 %3962
      %3964 = vrot.lane.b32.xlu0 %v3584, 16
      %v3965 = vpop.permute.xlu0 %3964
      %3966 = vrot.lane.b32.xlu0 %v3585, 16
      %v3967 = vpop.permute.xlu0 %3966
      %3968 = vrot.lane.b32.xlu0 %v3586, 16
      %v3969 = vpop.permute.xlu0 %3968
      %3970 = vrot.lane.b32.xlu0 %v3587, 16
      %v3971 = vpop.permute.xlu0 %3970
      %3972 = vrot.lane.b32.xlu0 %v3588, 16
      %v3973 = vpop.permute.xlu0 %3972
      %3990 = vrot.lane.b32.xlu0 %v3621, 32
      %v3991 = vpop.permute.xlu0 %3990
      %3992 = vrot.lane.b32.xlu0 %v3622, 32
      %v3993 = vpop.permute.xlu0 %3992
      %3994 = vrot.lane.b32.xlu0 %v3623, 32
      %v3995 = vpop.permute.xlu0 %3994
      %3996 = vrot.lane.b32.xlu0 %v3624, 32
      %v3997 = vpop.permute.xlu0 %3996
      %3998 = vrot.lane.b32.xlu0 %v3625, 32
      %v3999 = vpop.permute.xlu0 %3998
      %4000 = vrot.lane.b32.xlu0 %v3626, 32
      %v4001 = vpop.permute.xlu0 %4000
      %4002 = vrot.lane.b32.xlu0 %v3627, 32
      %v4003 = vpop.permute.xlu0 %4002
      %4004 = vrot.lane.b32.xlu0 %v3628, 32
      %v4005 = vpop.permute.xlu0 %4004
      %4006 = vrot.lane.b32.xlu0 %v3629, 32
      %v4007 = vpop.permute.xlu0 %4006
      %4008 = vrot.lane.b32.xlu0 %v3630, 32
      %v4009 = vpop.permute.xlu0 %4008
      %4010 = vrot.lane.b32.xlu0 %v3631, 32
      %v4011 = vpop.permute.xlu0 %4010
      %4012 = vrot.lane.b32.xlu0 %v3632, 32
      %v4013 = vpop.permute.xlu0 %4012
      %4014 = vrot.lane.b32.xlu0 %v3633, 32
      %v4015 = vpop.permute.xlu0 %4014
      %4016 = vrot.lane.b32.xlu0 %v3634, 32
      %v4017 = vpop.permute.xlu0 %4016
      %4018 = vrot.lane.b32.xlu0 %v3635, 32
      %v4019 = vpop.permute.xlu0 %4018
      %4020 = vrot.lane.b32.xlu0 %v3636, 32
      %v4021 = vpop.permute.xlu0 %4020
      %4038 = vrot.lane.b32.xlu0 %v3669, 48
      %v4039 = vpop.permute.xlu0 %4038
      %4040 = vrot.lane.b32.xlu0 %v3670, 48
      %v4041 = vpop.permute.xlu0 %4040
      %4042 = vrot.lane.b32.xlu0 %v3671, 48
      %v4043 = vpop.permute.xlu0 %4042
      %4044 = vrot.lane.b32.xlu0 %v3672, 48
      %v4045 = vpop.permute.xlu0 %4044
      %4046 = vrot.lane.b32.xlu0 %v3673, 48
      %v4047 = vpop.permute.xlu0 %4046
      %4048 = vrot.lane.b32.xlu0 %v3674, 48
      %v4049 = vpop.permute.xlu0 %4048
      %4050 = vrot.lane.b32.xlu0 %v3675, 48
      %v4051 = vpop.permute.xlu0 %4050
      %4052 = vrot.lane.b32.xlu0 %v3676, 48
      %v4053 = vpop.permute.xlu0 %4052
      %4054 = vrot.lane.b32.xlu0 %v3677, 48
      %v4055 = vpop.permute.xlu0 %4054
      %4056 = vrot.lane.b32.xlu0 %v3678, 48
      %v4057 = vpop.permute.xlu0 %4056
      %4058 = vrot.lane.b32.xlu0 %v3679, 48
      %v4059 = vpop.permute.xlu0 %4058
      %4060 = vrot.lane.b32.xlu0 %v3680, 48
      %v4061 = vpop.permute.xlu0 %4060
      %4062 = vrot.lane.b32.xlu0 %v3681, 48
      %v4063 = vpop.permute.xlu0 %4062
      %4064 = vrot.lane.b32.xlu0 %v3682, 48
      %v4065 = vpop.permute.xlu0 %4064
      %4066 = vrot.lane.b32.xlu0 %v3683, 48
      %v4067 = vpop.permute.xlu0 %4066
      %4068 = vrot.lane.b32.xlu0 %v3684, 48
      %v4069 = vpop.permute.xlu0 %4068
      %4086 = vrot.lane.b32.xlu0 %v3717, 64
      %v4087 = vpop.permute.xlu0 %4086
      %4088 = vrot.lane.b32.xlu0 %v3718, 64
      %v4089 = vpop.permute.xlu0 %4088
      %4090 = vrot.lane.b32.xlu0 %v3719, 64
      %v4091 = vpop.permute.xlu0 %4090
      %4092 = vrot.lane.b32.xlu0 %v3720, 64
      %v4093 = vpop.permute.xlu0 %4092
      %4094 = vrot.lane.b32.xlu0 %v3721, 64
      %v4095 = vpop.permute.xlu0 %4094
      %4096 = vrot.lane.b32.xlu0 %v3722, 64
      %v4097 = vpop.permute.xlu0 %4096
      %4098 = vrot.lane.b32.xlu0 %v3723, 64
      %v4099 = vpop.permute.xlu0 %4098
      %4100 = vrot.lane.b32.xlu0 %v3724, 64
      %v4101 = vpop.permute.xlu0 %4100
      %4102 = vrot.lane.b32.xlu0 %v3725, 64
      %v4103 = vpop.permute.xlu0 %4102
      %4104 = vrot.lane.b32.xlu0 %v3726, 64
      %v4105 = vpop.permute.xlu0 %4104
      %4106 = vrot.lane.b32.xlu0 %v3727, 64
      %v4107 = vpop.permute.xlu0 %4106
      %4108 = vrot.lane.b32.xlu0 %v3728, 64
      %v4109 = vpop.permute.xlu0 %4108
      %4110 = vrot.lane.b32.xlu0 %v3729, 64
      %v4111 = vpop.permute.xlu0 %4110
      %4112 = vrot.lane.b32.xlu0 %v3730, 64
      %v4113 = vpop.permute.xlu0 %4112
      %4114 = vrot.lane.b32.xlu0 %v3731, 64
      %v4115 = vpop.permute.xlu0 %4114
      %4116 = vrot.lane.b32.xlu0 %v3732, 64
      %v4117 = vpop.permute.xlu0 %4116
      %4134 = vrot.lane.b32.xlu0 %v3765, 80
      %v4135 = vpop.permute.xlu0 %4134
      %4136 = vrot.lane.b32.xlu0 %v3766, 80
      %v4137 = vpop.permute.xlu0 %4136
      %4138 = vrot.lane.b32.xlu0 %v3767, 80
      %v4139 = vpop.permute.xlu0 %4138
      %4140 = vrot.lane.b32.xlu0 %v3768, 80
      %v4141 = vpop.permute.xlu0 %4140
      %4142 = vrot.lane.b32.xlu0 %v3769, 80
      %v4143 = vpop.permute.xlu0 %4142
      %4144 = vrot.lane.b32.xlu0 %v3770, 80
      %v4145 = vpop.permute.xlu0 %4144
      %4146 = vrot.lane.b32.xlu0 %v3771, 80
      %v4147 = vpop.permute.xlu0 %4146
      %4148 = vrot.lane.b32.xlu0 %v3772, 80
      %v4149 = vpop.permute.xlu0 %4148
      %4150 = vrot.lane.b32.xlu0 %v3773, 80
      %v4151 = vpop.permute.xlu0 %4150
      %4152 = vrot.lane.b32.xlu0 %v3774, 80
      %v4153 = vpop.permute.xlu0 %4152
      %4154 = vrot.lane.b32.xlu0 %v3775, 80
      %v4155 = vpop.permute.xlu0 %4154
      %4156 = vrot.lane.b32.xlu0 %v3776, 80
      %v4157 = vpop.permute.xlu0 %4156
      %4158 = vrot.lane.b32.xlu0 %v3777, 80
      %v4159 = vpop.permute.xlu0 %4158
      %4160 = vrot.lane.b32.xlu0 %v3778, 80
      %v4161 = vpop.permute.xlu0 %4160
      %4162 = vrot.lane.b32.xlu0 %v3779, 80
      %v4163 = vpop.permute.xlu0 %4162
      %4164 = vrot.lane.b32.xlu0 %v3780, 80
      %v4165 = vpop.permute.xlu0 %4164
      %4182 = vrot.lane.b32.xlu0 %v3814, 96
      %v4183 = vpop.permute.xlu0 %4182
      %4184 = vrot.lane.b32.xlu0 %v3815, 96
      %v4185 = vpop.permute.xlu0 %4184
      %4186 = vrot.lane.b32.xlu0 %v3816, 96
      %v4187 = vpop.permute.xlu0 %4186
      %4188 = vrot.lane.b32.xlu0 %v3817, 96
      %v4189 = vpop.permute.xlu0 %4188
      %4190 = vrot.lane.b32.xlu0 %v3818, 96
      %v4191 = vpop.permute.xlu0 %4190
      %4192 = vrot.lane.b32.xlu0 %v3819, 96
      %v4193 = vpop.permute.xlu0 %4192
      %4194 = vrot.lane.b32.xlu0 %v3820, 96
      %v4195 = vpop.permute.xlu0 %4194
      %4196 = vrot.lane.b32.xlu0 %v3821, 96
      %v4197 = vpop.permute.xlu0 %4196
      %4198 = vrot.lane.b32.xlu0 %v3822, 96
      %v4199 = vpop.permute.xlu0 %4198
      %4200 = vrot.lane.b32.xlu0 %v3823, 96
      %v4201 = vpop.permute.xlu0 %4200
      %4202 = vrot.lane.b32.xlu0 %v3824, 96
      %v4203 = vpop.permute.xlu0 %4202
      %4204 = vrot.lane.b32.xlu0 %v3825, 96
      %v4205 = vpop.permute.xlu0 %4204
      %4206 = vrot.lane.b32.xlu0 %v3826, 96
      %v4207 = vpop.permute.xlu0 %4206
      %4208 = vrot.lane.b32.xlu0 %v3827, 96
      %v4209 = vpop.permute.xlu0 %4208
      %4210 = vrot.lane.b32.xlu0 %v3828, 96
      %v4211 = vpop.permute.xlu0 %4210
      %4212 = vrot.lane.b32.xlu0 %v3829, 96
      %v4213 = vpop.permute.xlu0 %4212
      %4230 = vrot.lane.b32.xlu0 %v3862, 112
      %v4231 = vpop.permute.xlu0 %4230
      %4232 = vrot.lane.b32.xlu0 %v3863, 112
      %v4233 = vpop.permute.xlu0 %4232
      %4234 = vrot.lane.b32.xlu0 %v3864, 112
      %v4235 = vpop.permute.xlu0 %4234
      %4236 = vrot.lane.b32.xlu0 %v3865, 112
      %v4237 = vpop.permute.xlu0 %4236
      %4238 = vrot.lane.b32.xlu0 %v3866, 112
      %v4239 = vpop.permute.xlu0 %4238
      %4240 = vrot.lane.b32.xlu0 %v3867, 112
      %v4241 = vpop.permute.xlu0 %4240
      %4242 = vrot.lane.b32.xlu0 %v3868, 112
      %v4243 = vpop.permute.xlu0 %4242
      %4244 = vrot.lane.b32.xlu0 %v3869, 112
      %v4245 = vpop.permute.xlu0 %4244
      %4246 = vrot.lane.b32.xlu0 %v3870, 112
      %v4247 = vpop.permute.xlu0 %4246
      %4248 = vrot.lane.b32.xlu0 %v3871, 112
      %v4249 = vpop.permute.xlu0 %4248
      %4250 = vrot.lane.b32.xlu0 %v3872, 112
      %v4251 = vpop.permute.xlu0 %4250
      %4252 = vrot.lane.b32.xlu0 %v3873, 112
      %v4253 = vpop.permute.xlu0 %4252
      %4254 = vrot.lane.b32.xlu0 %v3874, 112
      %v4255 = vpop.permute.xlu0 %4254
      %4256 = vrot.lane.b32.xlu0 %v3875, 112
      %v4257 = vpop.permute.xlu0 %4256
      %4258 = vrot.lane.b32.xlu0 %v3876, 112
      %v4259 = vpop.permute.xlu0 %4258
      %4260 = vrot.lane.b32.xlu0 %v3877, 112
      %v4261 = vpop.permute.xlu0 %4260
      %v4264 = vsel %vm226, %v3525, %v3943
      %v4267 = vsel %vm226, %v3526, %v3945
      %v4270 = vsel %vm226, %v3527, %v3947
      %v4273 = vsel %vm226, %v3528, %v3949
      %v4276 = vsel %vm226, %v3529, %v3951
      %v4279 = vsel %vm226, %v3530, %v3953
      %v4282 = vsel %vm226, %v3531, %v3955
      %v4285 = vsel %vm226, %v3532, %v3957
      %v4288 = vsel %vm226, %v3533, %v3959
      %v4291 = vsel %vm226, %v3534, %v3961
      %v4294 = vsel %vm226, %v3535, %v3963
      %v4297 = vsel %vm226, %v3536, %v3965
      %v4300 = vsel %vm226, %v3537, %v3967
      %v4303 = vsel %vm226, %v3538, %v3969
      %v4306 = vsel %vm226, %v3539, %v3971
      %v4309 = vsel %vm226, %v3540, %v3973
      %v4311 = vsel %vm2925, %v4264, %v3991
      %v4313 = vsel %vm2925, %v4267, %v3993
      %v4315 = vsel %vm2925, %v4270, %v3995
      %v4317 = vsel %vm2925, %v4273, %v3997
      %v4319 = vsel %vm2925, %v4276, %v3999
      %v4321 = vsel %vm2925, %v4279, %v4001
      %v4323 = vsel %vm2925, %v4282, %v4003
      %v4325 = vsel %vm2925, %v4285, %v4005
      %v4327 = vsel %vm2925, %v4288, %v4007
      %v4329 = vsel %vm2925, %v4291, %v4009
      %v4331 = vsel %vm2925, %v4294, %v4011
      %v4333 = vsel %vm2925, %v4297, %v4013
      %v4335 = vsel %vm2925, %v4300, %v4015
      %v4337 = vsel %vm2925, %v4303, %v4017
      %v4339 = vsel %vm2925, %v4306, %v4019
      %v4341 = vsel %vm2925, %v4309, %v4021
      %v4343 = vsel %vm2958, %v4311, %v4039
      %v4345 = vsel %vm2958, %v4313, %v4041
      %v4347 = vsel %vm2958, %v4315, %v4043
      %v4349 = vsel %vm2958, %v4317, %v4045
      %v4351 = vsel %vm2958, %v4319, %v4047
      %v4353 = vsel %vm2958, %v4321, %v4049
      %v4355 = vsel %vm2958, %v4323, %v4051
      %v4357 = vsel %vm2958, %v4325, %v4053
      %v4359 = vsel %vm2958, %v4327, %v4055
      %v4361 = vsel %vm2958, %v4329, %v4057
      %v4363 = vsel %vm2958, %v4331, %v4059
      %v4365 = vsel %vm2958, %v4333, %v4061
      %v4367 = vsel %vm2958, %v4335, %v4063
      %v4369 = vsel %vm2958, %v4337, %v4065
      %v4371 = vsel %vm2958, %v4339, %v4067
      %v4373 = vsel %vm2958, %v4341, %v4069
      %v4375 = vsel %vm1014, %v4343, %v4087
      %v4377 = vsel %vm1014, %v4345, %v4089
      %v4379 = vsel %vm1014, %v4347, %v4091
      %v4381 = vsel %vm1014, %v4349, %v4093
      %v4383 = vsel %vm1014, %v4351, %v4095
      %v4385 = vsel %vm1014, %v4353, %v4097
      %v4387 = vsel %vm1014, %v4355, %v4099
      %v4389 = vsel %vm1014, %v4357, %v4101
      %v4391 = vsel %vm1014, %v4359, %v4103
      %v4393 = vsel %vm1014, %v4361, %v4105
      %v4395 = vsel %vm1014, %v4363, %v4107
      %v4397 = vsel %vm1014, %v4365, %v4109
      %v4399 = vsel %vm1014, %v4367, %v4111
      %v4401 = vsel %vm1014, %v4369, %v4113
      %v4403 = vsel %vm1014, %v4371, %v4115
      %v4405 = vsel %vm1014, %v4373, %v4117
      %v4407 = vsel %vm3023, %v4375, %v4135
      %v4409 = vsel %vm3023, %v4377, %v4137
      %v4411 = vsel %vm3023, %v4379, %v4139
      %v4413 = vsel %vm3023, %v4381, %v4141
      %v4415 = vsel %vm3023, %v4383, %v4143
      %v4417 = vsel %vm3023, %v4385, %v4145
      %v4419 = vsel %vm3023, %v4387, %v4147
      %v4421 = vsel %vm3023, %v4389, %v4149
      %v4423 = vsel %vm3023, %v4391, %v4151
      %v4425 = vsel %vm3023, %v4393, %v4153
      %v4427 = vsel %vm3023, %v4395, %v4155
      %v4429 = vsel %vm3023, %v4397, %v4157
      %v4431 = vsel %vm3023, %v4399, %v4159
      %v4433 = vsel %vm3023, %v4401, %v4161
      %v4435 = vsel %vm3023, %v4403, %v4163
      %v4437 = vsel %vm3023, %v4405, %v4165
      %v4439 = vsel %vm3056, %v4407, %v4183
      %v4441 = vsel %vm3056, %v4409, %v4185
      %v4443 = vsel %vm3056, %v4411, %v4187
      %v4445 = vsel %vm3056, %v4413, %v4189
      %v4447 = vsel %vm3056, %v4415, %v4191
      %v4449 = vsel %vm3056, %v4417, %v4193
      %v4451 = vsel %vm3056, %v4419, %v4195
      %v4453 = vsel %vm3056, %v4421, %v4197
      %v4455 = vsel %vm3056, %v4423, %v4199
      %v4457 = vsel %vm3056, %v4425, %v4201
      %v4459 = vsel %vm3056, %v4427, %v4203
      %v4461 = vsel %vm3056, %v4429, %v4205
      %v4463 = vsel %vm3056, %v4431, %v4207
      %v4465 = vsel %vm3056, %v4433, %v4209
      %v4467 = vsel %vm3056, %v4435, %v4211
      %v4469 = vsel %vm3056, %v4437, %v4213
      %v4471 = vsel %vm3089, %v4439, %v4231
      %v4474 = vsel %vm3089, %v4441, %v4233
      %v4477 = vsel %vm3089, %v4443, %v4235
      %v4480 = vsel %vm3089, %v4445, %v4237
      %v4483 = vsel %vm3089, %v4447, %v4239
      %v4486 = vsel %vm3089, %v4449, %v4241
      %v4489 = vsel %vm3089, %v4451, %v4243
      %v4492 = vsel %vm3089, %v4453, %v4245
      %v4495 = vsel %vm3089, %v4455, %v4247
      %v4498 = vsel %vm3089, %v4457, %v4249
      %v4501 = vsel %vm3089, %v4459, %v4251
      %v4504 = vsel %vm3089, %v4461, %v4253
      %v4507 = vsel %vm3089, %v4463, %v4255
      %v4510 = vsel %vm3089, %v4465, %v4257
      %v4513 = vsel %vm3089, %v4467, %v4259
      %v4516 = vsel %vm3089, %v4469, %v4261
      %v4519 = vlaneseq
      %v4520 = vshrl.u32 %v4519, 7
      %v4521 = vsub.s32 0, %v4520
      %v4522 = vrot.slane %v3492, %v4521
      %v4542 = vunpack.c.l.b16 %v3473
      %v4543 = vunpack.c.l.b16 %v3474
      %v4544 = vunpack.c.l.b16 %v3475
      %v4545 = vunpack.c.l.b16 %v3476
      %v4546 = vunpack.c.l.b16 %v3477
      %v4547 = vunpack.c.l.b16 %v3478
      %v4548 = vunpack.c.l.b16 %v3479
      %v4549 = vunpack.c.l.b16 %v3480
      %v4550 = vunpack.c.l.b16 %v3481
      %v4551 = vunpack.c.l.b16 %v3482
      %v4552 = vunpack.c.l.b16 %v3483
      %v4553 = vunpack.c.l.b16 %v3484
      %v4554 = vunpack.c.l.b16 %v3485
      %v4555 = vunpack.c.l.b16 %v3486
      %v4556 = vunpack.c.l.b16 %v3487
      %v4557 = vunpack.c.l.b16 %v3488
      %v4558 = vunpack.c.l.b16 %v3489
      %v4559 = vunpack.c.l.b16 %v3490
      %v4560 = vpack.c.b16 %v4543, %v4542
      %v4561 = vpack.c.b16 %v4545, %v4544
      %v4562 = vpack.c.b16 %v4547, %v4546
      %v4563 = vpack.c.b16 %v4549, %v4548
      %v4564 = vpack.c.b16 %v4551, %v4550
      %v4565 = vpack.c.b16 %v4553, %v4552
      %v4566 = vpack.c.b16 %v4555, %v4554
      %v4567 = vpack.c.b16 %v4557, %v4556
      %v4568 = vpack.c.b16 %v4559, %v4558
      %v4579 = vsel %vm226, %v3910, 0
      %v4582 = vsel %vm226, %v3911, 0
      %v4585 = vsel %vm226, %v3912, 0
      %v4588 = vsel %vm226, %v3913, 0
      %v4591 = vsel %vm226, %v3914, 0
      %v4594 = vsel %vm226, %v3915, 0
      %v4597 = vsel %vm226, %v3916, 0
      %v4600 = vsel %vm226, %v3917, 0
      %v4603 = vsel %vm226, %v3918, 0
      %v4606 = vsel %vm226, %v3919, 0
      %v4609 = vsel %vm226, %v3920, 0
      %v4612 = vsel %vm226, %v3921, 0
      %v4615 = vsel %vm226, %v3922, 0
      %v4618 = vsel %vm226, %v3923, 0
      %v4621 = vsel %vm226, %v3924, 0
      %v4624 = vsel %vm226, %v3925, 0
      %4626 = vmatprep.subr.bf16.mxu0 0
      %4627 = vmatpush1.bf16.msra.mxu0 %v4560
      %4628 = vmatprep.subr.bf16.mxu0 0
      %4629 = vmatpush1.bf16.msra.mxu0 %v4561
      %4630 = vmatprep.subr.bf16.mxu0 0
      %4631 = vmatpush1.bf16.msra.mxu0 %v4562
      %4632 = vmatprep.subr.bf16.mxu0 0
      %4633 = vmatpush1.bf16.msra.mxu0 %v4563
      %4634 = vmatprep.subr.bf16.mxu0 0
      %4635 = vmatpush1.bf16.msra.mxu0 %v4564
      %4636 = vmatprep.subr.bf16.mxu0 0
      %4637 = vmatpush1.bf16.msra.mxu0 %v4565
      %4638 = vmatprep.subr.bf16.mxu0 0
      %4639 = vmatpush1.bf16.msra.mxu0 %v4566
      %4640 = vmatprep.subr.bf16.mxu0 0
      %4641 = vmatpush1.bf16.msra.mxu0 %v4567
      %4642 = vmatprep.subr.bf16.mxu0 0
      %4643 = vmatpush1.bf16.msra.mxu0 %v4568
      %4644 = vmatprep.subr.bf16.mxu0 0
      %4645 = vmatpush1.bf16.msra.mxu0 0
      %4646 = vmatprep.subr.bf16.mxu0 0
      %4647 = vmatpush1.bf16.msra.mxu0 0
      %4648 = vmatprep.subr.bf16.mxu0 0
      %4649 = vmatpush1.bf16.msra.mxu0 0
      %4650 = vmatprep.subr.bf16.mxu0 0
      %4651 = vmatpush1.bf16.msra.mxu0 0
      %4652 = vmatprep.subr.bf16.mxu0 0
      %4653 = vmatpush1.bf16.msra.mxu0 0
      %4654 = vmatprep.subr.bf16.mxu0 0
      %4655 = vmatpush1.bf16.msra.mxu0 0
      %4656 = vmatprep.subr.bf16.mxu0 0
      %4657 = vmatpush1.bf16.msra.mxu0 0
      %4658 = vmatprep.mubr.bf16.mxu0 %v4579
      %4659 = vmatmul.mubr.bf16.gmra.mrb[0].mxu0 %v4471
      %v4660 = vpop.f32.mrb[0].mxu0
      %v4661 = vadd.f32 %v4522, %v4660
      %v4662 = vpop.f32.mrb[0].mxu0
      %v4663 = vpop.f32.mrb[0].mxu0
      %v4664 = vadd.f32 %v4522, %v4663
      %v4665 = vpop.f32.mrb[0].mxu0
      %4666 = vmatprep.mubr.bf16.mxu0 %v4582
      %4667 = vmatmul.mubr.bf16.gmra.mrb[0].mxu0 %v4474
      %v4668 = vpop.f32.mrb[0].mxu0
      %v4669 = vadd.f32 %v4522, %v4668
      %v4670 = vpop.f32.mrb[0].mxu0
      %v4671 = vpop.f32.mrb[0].mxu0
      %v4672 = vadd.f32 %v4522, %v4671
      %v4673 = vpop.f32.mrb[0].mxu0
      %4674 = vmatprep.mubr.bf16.mxu0 %v4585
      %4675 = vmatmul.mubr.bf16.gmra.mrb[0].mxu0 %v4477
      %v4676 = vpop.f32.mrb[0].mxu0
      %v4677 = vadd.f32 %v4522, %v4676
      %v4678 = vpop.f32.mrb[0].mxu0
      %v4679 = vpop.f32.mrb[0].mxu0
      %v4680 = vadd.f32 %v4522, %v4679
      %v4681 = vpop.f32.mrb[0].mxu0
      %4682 = vmatprep.mubr.bf16.mxu0 %v4588
      %4683 = vmatmul.mubr.bf16.gmra.mrb[0].mxu0 %v4480
      %v4684 = vpop.f32.mrb[0].mxu0
      %v4685 = vadd.f32 %v4522, %v4684
      %v4686 = vpop.f32.mrb[0].mxu0
      %v4687 = vpop.f32.mrb[0].mxu0
      %v4688 = vadd.f32 %v4522, %v4687
      %v4689 = vpop.f32.mrb[0].mxu0
      %4690 = vmatprep.mubr.bf16.mxu0 %v4591
      %4691 = vmatmul.mubr.bf16.gmra.mrb[0].mxu0 %v4483
      %v4692 = vpop.f32.mrb[0].mxu0
      %v4693 = vadd.f32 %v4522, %v4692
      %v4694 = vpop.f32.mrb[0].mxu0
      %v4695 = vpop.f32.mrb[0].mxu0
      %v4696 = vadd.f32 %v4522, %v4695
      %v4697 = vpop.f32.mrb[0].mxu0
      %4698 = vmatprep.mubr.bf16.mxu0 %v4594
      %4699 = vmatmul.mubr.bf16.gmra.mrb[0].mxu0 %v4486
      %v4700 = vpop.f32.mrb[0].mxu0
      %v4701 = vadd.f32 %v4522, %v4700
      %v4702 = vpop.f32.mrb[0].mxu0
      %v4703 = vpop.f32.mrb[0].mxu0
      %v4704 = vadd.f32 %v4522, %v4703
      %v4705 = vpop.f32.mrb[0].mxu0
      %4706 = vmatprep.mubr.bf16.mxu0 %v4597
      %4707 = vmatmul.mubr.bf16.gmra.mrb[0].mxu0 %v4489
      %v4708 = vpop.f32.mrb[0].mxu0
      %v4709 = vadd.f32 %v4522, %v4708
      %v4710 = vpop.f32.mrb[0].mxu0
      %v4711 = vpop.f32.mrb[0].mxu0
      %v4712 = vadd.f32 %v4522, %v4711
      %v4713 = vpop.f32.mrb[0].mxu0
      %4714 = vmatprep.mubr.bf16.mxu0 %v4600
      %4715 = vmatmul.mubr.bf16.gmra.mrb[0].mxu0 %v4492
      %v4716 = vpop.f32.mrb[0].mxu0
      %v4717 = vadd.f32 %v4522, %v4716
      %v4718 = vpop.f32.mrb[0].mxu0
      %v4719 = vpop.f32.mrb[0].mxu0
      %v4720 = vadd.f32 %v4522, %v4719
      %v4721 = vpop.f32.mrb[0].mxu0
      %4722 = vmatprep.mubr.bf16.mxu0 %v4603
      %4723 = vmatmul.mubr.bf16.gmra.mrb[0].mxu0 %v4495
      %v4724 = vpop.f32.mrb[0].mxu0
      %v4725 = vadd.f32 %v4522, %v4724
      %v4726 = vpop.f32.mrb[0].mxu0
      %v4727 = vpop.f32.mrb[0].mxu0
      %v4728 = vadd.f32 %v4522, %v4727
      %v4729 = vpop.f32.mrb[0].mxu0
      %4730 = vmatprep.mubr.bf16.mxu0 %v4606
      %4731 = vmatmul.mubr.bf16.gmra.mrb[0].mxu0 %v4498
      %v4732 = vpop.f32.mrb[0].mxu0
      %v4733 = vadd.f32 %v4522, %v4732
      %v4734 = vpop.f32.mrb[0].mxu0
      %v4735 = vpop.f32.mrb[0].mxu0
      %v4736 = vadd.f32 %v4522, %v4735
      %v4737 = vpop.f32.mrb[0].mxu0
      %4738 = vmatprep.mubr.bf16.mxu0 %v4609
      %4739 = vmatmul.mubr.bf16.gmra.mrb[0].mxu0 %v4501
      %v4740 = vpop.f32.mrb[0].mxu0
      %v4741 = vadd.f32 %v4522, %v4740
      %v4742 = vpop.f32.mrb[0].mxu0
      %v4743 = vpop.f32.mrb[0].mxu0
      %v4744 = vadd.f32 %v4522, %v4743
      %v4745 = vpop.f32.mrb[0].mxu0
      %4746 = vmatprep.mubr.bf16.mxu0 %v4612
      %4747 = vmatmul.mubr.bf16.gmra.mrb[0].mxu0 %v4504
      %v4748 = vpop.f32.mrb[0].mxu0
      %v4749 = vadd.f32 %v4522, %v4748
      %v4750 = vpop.f32.mrb[0].mxu0
      %v4751 = vpop.f32.mrb[0].mxu0
      %v4752 = vadd.f32 %v4522, %v4751
      %v4753 = vpop.f32.mrb[0].mxu0
      %4754 = vmatprep.mubr.bf16.mxu0 %v4615
      %4755 = vmatmul.mubr.bf16.gmra.mrb[0].mxu0 %v4507
      %v4756 = vpop.f32.mrb[0].mxu0
      %v4757 = vadd.f32 %v4522, %v4756
      %v4758 = vpop.f32.mrb[0].mxu0
      %v4759 = vpop.f32.mrb[0].mxu0
      %v4760 = vadd.f32 %v4522, %v4759
      %v4761 = vpop.f32.mrb[0].mxu0
      %4762 = vmatprep.mubr.bf16.mxu0 %v4618
      %4763 = vmatmul.mubr.bf16.gmra.mrb[0].mxu0 %v4510
      %v4764 = vpop.f32.mrb[0].mxu0
      %v4765 = vadd.f32 %v4522, %v4764
      %v4766 = vpop.f32.mrb[0].mxu0
      %v4767 = vpop.f32.mrb[0].mxu0
      %v4768 = vadd.f32 %v4522, %v4767
      %v4769 = vpop.f32.mrb[0].mxu0
      %4770 = vmatprep.mubr.bf16.mxu0 %v4621
      %4771 = vmatmul.mubr.bf16.gmra.mrb[0].mxu0 %v4513
      %v4772 = vpop.f32.mrb[0].mxu0
      %v4773 = vadd.f32 %v4522, %v4772
      %v4774 = vpop.f32.mrb[0].mxu0
      %v4775 = vpop.f32.mrb[0].mxu0
      %v4776 = vadd.f32 %v4522, %v4775
      %v4777 = vpop.f32.mrb[0].mxu0
      %4778 = vmatprep.mubr.bf16.mxu0 %v4624
      %4779 = vmatmul.mubr.bf16.gmra.mrb[0].mxu0 %v4516
      %v4780 = vpop.f32.mrb[0].mxu0
      %v4781 = vadd.f32 %v4522, %v4780
      %v4782 = vpop.f32.mrb[0].mxu0
      %v4783 = vpop.f32.mrb[0].mxu0
      %v4784 = vadd.f32 %v4522, %v4783
      %v4785 = vpop.f32.mrb[0].mxu0
      %4786 = vdwg.mxu0
      %v4787 = vld [vmem:[%s2056 + $0x1] sm:$0xff]
      %v4788 = vld [vmem:[%s2056 + $0x9] sm:$0xff]
      %v4789 = vld [vmem:[%s2056 + $0x19] sm:$0xff]
      %v4790 = vld [vmem:[%s2056 + $0x21] sm:$0xff]
      %v4791 = vld [vmem:[%s2056 + $0x31] sm:$0xff]
      %v4792 = vld [vmem:[%s2056 + $0x39] sm:$0xff]
      %v4793 = vld [vmem:[%s2056 + $0x49] sm:$0xff]
      %v4794 = vld [vmem:[%s2056 + $0x51] sm:$0xff]
      %v4795 = vld [vmem:[%s2056 + $0x61] sm:$0xff]
      %v4796 = vld [vmem:[%s2056 + $0x69] sm:$0xff]
      %v4797 = vld [vmem:[%s2056 + $0x79] sm:$0xff]
      %v4798 = vld [vmem:[%s2056 + $0x81] sm:$0xff]
      %v4799 = vld [vmem:[%s2056 + $0x91] sm:$0xff]
      %v4800 = vld [vmem:[%s2056 + $0x99] sm:$0xff]
      %v4801 = vld [vmem:[%s2056 + $0xa9] sm:$0xff]
      %v4802 = vld [vmem:[%s2056 + $0xb1] sm:$0xff]
      %v4803 = vld [vmem:[%s2056 + $0xc1] sm:$0xff]
      %v4804 = vld [vmem:[%s2056 + $0xc9] sm:$0xff]
      %v4805 = vld [vmem:[%s2056 + $0xd9] sm:$0xff]
      %v4806 = vld [vmem:[%s2056 + $0xe1] sm:$0xff]
      %v4807 = vld [vmem:[%s2056 + $0xf1] sm:$0xff]
      %v4808 = vld [vmem:[%s2056 + $0xf9] sm:$0xff]
      %v4809 = vld [vmem:[%s2056 + $0x109] sm:$0xff]
      %v4810 = vld [vmem:[%s2056 + $0x111] sm:$0xff]
      %v4811 = vld [vmem:[%s2056 + $0x121] sm:$0xff]
      %v4812 = vld [vmem:[%s2056 + $0x129] sm:$0xff]
      %v4813 = vld [vmem:[%s2056 + $0x139] sm:$0xff]
      %v4814 = vld [vmem:[%s2056 + $0x141] sm:$0xff]
      %v4815 = vld [vmem:[%s2056 + $0x151] sm:$0xff]
      %v4816 = vld [vmem:[%s2056 + $0x159] sm:$0xff]
      %v4817 = vld [vmem:[%s2056 + $0x169] sm:$0xff]
      %v4818 = vld [vmem:[%s2056 + $0x171] sm:$0xff]
      %v4819 = vadd.f32 %v4787, %v4661
      %v4820 = vadd.f32 %v4788, %v4664
      %v4821 = vadd.f32 %v4789, %v4669
      %v4822 = vadd.f32 %v4790, %v4672
      %v4823 = vadd.f32 %v4791, %v4677
      %v4824 = vadd.f32 %v4792, %v4680
      %v4825 = vadd.f32 %v4793, %v4685
      %v4826 = vadd.f32 %v4794, %v4688
      %v4827 = vadd.f32 %v4795, %v4693
      %v4828 = vadd.f32 %v4796, %v4696
      %v4829 = vadd.f32 %v4797, %v4701
      %v4830 = vadd.f32 %v4798, %v4704
      %v4831 = vadd.f32 %v4799, %v4709
      %v4832 = vadd.f32 %v4800, %v4712
      %v4833 = vadd.f32 %v4801, %v4717
      %v4834 = vadd.f32 %v4802, %v4720
      %v4835 = vadd.f32 %v4803, %v4725
      %v4836 = vadd.f32 %v4804, %v4728
      %v4837 = vadd.f32 %v4805, %v4733
      %v4838 = vadd.f32 %v4806, %v4736
      %v4839 = vadd.f32 %v4807, %v4741
      %v4840 = vadd.f32 %v4808, %v4744
      %v4841 = vadd.f32 %v4809, %v4749
      %v4842 = vadd.f32 %v4810, %v4752
      %v4843 = vadd.f32 %v4811, %v4757
      %v4844 = vadd.f32 %v4812, %v4760
      %v4845 = vadd.f32 %v4813, %v4765
      %v4846 = vadd.f32 %v4814, %v4768
      %v4847 = vadd.f32 %v4815, %v4773
      %v4848 = vadd.f32 %v4816, %v4776
      %v4849 = vadd.f32 %v4817, %v4781
      %v4850 = vadd.f32 %v4818, %v4784
      %4851 = vst.msk [vmem:[%s2056 + $0x1] sm:$0xff] %vm226, %v4819
      %4852 = vst.msk [vmem:[%s2056 + $0x9] sm:$0xff] %vm226, %v4820
      %4853 = vst.msk [vmem:[%s2056 + $0x19] sm:$0xff] %vm226, %v4821
      %4854 = vst.msk [vmem:[%s2056 + $0x21] sm:$0xff] %vm226, %v4822
      %4855 = vst.msk [vmem:[%s2056 + $0x31] sm:$0xff] %vm226, %v4823
      %4856 = vst.msk [vmem:[%s2056 + $0x39] sm:$0xff] %vm226, %v4824
      %4857 = vst.msk [vmem:[%s2056 + $0x49] sm:$0xff] %vm226, %v4825
      %4858 = vst.msk [vmem:[%s2056 + $0x51] sm:$0xff] %vm226, %v4826
      %4859 = vst.msk [vmem:[%s2056 + $0x61] sm:$0xff] %vm226, %v4827
      %4860 = vst.msk [vmem:[%s2056 + $0x69] sm:$0xff] %vm226, %v4828
      %4861 = vst.msk [vmem:[%s2056 + $0x79] sm:$0xff] %vm226, %v4829
      %4862 = vst.msk [vmem:[%s2056 + $0x81] sm:$0xff] %vm226, %v4830
      %4863 = vst.msk [vmem:[%s2056 + $0x91] sm:$0xff] %vm226, %v4831
      %4864 = vst.msk [vmem:[%s2056 + $0x99] sm:$0xff] %vm226, %v4832
      %4865 = vst.msk [vmem:[%s2056 + $0xa9] sm:$0xff] %vm226, %v4833
      %4866 = vst.msk [vmem:[%s2056 + $0xb1] sm:$0xff] %vm226, %v4834
      %4867 = vst.msk [vmem:[%s2056 + $0xc1] sm:$0xff] %vm226, %v4835
      %4868 = vst.msk [vmem:[%s2056 + $0xc9] sm:$0xff] %vm226, %v4836
      %4869 = vst.msk [vmem:[%s2056 + $0xd9] sm:$0xff] %vm226, %v4837
      %4870 = vst.msk [vmem:[%s2056 + $0xe1] sm:$0xff] %vm226, %v4838
      %4871 = vst.msk [vmem:[%s2056 + $0xf1] sm:$0xff] %vm226, %v4839
      %4872 = vst.msk [vmem:[%s2056 + $0xf9] sm:$0xff] %vm226, %v4840
      %4873 = vst.msk [vmem:[%s2056 + $0x109] sm:$0xff] %vm226, %v4841
      %4874 = vst.msk [vmem:[%s2056 + $0x111] sm:$0xff] %vm226, %v4842
      %4875 = vst.msk [vmem:[%s2056 + $0x121] sm:$0xff] %vm226, %v4843
      %4876 = vst.msk [vmem:[%s2056 + $0x129] sm:$0xff] %vm226, %v4844
      %4877 = vst.msk [vmem:[%s2056 + $0x139] sm:$0xff] %vm226, %v4845
      %4878 = vst.msk [vmem:[%s2056 + $0x141] sm:$0xff] %vm226, %v4846
      %4879 = vst.msk [vmem:[%s2056 + $0x151] sm:$0xff] %vm226, %v4847
      %4880 = vst.msk [vmem:[%s2056 + $0x159] sm:$0xff] %vm226, %v4848
      %4881 = vst.msk [vmem:[%s2056 + $0x169] sm:$0xff] %vm226, %v4849
      %4882 = vst.msk [vmem:[%s2056 + $0x171] sm:$0xff] %vm226, %v4850
      %s4883 = scalar_lea.vmem %s3, 144
      %v4884 = vld [vmem:[%s4883] sm:$0xf]
      %v4885 = vld [vmem:[%s4883 + $0x4] sm:$0xf]
      %v4886 = vld [vmem:[%s4883 + $0x8] sm:$0xf]
      %v4887 = vld [vmem:[%s4883 + $0xc] sm:$0xf]
      %v4888 = vld [vmem:[%s4883 + $0x10] sm:$0xf]
      %v4889 = vld [vmem:[%s4883 + $0x14] sm:$0xf]
      %v4890 = vld [vmem:[%s4883 + $0x18] sm:$0xf]
      %v4891 = vld [vmem:[%s4883 + $0x1c] sm:$0xf]
      %v4892 = vld [vmem:[%s4883 + $0x20] sm:$0xf]
      %v4893 = vld [vmem:[%s4883 + $0x24] sm:$0xf]
      %v4894 = vld [vmem:[%s4883 + $0x28] sm:$0xf]
      %v4895 = vld [vmem:[%s4883 + $0x2c] sm:$0xf]
      %v4896 = vld [vmem:[%s4883 + $0x30] sm:$0xf]
      %v4897 = vld [vmem:[%s4883 + $0x34] sm:$0xf]
      %v4898 = vld [vmem:[%s4883 + $0x38] sm:$0xf]
      %v4899 = vld [vmem:[%s4883 + $0x3c] sm:$0xf]
      %v4900 = vld [vmem:[%s4883 + $0x40] sm:$0xf]
      %v4901 = vld [vmem:[%s4883 + $0x44] sm:$0xf]
      %s4902 = scalar_lea.vmem %s4, 2
      %v4903 = vld [vmem:[%s4902] sm:$0x1]
      %v4904 = vld [vmem:[#allocation2] sm:$0xff]
      %v4905 = vld [vmem:[#allocation2 + $0x8] sm:$0xff]
      %v4906 = vld [vmem:[#allocation2 + $0x18] sm:$0xff]
      %v4907 = vld [vmem:[#allocation2 + $0x20] sm:$0xff]
      %v4908 = vld [vmem:[#allocation2 + $0x30] sm:$0xff]
      %v4909 = vld [vmem:[#allocation2 + $0x38] sm:$0xff]
      %v4910 = vld [vmem:[#allocation2 + $0x48] sm:$0xff]
      %v4911 = vld [vmem:[#allocation2 + $0x50] sm:$0xff]
      %v4912 = vld [vmem:[#allocation2 + $0x60] sm:$0xff]
      %v4913 = vld [vmem:[#allocation2 + $0x68] sm:$0xff]
      %v4914 = vld [vmem:[#allocation2 + $0x78] sm:$0xff]
      %v4915 = vld [vmem:[#allocation2 + $0x80] sm:$0xff]
      %v4916 = vld [vmem:[#allocation2 + $0x90] sm:$0xff]
      %v4917 = vld [vmem:[#allocation2 + $0x98] sm:$0xff]
      %v4918 = vld [vmem:[#allocation2 + $0xa8] sm:$0xff]
      %v4919 = vld [vmem:[#allocation2 + $0xb0] sm:$0xff]
      %v4920 = vld [vmem:[#allocation2 + $0xc0] sm:$0xff]
      %v4921 = vld [vmem:[#allocation2 + $0xc8] sm:$0xff]
      %v4922 = vld [vmem:[#allocation2 + $0xd8] sm:$0xff]
      %v4923 = vld [vmem:[#allocation2 + $0xe0] sm:$0xff]
      %v4924 = vld [vmem:[#allocation2 + $0xf0] sm:$0xff]
      %v4925 = vld [vmem:[#allocation2 + $0xf8] sm:$0xff]
      %v4926 = vld [vmem:[#allocation2 + $0x108] sm:$0xff]
      %v4927 = vld [vmem:[#allocation2 + $0x110] sm:$0xff]
      %v4928 = vld [vmem:[#allocation2 + $0x120] sm:$0xff]
      %v4929 = vld [vmem:[#allocation2 + $0x128] sm:$0xff]
      %v4930 = vld [vmem:[#allocation2 + $0x138] sm:$0xff]
      %v4931 = vld [vmem:[#allocation2 + $0x140] sm:$0xff]
      %v4932 = vld [vmem:[#allocation2 + $0x150] sm:$0xff]
      %v4933 = vld [vmem:[#allocation2 + $0x158] sm:$0xff]
      %v4934 = vld [vmem:[#allocation2 + $0x168] sm:$0xff]
      %v4935 = vld [vmem:[#allocation2 + $0x170] sm:$0xff]
      %v4936 = vpack.c.bf16 %v4905, %v4904
      %v4937 = vpack.c.bf16 %v4907, %v4906
      %v4938 = vpack.c.bf16 %v4909, %v4908
      %v4939 = vpack.c.bf16 %v4911, %v4910
      %v4940 = vpack.c.bf16 %v4913, %v4912
      %v4941 = vpack.c.bf16 %v4915, %v4914
      %v4942 = vpack.c.bf16 %v4917, %v4916
      %v4943 = vpack.c.bf16 %v4919, %v4918
      %v4944 = vpack.c.bf16 %v4921, %v4920
      %v4945 = vpack.c.bf16 %v4923, %v4922
      %v4946 = vpack.c.bf16 %v4925, %v4924
      %v4947 = vpack.c.bf16 %v4927, %v4926
      %v4948 = vpack.c.bf16 %v4929, %v4928
      %v4949 = vpack.c.bf16 %v4931, %v4930
      %v4950 = vpack.c.bf16 %v4933, %v4932
      %v4951 = vpack.c.bf16 %v4935, %v4934
      %v4952 = vld [vmem:[#allocation2 + $0x1] sm:$0xff]
      %v4953 = vld [vmem:[#allocation2 + $0x9] sm:$0xff]
      %v4954 = vld [vmem:[#allocation2 + $0x19] sm:$0xff]
      %v4955 = vld [vmem:[#allocation2 + $0x21] sm:$0xff]
      %v4956 = vld [vmem:[#allocation2 + $0x31] sm:$0xff]
      %v4957 = vld [vmem:[#allocation2 + $0x39] sm:$0xff]
      %v4958 = vld [vmem:[#allocation2 + $0x49] sm:$0xff]
      %v4959 = vld [vmem:[#allocation2 + $0x51] sm:$0xff]
      %v4960 = vld [vmem:[#allocation2 + $0x61] sm:$0xff]
      %v4961 = vld [vmem:[#allocation2 + $0x69] sm:$0xff]
      %v4962 = vld [vmem:[#allocation2 + $0x79] sm:$0xff]
      %v4963 = vld [vmem:[#allocation2 + $0x81] sm:$0xff]
      %v4964 = vld [vmem:[#allocation2 + $0x91] sm:$0xff]
      %v4965 = vld [vmem:[#allocation2 + $0x99] sm:$0xff]
      %v4966 = vld [vmem:[#allocation2 + $0xa9] sm:$0xff]
      %v4967 = vld [vmem:[#allocation2 + $0xb1] sm:$0xff]
      %v4968 = vld [vmem:[#allocation2 + $0xc1] sm:$0xff]
      %v4969 = vld [vmem:[#allocation2 + $0xc9] sm:$0xff]
      %v4970 = vld [vmem:[#allocation2 + $0xd9] sm:$0xff]
      %v4971 = vld [vmem:[#allocation2 + $0xe1] sm:$0xff]
      %v4972 = vld [vmem:[#allocation2 + $0xf1] sm:$0xff]
      %v4973 = vld [vmem:[#allocation2 + $0xf9] sm:$0xff]
      %v4974 = vld [vmem:[#allocation2 + $0x109] sm:$0xff]
      %v4975 = vld [vmem:[#allocation2 + $0x111] sm:$0xff]
      %v4976 = vld [vmem:[#allocation2 + $0x121] sm:$0xff]
      %v4977 = vld [vmem:[#allocation2 + $0x129] sm:$0xff]
      %v4978 = vld [vmem:[#allocation2 + $0x139] sm:$0xff]
      %v4979 = vld [vmem:[#allocation2 + $0x141] sm:$0xff]
      %v4980 = vld [vmem:[#allocation2 + $0x151] sm:$0xff]
      %v4981 = vld [vmem:[#allocation2 + $0x159] sm:$0xff]
      %v4982 = vld [vmem:[#allocation2 + $0x169] sm:$0xff]
      %v4983 = vld [vmem:[#allocation2 + $0x171] sm:$0xff]
      %v4984 = vpack.c.bf16 %v4953, %v4952
      %v4985 = vpack.c.bf16 %v4955, %v4954
      %v4986 = vpack.c.bf16 %v4957, %v4956
      %v4987 = vpack.c.bf16 %v4959, %v4958
      %v4988 = vpack.c.bf16 %v4961, %v4960
      %v4989 = vpack.c.bf16 %v4963, %v4962
      %v4990 = vpack.c.bf16 %v4965, %v4964
      %v4991 = vpack.c.bf16 %v4967, %v4966
      %v4992 = vpack.c.bf16 %v4969, %v4968
      %v4993 = vpack.c.bf16 %v4971, %v4970
      %v4994 = vpack.c.bf16 %v4973, %v4972
      %v4995 = vpack.c.bf16 %v4975, %v4974
      %v4996 = vpack.c.bf16 %v4977, %v4976
      %v4997 = vpack.c.bf16 %v4979, %v4978
      %v4998 = vpack.c.bf16 %v4981, %v4980
      %v4999 = vpack.c.bf16 %v4983, %v4982
      %v5000 = vld [vmem:[#allocation2 + $0x2] sm:$0xff]
      %v5001 = vld [vmem:[#allocation2 + $0xa] sm:$0xff]
      %v5002 = vld [vmem:[#allocation2 + $0x1a] sm:$0xff]
      %v5003 = vld [vmem:[#allocation2 + $0x22] sm:$0xff]
      %v5004 = vld [vmem:[#allocation2 + $0x32] sm:$0xff]
      %v5005 = vld [vmem:[#allocation2 + $0x3a] sm:$0xff]
      %v5006 = vld [vmem:[#allocation2 + $0x4a] sm:$0xff]
      %v5007 = vld [vmem:[#allocation2 + $0x52] sm:$0xff]
      %v5008 = vld [vmem:[#allocation2 + $0x62] sm:$0xff]
      %v5009 = vld [vmem:[#allocation2 + $0x6a] sm:$0xff]
      %v5010 = vld [vmem:[#allocation2 + $0x7a] sm:$0xff]
      %v5011 = vld [vmem:[#allocation2 + $0x82] sm:$0xff]
      %v5012 = vld [vmem:[#allocation2 + $0x92] sm:$0xff]
      %v5013 = vld [vmem:[#allocation2 + $0x9a] sm:$0xff]
      %v5014 = vld [vmem:[#allocation2 + $0xaa] sm:$0xff]
      %v5015 = vld [vmem:[#allocation2 + $0xb2] sm:$0xff]
      %v5016 = vld [vmem:[#allocation2 + $0xc2] sm:$0xff]
      %v5017 = vld [vmem:[#allocation2 + $0xca] sm:$0xff]
      %v5018 = vld [vmem:[#allocation2 + $0xda] sm:$0xff]
      %v5019 = vld [vmem:[#allocation2 + $0xe2] sm:$0xff]
      %v5020 = vld [vmem:[#allocation2 + $0xf2] sm:$0xff]
      %v5021 = vld [vmem:[#allocation2 + $0xfa] sm:$0xff]
      %v5022 = vld [vmem:[#allocation2 + $0x10a] sm:$0xff]
      %v5023 = vld [vmem:[#allocation2 + $0x112] sm:$0xff]
      %v5024 = vld [vmem:[#allocation2 + $0x122] sm:$0xff]
      %v5025 = vld [vmem:[#allocation2 + $0x12a] sm:$0xff]
      %v5026 = vld [vmem:[#allocation2 + $0x13a] sm:$0xff]
      %v5027 = vld [vmem:[#allocation2 + $0x142] sm:$0xff]
      %v5028 = vld [vmem:[#allocation2 + $0x152] sm:$0xff]
      %v5029 = vld [vmem:[#allocation2 + $0x15a] sm:$0xff]
      %v5030 = vld [vmem:[#allocation2 + $0x16a] sm:$0xff]
      %v5031 = vld [vmem:[#allocation2 + $0x172] sm:$0xff]
      %v5032 = vpack.c.bf16 %v5001, %v5000
      %v5033 = vpack.c.bf16 %v5003, %v5002
      %v5034 = vpack.c.bf16 %v5005, %v5004
      %v5035 = vpack.c.bf16 %v5007, %v5006
      %v5036 = vpack.c.bf16 %v5009, %v5008
      %v5037 = vpack.c.bf16 %v5011, %v5010
      %v5038 = vpack.c.bf16 %v5013, %v5012
      %v5039 = vpack.c.bf16 %v5015, %v5014
      %v5040 = vpack.c.bf16 %v5017, %v5016
      %v5041 = vpack.c.bf16 %v5019, %v5018
      %v5042 = vpack.c.bf16 %v5021, %v5020
      %v5043 = vpack.c.bf16 %v5023, %v5022
      %v5044 = vpack.c.bf16 %v5025, %v5024
      %v5045 = vpack.c.bf16 %v5027, %v5026
      %v5046 = vpack.c.bf16 %v5029, %v5028
      %v5047 = vpack.c.bf16 %v5031, %v5030
      %v5048 = vld [vmem:[%s2056] sm:$0xff]
      %v5049 = vld [vmem:[%s2056 + $0x8] sm:$0xff]
      %v5050 = vld [vmem:[%s2056 + $0x18] sm:$0xff]
      %v5051 = vld [vmem:[%s2056 + $0x20] sm:$0xff]
      %v5052 = vld [vmem:[%s2056 + $0x30] sm:$0xff]
      %v5053 = vld [vmem:[%s2056 + $0x38] sm:$0xff]
      %v5054 = vld [vmem:[%s2056 + $0x48] sm:$0xff]
      %v5055 = vld [vmem:[%s2056 + $0x50] sm:$0xff]
      %v5056 = vld [vmem:[%s2056 + $0x60] sm:$0xff]
      %v5057 = vld [vmem:[%s2056 + $0x68] sm:$0xff]
      %v5058 = vld [vmem:[%s2056 + $0x78] sm:$0xff]
      %v5059 = vld [vmem:[%s2056 + $0x80] sm:$0xff]
      %v5060 = vld [vmem:[%s2056 + $0x90] sm:$0xff]
      %v5061 = vld [vmem:[%s2056 + $0x98] sm:$0xff]
      %v5062 = vld [vmem:[%s2056 + $0xa8] sm:$0xff]
      %v5063 = vld [vmem:[%s2056 + $0xb0] sm:$0xff]
      %v5064 = vld [vmem:[%s2056 + $0xc0] sm:$0xff]
      %v5065 = vld [vmem:[%s2056 + $0xc8] sm:$0xff]
      %v5066 = vld [vmem:[%s2056 + $0xd8] sm:$0xff]
      %v5067 = vld [vmem:[%s2056 + $0xe0] sm:$0xff]
      %v5068 = vld [vmem:[%s2056 + $0xf0] sm:$0xff]
      %v5069 = vld [vmem:[%s2056 + $0xf8] sm:$0xff]
      %v5070 = vld [vmem:[%s2056 + $0x108] sm:$0xff]
      %v5071 = vld [vmem:[%s2056 + $0x110] sm:$0xff]
      %v5072 = vld [vmem:[%s2056 + $0x120] sm:$0xff]
      %v5073 = vld [vmem:[%s2056 + $0x128] sm:$0xff]
      %v5074 = vld [vmem:[%s2056 + $0x138] sm:$0xff]
      %v5075 = vld [vmem:[%s2056 + $0x140] sm:$0xff]
      %v5076 = vld [vmem:[%s2056 + $0x150] sm:$0xff]
      %v5077 = vld [vmem:[%s2056 + $0x158] sm:$0xff]
      %v5078 = vld [vmem:[%s2056 + $0x168] sm:$0xff]
      %v5079 = vld [vmem:[%s2056 + $0x170] sm:$0xff]
      %v5080 = vpack.c.bf16 %v5049, %v5048
      %v5081 = vpack.c.bf16 %v5051, %v5050
      %v5082 = vpack.c.bf16 %v5053, %v5052
      %v5083 = vpack.c.bf16 %v5055, %v5054
      %v5084 = vpack.c.bf16 %v5057, %v5056
      %v5085 = vpack.c.bf16 %v5059, %v5058
      %v5086 = vpack.c.bf16 %v5061, %v5060
      %v5087 = vpack.c.bf16 %v5063, %v5062
      %v5088 = vpack.c.bf16 %v5065, %v5064
      %v5089 = vpack.c.bf16 %v5067, %v5066
      %v5090 = vpack.c.bf16 %v5069, %v5068
      %v5091 = vpack.c.bf16 %v5071, %v5070
      %v5092 = vpack.c.bf16 %v5073, %v5072
      %v5093 = vpack.c.bf16 %v5075, %v5074
      %v5094 = vpack.c.bf16 %v5077, %v5076
      %v5095 = vpack.c.bf16 %v5079, %v5078
      %v5096 = vld [vmem:[%s2056 + $0x1] sm:$0xff]
      %v5097 = vld [vmem:[%s2056 + $0x9] sm:$0xff]
      %v5098 = vld [vmem:[%s2056 + $0x19] sm:$0xff]
      %v5099 = vld [vmem:[%s2056 + $0x21] sm:$0xff]
      %v5100 = vld [vmem:[%s2056 + $0x31] sm:$0xff]
      %v5101 = vld [vmem:[%s2056 + $0x39] sm:$0xff]
      %v5102 = vld [vmem:[%s2056 + $0x49] sm:$0xff]
      %v5103 = vld [vmem:[%s2056 + $0x51] sm:$0xff]
      %v5104 = vld [vmem:[%s2056 + $0x61] sm:$0xff]
      %v5105 = vld [vmem:[%s2056 + $0x69] sm:$0xff]
      %v5106 = vld [vmem:[%s2056 + $0x79] sm:$0xff]
      %v5107 = vld [vmem:[%s2056 + $0x81] sm:$0xff]
      %v5108 = vld [vmem:[%s2056 + $0x91] sm:$0xff]
      %v5109 = vld [vmem:[%s2056 + $0x99] sm:$0xff]
      %v5110 = vld [vmem:[%s2056 + $0xa9] sm:$0xff]
      %v5111 = vld [vmem:[%s2056 + $0xb1] sm:$0xff]
      %v5112 = vld [vmem:[%s2056 + $0xc1] sm:$0xff]
      %v5113 = vld [vmem:[%s2056 + $0xc9] sm:$0xff]
      %v5114 = vld [vmem:[%s2056 + $0xd9] sm:$0xff]
      %v5115 = vld [vmem:[%s2056 + $0xe1] sm:$0xff]
      %v5116 = vld [vmem:[%s2056 + $0xf1] sm:$0xff]
      %v5117 = vld [vmem:[%s2056 + $0xf9] sm:$0xff]
      %v5118 = vld [vmem:[%s2056 + $0x109] sm:$0xff]
      %v5119 = vld [vmem:[%s2056 + $0x111] sm:$0xff]
      %v5120 = vld [vmem:[%s2056 + $0x121] sm:$0xff]
      %v5121 = vld [vmem:[%s2056 + $0x129] sm:$0xff]
      %v5122 = vld [vmem:[%s2056 + $0x139] sm:$0xff]
      %v5123 = vld [vmem:[%s2056 + $0x141] sm:$0xff]
      %v5124 = vld [vmem:[%s2056 + $0x151] sm:$0xff]
      %v5125 = vld [vmem:[%s2056 + $0x159] sm:$0xff]
      %v5126 = vld [vmem:[%s2056 + $0x169] sm:$0xff]
      %v5127 = vld [vmem:[%s2056 + $0x171] sm:$0xff]
      %v5128 = vpack.c.bf16 %v5097, %v5096
      %v5129 = vpack.c.bf16 %v5099, %v5098
      %v5130 = vpack.c.bf16 %v5101, %v5100
      %v5131 = vpack.c.bf16 %v5103, %v5102
      %v5132 = vpack.c.bf16 %v5105, %v5104
      %v5133 = vpack.c.bf16 %v5107, %v5106
      %v5134 = vpack.c.bf16 %v5109, %v5108
      %v5135 = vpack.c.bf16 %v5111, %v5110
      %v5136 = vpack.c.bf16 %v5113, %v5112
      %v5137 = vpack.c.bf16 %v5115, %v5114
      %v5138 = vpack.c.bf16 %v5117, %v5116
      %v5139 = vpack.c.bf16 %v5119, %v5118
      %v5140 = vpack.c.bf16 %v5121, %v5120
      %v5141 = vpack.c.bf16 %v5123, %v5122
      %v5142 = vpack.c.bf16 %v5125, %v5124
      %v5143 = vpack.c.bf16 %v5127, %v5126
      %v5144 = vld [vmem:[%s2056 + $0x2] sm:$0xff]
      %v5145 = vld [vmem:[%s2056 + $0xa] sm:$0xff]
      %v5146 = vld [vmem:[%s2056 + $0x1a] sm:$0xff]
      %v5147 = vld [vmem:[%s2056 + $0x22] sm:$0xff]
      %v5148 = vld [vmem:[%s2056 + $0x32] sm:$0xff]
      %v5149 = vld [vmem:[%s2056 + $0x3a] sm:$0xff]
      %v5150 = vld [vmem:[%s2056 + $0x4a] sm:$0xff]
      %v5151 = vld [vmem:[%s2056 + $0x52] sm:$0xff]
      %v5152 = vld [vmem:[%s2056 + $0x62] sm:$0xff]
      %v5153 = vld [vmem:[%s2056 + $0x6a] sm:$0xff]
      %v5154 = vld [vmem:[%s2056 + $0x7a] sm:$0xff]
      %v5155 = vld [vmem:[%s2056 + $0x82] sm:$0xff]
      %v5156 = vld [vmem:[%s2056 + $0x92] sm:$0xff]
      %v5157 = vld [vmem:[%s2056 + $0x9a] sm:$0xff]
      %v5158 = vld [vmem:[%s2056 + $0xaa] sm:$0xff]
      %v5159 = vld [vmem:[%s2056 + $0xb2] sm:$0xff]
      %v5160 = vld [vmem:[%s2056 + $0xc2] sm:$0xff]
      %v5161 = vld [vmem:[%s2056 + $0xca] sm:$0xff]
      %v5162 = vld [vmem:[%s2056 + $0xda] sm:$0xff]
      %v5163 = vld [vmem:[%s2056 + $0xe2] sm:$0xff]
      %v5164 = vld [vmem:[%s2056 + $0xf2] sm:$0xff]
      %v5165 = vld [vmem:[%s2056 + $0xfa] sm:$0xff]
      %v5166 = vld [vmem:[%s2056 + $0x10a] sm:$0xff]
      %v5167 = vld [vmem:[%s2056 + $0x112] sm:$0xff]
      %v5168 = vld [vmem:[%s2056 + $0x122] sm:$0xff]
      %v5169 = vld [vmem:[%s2056 + $0x12a] sm:$0xff]
      %v5170 = vld [vmem:[%s2056 + $0x13a] sm:$0xff]
      %v5171 = vld [vmem:[%s2056 + $0x142] sm:$0xff]
      %v5172 = vld [vmem:[%s2056 + $0x152] sm:$0xff]
      %v5173 = vld [vmem:[%s2056 + $0x15a] sm:$0xff]
      %v5174 = vld [vmem:[%s2056 + $0x16a] sm:$0xff]
      %v5175 = vld [vmem:[%s2056 + $0x172] sm:$0xff]
      %v5176 = vpack.c.bf16 %v5145, %v5144
      %v5177 = vpack.c.bf16 %v5147, %v5146
      %v5178 = vpack.c.bf16 %v5149, %v5148
      %v5179 = vpack.c.bf16 %v5151, %v5150
      %v5180 = vpack.c.bf16 %v5153, %v5152
      %v5181 = vpack.c.bf16 %v5155, %v5154
      %v5182 = vpack.c.bf16 %v5157, %v5156
      %v5183 = vpack.c.bf16 %v5159, %v5158
      %v5184 = vpack.c.bf16 %v5161, %v5160
      %v5185 = vpack.c.bf16 %v5163, %v5162
      %v5186 = vpack.c.bf16 %v5165, %v5164
      %v5187 = vpack.c.bf16 %v5167, %v5166
      %v5188 = vpack.c.bf16 %v5169, %v5168
      %v5189 = vpack.c.bf16 %v5171, %v5170
      %v5190 = vpack.c.bf16 %v5173, %v5172
      %v5191 = vpack.c.bf16 %v5175, %v5174
      %v5192 = vld [vmem:[%s2396] sm:$0xff]
      %v5193 = vld [vmem:[%s2396 + $0x8] sm:$0xff]
      %v5194 = vld [vmem:[%s2396 + $0x18] sm:$0xff]
      %v5195 = vld [vmem:[%s2396 + $0x20] sm:$0xff]
      %v5196 = vld [vmem:[%s2396 + $0x30] sm:$0xff]
      %v5197 = vld [vmem:[%s2396 + $0x38] sm:$0xff]
      %v5198 = vld [vmem:[%s2396 + $0x48] sm:$0xff]
      %v5199 = vld [vmem:[%s2396 + $0x50] sm:$0xff]
      %v5200 = vld [vmem:[%s2396 + $0x60] sm:$0xff]
      %v5201 = vld [vmem:[%s2396 + $0x68] sm:$0xff]
      %v5202 = vld [vmem:[%s2396 + $0x78] sm:$0xff]
      %v5203 = vld [vmem:[%s2396 + $0x80] sm:$0xff]
      %v5204 = vld [vmem:[%s2396 + $0x90] sm:$0xff]
      %v5205 = vld [vmem:[%s2396 + $0x98] sm:$0xff]
      %v5206 = vld [vmem:[%s2396 + $0xa8] sm:$0xff]
      %v5207 = vld [vmem:[%s2396 + $0xb0] sm:$0xff]
      %v5208 = vld [vmem:[%s2396 + $0xc0] sm:$0xff]
      %v5209 = vld [vmem:[%s2396 + $0xc8] sm:$0xff]
      %v5210 = vld [vmem:[%s2396 + $0xd8] sm:$0xff]
      %v5211 = vld [vmem:[%s2396 + $0xe0] sm:$0xff]
      %v5212 = vld [vmem:[%s2396 + $0xf0] sm:$0xff]
      %v5213 = vld [vmem:[%s2396 + $0xf8] sm:$0xff]
      %v5214 = vld [vmem:[%s2396 + $0x108] sm:$0xff]
      %v5215 = vld [vmem:[%s2396 + $0x110] sm:$0xff]
      %v5216 = vld [vmem:[%s2396 + $0x120] sm:$0xff]
      %v5217 = vld [vmem:[%s2396 + $0x128] sm:$0xff]
      %v5218 = vld [vmem:[%s2396 + $0x138] sm:$0xff]
      %v5219 = vld [vmem:[%s2396 + $0x140] sm:$0xff]
      %v5220 = vld [vmem:[%s2396 + $0x150] sm:$0xff]
      %v5221 = vld [vmem:[%s2396 + $0x158] sm:$0xff]
      %v5222 = vld [vmem:[%s2396 + $0x168] sm:$0xff]
      %v5223 = vld [vmem:[%s2396 + $0x170] sm:$0xff]
      %v5224 = vpack.c.bf16 %v5193, %v5192
      %v5225 = vpack.c.bf16 %v5195, %v5194
      %v5226 = vpack.c.bf16 %v5197, %v5196
      %v5227 = vpack.c.bf16 %v5199, %v5198
      %v5228 = vpack.c.bf16 %v5201, %v5200
      %v5229 = vpack.c.bf16 %v5203, %v5202
      %v5230 = vpack.c.bf16 %v5205, %v5204
      %v5231 = vpack.c.bf16 %v5207, %v5206
      %v5232 = vpack.c.bf16 %v5209, %v5208
      %v5233 = vpack.c.bf16 %v5211, %v5210
      %v5234 = vpack.c.bf16 %v5213, %v5212
      %v5235 = vpack.c.bf16 %v5215, %v5214
      %v5236 = vpack.c.bf16 %v5217, %v5216
      %v5237 = vpack.c.bf16 %v5219, %v5218
      %v5238 = vpack.c.bf16 %v5221, %v5220
      %v5239 = vpack.c.bf16 %v5223, %v5222
      %v5240 = vld [vmem:[%s2396 + $0x1] sm:$0xff]
      %v5241 = vld [vmem:[%s2396 + $0x9] sm:$0xff]
      %v5242 = vld [vmem:[%s2396 + $0x19] sm:$0xff]
      %v5243 = vld [vmem:[%s2396 + $0x21] sm:$0xff]
      %v5244 = vld [vmem:[%s2396 + $0x31] sm:$0xff]
      %v5245 = vld [vmem:[%s2396 + $0x39] sm:$0xff]
      %v5246 = vld [vmem:[%s2396 + $0x49] sm:$0xff]
      %v5247 = vld [vmem:[%s2396 + $0x51] sm:$0xff]
      %v5248 = vld [vmem:[%s2396 + $0x61] sm:$0xff]
      %v5249 = vld [vmem:[%s2396 + $0x69] sm:$0xff]
      %v5250 = vld [vmem:[%s2396 + $0x79] sm:$0xff]
      %v5251 = vld [vmem:[%s2396 + $0x81] sm:$0xff]
      %v5252 = vld [vmem:[%s2396 + $0x91] sm:$0xff]
      %v5253 = vld [vmem:[%s2396 + $0x99] sm:$0xff]
      %v5254 = vld [vmem:[%s2396 + $0xa9] sm:$0xff]
      %v5255 = vld [vmem:[%s2396 + $0xb1] sm:$0xff]
      %v5256 = vld [vmem:[%s2396 + $0xc1] sm:$0xff]
      %v5257 = vld [vmem:[%s2396 + $0xc9] sm:$0xff]
      %v5258 = vld [vmem:[%s2396 + $0xd9] sm:$0xff]
      %v5259 = vld [vmem:[%s2396 + $0xe1] sm:$0xff]
      %v5260 = vld [vmem:[%s2396 + $0xf1] sm:$0xff]
      %v5261 = vld [vmem:[%s2396 + $0xf9] sm:$0xff]
      %v5262 = vld [vmem:[%s2396 + $0x109] sm:$0xff]
      %v5263 = vld [vmem:[%s2396 + $0x111] sm:$0xff]
      %v5264 = vld [vmem:[%s2396 + $0x121] sm:$0xff]
      %v5265 = vld [vmem:[%s2396 + $0x129] sm:$0xff]
      %v5266 = vld [vmem:[%s2396 + $0x139] sm:$0xff]
      %v5267 = vld [vmem:[%s2396 + $0x141] sm:$0xff]
      %v5268 = vld [vmem:[%s2396 + $0x151] sm:$0xff]
      %v5269 = vld [vmem:[%s2396 + $0x159] sm:$0xff]
      %v5270 = vld [vmem:[%s2396 + $0x169] sm:$0xff]
      %v5271 = vld [vmem:[%s2396 + $0x171] sm:$0xff]
      %v5272 = vpack.c.bf16 %v5241, %v5240
      %v5273 = vpack.c.bf16 %v5243, %v5242
      %v5274 = vpack.c.bf16 %v5245, %v5244
      %v5275 = vpack.c.bf16 %v5247, %v5246
      %v5276 = vpack.c.bf16 %v5249, %v5248
      %v5277 = vpack.c.bf16 %v5251, %v5250
      %v5278 = vpack.c.bf16 %v5253, %v5252
      %v5279 = vpack.c.bf16 %v5255, %v5254
      %v5280 = vpack.c.bf16 %v5257, %v5256
      %v5281 = vpack.c.bf16 %v5259, %v5258
      %v5282 = vpack.c.bf16 %v5261, %v5260
      %v5283 = vpack.c.bf16 %v5263, %v5262
      %v5284 = vpack.c.bf16 %v5265, %v5264
      %v5285 = vpack.c.bf16 %v5267, %v5266
      %v5286 = vpack.c.bf16 %v5269, %v5268
      %v5287 = vpack.c.bf16 %v5271, %v5270
      %v5288 = vld [vmem:[%s2396 + $0x2] sm:$0xff]
      %v5289 = vld [vmem:[%s2396 + $0xa] sm:$0xff]
      %v5290 = vld [vmem:[%s2396 + $0x1a] sm:$0xff]
      %v5291 = vld [vmem:[%s2396 + $0x22] sm:$0xff]
      %v5292 = vld [vmem:[%s2396 + $0x32] sm:$0xff]
      %v5293 = vld [vmem:[%s2396 + $0x3a] sm:$0xff]
      %v5294 = vld [vmem:[%s2396 + $0x4a] sm:$0xff]
      %v5295 = vld [vmem:[%s2396 + $0x52] sm:$0xff]
      %v5296 = vld [vmem:[%s2396 + $0x62] sm:$0xff]
      %v5297 = vld [vmem:[%s2396 + $0x6a] sm:$0xff]
      %v5298 = vld [vmem:[%s2396 + $0x7a] sm:$0xff]
      %v5299 = vld [vmem:[%s2396 + $0x82] sm:$0xff]
      %v5300 = vld [vmem:[%s2396 + $0x92] sm:$0xff]
      %v5301 = vld [vmem:[%s2396 + $0x9a] sm:$0xff]
      %v5302 = vld [vmem:[%s2396 + $0xaa] sm:$0xff]
      %v5303 = vld [vmem:[%s2396 + $0xb2] sm:$0xff]
      %v5304 = vld [vmem:[%s2396 + $0xc2] sm:$0xff]
      %v5305 = vld [vmem:[%s2396 + $0xca] sm:$0xff]
      %v5306 = vld [vmem:[%s2396 + $0xda] sm:$0xff]
      %v5307 = vld [vmem:[%s2396 + $0xe2] sm:$0xff]
      %v5308 = vld [vmem:[%s2396 + $0xf2] sm:$0xff]
      %v5309 = vld [vmem:[%s2396 + $0xfa] sm:$0xff]
      %v5310 = vld [vmem:[%s2396 + $0x10a] sm:$0xff]
      %v5311 = vld [vmem:[%s2396 + $0x112] sm:$0xff]
      %v5312 = vld [vmem:[%s2396 + $0x122] sm:$0xff]
      %v5313 = vld [vmem:[%s2396 + $0x12a] sm:$0xff]
      %v5314 = vld [vmem:[%s2396 + $0x13a] sm:$0xff]
      %v5315 = vld [vmem:[%s2396 + $0x142] sm:$0xff]
      %v5316 = vld [vmem:[%s2396 + $0x152] sm:$0xff]
      %v5317 = vld [vmem:[%s2396 + $0x15a] sm:$0xff]
      %v5318 = vld [vmem:[%s2396 + $0x16a] sm:$0xff]
      %v5319 = vld [vmem:[%s2396 + $0x172] sm:$0xff]
      %v5320 = vpack.c.bf16 %v5289, %v5288
      %v5321 = vpack.c.bf16 %v5291, %v5290
      %v5322 = vpack.c.bf16 %v5293, %v5292
      %v5323 = vpack.c.bf16 %v5295, %v5294
      %v5324 = vpack.c.bf16 %v5297, %v5296
      %v5325 = vpack.c.bf16 %v5299, %v5298
      %v5326 = vpack.c.bf16 %v5301, %v5300
      %v5327 = vpack.c.bf16 %v5303, %v5302
      %v5328 = vpack.c.bf16 %v5305, %v5304
      %v5329 = vpack.c.bf16 %v5307, %v5306
      %v5330 = vpack.c.bf16 %v5309, %v5308
      %v5331 = vpack.c.bf16 %v5311, %v5310
      %v5332 = vpack.c.bf16 %v5313, %v5312
      %v5333 = vpack.c.bf16 %v5315, %v5314
      %v5334 = vpack.c.bf16 %v5317, %v5316
      %v5335 = vpack.c.bf16 %v5319, %v5318
      %5352 = vrot.lane.b32.xlu0 %v4984, 16
      %v5353 = vpop.permute.xlu0 %5352
      %5354 = vrot.lane.b32.xlu0 %v4985, 16
      %v5355 = vpop.permute.xlu0 %5354
      %5356 = vrot.lane.b32.xlu0 %v4986, 16
      %v5357 = vpop.permute.xlu0 %5356
      %5358 = vrot.lane.b32.xlu0 %v4987, 16
      %v5359 = vpop.permute.xlu0 %5358
      %5360 = vrot.lane.b32.xlu0 %v4988, 16
      %v5361 = vpop.permute.xlu0 %5360
      %5362 = vrot.lane.b32.xlu0 %v4989, 16
      %v5363 = vpop.permute.xlu0 %5362
      %5364 = vrot.lane.b32.xlu0 %v4990, 16
      %v5365 = vpop.permute.xlu0 %5364
      %5366 = vrot.lane.b32.xlu0 %v4991, 16
      %v5367 = vpop.permute.xlu0 %5366
      %5368 = vrot.lane.b32.xlu0 %v4992, 16
      %v5369 = vpop.permute.xlu0 %5368
      %5370 = vrot.lane.b32.xlu0 %v4993, 16
      %v5371 = vpop.permute.xlu0 %5370
      %5372 = vrot.lane.b32.xlu0 %v4994, 16
      %v5373 = vpop.permute.xlu0 %5372
      %5374 = vrot.lane.b32.xlu0 %v4995, 16
      %v5375 = vpop.permute.xlu0 %5374
      %5376 = vrot.lane.b32.xlu0 %v4996, 16
      %v5377 = vpop.permute.xlu0 %5376
      %5378 = vrot.lane.b32.xlu0 %v4997, 16
      %v5379 = vpop.permute.xlu0 %5378
      %5380 = vrot.lane.b32.xlu0 %v4998, 16
      %v5381 = vpop.permute.xlu0 %5380
      %5382 = vrot.lane.b32.xlu0 %v4999, 16
      %v5383 = vpop.permute.xlu0 %5382
      %5400 = vrot.lane.b32.xlu0 %v5032, 32
      %v5401 = vpop.permute.xlu0 %5400
      %5402 = vrot.lane.b32.xlu0 %v5033, 32
      %v5403 = vpop.permute.xlu0 %5402
      %5404 = vrot.lane.b32.xlu0 %v5034, 32
      %v5405 = vpop.permute.xlu0 %5404
      %5406 = vrot.lane.b32.xlu0 %v5035, 32
      %v5407 = vpop.permute.xlu0 %5406
      %5408 = vrot.lane.b32.xlu0 %v5036, 32
      %v5409 = vpop.permute.xlu0 %5408
      %5410 = vrot.lane.b32.xlu0 %v5037, 32
      %v5411 = vpop.permute.xlu0 %5410
      %5412 = vrot.lane.b32.xlu0 %v5038, 32
      %v5413 = vpop.permute.xlu0 %5412
      %5414 = vrot.lane.b32.xlu0 %v5039, 32
      %v5415 = vpop.permute.xlu0 %5414
      %5416 = vrot.lane.b32.xlu0 %v5040, 32
      %v5417 = vpop.permute.xlu0 %5416
      %5418 = vrot.lane.b32.xlu0 %v5041, 32
      %v5419 = vpop.permute.xlu0 %5418
      %5420 = vrot.lane.b32.xlu0 %v5042, 32
      %v5421 = vpop.permute.xlu0 %5420
      %5422 = vrot.lane.b32.xlu0 %v5043, 32
      %v5423 = vpop.permute.xlu0 %5422
      %5424 = vrot.lane.b32.xlu0 %v5044, 32
      %v5425 = vpop.permute.xlu0 %5424
      %5426 = vrot.lane.b32.xlu0 %v5045, 32
      %v5427 = vpop.permute.xlu0 %5426
      %5428 = vrot.lane.b32.xlu0 %v5046, 32
      %v5429 = vpop.permute.xlu0 %5428
      %5430 = vrot.lane.b32.xlu0 %v5047, 32
      %v5431 = vpop.permute.xlu0 %5430
      %5448 = vrot.lane.b32.xlu0 %v5080, 48
      %v5449 = vpop.permute.xlu0 %5448
      %5450 = vrot.lane.b32.xlu0 %v5081, 48
      %v5451 = vpop.permute.xlu0 %5450
      %5452 = vrot.lane.b32.xlu0 %v5082, 48
      %v5453 = vpop.permute.xlu0 %5452
      %5454 = vrot.lane.b32.xlu0 %v5083, 48
      %v5455 = vpop.permute.xlu0 %5454
      %5456 = vrot.lane.b32.xlu0 %v5084, 48
      %v5457 = vpop.permute.xlu0 %5456
      %5458 = vrot.lane.b32.xlu0 %v5085, 48
      %v5459 = vpop.permute.xlu0 %5458
      %5460 = vrot.lane.b32.xlu0 %v5086, 48
      %v5461 = vpop.permute.xlu0 %5460
      %5462 = vrot.lane.b32.xlu0 %v5087, 48
      %v5463 = vpop.permute.xlu0 %5462
      %5464 = vrot.lane.b32.xlu0 %v5088, 48
      %v5465 = vpop.permute.xlu0 %5464
      %5466 = vrot.lane.b32.xlu0 %v5089, 48
      %v5467 = vpop.permute.xlu0 %5466
      %5468 = vrot.lane.b32.xlu0 %v5090, 48
      %v5469 = vpop.permute.xlu0 %5468
      %5470 = vrot.lane.b32.xlu0 %v5091, 48
      %v5471 = vpop.permute.xlu0 %5470
      %5472 = vrot.lane.b32.xlu0 %v5092, 48
      %v5473 = vpop.permute.xlu0 %5472
      %5474 = vrot.lane.b32.xlu0 %v5093, 48
      %v5475 = vpop.permute.xlu0 %5474
      %5476 = vrot.lane.b32.xlu0 %v5094, 48
      %v5477 = vpop.permute.xlu0 %5476
      %5478 = vrot.lane.b32.xlu0 %v5095, 48
      %v5479 = vpop.permute.xlu0 %5478
      %5496 = vrot.lane.b32.xlu0 %v5128, 64
      %v5497 = vpop.permute.xlu0 %5496
      %5498 = vrot.lane.b32.xlu0 %v5129, 64
      %v5499 = vpop.permute.xlu0 %5498
      %5500 = vrot.lane.b32.xlu0 %v5130, 64
      %v5501 = vpop.permute.xlu0 %5500
      %5502 = vrot.lane.b32.xlu0 %v5131, 64
      %v5503 = vpop.permute.xlu0 %5502
      %5504 = vrot.lane.b32.xlu0 %v5132, 64
      %v5505 = vpop.permute.xlu0 %5504
      %5506 = vrot.lane.b32.xlu0 %v5133, 64
      %v5507 = vpop.permute.xlu0 %5506
      %5508 = vrot.lane.b32.xlu0 %v5134, 64
      %v5509 = vpop.permute.xlu0 %5508
      %5510 = vrot.lane.b32.xlu0 %v5135, 64
      %v5511 = vpop.permute.xlu0 %5510
      %5512 = vrot.lane.b32.xlu0 %v5136, 64
      %v5513 = vpop.permute.xlu0 %5512
      %5514 = vrot.lane.b32.xlu0 %v5137, 64
      %v5515 = vpop.permute.xlu0 %5514
      %5516 = vrot.lane.b32.xlu0 %v5138, 64
      %v5517 = vpop.permute.xlu0 %5516
      %5518 = vrot.lane.b32.xlu0 %v5139, 64
      %v5519 = vpop.permute.xlu0 %5518
      %5520 = vrot.lane.b32.xlu0 %v5140, 64
      %v5521 = vpop.permute.xlu0 %5520
      %5522 = vrot.lane.b32.xlu0 %v5141, 64
      %v5523 = vpop.permute.xlu0 %5522
      %5524 = vrot.lane.b32.xlu0 %v5142, 64
      %v5525 = vpop.permute.xlu0 %5524
      %5526 = vrot.lane.b32.xlu0 %v5143, 64
      %v5527 = vpop.permute.xlu0 %5526
      %5544 = vrot.lane.b32.xlu0 %v5176, 80
      %v5545 = vpop.permute.xlu0 %5544
      %5546 = vrot.lane.b32.xlu0 %v5177, 80
      %v5547 = vpop.permute.xlu0 %5546
      %5548 = vrot.lane.b32.xlu0 %v5178, 80
      %v5549 = vpop.permute.xlu0 %5548
      %5550 = vrot.lane.b32.xlu0 %v5179, 80
      %v5551 = vpop.permute.xlu0 %5550
      %5552 = vrot.lane.b32.xlu0 %v5180, 80
      %v5553 = vpop.permute.xlu0 %5552
      %5554 = vrot.lane.b32.xlu0 %v5181, 80
      %v5555 = vpop.permute.xlu0 %5554
      %5556 = vrot.lane.b32.xlu0 %v5182, 80
      %v5557 = vpop.permute.xlu0 %5556
      %5558 = vrot.lane.b32.xlu0 %v5183, 80
      %v5559 = vpop.permute.xlu0 %5558
      %5560 = vrot.lane.b32.xlu0 %v5184, 80
      %v5561 = vpop.permute.xlu0 %5560
      %5562 = vrot.lane.b32.xlu0 %v5185, 80
      %v5563 = vpop.permute.xlu0 %5562
      %5564 = vrot.lane.b32.xlu0 %v5186, 80
      %v5565 = vpop.permute.xlu0 %5564
      %5566 = vrot.lane.b32.xlu0 %v5187, 80
      %v5567 = vpop.permute.xlu0 %5566
      %5568 = vrot.lane.b32.xlu0 %v5188, 80
      %v5569 = vpop.permute.xlu0 %5568
      %5570 = vrot.lane.b32.xlu0 %v5189, 80
      %v5571 = vpop.permute.xlu0 %5570
      %5572 = vrot.lane.b32.xlu0 %v5190, 80
      %v5573 = vpop.permute.xlu0 %5572
      %5574 = vrot.lane.b32.xlu0 %v5191, 80
      %v5575 = vpop.permute.xlu0 %5574
      %5592 = vrot.lane.b32.xlu0 %v5224, 96
      %v5593 = vpop.permute.xlu0 %5592
      %5594 = vrot.lane.b32.xlu0 %v5225, 96
      %v5595 = vpop.permute.xlu0 %5594
      %5596 = vrot.lane.b32.xlu0 %v5226, 96
      %v5597 = vpop.permute.xlu0 %5596
      %5598 = vrot.lane.b32.xlu0 %v5227, 96
      %v5599 = vpop.permute.xlu0 %5598
      %5600 = vrot.lane.b32.xlu0 %v5228, 96
      %v5601 = vpop.permute.xlu0 %5600
      %5602 = vrot.lane.b32.xlu0 %v5229, 96
      %v5603 = vpop.permute.xlu0 %5602
      %5604 = vrot.lane.b32.xlu0 %v5230, 96
      %v5605 = vpop.permute.xlu0 %5604
      %5606 = vrot.lane.b32.xlu0 %v5231, 96
      %v5607 = vpop.permute.xlu0 %5606
      %5608 = vrot.lane.b32.xlu0 %v5232, 96
      %v5609 = vpop.permute.xlu0 %5608
      %5610 = vrot.lane.b32.xlu0 %v5233, 96
      %v5611 = vpop.permute.xlu0 %5610
      %5612 = vrot.lane.b32.xlu0 %v5234, 96
      %v5613 = vpop.permute.xlu0 %5612
      %5614 = vrot.lane.b32.xlu0 %v5235, 96
      %v5615 = vpop.permute.xlu0 %5614
      %5616 = vrot.lane.b32.xlu0 %v5236, 96
      %v5617 = vpop.permute.xlu0 %5616
      %5618 = vrot.lane.b32.xlu0 %v5237, 96
      %v5619 = vpop.permute.xlu0 %5618
      %5620 = vrot.lane.b32.xlu0 %v5238, 96
      %v5621 = vpop.permute.xlu0 %5620
      %5622 = vrot.lane.b32.xlu0 %v5239, 96
      %v5623 = vpop.permute.xlu0 %5622
      %5640 = vrot.lane.b32.xlu0 %v5272, 112
      %v5641 = vpop.permute.xlu0 %5640
      %5642 = vrot.lane.b32.xlu0 %v5273, 112
      %v5643 = vpop.permute.xlu0 %5642
      %5644 = vrot.lane.b32.xlu0 %v5274, 112
      %v5645 = vpop.permute.xlu0 %5644
      %5646 = vrot.lane.b32.xlu0 %v5275, 112
      %v5647 = vpop.permute.xlu0 %5646
      %5648 = vrot.lane.b32.xlu0 %v5276, 112
      %v5649 = vpop.permute.xlu0 %5648
      %5650 = vrot.lane.b32.xlu0 %v5277, 112
      %v5651 = vpop.permute.xlu0 %5650
      %5652 = vrot.lane.b32.xlu0 %v5278, 112
      %v5653 = vpop.permute.xlu0 %5652
      %5654 = vrot.lane.b32.xlu0 %v5279, 112
      %v5655 = vpop.permute.xlu0 %5654
      %5656 = vrot.lane.b32.xlu0 %v5280, 112
      %v5657 = vpop.permute.xlu0 %5656
      %5658 = vrot.lane.b32.xlu0 %v5281, 112
      %v5659 = vpop.permute.xlu0 %5658
      %5660 = vrot.lane.b32.xlu0 %v5282, 112
      %v5661 = vpop.permute.xlu0 %5660
      %5662 = vrot.lane.b32.xlu0 %v5283, 112
      %v5663 = vpop.permute.xlu0 %5662
      %5664 = vrot.lane.b32.xlu0 %v5284, 112
      %v5665 = vpop.permute.xlu0 %5664
      %5666 = vrot.lane.b32.xlu0 %v5285, 112
      %v5667 = vpop.permute.xlu0 %5666
      %5668 = vrot.lane.b32.xlu0 %v5286, 112
      %v5669 = vpop.permute.xlu0 %5668
      %5670 = vrot.lane.b32.xlu0 %v5287, 112
      %v5671 = vpop.permute.xlu0 %5670
      %v5674 = vsel %vm226, %v4936, %v5353
      %v5677 = vsel %vm226, %v4937, %v5355
      %v5680 = vsel %vm226, %v4938, %v5357
      %v5683 = vsel %vm226, %v4939, %v5359
      %v5686 = vsel %vm226, %v4940, %v5361
      %v5689 = vsel %vm226, %v4941, %v5363
      %v5692 = vsel %vm226, %v4942, %v5365
      %v5695 = vsel %vm226, %v4943, %v5367
      %v5698 = vsel %vm226, %v4944, %v5369
      %v5701 = vsel %vm226, %v4945, %v5371
      %v5704 = vsel %vm226, %v4946, %v5373
      %v5707 = vsel %vm226, %v4947, %v5375
      %v5710 = vsel %vm226, %v4948, %v5377
      %v5713 = vsel %vm226, %v4949, %v5379
      %v5716 = vsel %vm226, %v4950, %v5381
      %v5719 = vsel %vm226, %v4951, %v5383
      %v5721 = vsel %vm2925, %v5674, %v5401
      %v5723 = vsel %vm2925, %v5677, %v5403
      %v5725 = vsel %vm2925, %v5680, %v5405
      %v5727 = vsel %vm2925, %v5683, %v5407
      %v5729 = vsel %vm2925, %v5686, %v5409
      %v5731 = vsel %vm2925, %v5689, %v5411
      %v5733 = vsel %vm2925, %v5692, %v5413
      %v5735 = vsel %vm2925, %v5695, %v5415
      %v5737 = vsel %vm2925, %v5698, %v5417
      %v5739 = vsel %vm2925, %v5701, %v5419
      %v5741 = vsel %vm2925, %v5704, %v5421
      %v5743 = vsel %vm2925, %v5707, %v5423
      %v5745 = vsel %vm2925, %v5710, %v5425
      %v5747 = vsel %vm2925, %v5713, %v5427
      %v5749 = vsel %vm2925, %v5716, %v5429
      %v5751 = vsel %vm2925, %v5719, %v5431
      %v5753 = vsel %vm2958, %v5721, %v5449
      %v5755 = vsel %vm2958, %v5723, %v5451
      %v5757 = vsel %vm2958, %v5725, %v5453
      %v5759 = vsel %vm2958, %v5727, %v5455
      %v5761 = vsel %vm2958, %v5729, %v5457
      %v5763 = vsel %vm2958, %v5731, %v5459
      %v5765 = vsel %vm2958, %v5733, %v5461
      %v5767 = vsel %vm2958, %v5735, %v5463
      %v5769 = vsel %vm2958, %v5737, %v5465
      %v5771 = vsel %vm2958, %v5739, %v5467
      %v5773 = vsel %vm2958, %v5741, %v5469
      %v5775 = vsel %vm2958, %v5743, %v5471
      %v5777 = vsel %vm2958, %v5745, %v5473
      %v5779 = vsel %vm2958, %v5747, %v5475
      %v5781 = vsel %vm2958, %v5749, %v5477
      %v5783 = vsel %vm2958, %v5751, %v5479
      %v5785 = vsel %vm1014, %v5753, %v5497
      %v5787 = vsel %vm1014, %v5755, %v5499
      %v5789 = vsel %vm1014, %v5757, %v5501
      %v5791 = vsel %vm1014, %v5759, %v5503
      %v5793 = vsel %vm1014, %v5761, %v5505
      %v5795 = vsel %vm1014, %v5763, %v5507
      %v5797 = vsel %vm1014, %v5765, %v5509
      %v5799 = vsel %vm1014, %v5767, %v5511
      %v5801 = vsel %vm1014, %v5769, %v5513
      %v5803 = vsel %vm1014, %v5771, %v5515
      %v5805 = vsel %vm1014, %v5773, %v5517
      %v5807 = vsel %vm1014, %v5775, %v5519
      %v5809 = vsel %vm1014, %v5777, %v5521
      %v5811 = vsel %vm1014, %v5779, %v5523
      %v5813 = vsel %vm1014, %v5781, %v5525
      %v5815 = vsel %vm1014, %v5783, %v5527
      %v5817 = vsel %vm3023, %v5785, %v5545
      %v5819 = vsel %vm3023, %v5787, %v5547
      %v5821 = vsel %vm3023, %v5789, %v5549
      %v5823 = vsel %vm3023, %v5791, %v5551
      %v5825 = vsel %vm3023, %v5793, %v5553
      %v5827 = vsel %vm3023, %v5795, %v5555
      %v5829 = vsel %vm3023, %v5797, %v5557
      %v5831 = vsel %vm3023, %v5799, %v5559
      %v5833 = vsel %vm3023, %v5801, %v5561
      %v5835 = vsel %vm3023, %v5803, %v5563
      %v5837 = vsel %vm3023, %v5805, %v5565
      %v5839 = vsel %vm3023, %v5807, %v5567
      %v5841 = vsel %vm3023, %v5809, %v5569
      %v5843 = vsel %vm3023, %v5811, %v5571
      %v5845 = vsel %vm3023, %v5813, %v5573
      %v5847 = vsel %vm3023, %v5815, %v5575
      %v5849 = vsel %vm3056, %v5817, %v5593
      %v5851 = vsel %vm3056, %v5819, %v5595
      %v5853 = vsel %vm3056, %v5821, %v5597
      %v5855 = vsel %vm3056, %v5823, %v5599
      %v5857 = vsel %vm3056, %v5825, %v5601
      %v5859 = vsel %vm3056, %v5827, %v5603
      %v5861 = vsel %vm3056, %v5829, %v5605
      %v5863 = vsel %vm3056, %v5831, %v5607
      %v5865 = vsel %vm3056, %v5833, %v5609
      %v5867 = vsel %vm3056, %v5835, %v5611
      %v5869 = vsel %vm3056, %v5837, %v5613
      %v5871 = vsel %vm3056, %v5839, %v5615
      %v5873 = vsel %vm3056, %v5841, %v5617
      %v5875 = vsel %vm3056, %v5843, %v5619
      %v5877 = vsel %vm3056, %v5845, %v5621
      %v5879 = vsel %vm3056, %v5847, %v5623
      %v5881 = vsel %vm3089, %v5849, %v5641
      %v5884 = vsel %vm3089, %v5851, %v5643
      %v5887 = vsel %vm3089, %v5853, %v5645
      %v5890 = vsel %vm3089, %v5855, %v5647
      %v5893 = vsel %vm3089, %v5857, %v5649
      %v5896 = vsel %vm3089, %v5859, %v5651
      %v5899 = vsel %vm3089, %v5861, %v5653
      %v5902 = vsel %vm3089, %v5863, %v5655
      %v5905 = vsel %vm3089, %v5865, %v5657
      %v5908 = vsel %vm3089, %v5867, %v5659
      %v5911 = vsel %vm3089, %v5869, %v5661
      %v5914 = vsel %vm3089, %v5871, %v5663
      %v5917 = vsel %vm3089, %v5873, %v5665
      %v5920 = vsel %vm3089, %v5875, %v5667
      %v5923 = vsel %vm3089, %v5877, %v5669
      %v5926 = vsel %vm3089, %v5879, %v5671
      %v5929 = vlaneseq
      %v5930 = vshrl.u32 %v5929, 7
      %v5931 = vsub.s32 0, %v5930
      %v5932 = vrot.slane %v4903, %v5931
      %v5952 = vunpack.c.l.b16 %v4884
      %v5953 = vunpack.c.l.b16 %v4885
      %v5954 = vunpack.c.l.b16 %v4886
      %v5955 = vunpack.c.l.b16 %v4887
      %v5956 = vunpack.c.l.b16 %v4888
      %v5957 = vunpack.c.l.b16 %v4889
      %v5958 = vunpack.c.l.b16 %v4890
      %v5959 = vunpack.c.l.b16 %v4891
      %v5960 = vunpack.c.l.b16 %v4892
      %v5961 = vunpack.c.l.b16 %v4893
      %v5962 = vunpack.c.l.b16 %v4894
      %v5963 = vunpack.c.l.b16 %v4895
      %v5964 = vunpack.c.l.b16 %v4896
      %v5965 = vunpack.c.l.b16 %v4897
      %v5966 = vunpack.c.l.b16 %v4898
      %v5967 = vunpack.c.l.b16 %v4899
      %v5968 = vunpack.c.l.b16 %v4900
      %v5969 = vunpack.c.l.b16 %v4901
      %v5970 = vpack.c.b16 %v5953, %v5952
      %v5971 = vpack.c.b16 %v5955, %v5954
      %v5972 = vpack.c.b16 %v5957, %v5956
      %v5973 = vpack.c.b16 %v5959, %v5958
      %v5974 = vpack.c.b16 %v5961, %v5960
      %v5975 = vpack.c.b16 %v5963, %v5962
      %v5976 = vpack.c.b16 %v5965, %v5964
      %v5977 = vpack.c.b16 %v5967, %v5966
      %v5978 = vpack.c.b16 %v5969, %v5968
      %v5989 = vsel %vm226, %v5320, 0
      %v5992 = vsel %vm226, %v5321, 0
      %v5995 = vsel %vm226, %v5322, 0
      %v5998 = vsel %vm226, %v5323, 0
      %v6001 = vsel %vm226, %v5324, 0
      %v6004 = vsel %vm226, %v5325, 0
      %v6007 = vsel %vm226, %v5326, 0
      %v6010 = vsel %vm226, %v5327, 0
      %v6013 = vsel %vm226, %v5328, 0
      %v6016 = vsel %vm226, %v5329, 0
      %v6019 = vsel %vm226, %v5330, 0
      %v6022 = vsel %vm226, %v5331, 0
      %v6025 = vsel %vm226, %v5332, 0
      %v6028 = vsel %vm226, %v5333, 0
      %v6031 = vsel %vm226, %v5334, 0
      %v6034 = vsel %vm226, %v5335, 0
      %6036 = vmatprep.subr.bf16.mxu0 0
      %6037 = vmatpush1.bf16.msra.mxu0 %v5970
      %6038 = vmatprep.subr.bf16.mxu0 0
      %6039 = vmatpush1.bf16.msra.mxu0 %v5971
      %6040 = vmatprep.subr.bf16.mxu0 0
      %6041 = vmatpush1.bf16.msra.mxu0 %v5972
      %6042 = vmatprep.subr.bf16.mxu0 0
      %6043 = vmatpush1.bf16.msra.mxu0 %v5973
      %6044 = vmatprep.subr.bf16.mxu0 0
      %6045 = vmatpush1.bf16.msra.mxu0 %v5974
      %6046 = vmatprep.subr.bf16.mxu0 0
      %6047 = vmatpush1.bf16.msra.mxu0 %v5975
      %6048 = vmatprep.subr.bf16.mxu0 0
      %6049 = vmatpush1.bf16.msra.mxu0 %v5976
      %6050 = vmatprep.subr.bf16.mxu0 0
      %6051 = vmatpush1.bf16.msra.mxu0 %v5977
      %6052 = vmatprep.subr.bf16.mxu0 0
      %6053 = vmatpush1.bf16.msra.mxu0 %v5978
      %6054 = vmatprep.subr.bf16.mxu0 0
      %6055 = vmatpush1.bf16.msra.mxu0 0
      %6056 = vmatprep.subr.bf16.mxu0 0
      %6057 = vmatpush1.bf16.msra.mxu0 0
      %6058 = vmatprep.subr.bf16.mxu0 0
      %6059 = vmatpush1.bf16.msra.mxu0 0
      %6060 = vmatprep.subr.bf16.mxu0 0
      %6061 = vmatpush1.bf16.msra.mxu0 0
      %6062 = vmatprep.subr.bf16.mxu0 0
      %6063 = vmatpush1.bf16.msra.mxu0 0
      %6064 = vmatprep.subr.bf16.mxu0 0
      %6065 = vmatpush1.bf16.msra.mxu0 0
      %6066 = vmatprep.subr.bf16.mxu0 0
      %6067 = vmatpush1.bf16.msra.mxu0 0
      %6068 = vmatprep.mubr.bf16.mxu0 %v5989
      %6069 = vmatmul.mubr.bf16.gmra.mrb[0].mxu0 %v5881
      %v6070 = vpop.f32.mrb[0].mxu0
      %v6071 = vadd.f32 %v5932, %v6070
      %v6072 = vpop.f32.mrb[0].mxu0
      %v6073 = vpop.f32.mrb[0].mxu0
      %v6074 = vadd.f32 %v5932, %v6073
      %v6075 = vpop.f32.mrb[0].mxu0
      %6076 = vmatprep.mubr.bf16.mxu0 %v5992
      %6077 = vmatmul.mubr.bf16.gmra.mrb[0].mxu0 %v5884
      %v6078 = vpop.f32.mrb[0].mxu0
      %v6079 = vadd.f32 %v5932, %v6078
      %v6080 = vpop.f32.mrb[0].mxu0
      %v6081 = vpop.f32.mrb[0].mxu0
      %v6082 = vadd.f32 %v5932, %v6081
      %v6083 = vpop.f32.mrb[0].mxu0
      %6084 = vmatprep.mubr.bf16.mxu0 %v5995
      %6085 = vmatmul.mubr.bf16.gmra.mrb[0].mxu0 %v5887
      %v6086 = vpop.f32.mrb[0].mxu0
      %v6087 = vadd.f32 %v5932, %v6086
      %v6088 = vpop.f32.mrb[0].mxu0
      %v6089 = vpop.f32.mrb[0].mxu0
      %v6090 = vadd.f32 %v5932, %v6089
      %v6091 = vpop.f32.mrb[0].mxu0
      %6092 = vmatprep.mubr.bf16.mxu0 %v5998
      %6093 = vmatmul.mubr.bf16.gmra.mrb[0].mxu0 %v5890
      %v6094 = vpop.f32.mrb[0].mxu0
      %v6095 = vadd.f32 %v5932, %v6094
      %v6096 = vpop.f32.mrb[0].mxu0
      %v6097 = vpop.f32.mrb[0].mxu0
      %v6098 = vadd.f32 %v5932, %v6097
      %v6099 = vpop.f32.mrb[0].mxu0
      %6100 = vmatprep.mubr.bf16.mxu0 %v6001
      %6101 = vmatmul.mubr.bf16.gmra.mrb[0].mxu0 %v5893
      %v6102 = vpop.f32.mrb[0].mxu0
      %v6103 = vadd.f32 %v5932, %v6102
      %v6104 = vpop.f32.mrb[0].mxu0
      %v6105 = vpop.f32.mrb[0].mxu0
      %v6106 = vadd.f32 %v5932, %v6105
      %v6107 = vpop.f32.mrb[0].mxu0
      %6108 = vmatprep.mubr.bf16.mxu0 %v6004
      %6109 = vmatmul.mubr.bf16.gmra.mrb[0].mxu0 %v5896
      %v6110 = vpop.f32.mrb[0].mxu0
      %v6111 = vadd.f32 %v5932, %v6110
      %v6112 = vpop.f32.mrb[0].mxu0
      %v6113 = vpop.f32.mrb[0].mxu0
      %v6114 = vadd.f32 %v5932, %v6113
      %v6115 = vpop.f32.mrb[0].mxu0
      %6116 = vmatprep.mubr.bf16.mxu0 %v6007
      %6117 = vmatmul.mubr.bf16.gmra.mrb[0].mxu0 %v5899
      %v6118 = vpop.f32.mrb[0].mxu0
      %v6119 = vadd.f32 %v5932, %v6118
      %v6120 = vpop.f32.mrb[0].mxu0
      %v6121 = vpop.f32.mrb[0].mxu0
      %v6122 = vadd.f32 %v5932, %v6121
      %v6123 = vpop.f32.mrb[0].mxu0
      %6124 = vmatprep.mubr.bf16.mxu0 %v6010
      %6125 = vmatmul.mubr.bf16.gmra.mrb[0].mxu0 %v5902
      %v6126 = vpop.f32.mrb[0].mxu0
      %v6127 = vadd.f32 %v5932, %v6126
      %v6128 = vpop.f32.mrb[0].mxu0
      %v6129 = vpop.f32.mrb[0].mxu0
      %v6130 = vadd.f32 %v5932, %v6129
      %v6131 = vpop.f32.mrb[0].mxu0
      %6132 = vmatprep.mubr.bf16.mxu0 %v6013
      %6133 = vmatmul.mubr.bf16.gmra.mrb[0].mxu0 %v5905
      %v6134 = vpop.f32.mrb[0].mxu0
      %v6135 = vadd.f32 %v5932, %v6134
      %v6136 = vpop.f32.mrb[0].mxu0
      %v6137 = vpop.f32.mrb[0].mxu0
      %v6138 = vadd.f32 %v5932, %v6137
      %v6139 = vpop.f32.mrb[0].mxu0
      %6140 = vmatprep.mubr.bf16.mxu0 %v6016
      %6141 = vmatmul.mubr.bf16.gmra.mrb[0].mxu0 %v5908
      %v6142 = vpop.f32.mrb[0].mxu0
      %v6143 = vadd.f32 %v5932, %v6142
      %v6144 = vpop.f32.mrb[0].mxu0
      %v6145 = vpop.f32.mrb[0].mxu0
      %v6146 = vadd.f32 %v5932, %v6145
      %v6147 = vpop.f32.mrb[0].mxu0
      %6148 = vmatprep.mubr.bf16.mxu0 %v6019
      %6149 = vmatmul.mubr.bf16.gmra.mrb[0].mxu0 %v5911
      %v6150 = vpop.f32.mrb[0].mxu0
      %v6151 = vadd.f32 %v5932, %v6150
      %v6152 = vpop.f32.mrb[0].mxu0
      %v6153 = vpop.f32.mrb[0].mxu0
      %v6154 = vadd.f32 %v5932, %v6153
      %v6155 = vpop.f32.mrb[0].mxu0
      %6156 = vmatprep.mubr.bf16.mxu0 %v6022
      %6157 = vmatmul.mubr.bf16.gmra.mrb[0].mxu0 %v5914
      %v6158 = vpop.f32.mrb[0].mxu0
      %v6159 = vadd.f32 %v5932, %v6158
      %v6160 = vpop.f32.mrb[0].mxu0
      %v6161 = vpop.f32.mrb[0].mxu0
      %v6162 = vadd.f32 %v5932, %v6161
      %v6163 = vpop.f32.mrb[0].mxu0
      %6164 = vmatprep.mubr.bf16.mxu0 %v6025
      %6165 = vmatmul.mubr.bf16.gmra.mrb[0].mxu0 %v5917
      %v6166 = vpop.f32.mrb[0].mxu0
      %v6167 = vadd.f32 %v5932, %v6166
      %v6168 = vpop.f32.mrb[0].mxu0
      %v6169 = vpop.f32.mrb[0].mxu0
      %v6170 = vadd.f32 %v5932, %v6169
      %v6171 = vpop.f32.mrb[0].mxu0
      %6172 = vmatprep.mubr.bf16.mxu0 %v6028
      %6173 = vmatmul.mubr.bf16.gmra.mrb[0].mxu0 %v5920
      %v6174 = vpop.f32.mrb[0].mxu0
      %v6175 = vadd.f32 %v5932, %v6174
      %v6176 = vpop.f32.mrb[0].mxu0
      %v6177 = vpop.f32.mrb[0].mxu0
      %v6178 = vadd.f32 %v5932, %v6177
      %v6179 = vpop.f32.mrb[0].mxu0
      %6180 = vmatprep.mubr.bf16.mxu0 %v6031
      %6181 = vmatmul.mubr.bf16.gmra.mrb[0].mxu0 %v5923
      %v6182 = vpop.f32.mrb[0].mxu0
      %v6183 = vadd.f32 %v5932, %v6182
      %v6184 = vpop.f32.mrb[0].mxu0
      %v6185 = vpop.f32.mrb[0].mxu0
      %v6186 = vadd.f32 %v5932, %v6185
      %v6187 = vpop.f32.mrb[0].mxu0
      %6188 = vmatprep.mubr.bf16.mxu0 %v6034
      %6189 = vmatmul.mubr.bf16.gmra.mrb[0].mxu0 %v5926
      %v6190 = vpop.f32.mrb[0].mxu0
      %v6191 = vadd.f32 %v5932, %v6190
      %v6192 = vpop.f32.mrb[0].mxu0
      %v6193 = vpop.f32.mrb[0].mxu0
      %v6194 = vadd.f32 %v5932, %v6193
      %v6195 = vpop.f32.mrb[0].mxu0
      %6196 = vdwg.mxu0
      %v6197 = vmax.f32 %v6071, 0.0
      %v6198 = vmax.f32 %v6074, 0.0
      %v6199 = vmax.f32 %v6079, 0.0
      %v6200 = vmax.f32 %v6082, 0.0
      %v6201 = vmax.f32 %v6087, 0.0
      %v6202 = vmax.f32 %v6090, 0.0
      %v6203 = vmax.f32 %v6095, 0.0
      %v6204 = vmax.f32 %v6098, 0.0
      %v6205 = vmax.f32 %v6103, 0.0
      %v6206 = vmax.f32 %v6106, 0.0
      %v6207 = vmax.f32 %v6111, 0.0
      %v6208 = vmax.f32 %v6114, 0.0
      %v6209 = vmax.f32 %v6119, 0.0
      %v6210 = vmax.f32 %v6122, 0.0
      %v6211 = vmax.f32 %v6127, 0.0
      %v6212 = vmax.f32 %v6130, 0.0
      %v6213 = vmax.f32 %v6135, 0.0
      %v6214 = vmax.f32 %v6138, 0.0
      %v6215 = vmax.f32 %v6143, 0.0
      %v6216 = vmax.f32 %v6146, 0.0
      %v6217 = vmax.f32 %v6151, 0.0
      %v6218 = vmax.f32 %v6154, 0.0
      %v6219 = vmax.f32 %v6159, 0.0
      %v6220 = vmax.f32 %v6162, 0.0
      %v6221 = vmax.f32 %v6167, 0.0
      %v6222 = vmax.f32 %v6170, 0.0
      %v6223 = vmax.f32 %v6175, 0.0
      %v6224 = vmax.f32 %v6178, 0.0
      %v6225 = vmax.f32 %v6183, 0.0
      %v6226 = vmax.f32 %v6186, 0.0
      %v6227 = vmax.f32 %v6191, 0.0
      %v6228 = vmax.f32 %v6194, 0.0
      %6229 = vst.msk [vmem:[%s3439 + $0x1] sm:$0xff] %vm226, %v6197
      %6230 = vst.msk [vmem:[%s3439 + $0x9] sm:$0xff] %vm226, %v6198
      %6231 = vst.msk [vmem:[%s3439 + $0x19] sm:$0xff] %vm226, %v6199
      %6232 = vst.msk [vmem:[%s3439 + $0x21] sm:$0xff] %vm226, %v6200
      %6233 = vst.msk [vmem:[%s3439 + $0x31] sm:$0xff] %vm226, %v6201
      %6234 = vst.msk [vmem:[%s3439 + $0x39] sm:$0xff] %vm226, %v6202
      %6235 = vst.msk [vmem:[%s3439 + $0x49] sm:$0xff] %vm226, %v6203
      %6236 = vst.msk [vmem:[%s3439 + $0x51] sm:$0xff] %vm226, %v6204
      %6237 = vst.msk [vmem:[%s3439 + $0x61] sm:$0xff] %vm226, %v6205
      %6238 = vst.msk [vmem:[%s3439 + $0x69] sm:$0xff] %vm226, %v6206
      %6239 = vst.msk [vmem:[%s3439 + $0x79] sm:$0xff] %vm226, %v6207
      %6240 = vst.msk [vmem:[%s3439 + $0x81] sm:$0xff] %vm226, %v6208
      %6241 = vst.msk [vmem:[%s3439 + $0x91] sm:$0xff] %vm226, %v6209
      %6242 = vst.msk [vmem:[%s3439 + $0x99] sm:$0xff] %vm226, %v6210
      %6243 = vst.msk [vmem:[%s3439 + $0xa9] sm:$0xff] %vm226, %v6211
      %6244 = vst.msk [vmem:[%s3439 + $0xb1] sm:$0xff] %vm226, %v6212
      %6245 = vst.msk [vmem:[%s3439 + $0xc1] sm:$0xff] %vm226, %v6213
      %6246 = vst.msk [vmem:[%s3439 + $0xc9] sm:$0xff] %vm226, %v6214
      %6247 = vst.msk [vmem:[%s3439 + $0xd9] sm:$0xff] %vm226, %v6215
      %6248 = vst.msk [vmem:[%s3439 + $0xe1] sm:$0xff] %vm226, %v6216
      %6249 = vst.msk [vmem:[%s3439 + $0xf1] sm:$0xff] %vm226, %v6217
      %6250 = vst.msk [vmem:[%s3439 + $0xf9] sm:$0xff] %vm226, %v6218
      %6251 = vst.msk [vmem:[%s3439 + $0x109] sm:$0xff] %vm226, %v6219
      %6252 = vst.msk [vmem:[%s3439 + $0x111] sm:$0xff] %vm226, %v6220
      %6253 = vst.msk [vmem:[%s3439 + $0x121] sm:$0xff] %vm226, %v6221
      %6254 = vst.msk [vmem:[%s3439 + $0x129] sm:$0xff] %vm226, %v6222
      %6255 = vst.msk [vmem:[%s3439 + $0x139] sm:$0xff] %vm226, %v6223
      %6256 = vst.msk [vmem:[%s3439 + $0x141] sm:$0xff] %vm226, %v6224
      %6257 = vst.msk [vmem:[%s3439 + $0x151] sm:$0xff] %vm226, %v6225
      %6258 = vst.msk [vmem:[%s3439 + $0x159] sm:$0xff] %vm226, %v6226
      %6259 = vst.msk [vmem:[%s3439 + $0x169] sm:$0xff] %vm226, %v6227
      %6260 = vst.msk [vmem:[%s3439 + $0x171] sm:$0xff] %vm226, %v6228
      %s6261 = scalar_lea.vmem %s3, 216
      %v6262 = vld [vmem:[%s6261] sm:$0xf]
      %v6263 = vld [vmem:[%s6261 + $0x4] sm:$0xf]
      %v6264 = vld [vmem:[%s6261 + $0x8] sm:$0xf]
      %v6265 = vld [vmem:[%s6261 + $0xc] sm:$0xf]
      %v6266 = vld [vmem:[%s6261 + $0x10] sm:$0xf]
      %v6267 = vld [vmem:[%s6261 + $0x14] sm:$0xf]
      %v6268 = vld [vmem:[%s6261 + $0x18] sm:$0xf]
      %v6269 = vld [vmem:[%s6261 + $0x1c] sm:$0xf]
      %v6270 = vld [vmem:[%s6261 + $0x20] sm:$0xf]
      %v6271 = vld [vmem:[%s6261 + $0x24] sm:$0xf]
      %v6272 = vld [vmem:[%s6261 + $0x28] sm:$0xf]
      %v6273 = vld [vmem:[%s6261 + $0x2c] sm:$0xf]
      %v6274 = vld [vmem:[%s6261 + $0x30] sm:$0xf]
      %v6275 = vld [vmem:[%s6261 + $0x34] sm:$0xf]
      %v6276 = vld [vmem:[%s6261 + $0x38] sm:$0xf]
      %v6277 = vld [vmem:[%s6261 + $0x3c] sm:$0xf]
      %v6278 = vld [vmem:[%s6261 + $0x40] sm:$0xf]
      %v6279 = vld [vmem:[%s6261 + $0x44] sm:$0xf]
      %s6280 = scalar_lea.vmem %s4, 3
      %v6281 = vld [vmem:[%s6280] sm:$0x1]
      %v6282 = vld [vmem:[#allocation3] sm:$0xff]
      %v6283 = vld [vmem:[#allocation3 + $0x8] sm:$0xff]
      %v6284 = vld [vmem:[#allocation3 + $0x18] sm:$0xff]
      %v6285 = vld [vmem:[#allocation3 + $0x20] sm:$0xff]
      %v6286 = vld [vmem:[#allocation3 + $0x30] sm:$0xff]
      %v6287 = vld [vmem:[#allocation3 + $0x38] sm:$0xff]
      %v6288 = vld [vmem:[#allocation3 + $0x48] sm:$0xff]
      %v6289 = vld [vmem:[#allocation3 + $0x50] sm:$0xff]
      %v6290 = vld [vmem:[#allocation3 + $0x60] sm:$0xff]
      %v6291 = vld [vmem:[#allocation3 + $0x68] sm:$0xff]
      %v6292 = vld [vmem:[#allocation3 + $0x78] sm:$0xff]
      %v6293 = vld [vmem:[#allocation3 + $0x80] sm:$0xff]
      %v6294 = vld [vmem:[#allocation3 + $0x90] sm:$0xff]
      %v6295 = vld [vmem:[#allocation3 + $0x98] sm:$0xff]
      %v6296 = vld [vmem:[#allocation3 + $0xa8] sm:$0xff]
      %v6297 = vld [vmem:[#allocation3 + $0xb0] sm:$0xff]
      %v6298 = vld [vmem:[#allocation3 + $0xc0] sm:$0xff]
      %v6299 = vld [vmem:[#allocation3 + $0xc8] sm:$0xff]
      %v6300 = vld [vmem:[#allocation3 + $0xd8] sm:$0xff]
      %v6301 = vld [vmem:[#allocation3 + $0xe0] sm:$0xff]
      %v6302 = vld [vmem:[#allocation3 + $0xf0] sm:$0xff]
      %v6303 = vld [vmem:[#allocation3 + $0xf8] sm:$0xff]
      %v6304 = vld [vmem:[#allocation3 + $0x108] sm:$0xff]
      %v6305 = vld [vmem:[#allocation3 + $0x110] sm:$0xff]
      %v6306 = vld [vmem:[#allocation3 + $0x120] sm:$0xff]
      %v6307 = vld [vmem:[#allocation3 + $0x128] sm:$0xff]
      %v6308 = vld [vmem:[#allocation3 + $0x138] sm:$0xff]
      %v6309 = vld [vmem:[#allocation3 + $0x140] sm:$0xff]
      %v6310 = vld [vmem:[#allocation3 + $0x150] sm:$0xff]
      %v6311 = vld [vmem:[#allocation3 + $0x158] sm:$0xff]
      %v6312 = vld [vmem:[#allocation3 + $0x168] sm:$0xff]
      %v6313 = vld [vmem:[#allocation3 + $0x170] sm:$0xff]
      %v6314 = vpack.c.bf16 %v6283, %v6282
      %v6315 = vpack.c.bf16 %v6285, %v6284
      %v6316 = vpack.c.bf16 %v6287, %v6286
      %v6317 = vpack.c.bf16 %v6289, %v6288
      %v6318 = vpack.c.bf16 %v6291, %v6290
      %v6319 = vpack.c.bf16 %v6293, %v6292
      %v6320 = vpack.c.bf16 %v6295, %v6294
      %v6321 = vpack.c.bf16 %v6297, %v6296
      %v6322 = vpack.c.bf16 %v6299, %v6298
      %v6323 = vpack.c.bf16 %v6301, %v6300
      %v6324 = vpack.c.bf16 %v6303, %v6302
      %v6325 = vpack.c.bf16 %v6305, %v6304
      %v6326 = vpack.c.bf16 %v6307, %v6306
      %v6327 = vpack.c.bf16 %v6309, %v6308
      %v6328 = vpack.c.bf16 %v6311, %v6310
      %v6329 = vpack.c.bf16 %v6313, %v6312
      %v6330 = vld [vmem:[#allocation3 + $0x1] sm:$0xff]
      %v6331 = vld [vmem:[#allocation3 + $0x9] sm:$0xff]
      %v6332 = vld [vmem:[#allocation3 + $0x19] sm:$0xff]
      %v6333 = vld [vmem:[#allocation3 + $0x21] sm:$0xff]
      %v6334 = vld [vmem:[#allocation3 + $0x31] sm:$0xff]
      %v6335 = vld [vmem:[#allocation3 + $0x39] sm:$0xff]
      %v6336 = vld [vmem:[#allocation3 + $0x49] sm:$0xff]
      %v6337 = vld [vmem:[#allocation3 + $0x51] sm:$0xff]
      %v6338 = vld [vmem:[#allocation3 + $0x61] sm:$0xff]
      %v6339 = vld [vmem:[#allocation3 + $0x69] sm:$0xff]
      %v6340 = vld [vmem:[#allocation3 + $0x79] sm:$0xff]
      %v6341 = vld [vmem:[#allocation3 + $0x81] sm:$0xff]
      %v6342 = vld [vmem:[#allocation3 + $0x91] sm:$0xff]
      %v6343 = vld [vmem:[#allocation3 + $0x99] sm:$0xff]
      %v6344 = vld [vmem:[#allocation3 + $0xa9] sm:$0xff]
      %v6345 = vld [vmem:[#allocation3 + $0xb1] sm:$0xff]
      %v6346 = vld [vmem:[#allocation3 + $0xc1] sm:$0xff]
      %v6347 = vld [vmem:[#allocation3 + $0xc9] sm:$0xff]
      %v6348 = vld [vmem:[#allocation3 + $0xd9] sm:$0xff]
      %v6349 = vld [vmem:[#allocation3 + $0xe1] sm:$0xff]
      %v6350 = vld [vmem:[#allocation3 + $0xf1] sm:$0xff]
      %v6351 = vld [vmem:[#allocation3 + $0xf9] sm:$0xff]
      %v6352 = vld [vmem:[#allocation3 + $0x109] sm:$0xff]
      %v6353 = vld [vmem:[#allocation3 + $0x111] sm:$0xff]
      %v6354 = vld [vmem:[#allocation3 + $0x121] sm:$0xff]
      %v6355 = vld [vmem:[#allocation3 + $0x129] sm:$0xff]
      %v6356 = vld [vmem:[#allocation3 + $0x139] sm:$0xff]
      %v6357 = vld [vmem:[#allocation3 + $0x141] sm:$0xff]
      %v6358 = vld [vmem:[#allocation3 + $0x151] sm:$0xff]
      %v6359 = vld [vmem:[#allocation3 + $0x159] sm:$0xff]
      %v6360 = vld [vmem:[#allocation3 + $0x169] sm:$0xff]
      %v6361 = vld [vmem:[#allocation3 + $0x171] sm:$0xff]
      %v6362 = vpack.c.bf16 %v6331, %v6330
      %v6363 = vpack.c.bf16 %v6333, %v6332
      %v6364 = vpack.c.bf16 %v6335, %v6334
      %v6365 = vpack.c.bf16 %v6337, %v6336
      %v6366 = vpack.c.bf16 %v6339, %v6338
      %v6367 = vpack.c.bf16 %v6341, %v6340
      %v6368 = vpack.c.bf16 %v6343, %v6342
      %v6369 = vpack.c.bf16 %v6345, %v6344
      %v6370 = vpack.c.bf16 %v6347, %v6346
      %v6371 = vpack.c.bf16 %v6349, %v6348
      %v6372 = vpack.c.bf16 %v6351, %v6350
      %v6373 = vpack.c.bf16 %v6353, %v6352
      %v6374 = vpack.c.bf16 %v6355, %v6354
      %v6375 = vpack.c.bf16 %v6357, %v6356
      %v6376 = vpack.c.bf16 %v6359, %v6358
      %v6377 = vpack.c.bf16 %v6361, %v6360
      %v6378 = vld [vmem:[#allocation3 + $0x2] sm:$0xff]
      %v6379 = vld [vmem:[#allocation3 + $0xa] sm:$0xff]
      %v6380 = vld [vmem:[#allocation3 + $0x1a] sm:$0xff]
      %v6381 = vld [vmem:[#allocation3 + $0x22] sm:$0xff]
      %v6382 = vld [vmem:[#allocation3 + $0x32] sm:$0xff]
      %v6383 = vld [vmem:[#allocation3 + $0x3a] sm:$0xff]
      %v6384 = vld [vmem:[#allocation3 + $0x4a] sm:$0xff]
      %v6385 = vld [vmem:[#allocation3 + $0x52] sm:$0xff]
      %v6386 = vld [vmem:[#allocation3 + $0x62] sm:$0xff]
      %v6387 = vld [vmem:[#allocation3 + $0x6a] sm:$0xff]
      %v6388 = vld [vmem:[#allocation3 + $0x7a] sm:$0xff]
      %v6389 = vld [vmem:[#allocation3 + $0x82] sm:$0xff]
      %v6390 = vld [vmem:[#allocation3 + $0x92] sm:$0xff]
      %v6391 = vld [vmem:[#allocation3 + $0x9a] sm:$0xff]
      %v6392 = vld [vmem:[#allocation3 + $0xaa] sm:$0xff]
      %v6393 = vld [vmem:[#allocation3 + $0xb2] sm:$0xff]
      %v6394 = vld [vmem:[#allocation3 + $0xc2] sm:$0xff]
      %v6395 = vld [vmem:[#allocation3 + $0xca] sm:$0xff]
      %v6396 = vld [vmem:[#allocation3 + $0xda] sm:$0xff]
      %v6397 = vld [vmem:[#allocation3 + $0xe2] sm:$0xff]
      %v6398 = vld [vmem:[#allocation3 + $0xf2] sm:$0xff]
      %v6399 = vld [vmem:[#allocation3 + $0xfa] sm:$0xff]
      %v6400 = vld [vmem:[#allocation3 + $0x10a] sm:$0xff]
      %v6401 = vld [vmem:[#allocation3 + $0x112] sm:$0xff]
      %v6402 = vld [vmem:[#allocation3 + $0x122] sm:$0xff]
      %v6403 = vld [vmem:[#allocation3 + $0x12a] sm:$0xff]
      %v6404 = vld [vmem:[#allocation3 + $0x13a] sm:$0xff]
      %v6405 = vld [vmem:[#allocation3 + $0x142] sm:$0xff]
      %v6406 = vld [vmem:[#allocation3 + $0x152] sm:$0xff]
      %v6407 = vld [vmem:[#allocation3 + $0x15a] sm:$0xff]
      %v6408 = vld [vmem:[#allocation3 + $0x16a] sm:$0xff]
      %v6409 = vld [vmem:[#allocation3 + $0x172] sm:$0xff]
      %v6410 = vpack.c.bf16 %v6379, %v6378
      %v6411 = vpack.c.bf16 %v6381, %v6380
      %v6412 = vpack.c.bf16 %v6383, %v6382
      %v6413 = vpack.c.bf16 %v6385, %v6384
      %v6414 = vpack.c.bf16 %v6387, %v6386
      %v6415 = vpack.c.bf16 %v6389, %v6388
      %v6416 = vpack.c.bf16 %v6391, %v6390
      %v6417 = vpack.c.bf16 %v6393, %v6392
      %v6418 = vpack.c.bf16 %v6395, %v6394
      %v6419 = vpack.c.bf16 %v6397, %v6396
      %v6420 = vpack.c.bf16 %v6399, %v6398
      %v6421 = vpack.c.bf16 %v6401, %v6400
      %v6422 = vpack.c.bf16 %v6403, %v6402
      %v6423 = vpack.c.bf16 %v6405, %v6404
      %v6424 = vpack.c.bf16 %v6407, %v6406
      %v6425 = vpack.c.bf16 %v6409, %v6408
      %v6426 = vld [vmem:[%s3439] sm:$0xff]
      %v6427 = vld [vmem:[%s3439 + $0x8] sm:$0xff]
      %v6428 = vld [vmem:[%s3439 + $0x18] sm:$0xff]
      %v6429 = vld [vmem:[%s3439 + $0x20] sm:$0xff]
      %v6430 = vld [vmem:[%s3439 + $0x30] sm:$0xff]
      %v6431 = vld [vmem:[%s3439 + $0x38] sm:$0xff]
      %v6432 = vld [vmem:[%s3439 + $0x48] sm:$0xff]
      %v6433 = vld [vmem:[%s3439 + $0x50] sm:$0xff]
      %v6434 = vld [vmem:[%s3439 + $0x60] sm:$0xff]
      %v6435 = vld [vmem:[%s3439 + $0x68] sm:$0xff]
      %v6436 = vld [vmem:[%s3439 + $0x78] sm:$0xff]
      %v6437 = vld [vmem:[%s3439 + $0x80] sm:$0xff]
      %v6438 = vld [vmem:[%s3439 + $0x90] sm:$0xff]
      %v6439 = vld [vmem:[%s3439 + $0x98] sm:$0xff]
      %v6440 = vld [vmem:[%s3439 + $0xa8] sm:$0xff]
      %v6441 = vld [vmem:[%s3439 + $0xb0] sm:$0xff]
      %v6442 = vld [vmem:[%s3439 + $0xc0] sm:$0xff]
      %v6443 = vld [vmem:[%s3439 + $0xc8] sm:$0xff]
      %v6444 = vld [vmem:[%s3439 + $0xd8] sm:$0xff]
      %v6445 = vld [vmem:[%s3439 + $0xe0] sm:$0xff]
      %v6446 = vld [vmem:[%s3439 + $0xf0] sm:$0xff]
      %v6447 = vld [vmem:[%s3439 + $0xf8] sm:$0xff]
      %v6448 = vld [vmem:[%s3439 + $0x108] sm:$0xff]
      %v6449 = vld [vmem:[%s3439 + $0x110] sm:$0xff]
      %v6450 = vld [vmem:[%s3439 + $0x120] sm:$0xff]
      %v6451 = vld [vmem:[%s3439 + $0x128] sm:$0xff]
      %v6452 = vld [vmem:[%s3439 + $0x138] sm:$0xff]
      %v6453 = vld [vmem:[%s3439 + $0x140] sm:$0xff]
      %v6454 = vld [vmem:[%s3439 + $0x150] sm:$0xff]
      %v6455 = vld [vmem:[%s3439 + $0x158] sm:$0xff]
      %v6456 = vld [vmem:[%s3439 + $0x168] sm:$0xff]
      %v6457 = vld [vmem:[%s3439 + $0x170] sm:$0xff]
      %v6458 = vpack.c.bf16 %v6427, %v6426
      %v6459 = vpack.c.bf16 %v6429, %v6428
      %v6460 = vpack.c.bf16 %v6431, %v6430
      %v6461 = vpack.c.bf16 %v6433, %v6432
      %v6462 = vpack.c.bf16 %v6435, %v6434
      %v6463 = vpack.c.bf16 %v6437, %v6436
      %v6464 = vpack.c.bf16 %v6439, %v6438
      %v6465 = vpack.c.bf16 %v6441, %v6440
      %v6466 = vpack.c.bf16 %v6443, %v6442
      %v6467 = vpack.c.bf16 %v6445, %v6444
      %v6468 = vpack.c.bf16 %v6447, %v6446
      %v6469 = vpack.c.bf16 %v6449, %v6448
      %v6470 = vpack.c.bf16 %v6451, %v6450
      %v6471 = vpack.c.bf16 %v6453, %v6452
      %v6472 = vpack.c.bf16 %v6455, %v6454
      %v6473 = vpack.c.bf16 %v6457, %v6456
      %v6474 = vld [vmem:[%s3439 + $0x1] sm:$0xff]
      %v6475 = vld [vmem:[%s3439 + $0x9] sm:$0xff]
      %v6476 = vld [vmem:[%s3439 + $0x19] sm:$0xff]
      %v6477 = vld [vmem:[%s3439 + $0x21] sm:$0xff]
      %v6478 = vld [vmem:[%s3439 + $0x31] sm:$0xff]
      %v6479 = vld [vmem:[%s3439 + $0x39] sm:$0xff]
      %v6480 = vld [vmem:[%s3439 + $0x49] sm:$0xff]
      %v6481 = vld [vmem:[%s3439 + $0x51] sm:$0xff]
      %v6482 = vld [vmem:[%s3439 + $0x61] sm:$0xff]
      %v6483 = vld [vmem:[%s3439 + $0x69] sm:$0xff]
      %v6484 = vld [vmem:[%s3439 + $0x79] sm:$0xff]
      %v6485 = vld [vmem:[%s3439 + $0x81] sm:$0xff]
      %v6486 = vld [vmem:[%s3439 + $0x91] sm:$0xff]
      %v6487 = vld [vmem:[%s3439 + $0x99] sm:$0xff]
      %v6488 = vld [vmem:[%s3439 + $0xa9] sm:$0xff]
      %v6489 = vld [vmem:[%s3439 + $0xb1] sm:$0xff]
      %v6490 = vld [vmem:[%s3439 + $0xc1] sm:$0xff]
      %v6491 = vld [vmem:[%s3439 + $0xc9] sm:$0xff]
      %v6492 = vld [vmem:[%s3439 + $0xd9] sm:$0xff]
      %v6493 = vld [vmem:[%s3439 + $0xe1] sm:$0xff]
      %v6494 = vld [vmem:[%s3439 + $0xf1] sm:$0xff]
      %v6495 = vld [vmem:[%s3439 + $0xf9] sm:$0xff]
      %v6496 = vld [vmem:[%s3439 + $0x109] sm:$0xff]
      %v6497 = vld [vmem:[%s3439 + $0x111] sm:$0xff]
      %v6498 = vld [vmem:[%s3439 + $0x121] sm:$0xff]
      %v6499 = vld [vmem:[%s3439 + $0x129] sm:$0xff]
      %v6500 = vld [vmem:[%s3439 + $0x139] sm:$0xff]
      %v6501 = vld [vmem:[%s3439 + $0x141] sm:$0xff]
      %v6502 = vld [vmem:[%s3439 + $0x151] sm:$0xff]
      %v6503 = vld [vmem:[%s3439 + $0x159] sm:$0xff]
      %v6504 = vld [vmem:[%s3439 + $0x169] sm:$0xff]
      %v6505 = vld [vmem:[%s3439 + $0x171] sm:$0xff]
      %v6506 = vpack.c.bf16 %v6475, %v6474
      %v6507 = vpack.c.bf16 %v6477, %v6476
      %v6508 = vpack.c.bf16 %v6479, %v6478
      %v6509 = vpack.c.bf16 %v6481, %v6480
      %v6510 = vpack.c.bf16 %v6483, %v6482
      %v6511 = vpack.c.bf16 %v6485, %v6484
      %v6512 = vpack.c.bf16 %v6487, %v6486
      %v6513 = vpack.c.bf16 %v6489, %v6488
      %v6514 = vpack.c.bf16 %v6491, %v6490
      %v6515 = vpack.c.bf16 %v6493, %v6492
      %v6516 = vpack.c.bf16 %v6495, %v6494
      %v6517 = vpack.c.bf16 %v6497, %v6496
      %v6518 = vpack.c.bf16 %v6499, %v6498
      %v6519 = vpack.c.bf16 %v6501, %v6500
      %v6520 = vpack.c.bf16 %v6503, %v6502
      %v6521 = vpack.c.bf16 %v6505, %v6504
      %v6522 = vld [vmem:[%s3439 + $0x2] sm:$0xff]
      %v6523 = vld [vmem:[%s3439 + $0xa] sm:$0xff]
      %v6524 = vld [vmem:[%s3439 + $0x1a] sm:$0xff]
      %v6525 = vld [vmem:[%s3439 + $0x22] sm:$0xff]
      %v6526 = vld [vmem:[%s3439 + $0x32] sm:$0xff]
      %v6527 = vld [vmem:[%s3439 + $0x3a] sm:$0xff]
      %v6528 = vld [vmem:[%s3439 + $0x4a] sm:$0xff]
      %v6529 = vld [vmem:[%s3439 + $0x52] sm:$0xff]
      %v6530 = vld [vmem:[%s3439 + $0x62] sm:$0xff]
      %v6531 = vld [vmem:[%s3439 + $0x6a] sm:$0xff]
      %v6532 = vld [vmem:[%s3439 + $0x7a] sm:$0xff]
      %v6533 = vld [vmem:[%s3439 + $0x82] sm:$0xff]
      %v6534 = vld [vmem:[%s3439 + $0x92] sm:$0xff]
      %v6535 = vld [vmem:[%s3439 + $0x9a] sm:$0xff]
      %v6536 = vld [vmem:[%s3439 + $0xaa] sm:$0xff]
      %v6537 = vld [vmem:[%s3439 + $0xb2] sm:$0xff]
      %v6538 = vld [vmem:[%s3439 + $0xc2] sm:$0xff]
      %v6539 = vld [vmem:[%s3439 + $0xca] sm:$0xff]
      %v6540 = vld [vmem:[%s3439 + $0xda] sm:$0xff]
      %v6541 = vld [vmem:[%s3439 + $0xe2] sm:$0xff]
      %v6542 = vld [vmem:[%s3439 + $0xf2] sm:$0xff]
      %v6543 = vld [vmem:[%s3439 + $0xfa] sm:$0xff]
      %v6544 = vld [vmem:[%s3439 + $0x10a] sm:$0xff]
      %v6545 = vld [vmem:[%s3439 + $0x112] sm:$0xff]
      %v6546 = vld [vmem:[%s3439 + $0x122] sm:$0xff]
      %v6547 = vld [vmem:[%s3439 + $0x12a] sm:$0xff]
      %v6548 = vld [vmem:[%s3439 + $0x13a] sm:$0xff]
      %v6549 = vld [vmem:[%s3439 + $0x142] sm:$0xff]
      %v6550 = vld [vmem:[%s3439 + $0x152] sm:$0xff]
      %v6551 = vld [vmem:[%s3439 + $0x15a] sm:$0xff]
      %v6552 = vld [vmem:[%s3439 + $0x16a] sm:$0xff]
      %v6553 = vld [vmem:[%s3439 + $0x172] sm:$0xff]
      %v6554 = vpack.c.bf16 %v6523, %v6522
      %v6555 = vpack.c.bf16 %v6525, %v6524
      %v6556 = vpack.c.bf16 %v6527, %v6526
      %v6557 = vpack.c.bf16 %v6529, %v6528
      %v6558 = vpack.c.bf16 %v6531, %v6530
      %v6559 = vpack.c.bf16 %v6533, %v6532
      %v6560 = vpack.c.bf16 %v6535, %v6534
      %v6561 = vpack.c.bf16 %v6537, %v6536
      %v6562 = vpack.c.bf16 %v6539, %v6538
      %v6563 = vpack.c.bf16 %v6541, %v6540
      %v6564 = vpack.c.bf16 %v6543, %v6542
      %v6565 = vpack.c.bf16 %v6545, %v6544
      %v6566 = vpack.c.bf16 %v6547, %v6546
      %v6567 = vpack.c.bf16 %v6549, %v6548
      %v6568 = vpack.c.bf16 %v6551, %v6550
      %v6569 = vpack.c.bf16 %v6553, %v6552
      %v6570 = vld [vmem:[%s3781] sm:$0xff]
      %v6571 = vld [vmem:[%s3781 + $0x8] sm:$0xff]
      %v6572 = vld [vmem:[%s3781 + $0x18] sm:$0xff]
      %v6573 = vld [vmem:[%s3781 + $0x20] sm:$0xff]
      %v6574 = vld [vmem:[%s3781 + $0x30] sm:$0xff]
      %v6575 = vld [vmem:[%s3781 + $0x38] sm:$0xff]
      %v6576 = vld [vmem:[%s3781 + $0x48] sm:$0xff]
      %v6577 = vld [vmem:[%s3781 + $0x50] sm:$0xff]
      %v6578 = vld [vmem:[%s3781 + $0x60] sm:$0xff]
      %v6579 = vld [vmem:[%s3781 + $0x68] sm:$0xff]
      %v6580 = vld [vmem:[%s3781 + $0x78] sm:$0xff]
      %v6581 = vld [vmem:[%s3781 + $0x80] sm:$0xff]
      %v6582 = vld [vmem:[%s3781 + $0x90] sm:$0xff]
      %v6583 = vld [vmem:[%s3781 + $0x98] sm:$0xff]
      %v6584 = vld [vmem:[%s3781 + $0xa8] sm:$0xff]
      %v6585 = vld [vmem:[%s3781 + $0xb0] sm:$0xff]
      %v6586 = vld [vmem:[%s3781 + $0xc0] sm:$0xff]
      %v6587 = vld [vmem:[%s3781 + $0xc8] sm:$0xff]
      %v6588 = vld [vmem:[%s3781 + $0xd8] sm:$0xff]
      %v6589 = vld [vmem:[%s3781 + $0xe0] sm:$0xff]
      %v6590 = vld [vmem:[%s3781 + $0xf0] sm:$0xff]
      %v6591 = vld [vmem:[%s3781 + $0xf8] sm:$0xff]
      %v6592 = vld [vmem:[%s3781 + $0x108] sm:$0xff]
      %v6593 = vld [vmem:[%s3781 + $0x110] sm:$0xff]
      %v6594 = vld [vmem:[%s3781 + $0x120] sm:$0xff]
      %v6595 = vld [vmem:[%s3781 + $0x128] sm:$0xff]
      %v6596 = vld [vmem:[%s3781 + $0x138] sm:$0xff]
      %v6597 = vld [vmem:[%s3781 + $0x140] sm:$0xff]
      %v6598 = vld [vmem:[%s3781 + $0x150] sm:$0xff]
      %v6599 = vld [vmem:[%s3781 + $0x158] sm:$0xff]
      %v6600 = vld [vmem:[%s3781 + $0x168] sm:$0xff]
      %v6601 = vld [vmem:[%s3781 + $0x170] sm:$0xff]
      %v6602 = vpack.c.bf16 %v6571, %v6570
      %v6603 = vpack.c.bf16 %v6573, %v6572
      %v6604 = vpack.c.bf16 %v6575, %v6574
      %v6605 = vpack.c.bf16 %v6577, %v6576
      %v6606 = vpack.c.bf16 %v6579, %v6578
      %v6607 = vpack.c.bf16 %v6581, %v6580
      %v6608 = vpack.c.bf16 %v6583, %v6582
      %v6609 = vpack.c.bf16 %v6585, %v6584
      %v6610 = vpack.c.bf16 %v6587, %v6586
      %v6611 = vpack.c.bf16 %v6589, %v6588
      %v6612 = vpack.c.bf16 %v6591, %v6590
      %v6613 = vpack.c.bf16 %v6593, %v6592
      %v6614 = vpack.c.bf16 %v6595, %v6594
      %v6615 = vpack.c.bf16 %v6597, %v6596
      %v6616 = vpack.c.bf16 %v6599, %v6598
      %v6617 = vpack.c.bf16 %v6601, %v6600
      %v6618 = vld [vmem:[%s3781 + $0x1] sm:$0xff]
      %v6619 = vld [vmem:[%s3781 + $0x9] sm:$0xff]
      %v6620 = vld [vmem:[%s3781 + $0x19] sm:$0xff]
      %v6621 = vld [vmem:[%s3781 + $0x21] sm:$0xff]
      %v6622 = vld [vmem:[%s3781 + $0x31] sm:$0xff]
      %v6623 = vld [vmem:[%s3781 + $0x39] sm:$0xff]
      %v6624 = vld [vmem:[%s3781 + $0x49] sm:$0xff]
      %v6625 = vld [vmem:[%s3781 + $0x51] sm:$0xff]
      %v6626 = vld [vmem:[%s3781 + $0x61] sm:$0xff]
      %v6627 = vld [vmem:[%s3781 + $0x69] sm:$0xff]
      %v6628 = vld [vmem:[%s3781 + $0x79] sm:$0xff]
      %v6629 = vld [vmem:[%s3781 + $0x81] sm:$0xff]
      %v6630 = vld [vmem:[%s3781 + $0x91] sm:$0xff]
      %v6631 = vld [vmem:[%s3781 + $0x99] sm:$0xff]
      %v6632 = vld [vmem:[%s3781 + $0xa9] sm:$0xff]
      %v6633 = vld [vmem:[%s3781 + $0xb1] sm:$0xff]
      %v6634 = vld [vmem:[%s3781 + $0xc1] sm:$0xff]
      %v6635 = vld [vmem:[%s3781 + $0xc9] sm:$0xff]
      %v6636 = vld [vmem:[%s3781 + $0xd9] sm:$0xff]
      %v6637 = vld [vmem:[%s3781 + $0xe1] sm:$0xff]
      %v6638 = vld [vmem:[%s3781 + $0xf1] sm:$0xff]
      %v6639 = vld [vmem:[%s3781 + $0xf9] sm:$0xff]
      %v6640 = vld [vmem:[%s3781 + $0x109] sm:$0xff]
      %v6641 = vld [vmem:[%s3781 + $0x111] sm:$0xff]
      %v6642 = vld [vmem:[%s3781 + $0x121] sm:$0xff]
      %v6643 = vld [vmem:[%s3781 + $0x129] sm:$0xff]
      %v6644 = vld [vmem:[%s3781 + $0x139] sm:$0xff]
      %v6645 = vld [vmem:[%s3781 + $0x141] sm:$0xff]
      %v6646 = vld [vmem:[%s3781 + $0x151] sm:$0xff]
      %v6647 = vld [vmem:[%s3781 + $0x159] sm:$0xff]
      %v6648 = vld [vmem:[%s3781 + $0x169] sm:$0xff]
      %v6649 = vld [vmem:[%s3781 + $0x171] sm:$0xff]
      %v6650 = vpack.c.bf16 %v6619, %v6618
      %v6651 = vpack.c.bf16 %v6621, %v6620
      %v6652 = vpack.c.bf16 %v6623, %v6622
      %v6653 = vpack.c.bf16 %v6625, %v6624
      %v6654 = vpack.c.bf16 %v6627, %v6626
      %v6655 = vpack.c.bf16 %v6629, %v6628
      %v6656 = vpack.c.bf16 %v6631, %v6630
      %v6657 = vpack.c.bf16 %v6633, %v6632
      %v6658 = vpack.c.bf16 %v6635, %v6634
      %v6659 = vpack.c.bf16 %v6637, %v6636
      %v6660 = vpack.c.bf16 %v6639, %v6638
      %v6661 = vpack.c.bf16 %v6641, %v6640
      %v6662 = vpack.c.bf16 %v6643, %v6642
      %v6663 = vpack.c.bf16 %v6645, %v6644
      %v6664 = vpack.c.bf16 %v6647, %v6646
      %v6665 = vpack.c.bf16 %v6649, %v6648
      %v6666 = vld [vmem:[%s3781 + $0x2] sm:$0xff]
      %v6667 = vld [vmem:[%s3781 + $0xa] sm:$0xff]
      %v6668 = vld [vmem:[%s3781 + $0x1a] sm:$0xff]
      %v6669 = vld [vmem:[%s3781 + $0x22] sm:$0xff]
      %v6670 = vld [vmem:[%s3781 + $0x32] sm:$0xff]
      %v6671 = vld [vmem:[%s3781 + $0x3a] sm:$0xff]
      %v6672 = vld [vmem:[%s3781 + $0x4a] sm:$0xff]
      %v6673 = vld [vmem:[%s3781 + $0x52] sm:$0xff]
      %v6674 = vld [vmem:[%s3781 + $0x62] sm:$0xff]
      %v6675 = vld [vmem:[%s3781 + $0x6a] sm:$0xff]
      %v6676 = vld [vmem:[%s3781 + $0x7a] sm:$0xff]
      %v6677 = vld [vmem:[%s3781 + $0x82] sm:$0xff]
      %v6678 = vld [vmem:[%s3781 + $0x92] sm:$0xff]
      %v6679 = vld [vmem:[%s3781 + $0x9a] sm:$0xff]
      %v6680 = vld [vmem:[%s3781 + $0xaa] sm:$0xff]
      %v6681 = vld [vmem:[%s3781 + $0xb2] sm:$0xff]
      %v6682 = vld [vmem:[%s3781 + $0xc2] sm:$0xff]
      %v6683 = vld [vmem:[%s3781 + $0xca] sm:$0xff]
      %v6684 = vld [vmem:[%s3781 + $0xda] sm:$0xff]
      %v6685 = vld [vmem:[%s3781 + $0xe2] sm:$0xff]
      %v6686 = vld [vmem:[%s3781 + $0xf2] sm:$0xff]
      %v6687 = vld [vmem:[%s3781 + $0xfa] sm:$0xff]
      %v6688 = vld [vmem:[%s3781 + $0x10a] sm:$0xff]
      %v6689 = vld [vmem:[%s3781 + $0x112] sm:$0xff]
      %v6690 = vld [vmem:[%s3781 + $0x122] sm:$0xff]
      %v6691 = vld [vmem:[%s3781 + $0x12a] sm:$0xff]
      %v6692 = vld [vmem:[%s3781 + $0x13a] sm:$0xff]
      %v6693 = vld [vmem:[%s3781 + $0x142] sm:$0xff]
      %v6694 = vld [vmem:[%s3781 + $0x152] sm:$0xff]
      %v6695 = vld [vmem:[%s3781 + $0x15a] sm:$0xff]
      %v6696 = vld [vmem:[%s3781 + $0x16a] sm:$0xff]
      %v6697 = vld [vmem:[%s3781 + $0x172] sm:$0xff]
      %v6698 = vpack.c.bf16 %v6667, %v6666
      %v6699 = vpack.c.bf16 %v6669, %v6668
      %v6700 = vpack.c.bf16 %v6671, %v6670
      %v6701 = vpack.c.bf16 %v6673, %v6672
      %v6702 = vpack.c.bf16 %v6675, %v6674
      %v6703 = vpack.c.bf16 %v6677, %v6676
      %v6704 = vpack.c.bf16 %v6679, %v6678
      %v6705 = vpack.c.bf16 %v6681, %v6680
      %v6706 = vpack.c.bf16 %v6683, %v6682
      %v6707 = vpack.c.bf16 %v6685, %v6684
      %v6708 = vpack.c.bf16 %v6687, %v6686
      %v6709 = vpack.c.bf16 %v6689, %v6688
      %v6710 = vpack.c.bf16 %v6691, %v6690
      %v6711 = vpack.c.bf16 %v6693, %v6692
      %v6712 = vpack.c.bf16 %v6695, %v6694
      %v6713 = vpack.c.bf16 %v6697, %v6696
      %6730 = vrot.lane.b32.xlu0 %v6362, 16
      %v6731 = vpop.permute.xlu0 %6730
      %6732 = vrot.lane.b32.xlu0 %v6363, 16
      %v6733 = vpop.permute.xlu0 %6732
      %6734 = vrot.lane.b32.xlu0 %v6364, 16
      %v6735 = vpop.permute.xlu0 %6734
      %6736 = vrot.lane.b32.xlu0 %v6365, 16
      %v6737 = vpop.permute.xlu0 %6736
      %6738 = vrot.lane.b32.xlu0 %v6366, 16
      %v6739 = vpop.permute.xlu0 %6738
      %6740 = vrot.lane.b32.xlu0 %v6367, 16
      %v6741 = vpop.permute.xlu0 %6740
      %6742 = vrot.lane.b32.xlu0 %v6368, 16
      %v6743 = vpop.permute.xlu0 %6742
      %6744 = vrot.lane.b32.xlu0 %v6369, 16
      %v6745 = vpop.permute.xlu0 %6744
      %6746 = vrot.lane.b32.xlu0 %v6370, 16
      %v6747 = vpop.permute.xlu0 %6746
      %6748 = vrot.lane.b32.xlu0 %v6371, 16
      %v6749 = vpop.permute.xlu0 %6748
      %6750 = vrot.lane.b32.xlu0 %v6372, 16
      %v6751 = vpop.permute.xlu0 %6750
      %6752 = vrot.lane.b32.xlu0 %v6373, 16
      %v6753 = vpop.permute.xlu0 %6752
      %6754 = vrot.lane.b32.xlu0 %v6374, 16
      %v6755 = vpop.permute.xlu0 %6754
      %6756 = vrot.lane.b32.xlu0 %v6375, 16
      %v6757 = vpop.permute.xlu0 %6756
      %6758 = vrot.lane.b32.xlu0 %v6376, 16
      %v6759 = vpop.permute.xlu0 %6758
      %6760 = vrot.lane.b32.xlu0 %v6377, 16
      %v6761 = vpop.permute.xlu0 %6760
      %6778 = vrot.lane.b32.xlu0 %v6410, 32
      %v6779 = vpop.permute.xlu0 %6778
      %6780 = vrot.lane.b32.xlu0 %v6411, 32
      %v6781 = vpop.permute.xlu0 %6780
      %6782 = vrot.lane.b32.xlu0 %v6412, 32
      %v6783 = vpop.permute.xlu0 %6782
      %6784 = vrot.lane.b32.xlu0 %v6413, 32
      %v6785 = vpop.permute.xlu0 %6784
      %6786 = vrot.lane.b32.xlu0 %v6414, 32
      %v6787 = vpop.permute.xlu0 %6786
      %6788 = vrot.lane.b32.xlu0 %v6415, 32
      %v6789 = vpop.permute.xlu0 %6788
      %6790 = vrot.lane.b32.xlu0 %v6416, 32
      %v6791 = vpop.permute.xlu0 %6790
      %6792 = vrot.lane.b32.xlu0 %v6417, 32
      %v6793 = vpop.permute.xlu0 %6792
      %6794 = vrot.lane.b32.xlu0 %v6418, 32
      %v6795 = vpop.permute.xlu0 %6794
      %6796 = vrot.lane.b32.xlu0 %v6419, 32
      %v6797 = vpop.permute.xlu0 %6796
      %6798 = vrot.lane.b32.xlu0 %v6420, 32
      %v6799 = vpop.permute.xlu0 %6798
      %6800 = vrot.lane.b32.xlu0 %v6421, 32
      %v6801 = vpop.permute.xlu0 %6800
      %6802 = vrot.lane.b32.xlu0 %v6422, 32
      %v6803 = vpop.permute.xlu0 %6802
      %6804 = vrot.lane.b32.xlu0 %v6423, 32
      %v6805 = vpop.permute.xlu0 %6804
      %6806 = vrot.lane.b32.xlu0 %v6424, 32
      %v6807 = vpop.permute.xlu0 %6806
      %6808 = vrot.lane.b32.xlu0 %v6425, 32
      %v6809 = vpop.permute.xlu0 %6808
      %6826 = vrot.lane.b32.xlu0 %v6458, 48
      %v6827 = vpop.permute.xlu0 %6826
      %6828 = vrot.lane.b32.xlu0 %v6459, 48
      %v6829 = vpop.permute.xlu0 %6828
      %6830 = vrot.lane.b32.xlu0 %v6460, 48
      %v6831 = vpop.permute.xlu0 %6830
      %6832 = vrot.lane.b32.xlu0 %v6461, 48
      %v6833 = vpop.permute.xlu0 %6832
      %6834 = vrot.lane.b32.xlu0 %v6462, 48
      %v6835 = vpop.permute.xlu0 %6834
      %6836 = vrot.lane.b32.xlu0 %v6463, 48
      %v6837 = vpop.permute.xlu0 %6836
      %6838 = vrot.lane.b32.xlu0 %v6464, 48
      %v6839 = vpop.permute.xlu0 %6838
      %6840 = vrot.lane.b32.xlu0 %v6465, 48
      %v6841 = vpop.permute.xlu0 %6840
      %6842 = vrot.lane.b32.xlu0 %v6466, 48
      %v6843 = vpop.permute.xlu0 %6842
      %6844 = vrot.lane.b32.xlu0 %v6467, 48
      %v6845 = vpop.permute.xlu0 %6844
      %6846 = vrot.lane.b32.xlu0 %v6468, 48
      %v6847 = vpop.permute.xlu0 %6846
      %6848 = vrot.lane.b32.xlu0 %v6469, 48
      %v6849 = vpop.permute.xlu0 %6848
      %6850 = vrot.lane.b32.xlu0 %v6470, 48
      %v6851 = vpop.permute.xlu0 %6850
      %6852 = vrot.lane.b32.xlu0 %v6471, 48
      %v6853 = vpop.permute.xlu0 %6852
      %6854 = vrot.lane.b32.xlu0 %v6472, 48
      %v6855 = vpop.permute.xlu0 %6854
      %6856 = vrot.lane.b32.xlu0 %v6473, 48
      %v6857 = vpop.permute.xlu0 %6856
      %6874 = vrot.lane.b32.xlu0 %v6506, 64
      %v6875 = vpop.permute.xlu0 %6874
      %6876 = vrot.lane.b32.xlu0 %v6507, 64
      %v6877 = vpop.permute.xlu0 %6876
      %6878 = vrot.lane.b32.xlu0 %v6508, 64
      %v6879 = vpop.permute.xlu0 %6878
      %6880 = vrot.lane.b32.xlu0 %v6509, 64
      %v6881 = vpop.permute.xlu0 %6880
      %6882 = vrot.lane.b32.xlu0 %v6510, 64
      %v6883 = vpop.permute.xlu0 %6882
      %6884 = vrot.lane.b32.xlu0 %v6511, 64
      %v6885 = vpop.permute.xlu0 %6884
      %6886 = vrot.lane.b32.xlu0 %v6512, 64
      %v6887 = vpop.permute.xlu0 %6886
      %6888 = vrot.lane.b32.xlu0 %v6513, 64
      %v6889 = vpop.permute.xlu0 %6888
      %6890 = vrot.lane.b32.xlu0 %v6514, 64
      %v6891 = vpop.permute.xlu0 %6890
      %6892 = vrot.lane.b32.xlu0 %v6515, 64
      %v6893 = vpop.permute.xlu0 %6892
      %6894 = vrot.lane.b32.xlu0 %v6516, 64
      %v6895 = vpop.permute.xlu0 %6894
      %6896 = vrot.lane.b32.xlu0 %v6517, 64
      %v6897 = vpop.permute.xlu0 %6896
      %6898 = vrot.lane.b32.xlu0 %v6518, 64
      %v6899 = vpop.permute.xlu0 %6898
      %6900 = vrot.lane.b32.xlu0 %v6519, 64
      %v6901 = vpop.permute.xlu0 %6900
      %6902 = vrot.lane.b32.xlu0 %v6520, 64
      %v6903 = vpop.permute.xlu0 %6902
      %6904 = vrot.lane.b32.xlu0 %v6521, 64
      %v6905 = vpop.permute.xlu0 %6904
      %6922 = vrot.lane.b32.xlu0 %v6554, 80
      %v6923 = vpop.permute.xlu0 %6922
      %6924 = vrot.lane.b32.xlu0 %v6555, 80
      %v6925 = vpop.permute.xlu0 %6924
      %6926 = vrot.lane.b32.xlu0 %v6556, 80
      %v6927 = vpop.permute.xlu0 %6926
      %6928 = vrot.lane.b32.xlu0 %v6557, 80
      %v6929 = vpop.permute.xlu0 %6928
      %6930 = vrot.lane.b32.xlu0 %v6558, 80
      %v6931 = vpop.permute.xlu0 %6930
      %6932 = vrot.lane.b32.xlu0 %v6559, 80
      %v6933 = vpop.permute.xlu0 %6932
      %6934 = vrot.lane.b32.xlu0 %v6560, 80
      %v6935 = vpop.permute.xlu0 %6934
      %6936 = vrot.lane.b32.xlu0 %v6561, 80
      %v6937 = vpop.permute.xlu0 %6936
      %6938 = vrot.lane.b32.xlu0 %v6562, 80
      %v6939 = vpop.permute.xlu0 %6938
      %6940 = vrot.lane.b32.xlu0 %v6563, 80
      %v6941 = vpop.permute.xlu0 %6940
      %6942 = vrot.lane.b32.xlu0 %v6564, 80
      %v6943 = vpop.permute.xlu0 %6942
      %6944 = vrot.lane.b32.xlu0 %v6565, 80
      %v6945 = vpop.permute.xlu0 %6944
      %6946 = vrot.lane.b32.xlu0 %v6566, 80
      %v6947 = vpop.permute.xlu0 %6946
      %6948 = vrot.lane.b32.xlu0 %v6567, 80
      %v6949 = vpop.permute.xlu0 %6948
      %6950 = vrot.lane.b32.xlu0 %v6568, 80
      %v6951 = vpop.permute.xlu0 %6950
      %6952 = vrot.lane.b32.xlu0 %v6569, 80
      %v6953 = vpop.permute.xlu0 %6952
      %6970 = vrot.lane.b32.xlu0 %v6602, 96
      %v6971 = vpop.permute.xlu0 %6970
      %6972 = vrot.lane.b32.xlu0 %v6603, 96
      %v6973 = vpop.permute.xlu0 %6972
      %6974 = vrot.lane.b32.xlu0 %v6604, 96
      %v6975 = vpop.permute.xlu0 %6974
      %6976 = vrot.lane.b32.xlu0 %v6605, 96
      %v6977 = vpop.permute.xlu0 %6976
      %6978 = vrot.lane.b32.xlu0 %v6606, 96
      %v6979 = vpop.permute.xlu0 %6978
      %6980 = vrot.lane.b32.xlu0 %v6607, 96
      %v6981 = vpop.permute.xlu0 %6980
      %6982 = vrot.lane.b32.xlu0 %v6608, 96
      %v6983 = vpop.permute.xlu0 %6982
      %6984 = vrot.lane.b32.xlu0 %v6609, 96
      %v6985 = vpop.permute.xlu0 %6984
      %6986 = vrot.lane.b32.xlu0 %v6610, 96
      %v6987 = vpop.permute.xlu0 %6986
      %6988 = vrot.lane.b32.xlu0 %v6611, 96
      %v6989 = vpop.permute.xlu0 %6988
      %6990 = vrot.lane.b32.xlu0 %v6612, 96
      %v6991 = vpop.permute.xlu0 %6990
      %6992 = vrot.lane.b32.xlu0 %v6613, 96
      %v6993 = vpop.permute.xlu0 %6992
      %6994 = vrot.lane.b32.xlu0 %v6614, 96
      %v6995 = vpop.permute.xlu0 %6994
      %6996 = vrot.lane.b32.xlu0 %v6615, 96
      %v6997 = vpop.permute.xlu0 %6996
      %6998 = vrot.lane.b32.xlu0 %v6616, 96
      %v6999 = vpop.permute.xlu0 %6998
      %7000 = vrot.lane.b32.xlu0 %v6617, 96
      %v7001 = vpop.permute.xlu0 %7000
      %7018 = vrot.lane.b32.xlu0 %v6650, 112
      %v7019 = vpop.permute.xlu0 %7018
      %7020 = vrot.lane.b32.xlu0 %v6651, 112
      %v7021 = vpop.permute.xlu0 %7020
      %7022 = vrot.lane.b32.xlu0 %v6652, 112
      %v7023 = vpop.permute.xlu0 %7022
      %7024 = vrot.lane.b32.xlu0 %v6653, 112
      %v7025 = vpop.permute.xlu0 %7024
      %7026 = vrot.lane.b32.xlu0 %v6654, 112
      %v7027 = vpop.permute.xlu0 %7026
      %7028 = vrot.lane.b32.xlu0 %v6655, 112
      %v7029 = vpop.permute.xlu0 %7028
      %7030 = vrot.lane.b32.xlu0 %v6656, 112
      %v7031 = vpop.permute.xlu0 %7030
      %7032 = vrot.lane.b32.xlu0 %v6657, 112
      %v7033 = vpop.permute.xlu0 %7032
      %7034 = vrot.lane.b32.xlu0 %v6658, 112
      %v7035 = vpop.permute.xlu0 %7034
      %7036 = vrot.lane.b32.xlu0 %v6659, 112
      %v7037 = vpop.permute.xlu0 %7036
      %7038 = vrot.lane.b32.xlu0 %v6660, 112
      %v7039 = vpop.permute.xlu0 %7038
      %7040 = vrot.lane.b32.xlu0 %v6661, 112
      %v7041 = vpop.permute.xlu0 %7040
      %7042 = vrot.lane.b32.xlu0 %v6662, 112
      %v7043 = vpop.permute.xlu0 %7042
      %7044 = vrot.lane.b32.xlu0 %v6663, 112
      %v7045 = vpop.permute.xlu0 %7044
      %7046 = vrot.lane.b32.xlu0 %v6664, 112
      %v7047 = vpop.permute.xlu0 %7046
      %7048 = vrot.lane.b32.xlu0 %v6665, 112
      %v7049 = vpop.permute.xlu0 %7048
      %v7052 = vsel %vm226, %v6314, %v6731
      %v7055 = vsel %vm226, %v6315, %v6733
      %v7058 = vsel %vm226, %v6316, %v6735
      %v7061 = vsel %vm226, %v6317, %v6737
      %v7064 = vsel %vm226, %v6318, %v6739
      %v7067 = vsel %vm226, %v6319, %v6741
      %v7070 = vsel %vm226, %v6320, %v6743
      %v7073 = vsel %vm226, %v6321, %v6745
      %v7076 = vsel %vm226, %v6322, %v6747
      %v7079 = vsel %vm226, %v6323, %v6749
      %v7082 = vsel %vm226, %v6324, %v6751
      %v7085 = vsel %vm226, %v6325, %v6753
      %v7088 = vsel %vm226, %v6326, %v6755
      %v7091 = vsel %vm226, %v6327, %v6757
      %v7094 = vsel %vm226, %v6328, %v6759
      %v7097 = vsel %vm226, %v6329, %v6761
      %v7099 = vsel %vm2925, %v7052, %v6779
      %v7101 = vsel %vm2925, %v7055, %v6781
      %v7103 = vsel %vm2925, %v7058, %v6783
      %v7105 = vsel %vm2925, %v7061, %v6785
      %v7107 = vsel %vm2925, %v7064, %v6787
      %v7109 = vsel %vm2925, %v7067, %v6789
      %v7111 = vsel %vm2925, %v7070, %v6791
      %v7113 = vsel %vm2925, %v7073, %v6793
      %v7115 = vsel %vm2925, %v7076, %v6795
      %v7117 = vsel %vm2925, %v7079, %v6797
      %v7119 = vsel %vm2925, %v7082, %v6799
      %v7121 = vsel %vm2925, %v7085, %v6801
      %v7123 = vsel %vm2925, %v7088, %v6803
      %v7125 = vsel %vm2925, %v7091, %v6805
      %v7127 = vsel %vm2925, %v7094, %v6807
      %v7129 = vsel %vm2925, %v7097, %v6809
      %v7131 = vsel %vm2958, %v7099, %v6827
      %v7133 = vsel %vm2958, %v7101, %v6829
      %v7135 = vsel %vm2958, %v7103, %v6831
      %v7137 = vsel %vm2958, %v7105, %v6833
      %v7139 = vsel %vm2958, %v7107, %v6835
      %v7141 = vsel %vm2958, %v7109, %v6837
      %v7143 = vsel %vm2958, %v7111, %v6839
      %v7145 = vsel %vm2958, %v7113, %v6841
      %v7147 = vsel %vm2958, %v7115, %v6843
      %v7149 = vsel %vm2958, %v7117, %v6845
      %v7151 = vsel %vm2958, %v7119, %v6847
      %v7153 = vsel %vm2958, %v7121, %v6849
      %v7155 = vsel %vm2958, %v7123, %v6851
      %v7157 = vsel %vm2958, %v7125, %v6853
      %v7159 = vsel %vm2958, %v7127, %v6855
      %v7161 = vsel %vm2958, %v7129, %v6857
      %v7163 = vsel %vm1014, %v7131, %v6875
      %v7165 = vsel %vm1014, %v7133, %v6877
      %v7167 = vsel %vm1014, %v7135, %v6879
      %v7169 = vsel %vm1014, %v7137, %v6881
      %v7171 = vsel %vm1014, %v7139, %v6883
      %v7173 = vsel %vm1014, %v7141, %v6885
      %v7175 = vsel %vm1014, %v7143, %v6887
      %v7177 = vsel %vm1014, %v7145, %v6889
      %v7179 = vsel %vm1014, %v7147, %v6891
      %v7181 = vsel %vm1014, %v7149, %v6893
      %v7183 = vsel %vm1014, %v7151, %v6895
      %v7185 = vsel %vm1014, %v7153, %v6897
      %v7187 = vsel %vm1014, %v7155, %v6899
      %v7189 = vsel %vm1014, %v7157, %v6901
      %v7191 = vsel %vm1014, %v7159, %v6903
      %v7193 = vsel %vm1014, %v7161, %v6905
      %v7195 = vsel %vm3023, %v7163, %v6923
      %v7197 = vsel %vm3023, %v7165, %v6925
      %v7199 = vsel %vm3023, %v7167, %v6927
      %v7201 = vsel %vm3023, %v7169, %v6929
      %v7203 = vsel %vm3023, %v7171, %v6931
      %v7205 = vsel %vm3023, %v7173, %v6933
      %v7207 = vsel %vm3023, %v7175, %v6935
      %v7209 = vsel %vm3023, %v7177, %v6937
      %v7211 = vsel %vm3023, %v7179, %v6939
      %v7213 = vsel %vm3023, %v7181, %v6941
      %v7215 = vsel %vm3023, %v7183, %v6943
      %v7217 = vsel %vm3023, %v7185, %v6945
      %v7219 = vsel %vm3023, %v7187, %v6947
      %v7221 = vsel %vm3023, %v7189, %v6949
      %v7223 = vsel %vm3023, %v7191, %v6951
      %v7225 = vsel %vm3023, %v7193, %v6953
      %v7227 = vsel %vm3056, %v7195, %v6971
      %v7229 = vsel %vm3056, %v7197, %v6973
      %v7231 = vsel %vm3056, %v7199, %v6975
      %v7233 = vsel %vm3056, %v7201, %v6977
      %v7235 = vsel %vm3056, %v7203, %v6979
      %v7237 = vsel %vm3056, %v7205, %v6981
      %v7239 = vsel %vm3056, %v7207, %v6983
      %v7241 = vsel %vm3056, %v7209, %v6985
      %v7243 = vsel %vm3056, %v7211, %v6987
      %v7245 = vsel %vm3056, %v7213, %v6989
      %v7247 = vsel %vm3056, %v7215, %v6991
      %v7249 = vsel %vm3056, %v7217, %v6993
      %v7251 = vsel %vm3056, %v7219, %v6995
      %v7253 = vsel %vm3056, %v7221, %v6997
      %v7255 = vsel %vm3056, %v7223, %v6999
      %v7257 = vsel %vm3056, %v7225, %v7001
      %v7259 = vsel %vm3089, %v7227, %v7019
      %v7262 = vsel %vm3089, %v7229, %v7021
      %v7265 = vsel %vm3089, %v7231, %v7023
      %v7268 = vsel %vm3089, %v7233, %v7025
      %v7271 = vsel %vm3089, %v7235, %v7027
      %v7274 = vsel %vm3089, %v7237, %v7029
      %v7277 = vsel %vm3089, %v7239, %v7031
      %v7280 = vsel %vm3089, %v7241, %v7033
      %v7283 = vsel %vm3089, %v7243, %v7035
      %v7286 = vsel %vm3089, %v7245, %v7037
      %v7289 = vsel %vm3089, %v7247, %v7039
      %v7292 = vsel %vm3089, %v7249, %v7041
      %v7295 = vsel %vm3089, %v7251, %v7043
      %v7298 = vsel %vm3089, %v7253, %v7045
      %v7301 = vsel %vm3089, %v7255, %v7047
      %v7304 = vsel %vm3089, %v7257, %v7049
      %v7307 = vlaneseq
      %v7308 = vshrl.u32 %v7307, 7
      %v7309 = vsub.s32 0, %v7308
      %v7310 = vrot.slane %v6281, %v7309
      %v7330 = vunpack.c.l.b16 %v6262
      %v7331 = vunpack.c.l.b16 %v6263
      %v7332 = vunpack.c.l.b16 %v6264
      %v7333 = vunpack.c.l.b16 %v6265
      %v7334 = vunpack.c.l.b16 %v6266
      %v7335 = vunpack.c.l.b16 %v6267
      %v7336 = vunpack.c.l.b16 %v6268
      %v7337 = vunpack.c.l.b16 %v6269
      %v7338 = vunpack.c.l.b16 %v6270
      %v7339 = vunpack.c.l.b16 %v6271
      %v7340 = vunpack.c.l.b16 %v6272
      %v7341 = vunpack.c.l.b16 %v6273
      %v7342 = vunpack.c.l.b16 %v6274
      %v7343 = vunpack.c.l.b16 %v6275
      %v7344 = vunpack.c.l.b16 %v6276
      %v7345 = vunpack.c.l.b16 %v6277
      %v7346 = vunpack.c.l.b16 %v6278
      %v7347 = vunpack.c.l.b16 %v6279
      %v7348 = vpack.c.b16 %v7331, %v7330
      %v7349 = vpack.c.b16 %v7333, %v7332
      %v7350 = vpack.c.b16 %v7335, %v7334
      %v7351 = vpack.c.b16 %v7337, %v7336
      %v7352 = vpack.c.b16 %v7339, %v7338
      %v7353 = vpack.c.b16 %v7341, %v7340
      %v7354 = vpack.c.b16 %v7343, %v7342
      %v7355 = vpack.c.b16 %v7345, %v7344
      %v7356 = vpack.c.b16 %v7347, %v7346
      %v7367 = vsel %vm226, %v6698, 0
      %v7370 = vsel %vm226, %v6699, 0
      %v7373 = vsel %vm226, %v6700, 0
      %v7376 = vsel %vm226, %v6701, 0
      %v7379 = vsel %vm226, %v6702, 0
      %v7382 = vsel %vm226, %v6703, 0
      %v7385 = vsel %vm226, %v6704, 0
      %v7388 = vsel %vm226, %v6705, 0
      %v7391 = vsel %vm226, %v6706, 0
      %v7394 = vsel %vm226, %v6707, 0
      %v7397 = vsel %vm226, %v6708, 0
      %v7400 = vsel %vm226, %v6709, 0
      %v7403 = vsel %vm226, %v6710, 0
      %v7406 = vsel %vm226, %v6711, 0
      %v7409 = vsel %vm226, %v6712, 0
      %v7412 = vsel %vm226, %v6713, 0
      %7414 = vmatprep.subr.bf16.mxu0 0
      %7415 = vmatpush1.bf16.msra.mxu0 %v7348
      %7416 = vmatprep.subr.bf16.mxu0 0
      %7417 = vmatpush1.bf16.msra.mxu0 %v7349
      %7418 = vmatprep.subr.bf16.mxu0 0
      %7419 = vmatpush1.bf16.msra.mxu0 %v7350
      %7420 = vmatprep.subr.bf16.mxu0 0
      %7421 = vmatpush1.bf16.msra.mxu0 %v7351
      %7422 = vmatprep.subr.bf16.mxu0 0
      %7423 = vmatpush1.bf16.msra.mxu0 %v7352
      %7424 = vmatprep.subr.bf16.mxu0 0
      %7425 = vmatpush1.bf16.msra.mxu0 %v7353
      %7426 = vmatprep.subr.bf16.mxu0 0
      %7427 = vmatpush1.bf16.msra.mxu0 %v7354
      %7428 = vmatprep.subr.bf16.mxu0 0
      %7429 = vmatpush1.bf16.msra.mxu0 %v7355
      %7430 = vmatprep.subr.bf16.mxu0 0
      %7431 = vmatpush1.bf16.msra.mxu0 %v7356
      %7432 = vmatprep.subr.bf16.mxu0 0
      %7433 = vmatpush1.bf16.msra.mxu0 0
      %7434 = vmatprep.subr.bf16.mxu0 0
      %7435 = vmatpush1.bf16.msra.mxu0 0
      %7436 = vmatprep.subr.bf16.mxu0 0
      %7437 = vmatpush1.bf16.msra.mxu0 0
      %7438 = vmatprep.subr.bf16.mxu0 0
      %7439 = vmatpush1.bf16.msra.mxu0 0
      %7440 = vmatprep.subr.bf16.mxu0 0
      %7441 = vmatpush1.bf16.msra.mxu0 0
      %7442 = vmatprep.subr.bf16.mxu0 0
      %7443 = vmatpush1.bf16.msra.mxu0 0
      %7444 = vmatprep.subr.bf16.mxu0 0
      %7445 = vmatpush1.bf16.msra.mxu0 0
      %7446 = vmatprep.mubr.bf16.mxu0 %v7367
      %7447 = vmatmul.mubr.bf16.gmra.mrb[0].mxu0 %v7259
      %v7448 = vpop.f32.mrb[0].mxu0
      %v7449 = vadd.f32 %v7310, %v7448
      %v7450 = vpop.f32.mrb[0].mxu0
      %v7451 = vpop.f32.mrb[0].mxu0
      %v7452 = vadd.f32 %v7310, %v7451
      %v7453 = vpop.f32.mrb[0].mxu0
      %7454 = vmatprep.mubr.bf16.mxu0 %v7370
      %7455 = vmatmul.mubr.bf16.gmra.mrb[0].mxu0 %v7262
      %v7456 = vpop.f32.mrb[0].mxu0
      %v7457 = vadd.f32 %v7310, %v7456
      %v7458 = vpop.f32.mrb[0].mxu0
      %v7459 = vpop.f32.mrb[0].mxu0
      %v7460 = vadd.f32 %v7310, %v7459
      %v7461 = vpop.f32.mrb[0].mxu0
      %7462 = vmatprep.mubr.bf16.mxu0 %v7373
      %7463 = vmatmul.mubr.bf16.gmra.mrb[0].mxu0 %v7265
      %v7464 = vpop.f32.mrb[0].mxu0
      %v7465 = vadd.f32 %v7310, %v7464
      %v7466 = vpop.f32.mrb[0].mxu0
      %v7467 = vpop.f32.mrb[0].mxu0
      %v7468 = vadd.f32 %v7310, %v7467
      %v7469 = vpop.f32.mrb[0].mxu0
      %7470 = vmatprep.mubr.bf16.mxu0 %v7376
      %7471 = vmatmul.mubr.bf16.gmra.mrb[0].mxu0 %v7268
      %v7472 = vpop.f32.mrb[0].mxu0
      %v7473 = vadd.f32 %v7310, %v7472
      %v7474 = vpop.f32.mrb[0].mxu0
      %v7475 = vpop.f32.mrb[0].mxu0
      %v7476 = vadd.f32 %v7310, %v7475
      %v7477 = vpop.f32.mrb[0].mxu0
      %7478 = vmatprep.mubr.bf16.mxu0 %v7379
      %7479 = vmatmul.mubr.bf16.gmra.mrb[0].mxu0 %v7271
      %v7480 = vpop.f32.mrb[0].mxu0
      %v7481 = vadd.f32 %v7310, %v7480
      %v7482 = vpop.f32.mrb[0].mxu0
      %v7483 = vpop.f32.mrb[0].mxu0
      %v7484 = vadd.f32 %v7310, %v7483
      %v7485 = vpop.f32.mrb[0].mxu0
      %7486 = vmatprep.mubr.bf16.mxu0 %v7382
      %7487 = vmatmul.mubr.bf16.gmra.mrb[0].mxu0 %v7274
      %v7488 = vpop.f32.mrb[0].mxu0
      %v7489 = vadd.f32 %v7310, %v7488
      %v7490 = vpop.f32.mrb[0].mxu0
      %v7491 = vpop.f32.mrb[0].mxu0
      %v7492 = vadd.f32 %v7310, %v7491
      %v7493 = vpop.f32.mrb[0].mxu0
      %7494 = vmatprep.mubr.bf16.mxu0 %v7385
      %7495 = vmatmul.mubr.bf16.gmra.mrb[0].mxu0 %v7277
      %v7496 = vpop.f32.mrb[0].mxu0
      %v7497 = vadd.f32 %v7310, %v7496
      %v7498 = vpop.f32.mrb[0].mxu0
      %v7499 = vpop.f32.mrb[0].mxu0
      %v7500 = vadd.f32 %v7310, %v7499
      %v7501 = vpop.f32.mrb[0].mxu0
      %7502 = vmatprep.mubr.bf16.mxu0 %v7388
      %7503 = vmatmul.mubr.bf16.gmra.mrb[0].mxu0 %v7280
      %v7504 = vpop.f32.mrb[0].mxu0
      %v7505 = vadd.f32 %v7310, %v7504
      %v7506 = vpop.f32.mrb[0].mxu0
      %v7507 = vpop.f32.mrb[0].mxu0
      %v7508 = vadd.f32 %v7310, %v7507
      %v7509 = vpop.f32.mrb[0].mxu0
      %7510 = vmatprep.mubr.bf16.mxu0 %v7391
      %7511 = vmatmul.mubr.bf16.gmra.mrb[0].mxu0 %v7283
      %v7512 = vpop.f32.mrb[0].mxu0
      %v7513 = vadd.f32 %v7310, %v7512
      %v7514 = vpop.f32.mrb[0].mxu0
      %v7515 = vpop.f32.mrb[0].mxu0
      %v7516 = vadd.f32 %v7310, %v7515
      %v7517 = vpop.f32.mrb[0].mxu0
      %7518 = vmatprep.mubr.bf16.mxu0 %v7394
      %7519 = vmatmul.mubr.bf16.gmra.mrb[0].mxu0 %v7286
      %v7520 = vpop.f32.mrb[0].mxu0
      %v7521 = vadd.f32 %v7310, %v7520
      %v7522 = vpop.f32.mrb[0].mxu0
      %v7523 = vpop.f32.mrb[0].mxu0
      %v7524 = vadd.f32 %v7310, %v7523
      %v7525 = vpop.f32.mrb[0].mxu0
      %7526 = vmatprep.mubr.bf16.mxu0 %v7397
      %7527 = vmatmul.mubr.bf16.gmra.mrb[0].mxu0 %v7289
      %v7528 = vpop.f32.mrb[0].mxu0
      %v7529 = vadd.f32 %v7310, %v7528
      %v7530 = vpop.f32.mrb[0].mxu0
      %v7531 = vpop.f32.mrb[0].mxu0
      %v7532 = vadd.f32 %v7310, %v7531
      %v7533 = vpop.f32.mrb[0].mxu0
      %7534 = vmatprep.mubr.bf16.mxu0 %v7400
      %7535 = vmatmul.mubr.bf16.gmra.mrb[0].mxu0 %v7292
      %v7536 = vpop.f32.mrb[0].mxu0
      %v7537 = vadd.f32 %v7310, %v7536
      %v7538 = vpop.f32.mrb[0].mxu0
      %v7539 = vpop.f32.mrb[0].mxu0
      %v7540 = vadd.f32 %v7310, %v7539
      %v7541 = vpop.f32.mrb[0].mxu0
      %7542 = vmatprep.mubr.bf16.mxu0 %v7403
      %7543 = vmatmul.mubr.bf16.gmra.mrb[0].mxu0 %v7295
      %v7544 = vpop.f32.mrb[0].mxu0
      %v7545 = vadd.f32 %v7310, %v7544
      %v7546 = vpop.f32.mrb[0].mxu0
      %v7547 = vpop.f32.mrb[0].mxu0
      %v7548 = vadd.f32 %v7310, %v7547
      %v7549 = vpop.f32.mrb[0].mxu0
      %7550 = vmatprep.mubr.bf16.mxu0 %v7406
      %7551 = vmatmul.mubr.bf16.gmra.mrb[0].mxu0 %v7298
      %v7552 = vpop.f32.mrb[0].mxu0
      %v7553 = vadd.f32 %v7310, %v7552
      %v7554 = vpop.f32.mrb[0].mxu0
      %v7555 = vpop.f32.mrb[0].mxu0
      %v7556 = vadd.f32 %v7310, %v7555
      %v7557 = vpop.f32.mrb[0].mxu0
      %7558 = vmatprep.mubr.bf16.mxu0 %v7409
      %7559 = vmatmul.mubr.bf16.gmra.mrb[0].mxu0 %v7301
      %v7560 = vpop.f32.mrb[0].mxu0
      %v7561 = vadd.f32 %v7310, %v7560
      %v7562 = vpop.f32.mrb[0].mxu0
      %v7563 = vpop.f32.mrb[0].mxu0
      %v7564 = vadd.f32 %v7310, %v7563
      %v7565 = vpop.f32.mrb[0].mxu0
      %7566 = vmatprep.mubr.bf16.mxu0 %v7412
      %7567 = vmatmul.mubr.bf16.gmra.mrb[0].mxu0 %v7304
      %v7568 = vpop.f32.mrb[0].mxu0
      %v7569 = vadd.f32 %v7310, %v7568
      %v7570 = vpop.f32.mrb[0].mxu0
      %v7571 = vpop.f32.mrb[0].mxu0
      %v7572 = vadd.f32 %v7310, %v7571
      %v7573 = vpop.f32.mrb[0].mxu0
      %7574 = vdwg.mxu0
      %v7575 = vld [vmem:[%s2056 + $0x1] sm:$0xff]
      %v7576 = vld [vmem:[%s2056 + $0x9] sm:$0xff]
      %v7577 = vld [vmem:[%s2056 + $0x19] sm:$0xff]
      %v7578 = vld [vmem:[%s2056 + $0x21] sm:$0xff]
      %v7579 = vld [vmem:[%s2056 + $0x31] sm:$0xff]
      %v7580 = vld [vmem:[%s2056 + $0x39] sm:$0xff]
      %v7581 = vld [vmem:[%s2056 + $0x49] sm:$0xff]
      %v7582 = vld [vmem:[%s2056 + $0x51] sm:$0xff]
      %v7583 = vld [vmem:[%s2056 + $0x61] sm:$0xff]
      %v7584 = vld [vmem:[%s2056 + $0x69] sm:$0xff]
      %v7585 = vld [vmem:[%s2056 + $0x79] sm:$0xff]
      %v7586 = vld [vmem:[%s2056 + $0x81] sm:$0xff]
      %v7587 = vld [vmem:[%s2056 + $0x91] sm:$0xff]
      %v7588 = vld [vmem:[%s2056 + $0x99] sm:$0xff]
      %v7589 = vld [vmem:[%s2056 + $0xa9] sm:$0xff]
      %v7590 = vld [vmem:[%s2056 + $0xb1] sm:$0xff]
      %v7591 = vld [vmem:[%s2056 + $0xc1] sm:$0xff]
      %v7592 = vld [vmem:[%s2056 + $0xc9] sm:$0xff]
      %v7593 = vld [vmem:[%s2056 + $0xd9] sm:$0xff]
      %v7594 = vld [vmem:[%s2056 + $0xe1] sm:$0xff]
      %v7595 = vld [vmem:[%s2056 + $0xf1] sm:$0xff]
      %v7596 = vld [vmem:[%s2056 + $0xf9] sm:$0xff]
      %v7597 = vld [vmem:[%s2056 + $0x109] sm:$0xff]
      %v7598 = vld [vmem:[%s2056 + $0x111] sm:$0xff]
      %v7599 = vld [vmem:[%s2056 + $0x121] sm:$0xff]
      %v7600 = vld [vmem:[%s2056 + $0x129] sm:$0xff]
      %v7601 = vld [vmem:[%s2056 + $0x139] sm:$0xff]
      %v7602 = vld [vmem:[%s2056 + $0x141] sm:$0xff]
      %v7603 = vld [vmem:[%s2056 + $0x151] sm:$0xff]
      %v7604 = vld [vmem:[%s2056 + $0x159] sm:$0xff]
      %v7605 = vld [vmem:[%s2056 + $0x169] sm:$0xff]
      %v7606 = vld [vmem:[%s2056 + $0x171] sm:$0xff]
      %v7607 = vadd.f32 %v7575, %v7449
      %v7608 = vadd.f32 %v7576, %v7452
      %v7609 = vadd.f32 %v7577, %v7457
      %v7610 = vadd.f32 %v7578, %v7460
      %v7611 = vadd.f32 %v7579, %v7465
      %v7612 = vadd.f32 %v7580, %v7468
      %v7613 = vadd.f32 %v7581, %v7473
      %v7614 = vadd.f32 %v7582, %v7476
      %v7615 = vadd.f32 %v7583, %v7481
      %v7616 = vadd.f32 %v7584, %v7484
      %v7617 = vadd.f32 %v7585, %v7489
      %v7618 = vadd.f32 %v7586, %v7492
      %v7619 = vadd.f32 %v7587, %v7497
      %v7620 = vadd.f32 %v7588, %v7500
      %v7621 = vadd.f32 %v7589, %v7505
      %v7622 = vadd.f32 %v7590, %v7508
      %v7623 = vadd.f32 %v7591, %v7513
      %v7624 = vadd.f32 %v7592, %v7516
      %v7625 = vadd.f32 %v7593, %v7521
      %v7626 = vadd.f32 %v7594, %v7524
      %v7627 = vadd.f32 %v7595, %v7529
      %v7628 = vadd.f32 %v7596, %v7532
      %v7629 = vadd.f32 %v7597, %v7537
      %v7630 = vadd.f32 %v7598, %v7540
      %v7631 = vadd.f32 %v7599, %v7545
      %v7632 = vadd.f32 %v7600, %v7548
      %v7633 = vadd.f32 %v7601, %v7553
      %v7634 = vadd.f32 %v7602, %v7556
      %v7635 = vadd.f32 %v7603, %v7561
      %v7636 = vadd.f32 %v7604, %v7564
      %v7637 = vadd.f32 %v7605, %v7569
      %v7638 = vadd.f32 %v7606, %v7572
      %7639 = vst.msk [vmem:[%s224] sm:$0xff] %vm226, %v7607
      %7640 = vst.msk [vmem:[%s224 + $0x8] sm:$0xff] %vm226, %v7608
      %7641 = vst.msk [vmem:[%s224 + $0x10] sm:$0xff] %vm226, %v7609
      %7642 = vst.msk [vmem:[%s224 + $0x18] sm:$0xff] %vm226, %v7610
      %7643 = vst.msk [vmem:[%s224 + $0x20] sm:$0xff] %vm226, %v7611
      %7644 = vst.msk [vmem:[%s224 + $0x28] sm:$0xff] %vm226, %v7612
      %7645 = vst.msk [vmem:[%s224 + $0x30] sm:$0xff] %vm226, %v7613
      %7646 = vst.msk [vmem:[%s224 + $0x38] sm:$0xff] %vm226, %v7614
      %7647 = vst.msk [vmem:[%s224 + $0x40] sm:$0xff] %vm226, %v7615
      %7648 = vst.msk [vmem:[%s224 + $0x48] sm:$0xff] %vm226, %v7616
      %7649 = vst.msk [vmem:[%s224 + $0x50] sm:$0xff] %vm226, %v7617
      %7650 = vst.msk [vmem:[%s224 + $0x58] sm:$0xff] %vm226, %v7618
      %7651 = vst.msk [vmem:[%s224 + $0x60] sm:$0xff] %vm226, %v7619
      %7652 = vst.msk [vmem:[%s224 + $0x68] sm:$0xff] %vm226, %v7620
      %7653 = vst.msk [vmem:[%s224 + $0x70] sm:$0xff] %vm226, %v7621
      %7654 = vst.msk [vmem:[%s224 + $0x78] sm:$0xff] %vm226, %v7622
      %7655 = vst.msk [vmem:[%s224 + $0x80] sm:$0xff] %vm226, %v7623
      %7656 = vst.msk [vmem:[%s224 + $0x88] sm:$0xff] %vm226, %v7624
      %7657 = vst.msk [vmem:[%s224 + $0x90] sm:$0xff] %vm226, %v7625
      %7658 = vst.msk [vmem:[%s224 + $0x98] sm:$0xff] %vm226, %v7626
      %7659 = vst.msk [vmem:[%s224 + $0xa0] sm:$0xff] %vm226, %v7627
      %7660 = vst.msk [vmem:[%s224 + $0xa8] sm:$0xff] %vm226, %v7628
      %7661 = vst.msk [vmem:[%s224 + $0xb0] sm:$0xff] %vm226, %v7629
      %7662 = vst.msk [vmem:[%s224 + $0xb8] sm:$0xff] %vm226, %v7630
      %7663 = vst.msk [vmem:[%s224 + $0xc0] sm:$0xff] %vm226, %v7631
      %7664 = vst.msk [vmem:[%s224 + $0xc8] sm:$0xff] %vm226, %v7632
      %7665 = vst.msk [vmem:[%s224 + $0xd0] sm:$0xff] %vm226, %v7633
      %7666 = vst.msk [vmem:[%s224 + $0xd8] sm:$0xff] %vm226, %v7634
      %7667 = vst.msk [vmem:[%s224 + $0xe0] sm:$0xff] %vm226, %v7635
      %7668 = vst.msk [vmem:[%s224 + $0xe8] sm:$0xff] %vm226, %v7636
      %7669 = vst.msk [vmem:[%s224 + $0xf0] sm:$0xff] %vm226, %v7637
      %7670 = vst.msk [vmem:[%s224 + $0xf8] sm:$0xff] %vm226, %v7638
      %p7671 = scmp.lt.s32.totalorder %s16, 1
      %s7672 = scalar_select %p7671, %s16, 1
      %s7673 = smul.addr %s7672, 32
      %s7674 = smul.addr %s7673, 8
      %s7675 = scalar_lea.vmem %s5, %s7674
      // Predicated region
      $region41: #{neuro_lv_forward.1} parent=39 // pred_check
        %p7676 = pneg %p144
      $region42: #{neuro_lv_forward.1} parent=39 // pred_check_branch
        %7678 = sbr.rel (%p7676) target = $region44
      $region43: #{neuro_lv_forward.1} parent=39 // pred_region
        _
      $region44: #{neuro_lv_forward.1} parent=39 // pred_fallthru
        _
    $region40: #{neuro_lv_forward.1} parent=5 // pred_fallthru
      _
    %p7679 = scmp.le.s32.totalorder 2, %s11
    // Predicated region
    $region45: #{neuro_lv_forward.1} parent=5 // pred_check
      %p7680 = pneg %p7679
    $region46: #{neuro_lv_forward.1} parent=5 // pred_check_branch
      %7682 = sbr.rel (%p7680) target = $region48
    $region47: #{neuro_lv_forward.1} parent=5 // pred_region
      %s7683 = ssub.s32 %s11, 2
      // Predicated region
      $region49: #{neuro_lv_forward.1} parent=47 // pred_check
        %p7684 = pneg %p150
      $region50: #{neuro_lv_forward.1} parent=47 // pred_check_branch
        %7686 = sbr.rel (%p7684) target = $region52
      $region51: #{neuro_lv_forward.1} parent=47 // pred_region
        %p7687 = scmp.lt.s32.totalorder %s17, 1
        %s7688 = scalar_select %p7687, %s17, 1
        %s7689 = smul.addr %s7688, 32
        %s7690 = smul.addr %s7689, 8
        %s7691 = scalar_lea.vmem %s5, %s7690
      $region52: #{neuro_lv_forward.1} parent=47 // pred_fallthru
        _
    $region48: #{neuro_lv_forward.1} parent=5 // pred_fallthru
      _
  $region6: #{neuro_lv_forward.1} parent=0 // loop_footer
    %s15 = sadd.s32 1, %s11
  $region7: #{neuro_lv_forward.1} parent=0 // loop_footer_branch
    %10 = sbr.rel target = $region3
  $region8: #{neuro_lv_forward.1} parent=0 // loop_exit
    _

</llo_original>
